<compile_context>
chip_gen: v7x
topology: tpu7x:2x2x1
jax: 0.10.0
libtpu: 0.0.40
codegen_flags: <defaults>
</compile_context>

<pallas_src>
import jax
import jax.numpy as jnp
from jax.experimental import pallas as pl
from jax.experimental.pallas import tpu as pltpu


def _round_up(v, m):
    return (v + m - 1) // m * m


# ----------------------------- fused network kernel ---------------------------
def _make_encoder_kernel(layer_dims):
    """layer_dims: list of (H, W, Cin, Cout) per layer (pre-pool spatial)."""
    depth = len(layer_dims)

    def kernel(*refs):
        # refs: x, [S, w1, b1, w2, b2]*depth, inter_0..inter_{d-1}, out,
        #       [pad1, im1, pad2, im2, cat]*depth (scratch)
        x_ref = refs[0]
        wrefs = refs[1:1 + 5 * depth]
        inter_refs = refs[1 + 5 * depth:1 + 6 * depth]
        out_ref = refs[1 + 6 * depth]
        scratch = refs[2 + 6 * depth:]

        x = x_ref[0]                                     # (Cpad_in0, H0*W0)

        for i, (H, W, Cin, Cout) in enumerate(layer_dims):
            HW = H * W
            Cpad_in = _round_up(Cin, 8)
            Cpad_out = _round_up(Cout, 8)
            Cpad_cat = _round_up(2 * Cout, 8)
            S_ref, w1_ref, b1_ref, w2_ref, b2_ref = wrefs[5 * i:5 * (i + 1)]
            pad1, im1, pad2, im2, cat = scratch[5 * i:5 * (i + 1)]

            # Column coordinate of every flattened spatial position (shared by
            # both convs of this layer); realises W-direction "same" padding.
            col = jax.lax.broadcasted_iota(jnp.int32, (1, HW), 1) % W

            def conv_relu(x_val, pad_ref, im_ref, w_ref, b_ref, K, Cpad,
                          col=col, HW=HW, W=W):
                """'same' KxK conv (stride 1) + bias + ReLU via im2col + one
                MXU matmul.  Channel stride in the im2col matrix is Cpad (a
                multiple of 8) so every tap store is sublane-aligned."""
                p = (K - 1) // 2
                off = p * (W + 1)
                LB = HW + (K - 1) * (W + 1)
                # Zero only the halo regions; the interior is overwritten.
                pad_ref[:, 0:off] = jnp.zeros((Cpad, off), jnp.float32)
                pad_ref[:, off + HW:LB] = jnp.zeros((Cpad, LB - off - HW),
                                                    jnp.float32)
                pad_ref[:, off:off + HW] = x_val
                # flat(out p, tap kh,kw) = p + kh*W + kw; wrap columns masked.
                for kw in range(K):
                    shift = kw - p
                    if shift != 0:
                        valid = jnp.logical_and(col + shift >= 0,
                                                col + shift < W)
                    for kh in range(K):
                        tap = pad_ref[:, kh * W + kw:kh * W + kw + HW]
                        if shift != 0:
                            tap = jnp.where(valid, tap, 0.0)
                        r0 = (kh * K + kw) * Cpad        # 8-sublane aligned
                        im_ref[r0:r0 + Cpad, :] = tap
                y = jnp.dot(w_ref[...], im_ref[...],
                            preferred_element_type=jnp.float32)
                return jnp.maximum(y + b_ref[...], 0.0)

            # conv1 + ReLU; the intermediate is written straight to HBM output.
            h1 = conv_relu(x, pad1, im1, w1_ref, b1_ref, 3, Cpad_in)
            inter_refs[i][0] = h1[:Cout, :]              # == x.clone()

            # conv2 + ReLU consumes h1 directly from VMEM/registers.
            h2 = conv_relu(h1, pad2, im2, w2_ref, b2_ref, 9, Cpad_out)

            # torch.cat([intermediate, x], dim=1) staged in a small halo buffer.
            cat[0:Cout, 0:HW] = h1[:Cout, :]
            cat[Cout:2 * Cout, 0:HW] = h2[:Cout, :]
            if 2 * Cout < Cpad_cat:                      # keep padded rows clean
                cat[2 * Cout:Cpad_cat, 0:HW] = jnp.zeros(
                    (Cpad_cat - 2 * Cout, HW), jnp.float32)
            cat[:, HW:HW + W + 1] = jnp.zeros((Cpad_cat, W + 1), jnp.float32)

            # Fused 2x2/stride-2 max pool: 4 shifted taps -> elementwise max,
            # then a 0/1 selection matmul (on the otherwise idle MXU) performs
            # the stride-2 compaction.  Wrapped/halo values only land at
            # positions the selection matrix never picks.
            m = jnp.maximum(
                jnp.maximum(cat[:, 0:HW], cat[:, 1:1 + HW]),
                jnp.maximum(cat[:, W:W + HW], cat[:, W + 1:W + 1 + HW]))
            x = jnp.dot(m, S_ref[...], preferred_element_type=jnp.float32)

        Cout_last = layer_dims[-1][3]
        out_ref[0] = x[:2 * Cout_last, :]

    return kernel


# ------------------------------- forward wrapper -------------------------------
def encoder_x_forward(x_nchw, packed):
    """Mirrors EncoderX.forward: returns (intermediates, x), NCHW like PyTorch.

    `packed` comes from pack_params(): per layer
    (w1m, b1c, w2m, b2c, Cin, Cout) with channel-padded im2col weights.
    """
    N, C, H, W = x_nchw.shape
    depth = len(packed)

    # One-time channel pad of the input to a multiple of 8 sublanes.
    Cpad0 = _round_up(C, 8)
    x_in = jnp.pad(x_nchw.reshape(N, C, H * W),
                   ((0, 0), (0, Cpad0 - C), (0, 0)))

    layer_dims = []
    inputs = [x_in]
    in_specs = [pl.BlockSpec((1, Cpad0, H * W), lambda n: (n, 0, 0))]
    out_shapes, out_specs, scratch = [], [], []

    Hi, Wi, Cini = H, W, C
    for (w1m, b1c, w2m, b2c, Cin, Cout) in packed:
        assert Cin == Cini, "packed params do not match layer input channels"
        HWi = Hi * Wi
        Ho, Wo = Hi // 2, Wi // 2
        Cpad_in = _round_up(Cin, 8)
        Cpad_out = _round_up(Cout, 8)
        Cpad_cat = _round_up(2 * Cout, 8)
        layer_dims.append((Hi, Wi, Cin, Cout))

        # 0/1 selection matrix for the stride-2 pool compaction (host-built).
        q = jnp.arange(Ho * Wo)
        pos = 2 * (q // Wo) * Wi + 2 * (q % Wo)
        S = (jnp.arange(HWi)[:, None] == pos[None, :]).astype(jnp.float32)

        inputs += [S, w1m, b1c, w2m, b2c]
        in_specs += [pl.BlockSpec(t.shape, lambda n: (0, 0))
                     for t in (S, w1m, b1c, w2m, b2c)]

        out_shapes.append(jax.ShapeDtypeStruct((N, Cout, HWi), jnp.float32))
        out_specs.append(pl.BlockSpec((1, Cout, HWi), lambda n: (n, 0, 0)))

        scratch += [
            pltpu.VMEM((Cpad_in, HWi + 2 * (Wi + 1)), jnp.float32),   # conv1 halo
            pltpu.VMEM((9 * Cpad_in, HWi), jnp.float32),              # conv1 im2col
            pltpu.VMEM((Cpad_out, HWi + 8 * (Wi + 1)), jnp.float32),  # conv2 halo
            pltpu.VMEM((81 * Cpad_out, HWi), jnp.float32),            # conv2 im2col
            pltpu.VMEM((Cpad_cat, HWi + Wi + 1), jnp.float32),        # concat+pool halo
        ]
        Hi, Wi, Cini = Ho, Wo, 2 * Cout

    # Final pooled activation of the last layer.
    out_shapes.append(jax.ShapeDtypeStruct((N, Cini, Hi * Wi), jnp.float32))
    out_specs.append(pl.BlockSpec((1, Cini, Hi * Wi), lambda n: (n, 0, 0)))

    results = pl.pallas_call(
        _make_encoder_kernel(layer_dims),
        out_shape=tuple(out_shapes),
        grid=(N,),
        in_specs=in_specs,
        out_specs=tuple(out_specs),
        scratch_shapes=scratch,
        # Batch axis is independent -> both v7x TensorCores can be used.
        # (For large N, process Nb>1 images per grid step to amortize the
        # ~0.35us/step overhead; at N=2 the per-image grid already matches
        # the 2-TC split.)
        compiler_params=pltpu.CompilerParams(dimension_semantics=("parallel",)),
    )(*inputs)

    inters = [results[i].reshape(N, ld[3], ld[0], ld[1])
              for i, ld in enumerate(layer_dims)]
    out = results[depth].reshape(N, Cini, Hi, Wi)
    return inters, out


# --------------------------- parameters (PyTorch-style) ------------------------
def init_params(key, depth, num_filter):
    """Deterministic synthetic OIHW weights; shapes match nn.Conv2d in __init__."""
    params = []
    for i in range(depth):
        cin = 3 if i == 0 else num_filter * 2
        key, k1, k2, k3, k4 = jax.random.split(key, 5)
        w1 = jax.random.normal(k1, (num_filter, cin, 3, 3), jnp.float32) * 0.1
        b1 = jax.random.normal(k2, (num_filter,), jnp.float32) * 0.1
        w2 = jax.random.normal(k3, (num_filter, num_filter, 9, 9), jnp.float32) * 0.05
        b2 = jax.random.normal(k4, (num_filter,), jnp.float32) * 0.1
        params.append((w1, b1, w2, b2))
    return params


def pack_params(params):
    """One-time prep: OIHW conv weights -> channel-padded (Cout_pad, K*K*C_pad)
    im2col matrices (8-sublane aligned), plus padded bias columns."""
    packed = []
    for (w1, b1, w2, b2) in params:
        Cout, Cin, _, _ = w1.shape
        Cpad_in = _round_up(Cin, 8)
        Cpad_mid = _round_up(Cout, 8)    # conv2 input channels = Cout
        Cpad_out = _round_up(Cout, 8)

        def pack(w, cpad_i, cpad_o):
            co, ci, k, _ = w.shape
            wt = jnp.transpose(w, (0, 2, 3, 1))                     # (Co,K,K,Ci)
            wt = jnp.pad(wt, ((0, cpad_o - co), (0, 0), (0, 0), (0, cpad_i - ci)))
            return wt.reshape(cpad_o, k * k * cpad_i)

        w1m = pack(w1, Cpad_in, Cpad_out)
        w2m = pack(w2, Cpad_mid, Cpad_out)
        b1c = jnp.pad(b1, (0, Cpad_out - Cout)).reshape(Cpad_out, 1)
        b2c = jnp.pad(b2, (0, Cpad_out - Cout)).reshape(Cpad_out, 1)
        packed.append((w1m, b1c, w2m, b2c, Cin, Cout))
    return packed


# ------------------------- pure-JAX reference ---------------------------------
def _ref_forward(x_nchw, params):
    x = x_nchw
    inters = []
    for (w1, b1, w2, b2) in params:
        p1 = (w1.shape[2] - 1) // 2
        p2 = (w2.shape[2] - 1) // 2
        x = jax.lax.conv_general_dilated(
            x, w1, (1, 1), [(p1, p1), (p1, p1)],
            dimension_numbers=("NCHW", "OIHW", "NCHW"),
            precision=jax.lax.Precision.HIGHEST) + b1[None, :, None, None]
        x = jnp.maximum(x, 0.0)
        inters.append(x)
        y = jax.lax.conv_general_dilated(
            x, w2, (1, 1), [(p2, p2), (p2, p2)],
            dimension_numbers=("NCHW", "OIHW", "NCHW"),
            precision=jax.lax.Precision.HIGHEST) + b2[None, :, None, None]
        y = jnp.maximum(y, 0.0)
        cat = jnp.concatenate([x, y], axis=1)
        x = jax.lax.reduce_window(cat, -jnp.inf, jax.lax.max,
                                  (1, 1, 2, 2), (1, 1, 2, 2), "VALID")
    return inters, x


if __name__ == "__main__":
    depth, num_filter = 2, 4
    key = jax.random.PRNGKey(0)
    key, xkey = jax.random.split(key)
    x = jax.random.normal(xkey, (2, 3, 16, 16), jnp.float32)   # NCHW, like PyTorch
    params = init_params(key, depth, num_filter)
    packed = pack_params(params)

    inters, out = encoder_x_forward(x, packed)
    jax.block_until_ready((inters, out))

    # sanity: shapes + numerics vs. pure-JAX reference
    assert out.shape == (2, 2 * num_filter, 4, 4), out.shape
    assert len(inters) == depth
    ref_inters, ref_out = _ref_forward(x, params)
    for a, b in zip(inters, ref_inters):
        assert a.shape == b.shape
        assert jnp.allclose(a, b, atol=2e-4, rtol=2e-4)
    assert jnp.allclose(out, ref_out, atol=2e-4, rtol=2e-4)

    print("KERNEL_OK")
</pallas_src>

<mosaic_0001>
module attributes {stable_mosaic.version = 11 : i64} {
  func.func @kernel(%arg0: i32, %arg1: memref<1x8x256xf32, #tpu.memory_space<vmem>>, %arg2: memref<256x64xf32, #tpu.memory_space<vmem>>, %arg3: memref<8x72xf32, #tpu.memory_space<vmem>>, %arg4: memref<8x1xf32, #tpu.memory_space<vmem>>, %arg5: memref<8x648xf32, #tpu.memory_space<vmem>>, %arg6: memref<8x1xf32, #tpu.memory_space<vmem>>, %arg7: memref<64x16xf32, #tpu.memory_space<vmem>>, %arg8: memref<8x72xf32, #tpu.memory_space<vmem>>, %arg9: memref<8x1xf32, #tpu.memory_space<vmem>>, %arg10: memref<8x648xf32, #tpu.memory_space<vmem>>, %arg11: memref<8x1xf32, #tpu.memory_space<vmem>>, %arg12: memref<1x4x256xf32, #tpu.memory_space<vmem>>, %arg13: memref<1x4x64xf32, #tpu.memory_space<vmem>>, %arg14: memref<1x8x16xf32, #tpu.memory_space<vmem>>, %arg15: memref<8x290xf32, #tpu.memory_space<vmem>>, %arg16: memref<72x256xf32, #tpu.memory_space<vmem>>, %arg17: memref<8x392xf32, #tpu.memory_space<vmem>>, %arg18: memref<648x256xf32, #tpu.memory_space<vmem>>, %arg19: memref<8x273xf32, #tpu.memory_space<vmem>>, %arg20: memref<8x82xf32, #tpu.memory_space<vmem>>, %arg21: memref<72x64xf32, #tpu.memory_space<vmem>>, %arg22: memref<8x136xf32, #tpu.memory_space<vmem>>, %arg23: memref<648x64xf32, #tpu.memory_space<vmem>>, %arg24: memref<8x73xf32, #tpu.memory_space<vmem>>) attributes {dimension_semantics = [#tpu.dimension_semantics<parallel>], iteration_bounds = array<i64: 2>, scalar_prefetch = 0 : i64, scratch_operands = 10 : i64, tpu.core_type = #tpu.core_type<tc>, window_params = [{transform_indices = @transform_0, window_bounds = array<i64: 1, 8, 256>}, {pipeline_mode = #tpu.pipeline_mode<synchronous>, transform_indices = @transform_1, window_bounds = array<i64: 256, 64>}, {pipeline_mode = #tpu.pipeline_mode<synchronous>, transform_indices = @transform_2, window_bounds = array<i64: 8, 72>}, {pipeline_mode = #tpu.pipeline_mode<synchronous>, transform_indices = @transform_3, window_bounds = array<i64: 8, 1>}, {pipeline_mode = #tpu.pipeline_mode<synchronous>, transform_indices = @transform_4, window_bounds = array<i64: 8, 648>}, {pipeline_mode = #tpu.pipeline_mode<synchronous>, transform_indices = @transform_5, window_bounds = array<i64: 8, 1>}, {pipeline_mode = #tpu.pipeline_mode<synchronous>, transform_indices = @transform_6, window_bounds = array<i64: 64, 16>}, {pipeline_mode = #tpu.pipeline_mode<synchronous>, transform_indices = @transform_7, window_bounds = array<i64: 8, 72>}, {pipeline_mode = #tpu.pipeline_mode<synchronous>, transform_indices = @transform_8, window_bounds = array<i64: 8, 1>}, {pipeline_mode = #tpu.pipeline_mode<synchronous>, transform_indices = @transform_9, window_bounds = array<i64: 8, 648>}, {pipeline_mode = #tpu.pipeline_mode<synchronous>, transform_indices = @transform_10, window_bounds = array<i64: 8, 1>}, {transform_indices = @transform_11, window_bounds = array<i64: 1, 4, 256>}, {transform_indices = @transform_12, window_bounds = array<i64: 1, 4, 64>}, {transform_indices = @transform_13, window_bounds = array<i64: 1, 8, 16>}]} {
    %c0 = arith.constant 0 : index
    %c0_0 = arith.constant 0 : index
    %c0_1 = arith.constant 0 : index
    %0 = vector.load %arg1[%c0, %c0_0, %c0_1] : memref<1x8x256xf32, #tpu.memory_space<vmem>>, vector<1x8x256xf32>
    %1 = vector.shape_cast %0 : vector<1x8x256xf32> to vector<8x256xf32>
    %2 = tpu.iota {dimensions = array<i32: 1>} : vector<1x256xi32>
    %c16_i32 = arith.constant 16 : i32
    %c0_i32 = arith.constant 0 : i32
    %3 = arith.cmpi eq, %c16_i32, %c0_i32 : i32
    %c1_i32 = arith.constant 1 : i32
    %4 = arith.select %3, %c1_i32, %c16_i32 : i32
    %5 = vector.broadcast %4 : i32 to vector<1x256xi32>
    %6 = arith.remsi %2, %5 : vector<1x256xi32>
    %c0_i32_2 = arith.constant 0 : i32
    %7 = vector.broadcast %c0_i32_2 : i32 to vector<1x256xi32>
    %8 = arith.cmpi ne, %6, %7 : vector<1x256xi32>
    %c0_i32_3 = arith.constant 0 : i32
    %9 = vector.broadcast %c0_i32_3 : i32 to vector<1x256xi32>
    %10 = arith.cmpi slt, %6, %9 : vector<1x256xi32>
    %c0_i32_4 = arith.constant 0 : i32
    %11 = arith.cmpi slt, %4, %c0_i32_4 : i32
    %12 = vector.broadcast %11 : i1 to vector<1x256xi1>
    %13 = vector.broadcast %12 : vector<1x256xi1> to vector<1x256xi1>
    %14 = arith.xori %10, %13 : vector<1x256xi1>
    %15 = arith.andi %14, %8 : vector<1x256xi1>
    %16 = vector.broadcast %4 : i32 to vector<1x256xi32>
    %17 = arith.addi %6, %16 : vector<1x256xi32>
    %18 = arith.select %15, %17, %6 : vector<1x256xi1>, vector<1x256xi32>
    %cst = arith.constant 0.000000e+00 : f32
    %19 = vector.broadcast %cst : f32 to vector<8x17xf32>
    %c0_5 = arith.constant 0 : index
    %c0_6 = arith.constant 0 : index
    %20 = vector.load %arg15[%c0_5, %c0_6] : memref<8x290xf32, #tpu.memory_space<vmem>>, vector<8x17xf32>
    tpu.vector_store %arg15[%c0_5, %c0_6], %19 {strides = array<i32>} : memref<8x290xf32, #tpu.memory_space<vmem>>, vector<8x17xf32>,
    %cst_7 = arith.constant 0.000000e+00 : f32
    %21 = vector.broadcast %cst_7 : f32 to vector<8x17xf32>
    %c0_8 = arith.constant 0 : index
    %c273 = arith.constant 273 : index
    %22 = vector.load %arg15[%c0_8, %c273] : memref<8x290xf32, #tpu.memory_space<vmem>>, vector<8x17xf32>
    tpu.vector_store %arg15[%c0_8, %c273], %21 {strides = array<i32>} : memref<8x290xf32, #tpu.memory_space<vmem>>, vector<8x17xf32>,
    %c0_9 = arith.constant 0 : index
    %c17 = arith.constant 17 : index
    %23 = vector.load %arg15[%c0_9, %c17] : memref<8x290xf32, #tpu.memory_space<vmem>>, vector<8x256xf32>
    tpu.vector_store %arg15[%c0_9, %c17], %1 {strides = array<i32>} : memref<8x290xf32, #tpu.memory_space<vmem>>, vector<8x256xf32>,
    %c-1_i32 = arith.constant -1 : i32
    %24 = vector.broadcast %c-1_i32 : i32 to vector<1x256xi32>
    %25 = arith.addi %18, %24 : vector<1x256xi32>
    %c0_i32_10 = arith.constant 0 : i32
    %26 = vector.broadcast %c0_i32_10 : i32 to vector<1x256xi32>
    %27 = arith.cmpi sge, %25, %26 : vector<1x256xi32>
    %c-1_i32_11 = arith.constant -1 : i32
    %28 = vector.broadcast %c-1_i32_11 : i32 to vector<1x256xi32>
    %29 = arith.addi %18, %28 : vector<1x256xi32>
    %c16_i32_12 = arith.constant 16 : i32
    %30 = vector.broadcast %c16_i32_12 : i32 to vector<1x256xi32>
    %31 = arith.cmpi slt, %29, %30 : vector<1x256xi32>
    %32 = arith.andi %27, %31 : vector<1x256xi1>
    %c0_13 = arith.constant 0 : index
    %c0_14 = arith.constant 0 : index
    %33 = vector.load %arg15[%c0_13, %c0_14] : memref<8x290xf32, #tpu.memory_space<vmem>>, vector<8x256xf32>
    %cst_15 = arith.constant 0.000000e+00 : f32
    %34 = vector.shape_cast %32 : vector<1x256xi1> to vector<1x256xi1>
    %35 = vector.broadcast %34 : vector<1x256xi1> to vector<8x256xi1>
    %36 = vector.broadcast %cst_15 : f32 to vector<8x256xf32>
    %37 = arith.select %35, %33, %36 : vector<8x256xi1>, vector<8x256xf32>
    %c0_16 = arith.constant 0 : index
    %c0_17 = arith.constant 0 : index
    %38 = vector.load %arg16[%c0_16, %c0_17] : memref<72x256xf32, #tpu.memory_space<vmem>>, vector<8x256xf32>
    tpu.vector_store %arg16[%c0_16, %c0_17], %37 {strides = array<i32>} : memref<72x256xf32, #tpu.memory_space<vmem>>, vector<8x256xf32>,
    %c0_18 = arith.constant 0 : index
    %c16 = arith.constant 16 : index
    %39 = vector.load %arg15[%c0_18, %c16] : memref<8x290xf32, #tpu.memory_space<vmem>>, vector<8x256xf32>
    %cst_19 = arith.constant 0.000000e+00 : f32
    %40 = vector.shape_cast %32 : vector<1x256xi1> to vector<1x256xi1>
    %41 = vector.broadcast %40 : vector<1x256xi1> to vector<8x256xi1>
    %42 = vector.broadcast %cst_19 : f32 to vector<8x256xf32>
    %43 = arith.select %41, %39, %42 : vector<8x256xi1>, vector<8x256xf32>
    %c24 = arith.constant 24 : index
    %c0_20 = arith.constant 0 : index
    %44 = vector.load %arg16[%c24, %c0_20] : memref<72x256xf32, #tpu.memory_space<vmem>>, vector<8x256xf32>
    tpu.vector_store %arg16[%c24, %c0_20], %43 {strides = array<i32>} : memref<72x256xf32, #tpu.memory_space<vmem>>, vector<8x256xf32>,
    %c0_21 = arith.constant 0 : index
    %c32 = arith.constant 32 : index
    %45 = vector.load %arg15[%c0_21, %c32] : memref<8x290xf32, #tpu.memory_space<vmem>>, vector<8x256xf32>
    %cst_22 = arith.constant 0.000000e+00 : f32
    %46 = vector.shape_cast %32 : vector<1x256xi1> to vector<1x256xi1>
    %47 = vector.broadcast %46 : vector<1x256xi1> to vector<8x256xi1>
    %48 = vector.broadcast %cst_22 : f32 to vector<8x256xf32>
    %49 = arith.select %47, %45, %48 : vector<8x256xi1>, vector<8x256xf32>
    %c48 = arith.constant 48 : index
    %c0_23 = arith.constant 0 : index
    %50 = vector.load %arg16[%c48, %c0_23] : memref<72x256xf32, #tpu.memory_space<vmem>>, vector<8x256xf32>
    tpu.vector_store %arg16[%c48, %c0_23], %49 {strides = array<i32>} : memref<72x256xf32, #tpu.memory_space<vmem>>, vector<8x256xf32>,
    %c0_24 = arith.constant 0 : index
    %c1 = arith.constant 1 : index
    %51 = vector.load %arg15[%c0_24, %c1] : memref<8x290xf32, #tpu.memory_space<vmem>>, vector<8x256xf32>
    %c8 = arith.constant 8 : index
    %c0_25 = arith.constant 0 : index
    %52 = vector.load %arg16[%c8, %c0_25] : memref<72x256xf32, #tpu.memory_space<vmem>>, vector<8x256xf32>
    tpu.vector_store %arg16[%c8, %c0_25], %51 {strides = array<i32>} : memref<72x256xf32, #tpu.memory_space<vmem>>, vector<8x256xf32>,
    %c0_26 = arith.constant 0 : index
    %c17_27 = arith.constant 17 : index
    %53 = vector.load %arg15[%c0_26, %c17_27] : memref<8x290xf32, #tpu.memory_space<vmem>>, vector<8x256xf32>
    %c32_28 = arith.constant 32 : index
    %c0_29 = arith.constant 0 : index
    %54 = vector.load %arg16[%c32_28, %c0_29] : memref<72x256xf32, #tpu.memory_space<vmem>>, vector<8x256xf32>
    tpu.vector_store %arg16[%c32_28, %c0_29], %53 {strides = array<i32>} : memref<72x256xf32, #tpu.memory_space<vmem>>, vector<8x256xf32>,
    %c0_30 = arith.constant 0 : index
    %c33 = arith.constant 33 : index
    %55 = vector.load %arg15[%c0_30, %c33] : memref<8x290xf32, #tpu.memory_space<vmem>>, vector<8x256xf32>
    %c56 = arith.constant 56 : index
    %c0_31 = arith.constant 0 : index
    %56 = vector.load %arg16[%c56, %c0_31] : memref<72x256xf32, #tpu.memory_space<vmem>>, vector<8x256xf32>
    tpu.vector_store %arg16[%c56, %c0_31], %55 {strides = array<i32>} : memref<72x256xf32, #tpu.memory_space<vmem>>, vector<8x256xf32>,
    %c1_i32_32 = arith.constant 1 : i32
    %57 = vector.broadcast %c1_i32_32 : i32 to vector<1x256xi32>
    %58 = arith.addi %18, %57 : vector<1x256xi32>
    %c0_i32_33 = arith.constant 0 : i32
    %59 = vector.broadcast %c0_i32_33 : i32 to vector<1x256xi32>
    %60 = arith.cmpi sge, %58, %59 : vector<1x256xi32>
    %c1_i32_34 = arith.constant 1 : i32
    %61 = vector.broadcast %c1_i32_34 : i32 to vector<1x256xi32>
    %62 = arith.addi %18, %61 : vector<1x256xi32>
    %c16_i32_35 = arith.constant 16 : i32
    %63 = vector.broadcast %c16_i32_35 : i32 to vector<1x256xi32>
    %64 = arith.cmpi slt, %62, %63 : vector<1x256xi32>
    %65 = arith.andi %60, %64 : vector<1x256xi1>
    %c0_36 = arith.constant 0 : index
    %c2 = arith.constant 2 : index
    %66 = vector.load %arg15[%c0_36, %c2] : memref<8x290xf32, #tpu.memory_space<vmem>>, vector<8x256xf32>
    %cst_37 = arith.constant 0.000000e+00 : f32
    %67 = vector.shape_cast %65 : vector<1x256xi1> to vector<1x256xi1>
    %68 = vector.broadcast %67 : vector<1x256xi1> to vector<8x256xi1>
    %69 = vector.broadcast %cst_37 : f32 to vector<8x256xf32>
    %70 = arith.select %68, %66, %69 : vector<8x256xi1>, vector<8x256xf32>
    %c16_38 = arith.constant 16 : index
    %c0_39 = arith.constant 0 : index
    %71 = vector.load %arg16[%c16_38, %c0_39] : memref<72x256xf32, #tpu.memory_space<vmem>>, vector<8x256xf32>
    tpu.vector_store %arg16[%c16_38, %c0_39], %70 {strides = array<i32>} : memref<72x256xf32, #tpu.memory_space<vmem>>, vector<8x256xf32>,
    %c0_40 = arith.constant 0 : index
    %c18 = arith.constant 18 : index
    %72 = vector.load %arg15[%c0_40, %c18] : memref<8x290xf32, #tpu.memory_space<vmem>>, vector<8x256xf32>
    %cst_41 = arith.constant 0.000000e+00 : f32
    %73 = vector.shape_cast %65 : vector<1x256xi1> to vector<1x256xi1>
    %74 = vector.broadcast %73 : vector<1x256xi1> to vector<8x256xi1>
    %75 = vector.broadcast %cst_41 : f32 to vector<8x256xf32>
    %76 = arith.select %74, %72, %75 : vector<8x256xi1>, vector<8x256xf32>
    %c40 = arith.constant 40 : index
    %c0_42 = arith.constant 0 : index
    %77 = vector.load %arg16[%c40, %c0_42] : memref<72x256xf32, #tpu.memory_space<vmem>>, vector<8x256xf32>
    tpu.vector_store %arg16[%c40, %c0_42], %76 {strides = array<i32>} : memref<72x256xf32, #tpu.memory_space<vmem>>, vector<8x256xf32>,
    %c0_43 = arith.constant 0 : index
    %c34 = arith.constant 34 : index
    %78 = vector.load %arg15[%c0_43, %c34] : memref<8x290xf32, #tpu.memory_space<vmem>>, vector<8x256xf32>
    %cst_44 = arith.constant 0.000000e+00 : f32
    %79 = vector.shape_cast %65 : vector<1x256xi1> to vector<1x256xi1>
    %80 = vector.broadcast %79 : vector<1x256xi1> to vector<8x256xi1>
    %81 = vector.broadcast %cst_44 : f32 to vector<8x256xf32>
    %82 = arith.select %80, %78, %81 : vector<8x256xi1>, vector<8x256xf32>
    %c64 = arith.constant 64 : index
    %c0_45 = arith.constant 0 : index
    %83 = vector.load %arg16[%c64, %c0_45] : memref<72x256xf32, #tpu.memory_space<vmem>>, vector<8x256xf32>
    tpu.vector_store %arg16[%c64, %c0_45], %82 {strides = array<i32>} : memref<72x256xf32, #tpu.memory_space<vmem>>, vector<8x256xf32>,
    %c0_46 = arith.constant 0 : index
    %c0_47 = arith.constant 0 : index
    %84 = vector.load %arg3[%c0_46, %c0_47] : memref<8x72xf32, #tpu.memory_space<vmem>>, vector<8x72xf32>
    %c0_48 = arith.constant 0 : index
    %c0_49 = arith.constant 0 : index
    %85 = vector.load %arg16[%c0_48, %c0_49] : memref<72x256xf32, #tpu.memory_space<vmem>>, vector<72x256xf32>
    %cst_50 = arith.constant dense<0.000000e+00> : vector<8x256xf32>
    %86 = tpu.matmul %84, %85, %cst_50 {dimension_numbers = #tpu.dot_dimension_numbers<[1], [0], [0], [1], [0, 0, 1, 1], [], []>} : vector<8x72xf32>, vector<72x256xf32>, vector<8x256xf32> -> vector<8x256xf32>
    %c0_51 = arith.constant 0 : index
    %c0_52 = arith.constant 0 : index
    %87 = vector.load %arg4[%c0_51, %c0_52] : memref<8x1xf32, #tpu.memory_space<vmem>>, vector<8x1xf32>
    %88 = vector.broadcast %87 : vector<8x1xf32> to vector<8x256xf32>
    %89 = arith.addf %86, %88 : vector<8x256xf32>
    %cst_53 = arith.constant 0.000000e+00 : f32
    %90 = vector.broadcast %cst_53 : f32 to vector<8x256xf32>
    %91 = arith.maximumf %89, %90 : vector<8x256xf32>
    %92 = vector.extract_strided_slice %91 {offsets = [0, 0], sizes = [4, 256], strides = [1, 1]} : vector<8x256xf32> to vector<4x256xf32>
    %c0_54 = arith.constant 0 : index
    %c0_55 = arith.constant 0 : index
    %c0_56 = arith.constant 0 : index
    %93 = vector.load %arg12[%c0_54, %c0_55, %c0_56] : memref<1x4x256xf32, #tpu.memory_space<vmem>>, vector<1x4x256xf32>
    %94 = vector.shape_cast %93 : vector<1x4x256xf32> to vector<4x256xf32>
    %95 = vector.shape_cast %92 : vector<4x256xf32> to vector<1x4x256xf32>
    tpu.vector_store %arg12[%c0_54, %c0_55, %c0_56], %95 {strides = array<i32>} : memref<1x4x256xf32, #tpu.memory_space<vmem>>, vector<1x4x256xf32>,
    %cst_57 = arith.constant 0.000000e+00 : f32
    %96 = vector.broadcast %cst_57 : f32 to vector<8x68xf32>
    %c0_58 = arith.constant 0 : index
    %c0_59 = arith.constant 0 : index
    %97 = vector.load %arg17[%c0_58, %c0_59] : memref<8x392xf32, #tpu.memory_space<vmem>>, vector<8x68xf32>
    tpu.vector_store %arg17[%c0_58, %c0_59], %96 {strides = array<i32>} : memref<8x392xf32, #tpu.memory_space<vmem>>, vector<8x68xf32>,
    %cst_60 = arith.constant 0.000000e+00 : f32
    %98 = vector.broadcast %cst_60 : f32 to vector<8x68xf32>
    %c0_61 = arith.constant 0 : index
    %c324 = arith.constant 324 : index
    %99 = vector.load %arg17[%c0_61, %c324] : memref<8x392xf32, #tpu.memory_space<vmem>>, vector<8x68xf32>
    tpu.vector_store %arg17[%c0_61, %c324], %98 {strides = array<i32>} : memref<8x392xf32, #tpu.memory_space<vmem>>, vector<8x68xf32>,
    %c0_62 = arith.constant 0 : index
    %c68 = arith.constant 68 : index
    %100 = vector.load %arg17[%c0_62, %c68] : memref<8x392xf32, #tpu.memory_space<vmem>>, vector<8x256xf32>
    tpu.vector_store %arg17[%c0_62, %c68], %91 {strides = array<i32>} : memref<8x392xf32, #tpu.memory_space<vmem>>, vector<8x256xf32>,
    %c-4_i32 = arith.constant -4 : i32
    %101 = vector.broadcast %c-4_i32 : i32 to vector<1x256xi32>
    %102 = arith.addi %18, %101 : vector<1x256xi32>
    %c0_i32_63 = arith.constant 0 : i32
    %103 = vector.broadcast %c0_i32_63 : i32 to vector<1x256xi32>
    %104 = arith.cmpi sge, %102, %103 : vector<1x256xi32>
    %c-4_i32_64 = arith.constant -4 : i32
    %105 = vector.broadcast %c-4_i32_64 : i32 to vector<1x256xi32>
    %106 = arith.addi %18, %105 : vector<1x256xi32>
    %c16_i32_65 = arith.constant 16 : i32
    %107 = vector.broadcast %c16_i32_65 : i32 to vector<1x256xi32>
    %108 = arith.cmpi slt, %106, %107 : vector<1x256xi32>
    %109 = arith.andi %104, %108 : vector<1x256xi1>
    %c0_66 = arith.constant 0 : index
    %c0_67 = arith.constant 0 : index
    %110 = vector.load %arg17[%c0_66, %c0_67] : memref<8x392xf32, #tpu.memory_space<vmem>>, vector<8x256xf32>
    %cst_68 = arith.constant 0.000000e+00 : f32
    %111 = vector.shape_cast %109 : vector<1x256xi1> to vector<1x256xi1>
    %112 = vector.broadcast %111 : vector<1x256xi1> to vector<8x256xi1>
    %113 = vector.broadcast %cst_68 : f32 to vector<8x256xf32>
    %114 = arith.select %112, %110, %113 : vector<8x256xi1>, vector<8x256xf32>
    %c0_69 = arith.constant 0 : index
    %c0_70 = arith.constant 0 : index
    %115 = vector.load %arg18[%c0_69, %c0_70] : memref<648x256xf32, #tpu.memory_space<vmem>>, vector<8x256xf32>
    tpu.vector_store %arg18[%c0_69, %c0_70], %114 {strides = array<i32>} : memref<648x256xf32, #tpu.memory_space<vmem>>, vector<8x256xf32>,
    %c0_71 = arith.constant 0 : index
    %c16_72 = arith.constant 16 : index
    %116 = vector.load %arg17[%c0_71, %c16_72] : memref<8x392xf32, #tpu.memory_space<vmem>>, vector<8x256xf32>
    %cst_73 = arith.constant 0.000000e+00 : f32
    %117 = vector.shape_cast %109 : vector<1x256xi1> to vector<1x256xi1>
    %118 = vector.broadcast %117 : vector<1x256xi1> to vector<8x256xi1>
    %119 = vector.broadcast %cst_73 : f32 to vector<8x256xf32>
    %120 = arith.select %118, %116, %119 : vector<8x256xi1>, vector<8x256xf32>
    %c72 = arith.constant 72 : index
    %c0_74 = arith.constant 0 : index
    %121 = vector.load %arg18[%c72, %c0_74] : memref<648x256xf32, #tpu.memory_space<vmem>>, vector<8x256xf32>
    tpu.vector_store %arg18[%c72, %c0_74], %120 {strides = array<i32>} : memref<648x256xf32, #tpu.memory_space<vmem>>, vector<8x256xf32>,
    %c0_75 = arith.constant 0 : index
    %c32_76 = arith.constant 32 : index
    %122 = vector.load %arg17[%c0_75, %c32_76] : memref<8x392xf32, #tpu.memory_space<vmem>>, vector<8x256xf32>
    %cst_77 = arith.constant 0.000000e+00 : f32
    %123 = vector.shape_cast %109 : vector<1x256xi1> to vector<1x256xi1>
    %124 = vector.broadcast %123 : vector<1x256xi1> to vector<8x256xi1>
    %125 = vector.broadcast %cst_77 : f32 to vector<8x256xf32>
    %126 = arith.select %124, %122, %125 : vector<8x256xi1>, vector<8x256xf32>
    %c144 = arith.constant 144 : index
    %c0_78 = arith.constant 0 : index
    %127 = vector.load %arg18[%c144, %c0_78] : memref<648x256xf32, #tpu.memory_space<vmem>>, vector<8x256xf32>
    tpu.vector_store %arg18[%c144, %c0_78], %126 {strides = array<i32>} : memref<648x256xf32, #tpu.memory_space<vmem>>, vector<8x256xf32>,
    %c0_79 = arith.constant 0 : index
    %c48_80 = arith.constant 48 : index
    %128 = vector.load %arg17[%c0_79, %c48_80] : memref<8x392xf32, #tpu.memory_space<vmem>>, vector<8x256xf32>
    %cst_81 = arith.constant 0.000000e+00 : f32
    %129 = vector.shape_cast %109 : vector<1x256xi1> to vector<1x256xi1>
    %130 = vector.broadcast %129 : vector<1x256xi1> to vector<8x256xi1>
    %131 = vector.broadcast %cst_81 : f32 to vector<8x256xf32>
    %132 = arith.select %130, %128, %131 : vector<8x256xi1>, vector<8x256xf32>
    %c216 = arith.constant 216 : index
    %c0_82 = arith.constant 0 : index
    %133 = vector.load %arg18[%c216, %c0_82] : memref<648x256xf32, #tpu.memory_space<vmem>>, vector<8x256xf32>
    tpu.vector_store %arg18[%c216, %c0_82], %132 {strides = array<i32>} : memref<648x256xf32, #tpu.memory_space<vmem>>, vector<8x256xf32>,
    %c0_83 = arith.constant 0 : index
    %c64_84 = arith.constant 64 : index
    %134 = vector.load %arg17[%c0_83, %c64_84] : memref<8x392xf32, #tpu.memory_space<vmem>>, vector<8x256xf32>
    %cst_85 = arith.constant 0.000000e+00 : f32
    %135 = vector.shape_cast %109 : vector<1x256xi1> to vector<1x256xi1>
    %136 = vector.broadcast %135 : vector<1x256xi1> to vector<8x256xi1>
    %137 = vector.broadcast %cst_85 : f32 to vector<8x256xf32>
    %138 = arith.select %136, %134, %137 : vector<8x256xi1>, vector<8x256xf32>
    %c288 = arith.constant 288 : index
    %c0_86 = arith.constant 0 : index
    %139 = vector.load %arg18[%c288, %c0_86] : memref<648x256xf32, #tpu.memory_space<vmem>>, vector<8x256xf32>
    tpu.vector_store %arg18[%c288, %c0_86], %138 {strides = array<i32>} : memref<648x256xf32, #tpu.memory_space<vmem>>, vector<8x256xf32>,
    %c0_87 = arith.constant 0 : index
    %c80 = arith.constant 80 : index
    %140 = vector.load %arg17[%c0_87, %c80] : memref<8x392xf32, #tpu.memory_space<vmem>>, vector<8x256xf32>
    %cst_88 = arith.constant 0.000000e+00 : f32
    %141 = vector.shape_cast %109 : vector<1x256xi1> to vector<1x256xi1>
    %142 = vector.broadcast %141 : vector<1x256xi1> to vector<8x256xi1>
    %143 = vector.broadcast %cst_88 : f32 to vector<8x256xf32>
    %144 = arith.select %142, %140, %143 : vector<8x256xi1>, vector<8x256xf32>
    %c360 = arith.constant 360 : index
    %c0_89 = arith.constant 0 : index
    %145 = vector.load %arg18[%c360, %c0_89] : memref<648x256xf32, #tpu.memory_space<vmem>>, vector<8x256xf32>
    tpu.vector_store %arg18[%c360, %c0_89], %144 {strides = array<i32>} : memref<648x256xf32, #tpu.memory_space<vmem>>, vector<8x256xf32>,
    %c0_90 = arith.constant 0 : index
    %c96 = arith.constant 96 : index
    %146 = vector.load %arg17[%c0_90, %c96] : memref<8x392xf32, #tpu.memory_space<vmem>>, vector<8x256xf32>
    %cst_91 = arith.constant 0.000000e+00 : f32
    %147 = vector.shape_cast %109 : vector<1x256xi1> to vector<1x256xi1>
    %148 = vector.broadcast %147 : vector<1x256xi1> to vector<8x256xi1>
    %149 = vector.broadcast %cst_91 : f32 to vector<8x256xf32>
    %150 = arith.select %148, %146, %149 : vector<8x256xi1>, vector<8x256xf32>
    %c432 = arith.constant 432 : index
    %c0_92 = arith.constant 0 : index
    %151 = vector.load %arg18[%c432, %c0_92] : memref<648x256xf32, #tpu.memory_space<vmem>>, vector<8x256xf32>
    tpu.vector_store %arg18[%c432, %c0_92], %150 {strides = array<i32>} : memref<648x256xf32, #tpu.memory_space<vmem>>, vector<8x256xf32>,
    %c0_93 = arith.constant 0 : index
    %c112 = arith.constant 112 : index
    %152 = vector.load %arg17[%c0_93, %c112] : memref<8x392xf32, #tpu.memory_space<vmem>>, vector<8x256xf32>
    %cst_94 = arith.constant 0.000000e+00 : f32
    %153 = vector.shape_cast %109 : vector<1x256xi1> to vector<1x256xi1>
    %154 = vector.broadcast %153 : vector<1x256xi1> to vector<8x256xi1>
    %155 = vector.broadcast %cst_94 : f32 to vector<8x256xf32>
    %156 = arith.select %154, %152, %155 : vector<8x256xi1>, vector<8x256xf32>
    %c504 = arith.constant 504 : index
    %c0_95 = arith.constant 0 : index
    %157 = vector.load %arg18[%c504, %c0_95] : memref<648x256xf32, #tpu.memory_space<vmem>>, vector<8x256xf32>
    tpu.vector_store %arg18[%c504, %c0_95], %156 {strides = array<i32>} : memref<648x256xf32, #tpu.memory_space<vmem>>, vector<8x256xf32>,
    %c0_96 = arith.constant 0 : index
    %c128 = arith.constant 128 : index
    %158 = vector.load %arg17[%c0_96, %c128] : memref<8x392xf32, #tpu.memory_space<vmem>>, vector<8x256xf32>
    %cst_97 = arith.constant 0.000000e+00 : f32
    %159 = vector.shape_cast %109 : vector<1x256xi1> to vector<1x256xi1>
    %160 = vector.broadcast %159 : vector<1x256xi1> to vector<8x256xi1>
    %161 = vector.broadcast %cst_97 : f32 to vector<8x256xf32>
    %162 = arith.select %160, %158, %161 : vector<8x256xi1>, vector<8x256xf32>
    %c576 = arith.constant 576 : index
    %c0_98 = arith.constant 0 : index
    %163 = vector.load %arg18[%c576, %c0_98] : memref<648x256xf32, #tpu.memory_space<vmem>>, vector<8x256xf32>
    tpu.vector_store %arg18[%c576, %c0_98], %162 {strides = array<i32>} : memref<648x256xf32, #tpu.memory_space<vmem>>, vector<8x256xf32>,
    %c-3_i32 = arith.constant -3 : i32
    %164 = vector.broadcast %c-3_i32 : i32 to vector<1x256xi32>
    %165 = arith.addi %18, %164 : vector<1x256xi32>
    %c0_i32_99 = arith.constant 0 : i32
    %166 = vector.broadcast %c0_i32_99 : i32 to vector<1x256xi32>
    %167 = arith.cmpi sge, %165, %166 : vector<1x256xi32>
    %c-3_i32_100 = arith.constant -3 : i32
    %168 = vector.broadcast %c-3_i32_100 : i32 to vector<1x256xi32>
    %169 = arith.addi %18, %168 : vector<1x256xi32>
    %c16_i32_101 = arith.constant 16 : i32
    %170 = vector.broadcast %c16_i32_101 : i32 to vector<1x256xi32>
    %171 = arith.cmpi slt, %169, %170 : vector<1x256xi32>
    %172 = arith.andi %167, %171 : vector<1x256xi1>
    %c0_102 = arith.constant 0 : index
    %c1_103 = arith.constant 1 : index
    %173 = vector.load %arg17[%c0_102, %c1_103] : memref<8x392xf32, #tpu.memory_space<vmem>>, vector<8x256xf32>
    %cst_104 = arith.constant 0.000000e+00 : f32
    %174 = vector.shape_cast %172 : vector<1x256xi1> to vector<1x256xi1>
    %175 = vector.broadcast %174 : vector<1x256xi1> to vector<8x256xi1>
    %176 = vector.broadcast %cst_104 : f32 to vector<8x256xf32>
    %177 = arith.select %175, %173, %176 : vector<8x256xi1>, vector<8x256xf32>
    %c8_105 = arith.constant 8 : index
    %c0_106 = arith.constant 0 : index
    %178 = vector.load %arg18[%c8_105, %c0_106] : memref<648x256xf32, #tpu.memory_space<vmem>>, vector<8x256xf32>
    tpu.vector_store %arg18[%c8_105, %c0_106], %177 {strides = array<i32>} : memref<648x256xf32, #tpu.memory_space<vmem>>, vector<8x256xf32>,
    %c0_107 = arith.constant 0 : index
    %c17_108 = arith.constant 17 : index
    %179 = vector.load %arg17[%c0_107, %c17_108] : memref<8x392xf32, #tpu.memory_space<vmem>>, vector<8x256xf32>
    %cst_109 = arith.constant 0.000000e+00 : f32
    %180 = vector.shape_cast %172 : vector<1x256xi1> to vector<1x256xi1>
    %181 = vector.broadcast %180 : vector<1x256xi1> to vector<8x256xi1>
    %182 = vector.broadcast %cst_109 : f32 to vector<8x256xf32>
    %183 = arith.select %181, %179, %182 : vector<8x256xi1>, vector<8x256xf32>
    %c80_110 = arith.constant 80 : index
    %c0_111 = arith.constant 0 : index
    %184 = vector.load %arg18[%c80_110, %c0_111] : memref<648x256xf32, #tpu.memory_space<vmem>>, vector<8x256xf32>
    tpu.vector_store %arg18[%c80_110, %c0_111], %183 {strides = array<i32>} : memref<648x256xf32, #tpu.memory_space<vmem>>, vector<8x256xf32>,
    %c0_112 = arith.constant 0 : index
    %c33_113 = arith.constant 33 : index
    %185 = vector.load %arg17[%c0_112, %c33_113] : memref<8x392xf32, #tpu.memory_space<vmem>>, vector<8x256xf32>
    %cst_114 = arith.constant 0.000000e+00 : f32
    %186 = vector.shape_cast %172 : vector<1x256xi1> to vector<1x256xi1>
    %187 = vector.broadcast %186 : vector<1x256xi1> to vector<8x256xi1>
    %188 = vector.broadcast %cst_114 : f32 to vector<8x256xf32>
    %189 = arith.select %187, %185, %188 : vector<8x256xi1>, vector<8x256xf32>
    %c152 = arith.constant 152 : index
    %c0_115 = arith.constant 0 : index
    %190 = vector.load %arg18[%c152, %c0_115] : memref<648x256xf32, #tpu.memory_space<vmem>>, vector<8x256xf32>
    tpu.vector_store %arg18[%c152, %c0_115], %189 {strides = array<i32>} : memref<648x256xf32, #tpu.memory_space<vmem>>, vector<8x256xf32>,
    %c0_116 = arith.constant 0 : index
    %c49 = arith.constant 49 : index
    %191 = vector.load %arg17[%c0_116, %c49] : memref<8x392xf32, #tpu.memory_space<vmem>>, vector<8x256xf32>
    %cst_117 = arith.constant 0.000000e+00 : f32
    %192 = vector.shape_cast %172 : vector<1x256xi1> to vector<1x256xi1>
    %193 = vector.broadcast %192 : vector<1x256xi1> to vector<8x256xi1>
    %194 = vector.broadcast %cst_117 : f32 to vector<8x256xf32>
    %195 = arith.select %193, %191, %194 : vector<8x256xi1>, vector<8x256xf32>
    %c224 = arith.constant 224 : index
    %c0_118 = arith.constant 0 : index
    %196 = vector.load %arg18[%c224, %c0_118] : memref<648x256xf32, #tpu.memory_space<vmem>>, vector<8x256xf32>
    tpu.vector_store %arg18[%c224, %c0_118], %195 {strides = array<i32>} : memref<648x256xf32, #tpu.memory_space<vmem>>, vector<8x256xf32>,
    %c0_119 = arith.constant 0 : index
    %c65 = arith.constant 65 : index
    %197 = vector.load %arg17[%c0_119, %c65] : memref<8x392xf32, #tpu.memory_space<vmem>>, vector<8x256xf32>
    %cst_120 = arith.constant 0.000000e+00 : f32
    %198 = vector.shape_cast %172 : vector<1x256xi1> to vector<1x256xi1>
    %199 = vector.broadcast %198 : vector<1x256xi1> to vector<8x256xi1>
    %200 = vector.broadcast %cst_120 : f32 to vector<8x256xf32>
    %201 = arith.select %199, %197, %200 : vector<8x256xi1>, vector<8x256xf32>
    %c296 = arith.constant 296 : index
    %c0_121 = arith.constant 0 : index
    %202 = vector.load %arg18[%c296, %c0_121] : memref<648x256xf32, #tpu.memory_space<vmem>>, vector<8x256xf32>
    tpu.vector_store %arg18[%c296, %c0_121], %201 {strides = array<i32>} : memref<648x256xf32, #tpu.memory_space<vmem>>, vector<8x256xf32>,
    %c0_122 = arith.constant 0 : index
    %c81 = arith.constant 81 : index
    %203 = vector.load %arg17[%c0_122, %c81] : memref<8x392xf32, #tpu.memory_space<vmem>>, vector<8x256xf32>
    %cst_123 = arith.constant 0.000000e+00 : f32
    %204 = vector.shape_cast %172 : vector<1x256xi1> to vector<1x256xi1>
    %205 = vector.broadcast %204 : vector<1x256xi1> to vector<8x256xi1>
    %206 = vector.broadcast %cst_123 : f32 to vector<8x256xf32>
    %207 = arith.select %205, %203, %206 : vector<8x256xi1>, vector<8x256xf32>
    %c368 = arith.constant 368 : index
    %c0_124 = arith.constant 0 : index
    %208 = vector.load %arg18[%c368, %c0_124] : memref<648x256xf32, #tpu.memory_space<vmem>>, vector<8x256xf32>
    tpu.vector_store %arg18[%c368, %c0_124], %207 {strides = array<i32>} : memref<648x256xf32, #tpu.memory_space<vmem>>, vector<8x256xf32>,
    %c0_125 = arith.constant 0 : index
    %c97 = arith.constant 97 : index
    %209 = vector.load %arg17[%c0_125, %c97] : memref<8x392xf32, #tpu.memory_space<vmem>>, vector<8x256xf32>
    %cst_126 = arith.constant 0.000000e+00 : f32
    %210 = vector.shape_cast %172 : vector<1x256xi1> to vector<1x256xi1>
    %211 = vector.broadcast %210 : vector<1x256xi1> to vector<8x256xi1>
    %212 = vector.broadcast %cst_126 : f32 to vector<8x256xf32>
    %213 = arith.select %211, %209, %212 : vector<8x256xi1>, vector<8x256xf32>
    %c440 = arith.constant 440 : index
    %c0_127 = arith.constant 0 : index
    %214 = vector.load %arg18[%c440, %c0_127] : memref<648x256xf32, #tpu.memory_space<vmem>>, vector<8x256xf32>
    tpu.vector_store %arg18[%c440, %c0_127], %213 {strides = array<i32>} : memref<648x256xf32, #tpu.memory_space<vmem>>, vector<8x256xf32>,
    %c0_128 = arith.constant 0 : index
    %c113 = arith.constant 113 : index
    %215 = vector.load %arg17[%c0_128, %c113] : memref<8x392xf32, #tpu.memory_space<vmem>>, vector<8x256xf32>
    %cst_129 = arith.constant 0.000000e+00 : f32
    %216 = vector.shape_cast %172 : vector<1x256xi1> to vector<1x256xi1>
    %217 = vector.broadcast %216 : vector<1x256xi1> to vector<8x256xi1>
    %218 = vector.broadcast %cst_129 : f32 to vector<8x256xf32>
    %219 = arith.select %217, %215, %218 : vector<8x256xi1>, vector<8x256xf32>
    %c512 = arith.constant 512 : index
    %c0_130 = arith.constant 0 : index
    %220 = vector.load %arg18[%c512, %c0_130] : memref<648x256xf32, #tpu.memory_space<vmem>>, vector<8x256xf32>
    tpu.vector_store %arg18[%c512, %c0_130], %219 {strides = array<i32>} : memref<648x256xf32, #tpu.memory_space<vmem>>, vector<8x256xf32>,
    %c0_131 = arith.constant 0 : index
    %c129 = arith.constant 129 : index
    %221 = vector.load %arg17[%c0_131, %c129] : memref<8x392xf32, #tpu.memory_space<vmem>>, vector<8x256xf32>
    %cst_132 = arith.constant 0.000000e+00 : f32
    %222 = vector.shape_cast %172 : vector<1x256xi1> to vector<1x256xi1>
    %223 = vector.broadcast %222 : vector<1x256xi1> to vector<8x256xi1>
    %224 = vector.broadcast %cst_132 : f32 to vector<8x256xf32>
    %225 = arith.select %223, %221, %224 : vector<8x256xi1>, vector<8x256xf32>
    %c584 = arith.constant 584 : index
    %c0_133 = arith.constant 0 : index
    %226 = vector.load %arg18[%c584, %c0_133] : memref<648x256xf32, #tpu.memory_space<vmem>>, vector<8x256xf32>
    tpu.vector_store %arg18[%c584, %c0_133], %225 {strides = array<i32>} : memref<648x256xf32, #tpu.memory_space<vmem>>, vector<8x256xf32>,
    %c-2_i32 = arith.constant -2 : i32
    %227 = vector.broadcast %c-2_i32 : i32 to vector<1x256xi32>
    %228 = arith.addi %18, %227 : vector<1x256xi32>
    %c0_i32_134 = arith.constant 0 : i32
    %229 = vector.broadcast %c0_i32_134 : i32 to vector<1x256xi32>
    %230 = arith.cmpi sge, %228, %229 : vector<1x256xi32>
    %c-2_i32_135 = arith.constant -2 : i32
    %231 = vector.broadcast %c-2_i32_135 : i32 to vector<1x256xi32>
    %232 = arith.addi %18, %231 : vector<1x256xi32>
    %c16_i32_136 = arith.constant 16 : i32
    %233 = vector.broadcast %c16_i32_136 : i32 to vector<1x256xi32>
    %234 = arith.cmpi slt, %232, %233 : vector<1x256xi32>
    %235 = arith.andi %230, %234 : vector<1x256xi1>
    %c0_137 = arith.constant 0 : index
    %c2_138 = arith.constant 2 : index
    %236 = vector.load %arg17[%c0_137, %c2_138] : memref<8x392xf32, #tpu.memory_space<vmem>>, vector<8x256xf32>
    %cst_139 = arith.constant 0.000000e+00 : f32
    %237 = vector.shape_cast %235 : vector<1x256xi1> to vector<1x256xi1>
    %238 = vector.broadcast %237 : vector<1x256xi1> to vector<8x256xi1>
    %239 = vector.broadcast %cst_139 : f32 to vector<8x256xf32>
    %240 = arith.select %238, %236, %239 : vector<8x256xi1>, vector<8x256xf32>
    %c16_140 = arith.constant 16 : index
    %c0_141 = arith.constant 0 : index
    %241 = vector.load %arg18[%c16_140, %c0_141] : memref<648x256xf32, #tpu.memory_space<vmem>>, vector<8x256xf32>
    tpu.vector_store %arg18[%c16_140, %c0_141], %240 {strides = array<i32>} : memref<648x256xf32, #tpu.memory_space<vmem>>, vector<8x256xf32>,
    %c0_142 = arith.constant 0 : index
    %c18_143 = arith.constant 18 : index
    %242 = vector.load %arg17[%c0_142, %c18_143] : memref<8x392xf32, #tpu.memory_space<vmem>>, vector<8x256xf32>
    %cst_144 = arith.constant 0.000000e+00 : f32
    %243 = vector.shape_cast %235 : vector<1x256xi1> to vector<1x256xi1>
    %244 = vector.broadcast %243 : vector<1x256xi1> to vector<8x256xi1>
    %245 = vector.broadcast %cst_144 : f32 to vector<8x256xf32>
    %246 = arith.select %244, %242, %245 : vector<8x256xi1>, vector<8x256xf32>
    %c88 = arith.constant 88 : index
    %c0_145 = arith.constant 0 : index
    %247 = vector.load %arg18[%c88, %c0_145] : memref<648x256xf32, #tpu.memory_space<vmem>>, vector<8x256xf32>
    tpu.vector_store %arg18[%c88, %c0_145], %246 {strides = array<i32>} : memref<648x256xf32, #tpu.memory_space<vmem>>, vector<8x256xf32>,
    %c0_146 = arith.constant 0 : index
    %c34_147 = arith.constant 34 : index
    %248 = vector.load %arg17[%c0_146, %c34_147] : memref<8x392xf32, #tpu.memory_space<vmem>>, vector<8x256xf32>
    %cst_148 = arith.constant 0.000000e+00 : f32
    %249 = vector.shape_cast %235 : vector<1x256xi1> to vector<1x256xi1>
    %250 = vector.broadcast %249 : vector<1x256xi1> to vector<8x256xi1>
    %251 = vector.broadcast %cst_148 : f32 to vector<8x256xf32>
    %252 = arith.select %250, %248, %251 : vector<8x256xi1>, vector<8x256xf32>
    %c160 = arith.constant 160 : index
    %c0_149 = arith.constant 0 : index
    %253 = vector.load %arg18[%c160, %c0_149] : memref<648x256xf32, #tpu.memory_space<vmem>>, vector<8x256xf32>
    tpu.vector_store %arg18[%c160, %c0_149], %252 {strides = array<i32>} : memref<648x256xf32, #tpu.memory_space<vmem>>, vector<8x256xf32>,
    %c0_150 = arith.constant 0 : index
    %c50 = arith.constant 50 : index
    %254 = vector.load %arg17[%c0_150, %c50] : memref<8x392xf32, #tpu.memory_space<vmem>>, vector<8x256xf32>
    %cst_151 = arith.constant 0.000000e+00 : f32
    %255 = vector.shape_cast %235 : vector<1x256xi1> to vector<1x256xi1>
    %256 = vector.broadcast %255 : vector<1x256xi1> to vector<8x256xi1>
    %257 = vector.broadcast %cst_151 : f32 to vector<8x256xf32>
    %258 = arith.select %256, %254, %257 : vector<8x256xi1>, vector<8x256xf32>
    %c232 = arith.constant 232 : index
    %c0_152 = arith.constant 0 : index
    %259 = vector.load %arg18[%c232, %c0_152] : memref<648x256xf32, #tpu.memory_space<vmem>>, vector<8x256xf32>
    tpu.vector_store %arg18[%c232, %c0_152], %258 {strides = array<i32>} : memref<648x256xf32, #tpu.memory_space<vmem>>, vector<8x256xf32>,
    %c0_153 = arith.constant 0 : index
    %c66 = arith.constant 66 : index
    %260 = vector.load %arg17[%c0_153, %c66] : memref<8x392xf32, #tpu.memory_space<vmem>>, vector<8x256xf32>
    %cst_154 = arith.constant 0.000000e+00 : f32
    %261 = vector.shape_cast %235 : vector<1x256xi1> to vector<1x256xi1>
    %262 = vector.broadcast %261 : vector<1x256xi1> to vector<8x256xi1>
    %263 = vector.broadcast %cst_154 : f32 to vector<8x256xf32>
    %264 = arith.select %262, %260, %263 : vector<8x256xi1>, vector<8x256xf32>
    %c304 = arith.constant 304 : index
    %c0_155 = arith.constant 0 : index
    %265 = vector.load %arg18[%c304, %c0_155] : memref<648x256xf32, #tpu.memory_space<vmem>>, vector<8x256xf32>
    tpu.vector_store %arg18[%c304, %c0_155], %264 {strides = array<i32>} : memref<648x256xf32, #tpu.memory_space<vmem>>, vector<8x256xf32>,
    %c0_156 = arith.constant 0 : index
    %c82 = arith.constant 82 : index
    %266 = vector.load %arg17[%c0_156, %c82] : memref<8x392xf32, #tpu.memory_space<vmem>>, vector<8x256xf32>
    %cst_157 = arith.constant 0.000000e+00 : f32
    %267 = vector.shape_cast %235 : vector<1x256xi1> to vector<1x256xi1>
    %268 = vector.broadcast %267 : vector<1x256xi1> to vector<8x256xi1>
    %269 = vector.broadcast %cst_157 : f32 to vector<8x256xf32>
    %270 = arith.select %268, %266, %269 : vector<8x256xi1>, vector<8x256xf32>
    %c376 = arith.constant 376 : index
    %c0_158 = arith.constant 0 : index
    %271 = vector.load %arg18[%c376, %c0_158] : memref<648x256xf32, #tpu.memory_space<vmem>>, vector<8x256xf32>
    tpu.vector_store %arg18[%c376, %c0_158], %270 {strides = array<i32>} : memref<648x256xf32, #tpu.memory_space<vmem>>, vector<8x256xf32>,
    %c0_159 = arith.constant 0 : index
    %c98 = arith.constant 98 : index
    %272 = vector.load %arg17[%c0_159, %c98] : memref<8x392xf32, #tpu.memory_space<vmem>>, vector<8x256xf32>
    %cst_160 = arith.constant 0.000000e+00 : f32
    %273 = vector.shape_cast %235 : vector<1x256xi1> to vector<1x256xi1>
    %274 = vector.broadcast %273 : vector<1x256xi1> to vector<8x256xi1>
    %275 = vector.broadcast %cst_160 : f32 to vector<8x256xf32>
    %276 = arith.select %274, %272, %275 : vector<8x256xi1>, vector<8x256xf32>
    %c448 = arith.constant 448 : index
    %c0_161 = arith.constant 0 : index
    %277 = vector.load %arg18[%c448, %c0_161] : memref<648x256xf32, #tpu.memory_space<vmem>>, vector<8x256xf32>
    tpu.vector_store %arg18[%c448, %c0_161], %276 {strides = array<i32>} : memref<648x256xf32, #tpu.memory_space<vmem>>, vector<8x256xf32>,
    %c0_162 = arith.constant 0 : index
    %c114 = arith.constant 114 : index
    %278 = vector.load %arg17[%c0_162, %c114] : memref<8x392xf32, #tpu.memory_space<vmem>>, vector<8x256xf32>
    %cst_163 = arith.constant 0.000000e+00 : f32
    %279 = vector.shape_cast %235 : vector<1x256xi1> to vector<1x256xi1>
    %280 = vector.broadcast %279 : vector<1x256xi1> to vector<8x256xi1>
    %281 = vector.broadcast %cst_163 : f32 to vector<8x256xf32>
    %282 = arith.select %280, %278, %281 : vector<8x256xi1>, vector<8x256xf32>
    %c520 = arith.constant 520 : index
    %c0_164 = arith.constant 0 : index
    %283 = vector.load %arg18[%c520, %c0_164] : memref<648x256xf32, #tpu.memory_space<vmem>>, vector<8x256xf32>
    tpu.vector_store %arg18[%c520, %c0_164], %282 {strides = array<i32>} : memref<648x256xf32, #tpu.memory_space<vmem>>, vector<8x256xf32>,
    %c0_165 = arith.constant 0 : index
    %c130 = arith.constant 130 : index
    %284 = vector.load %arg17[%c0_165, %c130] : memref<8x392xf32, #tpu.memory_space<vmem>>, vector<8x256xf32>
    %cst_166 = arith.constant 0.000000e+00 : f32
    %285 = vector.shape_cast %235 : vector<1x256xi1> to vector<1x256xi1>
    %286 = vector.broadcast %285 : vector<1x256xi1> to vector<8x256xi1>
    %287 = vector.broadcast %cst_166 : f32 to vector<8x256xf32>
    %288 = arith.select %286, %284, %287 : vector<8x256xi1>, vector<8x256xf32>
    %c592 = arith.constant 592 : index
    %c0_167 = arith.constant 0 : index
    %289 = vector.load %arg18[%c592, %c0_167] : memref<648x256xf32, #tpu.memory_space<vmem>>, vector<8x256xf32>
    tpu.vector_store %arg18[%c592, %c0_167], %288 {strides = array<i32>} : memref<648x256xf32, #tpu.memory_space<vmem>>, vector<8x256xf32>,
    %c-1_i32_168 = arith.constant -1 : i32
    %290 = vector.broadcast %c-1_i32_168 : i32 to vector<1x256xi32>
    %291 = arith.addi %18, %290 : vector<1x256xi32>
    %c0_i32_169 = arith.constant 0 : i32
    %292 = vector.broadcast %c0_i32_169 : i32 to vector<1x256xi32>
    %293 = arith.cmpi sge, %291, %292 : vector<1x256xi32>
    %c-1_i32_170 = arith.constant -1 : i32
    %294 = vector.broadcast %c-1_i32_170 : i32 to vector<1x256xi32>
    %295 = arith.addi %18, %294 : vector<1x256xi32>
    %c16_i32_171 = arith.constant 16 : i32
    %296 = vector.broadcast %c16_i32_171 : i32 to vector<1x256xi32>
    %297 = arith.cmpi slt, %295, %296 : vector<1x256xi32>
    %298 = arith.andi %293, %297 : vector<1x256xi1>
    %c0_172 = arith.constant 0 : index
    %c3 = arith.constant 3 : index
    %299 = vector.load %arg17[%c0_172, %c3] : memref<8x392xf32, #tpu.memory_space<vmem>>, vector<8x256xf32>
    %cst_173 = arith.constant 0.000000e+00 : f32
    %300 = vector.shape_cast %298 : vector<1x256xi1> to vector<1x256xi1>
    %301 = vector.broadcast %300 : vector<1x256xi1> to vector<8x256xi1>
    %302 = vector.broadcast %cst_173 : f32 to vector<8x256xf32>
    %303 = arith.select %301, %299, %302 : vector<8x256xi1>, vector<8x256xf32>
    %c24_174 = arith.constant 24 : index
    %c0_175 = arith.constant 0 : index
    %304 = vector.load %arg18[%c24_174, %c0_175] : memref<648x256xf32, #tpu.memory_space<vmem>>, vector<8x256xf32>
    tpu.vector_store %arg18[%c24_174, %c0_175], %303 {strides = array<i32>} : memref<648x256xf32, #tpu.memory_space<vmem>>, vector<8x256xf32>,
    %c0_176 = arith.constant 0 : index
    %c19 = arith.constant 19 : index
    %305 = vector.load %arg17[%c0_176, %c19] : memref<8x392xf32, #tpu.memory_space<vmem>>, vector<8x256xf32>
    %cst_177 = arith.constant 0.000000e+00 : f32
    %306 = vector.shape_cast %298 : vector<1x256xi1> to vector<1x256xi1>
    %307 = vector.broadcast %306 : vector<1x256xi1> to vector<8x256xi1>
    %308 = vector.broadcast %cst_177 : f32 to vector<8x256xf32>
    %309 = arith.select %307, %305, %308 : vector<8x256xi1>, vector<8x256xf32>
    %c96_178 = arith.constant 96 : index
    %c0_179 = arith.constant 0 : index
    %310 = vector.load %arg18[%c96_178, %c0_179] : memref<648x256xf32, #tpu.memory_space<vmem>>, vector<8x256xf32>
    tpu.vector_store %arg18[%c96_178, %c0_179], %309 {strides = array<i32>} : memref<648x256xf32, #tpu.memory_space<vmem>>, vector<8x256xf32>,
    %c0_180 = arith.constant 0 : index
    %c35 = arith.constant 35 : index
    %311 = vector.load %arg17[%c0_180, %c35] : memref<8x392xf32, #tpu.memory_space<vmem>>, vector<8x256xf32>
    %cst_181 = arith.constant 0.000000e+00 : f32
    %312 = vector.shape_cast %298 : vector<1x256xi1> to vector<1x256xi1>
    %313 = vector.broadcast %312 : vector<1x256xi1> to vector<8x256xi1>
    %314 = vector.broadcast %cst_181 : f32 to vector<8x256xf32>
    %315 = arith.select %313, %311, %314 : vector<8x256xi1>, vector<8x256xf32>
    %c168 = arith.constant 168 : index
    %c0_182 = arith.constant 0 : index
    %316 = vector.load %arg18[%c168, %c0_182] : memref<648x256xf32, #tpu.memory_space<vmem>>, vector<8x256xf32>
    tpu.vector_store %arg18[%c168, %c0_182], %315 {strides = array<i32>} : memref<648x256xf32, #tpu.memory_space<vmem>>, vector<8x256xf32>,
    %c0_183 = arith.constant 0 : index
    %c51 = arith.constant 51 : index
    %317 = vector.load %arg17[%c0_183, %c51] : memref<8x392xf32, #tpu.memory_space<vmem>>, vector<8x256xf32>
    %cst_184 = arith.constant 0.000000e+00 : f32
    %318 = vector.shape_cast %298 : vector<1x256xi1> to vector<1x256xi1>
    %319 = vector.broadcast %318 : vector<1x256xi1> to vector<8x256xi1>
    %320 = vector.broadcast %cst_184 : f32 to vector<8x256xf32>
    %321 = arith.select %319, %317, %320 : vector<8x256xi1>, vector<8x256xf32>
    %c240 = arith.constant 240 : index
    %c0_185 = arith.constant 0 : index
    %322 = vector.load %arg18[%c240, %c0_185] : memref<648x256xf32, #tpu.memory_space<vmem>>, vector<8x256xf32>
    tpu.vector_store %arg18[%c240, %c0_185], %321 {strides = array<i32>} : memref<648x256xf32, #tpu.memory_space<vmem>>, vector<8x256xf32>,
    %c0_186 = arith.constant 0 : index
    %c67 = arith.constant 67 : index
    %323 = vector.load %arg17[%c0_186, %c67] : memref<8x392xf32, #tpu.memory_space<vmem>>, vector<8x256xf32>
    %cst_187 = arith.constant 0.000000e+00 : f32
    %324 = vector.shape_cast %298 : vector<1x256xi1> to vector<1x256xi1>
    %325 = vector.broadcast %324 : vector<1x256xi1> to vector<8x256xi1>
    %326 = vector.broadcast %cst_187 : f32 to vector<8x256xf32>
    %327 = arith.select %325, %323, %326 : vector<8x256xi1>, vector<8x256xf32>
    %c312 = arith.constant 312 : index
    %c0_188 = arith.constant 0 : index
    %328 = vector.load %arg18[%c312, %c0_188] : memref<648x256xf32, #tpu.memory_space<vmem>>, vector<8x256xf32>
    tpu.vector_store %arg18[%c312, %c0_188], %327 {strides = array<i32>} : memref<648x256xf32, #tpu.memory_space<vmem>>, vector<8x256xf32>,
    %c0_189 = arith.constant 0 : index
    %c83 = arith.constant 83 : index
    %329 = vector.load %arg17[%c0_189, %c83] : memref<8x392xf32, #tpu.memory_space<vmem>>, vector<8x256xf32>
    %cst_190 = arith.constant 0.000000e+00 : f32
    %330 = vector.shape_cast %298 : vector<1x256xi1> to vector<1x256xi1>
    %331 = vector.broadcast %330 : vector<1x256xi1> to vector<8x256xi1>
    %332 = vector.broadcast %cst_190 : f32 to vector<8x256xf32>
    %333 = arith.select %331, %329, %332 : vector<8x256xi1>, vector<8x256xf32>
    %c384 = arith.constant 384 : index
    %c0_191 = arith.constant 0 : index
    %334 = vector.load %arg18[%c384, %c0_191] : memref<648x256xf32, #tpu.memory_space<vmem>>, vector<8x256xf32>
    tpu.vector_store %arg18[%c384, %c0_191], %333 {strides = array<i32>} : memref<648x256xf32, #tpu.memory_space<vmem>>, vector<8x256xf32>,
    %c0_192 = arith.constant 0 : index
    %c99 = arith.constant 99 : index
    %335 = vector.load %arg17[%c0_192, %c99] : memref<8x392xf32, #tpu.memory_space<vmem>>, vector<8x256xf32>
    %cst_193 = arith.constant 0.000000e+00 : f32
    %336 = vector.shape_cast %298 : vector<1x256xi1> to vector<1x256xi1>
    %337 = vector.broadcast %336 : vector<1x256xi1> to vector<8x256xi1>
    %338 = vector.broadcast %cst_193 : f32 to vector<8x256xf32>
    %339 = arith.select %337, %335, %338 : vector<8x256xi1>, vector<8x256xf32>
    %c456 = arith.constant 456 : index
    %c0_194 = arith.constant 0 : index
    %340 = vector.load %arg18[%c456, %c0_194] : memref<648x256xf32, #tpu.memory_space<vmem>>, vector<8x256xf32>
    tpu.vector_store %arg18[%c456, %c0_194], %339 {strides = array<i32>} : memref<648x256xf32, #tpu.memory_space<vmem>>, vector<8x256xf32>,
    %c0_195 = arith.constant 0 : index
    %c115 = arith.constant 115 : index
    %341 = vector.load %arg17[%c0_195, %c115] : memref<8x392xf32, #tpu.memory_space<vmem>>, vector<8x256xf32>
    %cst_196 = arith.constant 0.000000e+00 : f32
    %342 = vector.shape_cast %298 : vector<1x256xi1> to vector<1x256xi1>
    %343 = vector.broadcast %342 : vector<1x256xi1> to vector<8x256xi1>
    %344 = vector.broadcast %cst_196 : f32 to vector<8x256xf32>
    %345 = arith.select %343, %341, %344 : vector<8x256xi1>, vector<8x256xf32>
    %c528 = arith.constant 528 : index
    %c0_197 = arith.constant 0 : index
    %346 = vector.load %arg18[%c528, %c0_197] : memref<648x256xf32, #tpu.memory_space<vmem>>, vector<8x256xf32>
    tpu.vector_store %arg18[%c528, %c0_197], %345 {strides = array<i32>} : memref<648x256xf32, #tpu.memory_space<vmem>>, vector<8x256xf32>,
    %c0_198 = arith.constant 0 : index
    %c131 = arith.constant 131 : index
    %347 = vector.load %arg17[%c0_198, %c131] : memref<8x392xf32, #tpu.memory_space<vmem>>, vector<8x256xf32>
    %cst_199 = arith.constant 0.000000e+00 : f32
    %348 = vector.shape_cast %298 : vector<1x256xi1> to vector<1x256xi1>
    %349 = vector.broadcast %348 : vector<1x256xi1> to vector<8x256xi1>
    %350 = vector.broadcast %cst_199 : f32 to vector<8x256xf32>
    %351 = arith.select %349, %347, %350 : vector<8x256xi1>, vector<8x256xf32>
    %c600 = arith.constant 600 : index
    %c0_200 = arith.constant 0 : index
    %352 = vector.load %arg18[%c600, %c0_200] : memref<648x256xf32, #tpu.memory_space<vmem>>, vector<8x256xf32>
    tpu.vector_store %arg18[%c600, %c0_200], %351 {strides = array<i32>} : memref<648x256xf32, #tpu.memory_space<vmem>>, vector<8x256xf32>,
    %c0_201 = arith.constant 0 : index
    %c4 = arith.constant 4 : index
    %353 = vector.load %arg17[%c0_201, %c4] : memref<8x392xf32, #tpu.memory_space<vmem>>, vector<8x256xf32>
    %c32_202 = arith.constant 32 : index
    %c0_203 = arith.constant 0 : index
    %354 = vector.load %arg18[%c32_202, %c0_203] : memref<648x256xf32, #tpu.memory_space<vmem>>, vector<8x256xf32>
    tpu.vector_store %arg18[%c32_202, %c0_203], %353 {strides = array<i32>} : memref<648x256xf32, #tpu.memory_space<vmem>>, vector<8x256xf32>,
    %c0_204 = arith.constant 0 : index
    %c20 = arith.constant 20 : index
    %355 = vector.load %arg17[%c0_204, %c20] : memref<8x392xf32, #tpu.memory_space<vmem>>, vector<8x256xf32>
    %c104 = arith.constant 104 : index
    %c0_205 = arith.constant 0 : index
    %356 = vector.load %arg18[%c104, %c0_205] : memref<648x256xf32, #tpu.memory_space<vmem>>, vector<8x256xf32>
    tpu.vector_store %arg18[%c104, %c0_205], %355 {strides = array<i32>} : memref<648x256xf32, #tpu.memory_space<vmem>>, vector<8x256xf32>,
    %c0_206 = arith.constant 0 : index
    %c36 = arith.constant 36 : index
    %357 = vector.load %arg17[%c0_206, %c36] : memref<8x392xf32, #tpu.memory_space<vmem>>, vector<8x256xf32>
    %c176 = arith.constant 176 : index
    %c0_207 = arith.constant 0 : index
    %358 = vector.load %arg18[%c176, %c0_207] : memref<648x256xf32, #tpu.memory_space<vmem>>, vector<8x256xf32>
    tpu.vector_store %arg18[%c176, %c0_207], %357 {strides = array<i32>} : memref<648x256xf32, #tpu.memory_space<vmem>>, vector<8x256xf32>,
    %c0_208 = arith.constant 0 : index
    %c52 = arith.constant 52 : index
    %359 = vector.load %arg17[%c0_208, %c52] : memref<8x392xf32, #tpu.memory_space<vmem>>, vector<8x256xf32>
    %c248 = arith.constant 248 : index
    %c0_209 = arith.constant 0 : index
    %360 = vector.load %arg18[%c248, %c0_209] : memref<648x256xf32, #tpu.memory_space<vmem>>, vector<8x256xf32>
    tpu.vector_store %arg18[%c248, %c0_209], %359 {strides = array<i32>} : memref<648x256xf32, #tpu.memory_space<vmem>>, vector<8x256xf32>,
    %c0_210 = arith.constant 0 : index
    %c68_211 = arith.constant 68 : index
    %361 = vector.load %arg17[%c0_210, %c68_211] : memref<8x392xf32, #tpu.memory_space<vmem>>, vector<8x256xf32>
    %c320 = arith.constant 320 : index
    %c0_212 = arith.constant 0 : index
    %362 = vector.load %arg18[%c320, %c0_212] : memref<648x256xf32, #tpu.memory_space<vmem>>, vector<8x256xf32>
    tpu.vector_store %arg18[%c320, %c0_212], %361 {strides = array<i32>} : memref<648x256xf32, #tpu.memory_space<vmem>>, vector<8x256xf32>,
    %c0_213 = arith.constant 0 : index
    %c84 = arith.constant 84 : index
    %363 = vector.load %arg17[%c0_213, %c84] : memref<8x392xf32, #tpu.memory_space<vmem>>, vector<8x256xf32>
    %c392 = arith.constant 392 : index
    %c0_214 = arith.constant 0 : index
    %364 = vector.load %arg18[%c392, %c0_214] : memref<648x256xf32, #tpu.memory_space<vmem>>, vector<8x256xf32>
    tpu.vector_store %arg18[%c392, %c0_214], %363 {strides = array<i32>} : memref<648x256xf32, #tpu.memory_space<vmem>>, vector<8x256xf32>,
    %c0_215 = arith.constant 0 : index
    %c100 = arith.constant 100 : index
    %365 = vector.load %arg17[%c0_215, %c100] : memref<8x392xf32, #tpu.memory_space<vmem>>, vector<8x256xf32>
    %c464 = arith.constant 464 : index
    %c0_216 = arith.constant 0 : index
    %366 = vector.load %arg18[%c464, %c0_216] : memref<648x256xf32, #tpu.memory_space<vmem>>, vector<8x256xf32>
    tpu.vector_store %arg18[%c464, %c0_216], %365 {strides = array<i32>} : memref<648x256xf32, #tpu.memory_space<vmem>>, vector<8x256xf32>,
    %c0_217 = arith.constant 0 : index
    %c116 = arith.constant 116 : index
    %367 = vector.load %arg17[%c0_217, %c116] : memref<8x392xf32, #tpu.memory_space<vmem>>, vector<8x256xf32>
    %c536 = arith.constant 536 : index
    %c0_218 = arith.constant 0 : index
    %368 = vector.load %arg18[%c536, %c0_218] : memref<648x256xf32, #tpu.memory_space<vmem>>, vector<8x256xf32>
    tpu.vector_store %arg18[%c536, %c0_218], %367 {strides = array<i32>} : memref<648x256xf32, #tpu.memory_space<vmem>>, vector<8x256xf32>,
    %c0_219 = arith.constant 0 : index
    %c132 = arith.constant 132 : index
    %369 = vector.load %arg17[%c0_219, %c132] : memref<8x392xf32, #tpu.memory_space<vmem>>, vector<8x256xf32>
    %c608 = arith.constant 608 : index
    %c0_220 = arith.constant 0 : index
    %370 = vector.load %arg18[%c608, %c0_220] : memref<648x256xf32, #tpu.memory_space<vmem>>, vector<8x256xf32>
    tpu.vector_store %arg18[%c608, %c0_220], %369 {strides = array<i32>} : memref<648x256xf32, #tpu.memory_space<vmem>>, vector<8x256xf32>,
    %c1_i32_221 = arith.constant 1 : i32
    %371 = vector.broadcast %c1_i32_221 : i32 to vector<1x256xi32>
    %372 = arith.addi %18, %371 : vector<1x256xi32>
    %c0_i32_222 = arith.constant 0 : i32
    %373 = vector.broadcast %c0_i32_222 : i32 to vector<1x256xi32>
    %374 = arith.cmpi sge, %372, %373 : vector<1x256xi32>
    %c1_i32_223 = arith.constant 1 : i32
    %375 = vector.broadcast %c1_i32_223 : i32 to vector<1x256xi32>
    %376 = arith.addi %18, %375 : vector<1x256xi32>
    %c16_i32_224 = arith.constant 16 : i32
    %377 = vector.broadcast %c16_i32_224 : i32 to vector<1x256xi32>
    %378 = arith.cmpi slt, %376, %377 : vector<1x256xi32>
    %379 = arith.andi %374, %378 : vector<1x256xi1>
    %c0_225 = arith.constant 0 : index
    %c5 = arith.constant 5 : index
    %380 = vector.load %arg17[%c0_225, %c5] : memref<8x392xf32, #tpu.memory_space<vmem>>, vector<8x256xf32>
    %cst_226 = arith.constant 0.000000e+00 : f32
    %381 = vector.shape_cast %379 : vector<1x256xi1> to vector<1x256xi1>
    %382 = vector.broadcast %381 : vector<1x256xi1> to vector<8x256xi1>
    %383 = vector.broadcast %cst_226 : f32 to vector<8x256xf32>
    %384 = arith.select %382, %380, %383 : vector<8x256xi1>, vector<8x256xf32>
    %c40_227 = arith.constant 40 : index
    %c0_228 = arith.constant 0 : index
    %385 = vector.load %arg18[%c40_227, %c0_228] : memref<648x256xf32, #tpu.memory_space<vmem>>, vector<8x256xf32>
    tpu.vector_store %arg18[%c40_227, %c0_228], %384 {strides = array<i32>} : memref<648x256xf32, #tpu.memory_space<vmem>>, vector<8x256xf32>,
    %c0_229 = arith.constant 0 : index
    %c21 = arith.constant 21 : index
    %386 = vector.load %arg17[%c0_229, %c21] : memref<8x392xf32, #tpu.memory_space<vmem>>, vector<8x256xf32>
    %cst_230 = arith.constant 0.000000e+00 : f32
    %387 = vector.shape_cast %379 : vector<1x256xi1> to vector<1x256xi1>
    %388 = vector.broadcast %387 : vector<1x256xi1> to vector<8x256xi1>
    %389 = vector.broadcast %cst_230 : f32 to vector<8x256xf32>
    %390 = arith.select %388, %386, %389 : vector<8x256xi1>, vector<8x256xf32>
    %c112_231 = arith.constant 112 : index
    %c0_232 = arith.constant 0 : index
    %391 = vector.load %arg18[%c112_231, %c0_232] : memref<648x256xf32, #tpu.memory_space<vmem>>, vector<8x256xf32>
    tpu.vector_store %arg18[%c112_231, %c0_232], %390 {strides = array<i32>} : memref<648x256xf32, #tpu.memory_space<vmem>>, vector<8x256xf32>,
    %c0_233 = arith.constant 0 : index
    %c37 = arith.constant 37 : index
    %392 = vector.load %arg17[%c0_233, %c37] : memref<8x392xf32, #tpu.memory_space<vmem>>, vector<8x256xf32>
    %cst_234 = arith.constant 0.000000e+00 : f32
    %393 = vector.shape_cast %379 : vector<1x256xi1> to vector<1x256xi1>
    %394 = vector.broadcast %393 : vector<1x256xi1> to vector<8x256xi1>
    %395 = vector.broadcast %cst_234 : f32 to vector<8x256xf32>
    %396 = arith.select %394, %392, %395 : vector<8x256xi1>, vector<8x256xf32>
    %c184 = arith.constant 184 : index
    %c0_235 = arith.constant 0 : index
    %397 = vector.load %arg18[%c184, %c0_235] : memref<648x256xf32, #tpu.memory_space<vmem>>, vector<8x256xf32>
    tpu.vector_store %arg18[%c184, %c0_235], %396 {strides = array<i32>} : memref<648x256xf32, #tpu.memory_space<vmem>>, vector<8x256xf32>,
    %c0_236 = arith.constant 0 : index
    %c53 = arith.constant 53 : index
    %398 = vector.load %arg17[%c0_236, %c53] : memref<8x392xf32, #tpu.memory_space<vmem>>, vector<8x256xf32>
    %cst_237 = arith.constant 0.000000e+00 : f32
    %399 = vector.shape_cast %379 : vector<1x256xi1> to vector<1x256xi1>
    %400 = vector.broadcast %399 : vector<1x256xi1> to vector<8x256xi1>
    %401 = vector.broadcast %cst_237 : f32 to vector<8x256xf32>
    %402 = arith.select %400, %398, %401 : vector<8x256xi1>, vector<8x256xf32>
    %c256 = arith.constant 256 : index
    %c0_238 = arith.constant 0 : index
    %403 = vector.load %arg18[%c256, %c0_238] : memref<648x256xf32, #tpu.memory_space<vmem>>, vector<8x256xf32>
    tpu.vector_store %arg18[%c256, %c0_238], %402 {strides = array<i32>} : memref<648x256xf32, #tpu.memory_space<vmem>>, vector<8x256xf32>,
    %c0_239 = arith.constant 0 : index
    %c69 = arith.constant 69 : index
    %404 = vector.load %arg17[%c0_239, %c69] : memref<8x392xf32, #tpu.memory_space<vmem>>, vector<8x256xf32>
    %cst_240 = arith.constant 0.000000e+00 : f32
    %405 = vector.shape_cast %379 : vector<1x256xi1> to vector<1x256xi1>
    %406 = vector.broadcast %405 : vector<1x256xi1> to vector<8x256xi1>
    %407 = vector.broadcast %cst_240 : f32 to vector<8x256xf32>
    %408 = arith.select %406, %404, %407 : vector<8x256xi1>, vector<8x256xf32>
    %c328 = arith.constant 328 : index
    %c0_241 = arith.constant 0 : index
    %409 = vector.load %arg18[%c328, %c0_241] : memref<648x256xf32, #tpu.memory_space<vmem>>, vector<8x256xf32>
    tpu.vector_store %arg18[%c328, %c0_241], %408 {strides = array<i32>} : memref<648x256xf32, #tpu.memory_space<vmem>>, vector<8x256xf32>,
    %c0_242 = arith.constant 0 : index
    %c85 = arith.constant 85 : index
    %410 = vector.load %arg17[%c0_242, %c85] : memref<8x392xf32, #tpu.memory_space<vmem>>, vector<8x256xf32>
    %cst_243 = arith.constant 0.000000e+00 : f32
    %411 = vector.shape_cast %379 : vector<1x256xi1> to vector<1x256xi1>
    %412 = vector.broadcast %411 : vector<1x256xi1> to vector<8x256xi1>
    %413 = vector.broadcast %cst_243 : f32 to vector<8x256xf32>
    %414 = arith.select %412, %410, %413 : vector<8x256xi1>, vector<8x256xf32>
    %c400 = arith.constant 400 : index
    %c0_244 = arith.constant 0 : index
    %415 = vector.load %arg18[%c400, %c0_244] : memref<648x256xf32, #tpu.memory_space<vmem>>, vector<8x256xf32>
    tpu.vector_store %arg18[%c400, %c0_244], %414 {strides = array<i32>} : memref<648x256xf32, #tpu.memory_space<vmem>>, vector<8x256xf32>,
    %c0_245 = arith.constant 0 : index
    %c101 = arith.constant 101 : index
    %416 = vector.load %arg17[%c0_245, %c101] : memref<8x392xf32, #tpu.memory_space<vmem>>, vector<8x256xf32>
    %cst_246 = arith.constant 0.000000e+00 : f32
    %417 = vector.shape_cast %379 : vector<1x256xi1> to vector<1x256xi1>
    %418 = vector.broadcast %417 : vector<1x256xi1> to vector<8x256xi1>
    %419 = vector.broadcast %cst_246 : f32 to vector<8x256xf32>
    %420 = arith.select %418, %416, %419 : vector<8x256xi1>, vector<8x256xf32>
    %c472 = arith.constant 472 : index
    %c0_247 = arith.constant 0 : index
    %421 = vector.load %arg18[%c472, %c0_247] : memref<648x256xf32, #tpu.memory_space<vmem>>, vector<8x256xf32>
    tpu.vector_store %arg18[%c472, %c0_247], %420 {strides = array<i32>} : memref<648x256xf32, #tpu.memory_space<vmem>>, vector<8x256xf32>,
    %c0_248 = arith.constant 0 : index
    %c117 = arith.constant 117 : index
    %422 = vector.load %arg17[%c0_248, %c117] : memref<8x392xf32, #tpu.memory_space<vmem>>, vector<8x256xf32>
    %cst_249 = arith.constant 0.000000e+00 : f32
    %423 = vector.shape_cast %379 : vector<1x256xi1> to vector<1x256xi1>
    %424 = vector.broadcast %423 : vector<1x256xi1> to vector<8x256xi1>
    %425 = vector.broadcast %cst_249 : f32 to vector<8x256xf32>
    %426 = arith.select %424, %422, %425 : vector<8x256xi1>, vector<8x256xf32>
    %c544 = arith.constant 544 : index
    %c0_250 = arith.constant 0 : index
    %427 = vector.load %arg18[%c544, %c0_250] : memref<648x256xf32, #tpu.memory_space<vmem>>, vector<8x256xf32>
    tpu.vector_store %arg18[%c544, %c0_250], %426 {strides = array<i32>} : memref<648x256xf32, #tpu.memory_space<vmem>>, vector<8x256xf32>,
    %c0_251 = arith.constant 0 : index
    %c133 = arith.constant 133 : index
    %428 = vector.load %arg17[%c0_251, %c133] : memref<8x392xf32, #tpu.memory_space<vmem>>, vector<8x256xf32>
    %cst_252 = arith.constant 0.000000e+00 : f32
    %429 = vector.shape_cast %379 : vector<1x256xi1> to vector<1x256xi1>
    %430 = vector.broadcast %429 : vector<1x256xi1> to vector<8x256xi1>
    %431 = vector.broadcast %cst_252 : f32 to vector<8x256xf32>
    %432 = arith.select %430, %428, %431 : vector<8x256xi1>, vector<8x256xf32>
    %c616 = arith.constant 616 : index
    %c0_253 = arith.constant 0 : index
    %433 = vector.load %arg18[%c616, %c0_253] : memref<648x256xf32, #tpu.memory_space<vmem>>, vector<8x256xf32>
    tpu.vector_store %arg18[%c616, %c0_253], %432 {strides = array<i32>} : memref<648x256xf32, #tpu.memory_space<vmem>>, vector<8x256xf32>,
    %c2_i32 = arith.constant 2 : i32
    %434 = vector.broadcast %c2_i32 : i32 to vector<1x256xi32>
    %435 = arith.addi %18, %434 : vector<1x256xi32>
    %c0_i32_254 = arith.constant 0 : i32
    %436 = vector.broadcast %c0_i32_254 : i32 to vector<1x256xi32>
    %437 = arith.cmpi sge, %435, %436 : vector<1x256xi32>
    %c2_i32_255 = arith.constant 2 : i32
    %438 = vector.broadcast %c2_i32_255 : i32 to vector<1x256xi32>
    %439 = arith.addi %18, %438 : vector<1x256xi32>
    %c16_i32_256 = arith.constant 16 : i32
    %440 = vector.broadcast %c16_i32_256 : i32 to vector<1x256xi32>
    %441 = arith.cmpi slt, %439, %440 : vector<1x256xi32>
    %442 = arith.andi %437, %441 : vector<1x256xi1>
    %c0_257 = arith.constant 0 : index
    %c6 = arith.constant 6 : index
    %443 = vector.load %arg17[%c0_257, %c6] : memref<8x392xf32, #tpu.memory_space<vmem>>, vector<8x256xf32>
    %cst_258 = arith.constant 0.000000e+00 : f32
    %444 = vector.shape_cast %442 : vector<1x256xi1> to vector<1x256xi1>
    %445 = vector.broadcast %444 : vector<1x256xi1> to vector<8x256xi1>
    %446 = vector.broadcast %cst_258 : f32 to vector<8x256xf32>
    %447 = arith.select %445, %443, %446 : vector<8x256xi1>, vector<8x256xf32>
    %c48_259 = arith.constant 48 : index
    %c0_260 = arith.constant 0 : index
    %448 = vector.load %arg18[%c48_259, %c0_260] : memref<648x256xf32, #tpu.memory_space<vmem>>, vector<8x256xf32>
    tpu.vector_store %arg18[%c48_259, %c0_260], %447 {strides = array<i32>} : memref<648x256xf32, #tpu.memory_space<vmem>>, vector<8x256xf32>,
    %c0_261 = arith.constant 0 : index
    %c22 = arith.constant 22 : index
    %449 = vector.load %arg17[%c0_261, %c22] : memref<8x392xf32, #tpu.memory_space<vmem>>, vector<8x256xf32>
    %cst_262 = arith.constant 0.000000e+00 : f32
    %450 = vector.shape_cast %442 : vector<1x256xi1> to vector<1x256xi1>
    %451 = vector.broadcast %450 : vector<1x256xi1> to vector<8x256xi1>
    %452 = vector.broadcast %cst_262 : f32 to vector<8x256xf32>
    %453 = arith.select %451, %449, %452 : vector<8x256xi1>, vector<8x256xf32>
    %c120 = arith.constant 120 : index
    %c0_263 = arith.constant 0 : index
    %454 = vector.load %arg18[%c120, %c0_263] : memref<648x256xf32, #tpu.memory_space<vmem>>, vector<8x256xf32>
    tpu.vector_store %arg18[%c120, %c0_263], %453 {strides = array<i32>} : memref<648x256xf32, #tpu.memory_space<vmem>>, vector<8x256xf32>,
    %c0_264 = arith.constant 0 : index
    %c38 = arith.constant 38 : index
    %455 = vector.load %arg17[%c0_264, %c38] : memref<8x392xf32, #tpu.memory_space<vmem>>, vector<8x256xf32>
    %cst_265 = arith.constant 0.000000e+00 : f32
    %456 = vector.shape_cast %442 : vector<1x256xi1> to vector<1x256xi1>
    %457 = vector.broadcast %456 : vector<1x256xi1> to vector<8x256xi1>
    %458 = vector.broadcast %cst_265 : f32 to vector<8x256xf32>
    %459 = arith.select %457, %455, %458 : vector<8x256xi1>, vector<8x256xf32>
    %c192 = arith.constant 192 : index
    %c0_266 = arith.constant 0 : index
    %460 = vector.load %arg18[%c192, %c0_266] : memref<648x256xf32, #tpu.memory_space<vmem>>, vector<8x256xf32>
    tpu.vector_store %arg18[%c192, %c0_266], %459 {strides = array<i32>} : memref<648x256xf32, #tpu.memory_space<vmem>>, vector<8x256xf32>,
    %c0_267 = arith.constant 0 : index
    %c54 = arith.constant 54 : index
    %461 = vector.load %arg17[%c0_267, %c54] : memref<8x392xf32, #tpu.memory_space<vmem>>, vector<8x256xf32>
    %cst_268 = arith.constant 0.000000e+00 : f32
    %462 = vector.shape_cast %442 : vector<1x256xi1> to vector<1x256xi1>
    %463 = vector.broadcast %462 : vector<1x256xi1> to vector<8x256xi1>
    %464 = vector.broadcast %cst_268 : f32 to vector<8x256xf32>
    %465 = arith.select %463, %461, %464 : vector<8x256xi1>, vector<8x256xf32>
    %c264 = arith.constant 264 : index
    %c0_269 = arith.constant 0 : index
    %466 = vector.load %arg18[%c264, %c0_269] : memref<648x256xf32, #tpu.memory_space<vmem>>, vector<8x256xf32>
    tpu.vector_store %arg18[%c264, %c0_269], %465 {strides = array<i32>} : memref<648x256xf32, #tpu.memory_space<vmem>>, vector<8x256xf32>,
    %c0_270 = arith.constant 0 : index
    %c70 = arith.constant 70 : index
    %467 = vector.load %arg17[%c0_270, %c70] : memref<8x392xf32, #tpu.memory_space<vmem>>, vector<8x256xf32>
    %cst_271 = arith.constant 0.000000e+00 : f32
    %468 = vector.shape_cast %442 : vector<1x256xi1> to vector<1x256xi1>
    %469 = vector.broadcast %468 : vector<1x256xi1> to vector<8x256xi1>
    %470 = vector.broadcast %cst_271 : f32 to vector<8x256xf32>
    %471 = arith.select %469, %467, %470 : vector<8x256xi1>, vector<8x256xf32>
    %c336 = arith.constant 336 : index
    %c0_272 = arith.constant 0 : index
    %472 = vector.load %arg18[%c336, %c0_272] : memref<648x256xf32, #tpu.memory_space<vmem>>, vector<8x256xf32>
    tpu.vector_store %arg18[%c336, %c0_272], %471 {strides = array<i32>} : memref<648x256xf32, #tpu.memory_space<vmem>>, vector<8x256xf32>,
    %c0_273 = arith.constant 0 : index
    %c86 = arith.constant 86 : index
    %473 = vector.load %arg17[%c0_273, %c86] : memref<8x392xf32, #tpu.memory_space<vmem>>, vector<8x256xf32>
    %cst_274 = arith.constant 0.000000e+00 : f32
    %474 = vector.shape_cast %442 : vector<1x256xi1> to vector<1x256xi1>
    %475 = vector.broadcast %474 : vector<1x256xi1> to vector<8x256xi1>
    %476 = vector.broadcast %cst_274 : f32 to vector<8x256xf32>
    %477 = arith.select %475, %473, %476 : vector<8x256xi1>, vector<8x256xf32>
    %c408 = arith.constant 408 : index
    %c0_275 = arith.constant 0 : index
    %478 = vector.load %arg18[%c408, %c0_275] : memref<648x256xf32, #tpu.memory_space<vmem>>, vector<8x256xf32>
    tpu.vector_store %arg18[%c408, %c0_275], %477 {strides = array<i32>} : memref<648x256xf32, #tpu.memory_space<vmem>>, vector<8x256xf32>,
    %c0_276 = arith.constant 0 : index
    %c102 = arith.constant 102 : index
    %479 = vector.load %arg17[%c0_276, %c102] : memref<8x392xf32, #tpu.memory_space<vmem>>, vector<8x256xf32>
    %cst_277 = arith.constant 0.000000e+00 : f32
    %480 = vector.shape_cast %442 : vector<1x256xi1> to vector<1x256xi1>
    %481 = vector.broadcast %480 : vector<1x256xi1> to vector<8x256xi1>
    %482 = vector.broadcast %cst_277 : f32 to vector<8x256xf32>
    %483 = arith.select %481, %479, %482 : vector<8x256xi1>, vector<8x256xf32>
    %c480 = arith.constant 480 : index
    %c0_278 = arith.constant 0 : index
    %484 = vector.load %arg18[%c480, %c0_278] : memref<648x256xf32, #tpu.memory_space<vmem>>, vector<8x256xf32>
    tpu.vector_store %arg18[%c480, %c0_278], %483 {strides = array<i32>} : memref<648x256xf32, #tpu.memory_space<vmem>>, vector<8x256xf32>,
    %c0_279 = arith.constant 0 : index
    %c118 = arith.constant 118 : index
    %485 = vector.load %arg17[%c0_279, %c118] : memref<8x392xf32, #tpu.memory_space<vmem>>, vector<8x256xf32>
    %cst_280 = arith.constant 0.000000e+00 : f32
    %486 = vector.shape_cast %442 : vector<1x256xi1> to vector<1x256xi1>
    %487 = vector.broadcast %486 : vector<1x256xi1> to vector<8x256xi1>
    %488 = vector.broadcast %cst_280 : f32 to vector<8x256xf32>
    %489 = arith.select %487, %485, %488 : vector<8x256xi1>, vector<8x256xf32>
    %c552 = arith.constant 552 : index
    %c0_281 = arith.constant 0 : index
    %490 = vector.load %arg18[%c552, %c0_281] : memref<648x256xf32, #tpu.memory_space<vmem>>, vector<8x256xf32>
    tpu.vector_store %arg18[%c552, %c0_281], %489 {strides = array<i32>} : memref<648x256xf32, #tpu.memory_space<vmem>>, vector<8x256xf32>,
    %c0_282 = arith.constant 0 : index
    %c134 = arith.constant 134 : index
    %491 = vector.load %arg17[%c0_282, %c134] : memref<8x392xf32, #tpu.memory_space<vmem>>, vector<8x256xf32>
    %cst_283 = arith.constant 0.000000e+00 : f32
    %492 = vector.shape_cast %442 : vector<1x256xi1> to vector<1x256xi1>
    %493 = vector.broadcast %492 : vector<1x256xi1> to vector<8x256xi1>
    %494 = vector.broadcast %cst_283 : f32 to vector<8x256xf32>
    %495 = arith.select %493, %491, %494 : vector<8x256xi1>, vector<8x256xf32>
    %c624 = arith.constant 624 : index
    %c0_284 = arith.constant 0 : index
    %496 = vector.load %arg18[%c624, %c0_284] : memref<648x256xf32, #tpu.memory_space<vmem>>, vector<8x256xf32>
    tpu.vector_store %arg18[%c624, %c0_284], %495 {strides = array<i32>} : memref<648x256xf32, #tpu.memory_space<vmem>>, vector<8x256xf32>,
    %c3_i32 = arith.constant 3 : i32
    %497 = vector.broadcast %c3_i32 : i32 to vector<1x256xi32>
    %498 = arith.addi %18, %497 : vector<1x256xi32>
    %c0_i32_285 = arith.constant 0 : i32
    %499 = vector.broadcast %c0_i32_285 : i32 to vector<1x256xi32>
    %500 = arith.cmpi sge, %498, %499 : vector<1x256xi32>
    %c3_i32_286 = arith.constant 3 : i32
    %501 = vector.broadcast %c3_i32_286 : i32 to vector<1x256xi32>
    %502 = arith.addi %18, %501 : vector<1x256xi32>
    %c16_i32_287 = arith.constant 16 : i32
    %503 = vector.broadcast %c16_i32_287 : i32 to vector<1x256xi32>
    %504 = arith.cmpi slt, %502, %503 : vector<1x256xi32>
    %505 = arith.andi %500, %504 : vector<1x256xi1>
    %c0_288 = arith.constant 0 : index
    %c7 = arith.constant 7 : index
    %506 = vector.load %arg17[%c0_288, %c7] : memref<8x392xf32, #tpu.memory_space<vmem>>, vector<8x256xf32>
    %cst_289 = arith.constant 0.000000e+00 : f32
    %507 = vector.shape_cast %505 : vector<1x256xi1> to vector<1x256xi1>
    %508 = vector.broadcast %507 : vector<1x256xi1> to vector<8x256xi1>
    %509 = vector.broadcast %cst_289 : f32 to vector<8x256xf32>
    %510 = arith.select %508, %506, %509 : vector<8x256xi1>, vector<8x256xf32>
    %c56_290 = arith.constant 56 : index
    %c0_291 = arith.constant 0 : index
    %511 = vector.load %arg18[%c56_290, %c0_291] : memref<648x256xf32, #tpu.memory_space<vmem>>, vector<8x256xf32>
    tpu.vector_store %arg18[%c56_290, %c0_291], %510 {strides = array<i32>} : memref<648x256xf32, #tpu.memory_space<vmem>>, vector<8x256xf32>,
    %c0_292 = arith.constant 0 : index
    %c23 = arith.constant 23 : index
    %512 = vector.load %arg17[%c0_292, %c23] : memref<8x392xf32, #tpu.memory_space<vmem>>, vector<8x256xf32>
    %cst_293 = arith.constant 0.000000e+00 : f32
    %513 = vector.shape_cast %505 : vector<1x256xi1> to vector<1x256xi1>
    %514 = vector.broadcast %513 : vector<1x256xi1> to vector<8x256xi1>
    %515 = vector.broadcast %cst_293 : f32 to vector<8x256xf32>
    %516 = arith.select %514, %512, %515 : vector<8x256xi1>, vector<8x256xf32>
    %c128_294 = arith.constant 128 : index
    %c0_295 = arith.constant 0 : index
    %517 = vector.load %arg18[%c128_294, %c0_295] : memref<648x256xf32, #tpu.memory_space<vmem>>, vector<8x256xf32>
    tpu.vector_store %arg18[%c128_294, %c0_295], %516 {strides = array<i32>} : memref<648x256xf32, #tpu.memory_space<vmem>>, vector<8x256xf32>,
    %c0_296 = arith.constant 0 : index
    %c39 = arith.constant 39 : index
    %518 = vector.load %arg17[%c0_296, %c39] : memref<8x392xf32, #tpu.memory_space<vmem>>, vector<8x256xf32>
    %cst_297 = arith.constant 0.000000e+00 : f32
    %519 = vector.shape_cast %505 : vector<1x256xi1> to vector<1x256xi1>
    %520 = vector.broadcast %519 : vector<1x256xi1> to vector<8x256xi1>
    %521 = vector.broadcast %cst_297 : f32 to vector<8x256xf32>
    %522 = arith.select %520, %518, %521 : vector<8x256xi1>, vector<8x256xf32>
    %c200 = arith.constant 200 : index
    %c0_298 = arith.constant 0 : index
    %523 = vector.load %arg18[%c200, %c0_298] : memref<648x256xf32, #tpu.memory_space<vmem>>, vector<8x256xf32>
    tpu.vector_store %arg18[%c200, %c0_298], %522 {strides = array<i32>} : memref<648x256xf32, #tpu.memory_space<vmem>>, vector<8x256xf32>,
    %c0_299 = arith.constant 0 : index
    %c55 = arith.constant 55 : index
    %524 = vector.load %arg17[%c0_299, %c55] : memref<8x392xf32, #tpu.memory_space<vmem>>, vector<8x256xf32>
    %cst_300 = arith.constant 0.000000e+00 : f32
    %525 = vector.shape_cast %505 : vector<1x256xi1> to vector<1x256xi1>
    %526 = vector.broadcast %525 : vector<1x256xi1> to vector<8x256xi1>
    %527 = vector.broadcast %cst_300 : f32 to vector<8x256xf32>
    %528 = arith.select %526, %524, %527 : vector<8x256xi1>, vector<8x256xf32>
    %c272 = arith.constant 272 : index
    %c0_301 = arith.constant 0 : index
    %529 = vector.load %arg18[%c272, %c0_301] : memref<648x256xf32, #tpu.memory_space<vmem>>, vector<8x256xf32>
    tpu.vector_store %arg18[%c272, %c0_301], %528 {strides = array<i32>} : memref<648x256xf32, #tpu.memory_space<vmem>>, vector<8x256xf32>,
    %c0_302 = arith.constant 0 : index
    %c71 = arith.constant 71 : index
    %530 = vector.load %arg17[%c0_302, %c71] : memref<8x392xf32, #tpu.memory_space<vmem>>, vector<8x256xf32>
    %cst_303 = arith.constant 0.000000e+00 : f32
    %531 = vector.shape_cast %505 : vector<1x256xi1> to vector<1x256xi1>
    %532 = vector.broadcast %531 : vector<1x256xi1> to vector<8x256xi1>
    %533 = vector.broadcast %cst_303 : f32 to vector<8x256xf32>
    %534 = arith.select %532, %530, %533 : vector<8x256xi1>, vector<8x256xf32>
    %c344 = arith.constant 344 : index
    %c0_304 = arith.constant 0 : index
    %535 = vector.load %arg18[%c344, %c0_304] : memref<648x256xf32, #tpu.memory_space<vmem>>, vector<8x256xf32>
    tpu.vector_store %arg18[%c344, %c0_304], %534 {strides = array<i32>} : memref<648x256xf32, #tpu.memory_space<vmem>>, vector<8x256xf32>,
    %c0_305 = arith.constant 0 : index
    %c87 = arith.constant 87 : index
    %536 = vector.load %arg17[%c0_305, %c87] : memref<8x392xf32, #tpu.memory_space<vmem>>, vector<8x256xf32>
    %cst_306 = arith.constant 0.000000e+00 : f32
    %537 = vector.shape_cast %505 : vector<1x256xi1> to vector<1x256xi1>
    %538 = vector.broadcast %537 : vector<1x256xi1> to vector<8x256xi1>
    %539 = vector.broadcast %cst_306 : f32 to vector<8x256xf32>
    %540 = arith.select %538, %536, %539 : vector<8x256xi1>, vector<8x256xf32>
    %c416 = arith.constant 416 : index
    %c0_307 = arith.constant 0 : index
    %541 = vector.load %arg18[%c416, %c0_307] : memref<648x256xf32, #tpu.memory_space<vmem>>, vector<8x256xf32>
    tpu.vector_store %arg18[%c416, %c0_307], %540 {strides = array<i32>} : memref<648x256xf32, #tpu.memory_space<vmem>>, vector<8x256xf32>,
    %c0_308 = arith.constant 0 : index
    %c103 = arith.constant 103 : index
    %542 = vector.load %arg17[%c0_308, %c103] : memref<8x392xf32, #tpu.memory_space<vmem>>, vector<8x256xf32>
    %cst_309 = arith.constant 0.000000e+00 : f32
    %543 = vector.shape_cast %505 : vector<1x256xi1> to vector<1x256xi1>
    %544 = vector.broadcast %543 : vector<1x256xi1> to vector<8x256xi1>
    %545 = vector.broadcast %cst_309 : f32 to vector<8x256xf32>
    %546 = arith.select %544, %542, %545 : vector<8x256xi1>, vector<8x256xf32>
    %c488 = arith.constant 488 : index
    %c0_310 = arith.constant 0 : index
    %547 = vector.load %arg18[%c488, %c0_310] : memref<648x256xf32, #tpu.memory_space<vmem>>, vector<8x256xf32>
    tpu.vector_store %arg18[%c488, %c0_310], %546 {strides = array<i32>} : memref<648x256xf32, #tpu.memory_space<vmem>>, vector<8x256xf32>,
    %c0_311 = arith.constant 0 : index
    %c119 = arith.constant 119 : index
    %548 = vector.load %arg17[%c0_311, %c119] : memref<8x392xf32, #tpu.memory_space<vmem>>, vector<8x256xf32>
    %cst_312 = arith.constant 0.000000e+00 : f32
    %549 = vector.shape_cast %505 : vector<1x256xi1> to vector<1x256xi1>
    %550 = vector.broadcast %549 : vector<1x256xi1> to vector<8x256xi1>
    %551 = vector.broadcast %cst_312 : f32 to vector<8x256xf32>
    %552 = arith.select %550, %548, %551 : vector<8x256xi1>, vector<8x256xf32>
    %c560 = arith.constant 560 : index
    %c0_313 = arith.constant 0 : index
    %553 = vector.load %arg18[%c560, %c0_313] : memref<648x256xf32, #tpu.memory_space<vmem>>, vector<8x256xf32>
    tpu.vector_store %arg18[%c560, %c0_313], %552 {strides = array<i32>} : memref<648x256xf32, #tpu.memory_space<vmem>>, vector<8x256xf32>,
    %c0_314 = arith.constant 0 : index
    %c135 = arith.constant 135 : index
    %554 = vector.load %arg17[%c0_314, %c135] : memref<8x392xf32, #tpu.memory_space<vmem>>, vector<8x256xf32>
    %cst_315 = arith.constant 0.000000e+00 : f32
    %555 = vector.shape_cast %505 : vector<1x256xi1> to vector<1x256xi1>
    %556 = vector.broadcast %555 : vector<1x256xi1> to vector<8x256xi1>
    %557 = vector.broadcast %cst_315 : f32 to vector<8x256xf32>
    %558 = arith.select %556, %554, %557 : vector<8x256xi1>, vector<8x256xf32>
    %c632 = arith.constant 632 : index
    %c0_316 = arith.constant 0 : index
    %559 = vector.load %arg18[%c632, %c0_316] : memref<648x256xf32, #tpu.memory_space<vmem>>, vector<8x256xf32>
    tpu.vector_store %arg18[%c632, %c0_316], %558 {strides = array<i32>} : memref<648x256xf32, #tpu.memory_space<vmem>>, vector<8x256xf32>,
    %c4_i32 = arith.constant 4 : i32
    %560 = vector.broadcast %c4_i32 : i32 to vector<1x256xi32>
    %561 = arith.addi %18, %560 : vector<1x256xi32>
    %c0_i32_317 = arith.constant 0 : i32
    %562 = vector.broadcast %c0_i32_317 : i32 to vector<1x256xi32>
    %563 = arith.cmpi sge, %561, %562 : vector<1x256xi32>
    %c4_i32_318 = arith.constant 4 : i32
    %564 = vector.broadcast %c4_i32_318 : i32 to vector<1x256xi32>
    %565 = arith.addi %18, %564 : vector<1x256xi32>
    %c16_i32_319 = arith.constant 16 : i32
    %566 = vector.broadcast %c16_i32_319 : i32 to vector<1x256xi32>
    %567 = arith.cmpi slt, %565, %566 : vector<1x256xi32>
    %568 = arith.andi %563, %567 : vector<1x256xi1>
    %c0_320 = arith.constant 0 : index
    %c8_321 = arith.constant 8 : index
    %569 = vector.load %arg17[%c0_320, %c8_321] : memref<8x392xf32, #tpu.memory_space<vmem>>, vector<8x256xf32>
    %cst_322 = arith.constant 0.000000e+00 : f32
    %570 = vector.shape_cast %568 : vector<1x256xi1> to vector<1x256xi1>
    %571 = vector.broadcast %570 : vector<1x256xi1> to vector<8x256xi1>
    %572 = vector.broadcast %cst_322 : f32 to vector<8x256xf32>
    %573 = arith.select %571, %569, %572 : vector<8x256xi1>, vector<8x256xf32>
    %c64_323 = arith.constant 64 : index
    %c0_324 = arith.constant 0 : index
    %574 = vector.load %arg18[%c64_323, %c0_324] : memref<648x256xf32, #tpu.memory_space<vmem>>, vector<8x256xf32>
    tpu.vector_store %arg18[%c64_323, %c0_324], %573 {strides = array<i32>} : memref<648x256xf32, #tpu.memory_space<vmem>>, vector<8x256xf32>,
    %c0_325 = arith.constant 0 : index
    %c24_326 = arith.constant 24 : index
    %575 = vector.load %arg17[%c0_325, %c24_326] : memref<8x392xf32, #tpu.memory_space<vmem>>, vector<8x256xf32>
    %cst_327 = arith.constant 0.000000e+00 : f32
    %576 = vector.shape_cast %568 : vector<1x256xi1> to vector<1x256xi1>
    %577 = vector.broadcast %576 : vector<1x256xi1> to vector<8x256xi1>
    %578 = vector.broadcast %cst_327 : f32 to vector<8x256xf32>
    %579 = arith.select %577, %575, %578 : vector<8x256xi1>, vector<8x256xf32>
    %c136 = arith.constant 136 : index
    %c0_328 = arith.constant 0 : index
    %580 = vector.load %arg18[%c136, %c0_328] : memref<648x256xf32, #tpu.memory_space<vmem>>, vector<8x256xf32>
    tpu.vector_store %arg18[%c136, %c0_328], %579 {strides = array<i32>} : memref<648x256xf32, #tpu.memory_space<vmem>>, vector<8x256xf32>,
    %c0_329 = arith.constant 0 : index
    %c40_330 = arith.constant 40 : index
    %581 = vector.load %arg17[%c0_329, %c40_330] : memref<8x392xf32, #tpu.memory_space<vmem>>, vector<8x256xf32>
    %cst_331 = arith.constant 0.000000e+00 : f32
    %582 = vector.shape_cast %568 : vector<1x256xi1> to vector<1x256xi1>
    %583 = vector.broadcast %582 : vector<1x256xi1> to vector<8x256xi1>
    %584 = vector.broadcast %cst_331 : f32 to vector<8x256xf32>
    %585 = arith.select %583, %581, %584 : vector<8x256xi1>, vector<8x256xf32>
    %c208 = arith.constant 208 : index
    %c0_332 = arith.constant 0 : index
    %586 = vector.load %arg18[%c208, %c0_332] : memref<648x256xf32, #tpu.memory_space<vmem>>, vector<8x256xf32>
    tpu.vector_store %arg18[%c208, %c0_332], %585 {strides = array<i32>} : memref<648x256xf32, #tpu.memory_space<vmem>>, vector<8x256xf32>,
    %c0_333 = arith.constant 0 : index
    %c56_334 = arith.constant 56 : index
    %587 = vector.load %arg17[%c0_333, %c56_334] : memref<8x392xf32, #tpu.memory_space<vmem>>, vector<8x256xf32>
    %cst_335 = arith.constant 0.000000e+00 : f32
    %588 = vector.shape_cast %568 : vector<1x256xi1> to vector<1x256xi1>
    %589 = vector.broadcast %588 : vector<1x256xi1> to vector<8x256xi1>
    %590 = vector.broadcast %cst_335 : f32 to vector<8x256xf32>
    %591 = arith.select %589, %587, %590 : vector<8x256xi1>, vector<8x256xf32>
    %c280 = arith.constant 280 : index
    %c0_336 = arith.constant 0 : index
    %592 = vector.load %arg18[%c280, %c0_336] : memref<648x256xf32, #tpu.memory_space<vmem>>, vector<8x256xf32>
    tpu.vector_store %arg18[%c280, %c0_336], %591 {strides = array<i32>} : memref<648x256xf32, #tpu.memory_space<vmem>>, vector<8x256xf32>,
    %c0_337 = arith.constant 0 : index
    %c72_338 = arith.constant 72 : index
    %593 = vector.load %arg17[%c0_337, %c72_338] : memref<8x392xf32, #tpu.memory_space<vmem>>, vector<8x256xf32>
    %cst_339 = arith.constant 0.000000e+00 : f32
    %594 = vector.shape_cast %568 : vector<1x256xi1> to vector<1x256xi1>
    %595 = vector.broadcast %594 : vector<1x256xi1> to vector<8x256xi1>
    %596 = vector.broadcast %cst_339 : f32 to vector<8x256xf32>
    %597 = arith.select %595, %593, %596 : vector<8x256xi1>, vector<8x256xf32>
    %c352 = arith.constant 352 : index
    %c0_340 = arith.constant 0 : index
    %598 = vector.load %arg18[%c352, %c0_340] : memref<648x256xf32, #tpu.memory_space<vmem>>, vector<8x256xf32>
    tpu.vector_store %arg18[%c352, %c0_340], %597 {strides = array<i32>} : memref<648x256xf32, #tpu.memory_space<vmem>>, vector<8x256xf32>,
    %c0_341 = arith.constant 0 : index
    %c88_342 = arith.constant 88 : index
    %599 = vector.load %arg17[%c0_341, %c88_342] : memref<8x392xf32, #tpu.memory_space<vmem>>, vector<8x256xf32>
    %cst_343 = arith.constant 0.000000e+00 : f32
    %600 = vector.shape_cast %568 : vector<1x256xi1> to vector<1x256xi1>
    %601 = vector.broadcast %600 : vector<1x256xi1> to vector<8x256xi1>
    %602 = vector.broadcast %cst_343 : f32 to vector<8x256xf32>
    %603 = arith.select %601, %599, %602 : vector<8x256xi1>, vector<8x256xf32>
    %c424 = arith.constant 424 : index
    %c0_344 = arith.constant 0 : index
    %604 = vector.load %arg18[%c424, %c0_344] : memref<648x256xf32, #tpu.memory_space<vmem>>, vector<8x256xf32>
    tpu.vector_store %arg18[%c424, %c0_344], %603 {strides = array<i32>} : memref<648x256xf32, #tpu.memory_space<vmem>>, vector<8x256xf32>,
    %c0_345 = arith.constant 0 : index
    %c104_346 = arith.constant 104 : index
    %605 = vector.load %arg17[%c0_345, %c104_346] : memref<8x392xf32, #tpu.memory_space<vmem>>, vector<8x256xf32>
    %cst_347 = arith.constant 0.000000e+00 : f32
    %606 = vector.shape_cast %568 : vector<1x256xi1> to vector<1x256xi1>
    %607 = vector.broadcast %606 : vector<1x256xi1> to vector<8x256xi1>
    %608 = vector.broadcast %cst_347 : f32 to vector<8x256xf32>
    %609 = arith.select %607, %605, %608 : vector<8x256xi1>, vector<8x256xf32>
    %c496 = arith.constant 496 : index
    %c0_348 = arith.constant 0 : index
    %610 = vector.load %arg18[%c496, %c0_348] : memref<648x256xf32, #tpu.memory_space<vmem>>, vector<8x256xf32>
    tpu.vector_store %arg18[%c496, %c0_348], %609 {strides = array<i32>} : memref<648x256xf32, #tpu.memory_space<vmem>>, vector<8x256xf32>,
    %c0_349 = arith.constant 0 : index
    %c120_350 = arith.constant 120 : index
    %611 = vector.load %arg17[%c0_349, %c120_350] : memref<8x392xf32, #tpu.memory_space<vmem>>, vector<8x256xf32>
    %cst_351 = arith.constant 0.000000e+00 : f32
    %612 = vector.shape_cast %568 : vector<1x256xi1> to vector<1x256xi1>
    %613 = vector.broadcast %612 : vector<1x256xi1> to vector<8x256xi1>
    %614 = vector.broadcast %cst_351 : f32 to vector<8x256xf32>
    %615 = arith.select %613, %611, %614 : vector<8x256xi1>, vector<8x256xf32>
    %c568 = arith.constant 568 : index
    %c0_352 = arith.constant 0 : index
    %616 = vector.load %arg18[%c568, %c0_352] : memref<648x256xf32, #tpu.memory_space<vmem>>, vector<8x256xf32>
    tpu.vector_store %arg18[%c568, %c0_352], %615 {strides = array<i32>} : memref<648x256xf32, #tpu.memory_space<vmem>>, vector<8x256xf32>,
    %c0_353 = arith.constant 0 : index
    %c136_354 = arith.constant 136 : index
    %617 = vector.load %arg17[%c0_353, %c136_354] : memref<8x392xf32, #tpu.memory_space<vmem>>, vector<8x256xf32>
    %cst_355 = arith.constant 0.000000e+00 : f32
    %618 = vector.shape_cast %568 : vector<1x256xi1> to vector<1x256xi1>
    %619 = vector.broadcast %618 : vector<1x256xi1> to vector<8x256xi1>
    %620 = vector.broadcast %cst_355 : f32 to vector<8x256xf32>
    %621 = arith.select %619, %617, %620 : vector<8x256xi1>, vector<8x256xf32>
    %c640 = arith.constant 640 : index
    %c0_356 = arith.constant 0 : index
    %622 = vector.load %arg18[%c640, %c0_356] : memref<648x256xf32, #tpu.memory_space<vmem>>, vector<8x256xf32>
    tpu.vector_store %arg18[%c640, %c0_356], %621 {strides = array<i32>} : memref<648x256xf32, #tpu.memory_space<vmem>>, vector<8x256xf32>,
    %c0_357 = arith.constant 0 : index
    %c0_358 = arith.constant 0 : index
    %623 = vector.load %arg5[%c0_357, %c0_358] : memref<8x648xf32, #tpu.memory_space<vmem>>, vector<8x648xf32>
    %c0_359 = arith.constant 0 : index
    %c0_360 = arith.constant 0 : index
    %624 = vector.load %arg18[%c0_359, %c0_360] : memref<648x256xf32, #tpu.memory_space<vmem>>, vector<648x256xf32>
    %cst_361 = arith.constant dense<0.000000e+00> : vector<8x256xf32>
    %625 = tpu.matmul %623, %624, %cst_361 {dimension_numbers = #tpu.dot_dimension_numbers<[1], [0], [0], [1], [0, 0, 1, 1], [], []>} : vector<8x648xf32>, vector<648x256xf32>, vector<8x256xf32> -> vector<8x256xf32>
    %c0_362 = arith.constant 0 : index
    %c0_363 = arith.constant 0 : index
    %626 = vector.load %arg6[%c0_362, %c0_363] : memref<8x1xf32, #tpu.memory_space<vmem>>, vector<8x1xf32>
    %627 = vector.broadcast %626 : vector<8x1xf32> to vector<8x256xf32>
    %628 = arith.addf %625, %627 : vector<8x256xf32>
    %cst_364 = arith.constant 0.000000e+00 : f32
    %629 = vector.broadcast %cst_364 : f32 to vector<8x256xf32>
    %630 = arith.maximumf %628, %629 : vector<8x256xf32>
    %631 = vector.extract_strided_slice %91 {offsets = [0, 0], sizes = [4, 256], strides = [1, 1]} : vector<8x256xf32> to vector<4x256xf32>
    %c0_365 = arith.constant 0 : index
    %c0_366 = arith.constant 0 : index
    %632 = vector.load %arg19[%c0_365, %c0_366] : memref<8x273xf32, #tpu.memory_space<vmem>>, vector<4x256xf32>
    tpu.vector_store %arg19[%c0_365, %c0_366], %631 {strides = array<i32>} : memref<8x273xf32, #tpu.memory_space<vmem>>, vector<4x256xf32>,
    %633 = vector.extract_strided_slice %630 {offsets = [0, 0], sizes = [4, 256], strides = [1, 1]} : vector<8x256xf32> to vector<4x256xf32>
    %c4_367 = arith.constant 4 : index
    %c0_368 = arith.constant 0 : index
    %634 = vector.load %arg19[%c4_367, %c0_368] : memref<8x273xf32, #tpu.memory_space<vmem>>, vector<4x256xf32>
    tpu.vector_store %arg19[%c4_367, %c0_368], %633 {strides = array<i32>} : memref<8x273xf32, #tpu.memory_space<vmem>>, vector<4x256xf32>,
    %cst_369 = arith.constant 0.000000e+00 : f32
    %635 = vector.broadcast %cst_369 : f32 to vector<8x17xf32>
    %c0_370 = arith.constant 0 : index
    %c256_371 = arith.constant 256 : index
    %636 = vector.load %arg19[%c0_370, %c256_371] : memref<8x273xf32, #tpu.memory_space<vmem>>, vector<8x17xf32>
    tpu.vector_store %arg19[%c0_370, %c256_371], %635 {strides = array<i32>} : memref<8x273xf32, #tpu.memory_space<vmem>>, vector<8x17xf32>,
    %c0_372 = arith.constant 0 : index
    %c0_373 = arith.constant 0 : index
    %637 = vector.load %arg19[%c0_372, %c0_373] : memref<8x273xf32, #tpu.memory_space<vmem>>, vector<8x256xf32>
    %c0_374 = arith.constant 0 : index
    %c1_375 = arith.constant 1 : index
    %638 = vector.load %arg19[%c0_374, %c1_375] : memref<8x273xf32, #tpu.memory_space<vmem>>, vector<8x256xf32>
    %639 = arith.maximumf %637, %638 : vector<8x256xf32>
    %c0_376 = arith.constant 0 : index
    %c16_377 = arith.constant 16 : index
    %640 = vector.load %arg19[%c0_376, %c16_377] : memref<8x273xf32, #tpu.memory_space<vmem>>, vector<8x256xf32>
    %c0_378 = arith.constant 0 : index
    %c17_379 = arith.constant 17 : index
    %641 = vector.load %arg19[%c0_378, %c17_379] : memref<8x273xf32, #tpu.memory_space<vmem>>, vector<8x256xf32>
    %642 = arith.maximumf %640, %641 : vector<8x256xf32>
    %643 = arith.maximumf %639, %642 : vector<8x256xf32>
    %c0_380 = arith.constant 0 : index
    %c0_381 = arith.constant 0 : index
    %644 = vector.load %arg2[%c0_380, %c0_381] : memref<256x64xf32, #tpu.memory_space<vmem>>, vector<256x64xf32>
    %cst_382 = arith.constant dense<0.000000e+00> : vector<8x64xf32>
    %645 = tpu.matmul %643, %644, %cst_382 {dimension_numbers = #tpu.dot_dimension_numbers<[1], [0], [0], [1], [0, 0, 1, 1], [], []>} : vector<8x256xf32>, vector<256x64xf32>, vector<8x64xf32> -> vector<8x64xf32>
    %646 = tpu.iota {dimensions = array<i32: 1>} : vector<1x64xi32>
    %c8_i32 = arith.constant 8 : i32
    %c0_i32_383 = arith.constant 0 : i32
    %647 = arith.cmpi eq, %c8_i32, %c0_i32_383 : i32
    %c1_i32_384 = arith.constant 1 : i32
    %648 = arith.select %647, %c1_i32_384, %c8_i32 : i32
    %649 = vector.broadcast %648 : i32 to vector<1x64xi32>
    %650 = arith.remsi %646, %649 : vector<1x64xi32>
    %c0_i32_385 = arith.constant 0 : i32
    %651 = vector.broadcast %c0_i32_385 : i32 to vector<1x64xi32>
    %652 = arith.cmpi ne, %650, %651 : vector<1x64xi32>
    %c0_i32_386 = arith.constant 0 : i32
    %653 = vector.broadcast %c0_i32_386 : i32 to vector<1x64xi32>
    %654 = arith.cmpi slt, %650, %653 : vector<1x64xi32>
    %c0_i32_387 = arith.constant 0 : i32
    %655 = arith.cmpi slt, %648, %c0_i32_387 : i32
    %656 = vector.broadcast %655 : i1 to vector<1x64xi1>
    %657 = vector.broadcast %656 : vector<1x64xi1> to vector<1x64xi1>
    %658 = arith.xori %654, %657 : vector<1x64xi1>
    %659 = arith.andi %658, %652 : vector<1x64xi1>
    %660 = vector.broadcast %648 : i32 to vector<1x64xi32>
    %661 = arith.addi %650, %660 : vector<1x64xi32>
    %662 = arith.select %659, %661, %650 : vector<1x64xi1>, vector<1x64xi32>
    %cst_388 = arith.constant 0.000000e+00 : f32
    %663 = vector.broadcast %cst_388 : f32 to vector<8x9xf32>
    %c0_389 = arith.constant 0 : index
    %c0_390 = arith.constant 0 : index
    %664 = vector.load %arg20[%c0_389, %c0_390] : memref<8x82xf32, #tpu.memory_space<vmem>>, vector<8x9xf32>
    tpu.vector_store %arg20[%c0_389, %c0_390], %663 {strides = array<i32>} : memref<8x82xf32, #tpu.memory_space<vmem>>, vector<8x9xf32>,
    %cst_391 = arith.constant 0.000000e+00 : f32
    %665 = vector.broadcast %cst_391 : f32 to vector<8x9xf32>
    %c0_392 = arith.constant 0 : index
    %c73 = arith.constant 73 : index
    %666 = vector.load %arg20[%c0_392, %c73] : memref<8x82xf32, #tpu.memory_space<vmem>>, vector<8x9xf32>
    tpu.vector_store %arg20[%c0_392, %c73], %665 {strides = array<i32>} : memref<8x82xf32, #tpu.memory_space<vmem>>, vector<8x9xf32>,
    %c0_393 = arith.constant 0 : index
    %c9 = arith.constant 9 : index
    %667 = vector.load %arg20[%c0_393, %c9] : memref<8x82xf32, #tpu.memory_space<vmem>>, vector<8x64xf32>
    tpu.vector_store %arg20[%c0_393, %c9], %645 {strides = array<i32>} : memref<8x82xf32, #tpu.memory_space<vmem>>, vector<8x64xf32>,
    %c-1_i32_394 = arith.constant -1 : i32
    %668 = vector.broadcast %c-1_i32_394 : i32 to vector<1x64xi32>
    %669 = arith.addi %662, %668 : vector<1x64xi32>
    %c0_i32_395 = arith.constant 0 : i32
    %670 = vector.broadcast %c0_i32_395 : i32 to vector<1x64xi32>
    %671 = arith.cmpi sge, %669, %670 : vector<1x64xi32>
    %c-1_i32_396 = arith.constant -1 : i32
    %672 = vector.broadcast %c-1_i32_396 : i32 to vector<1x64xi32>
    %673 = arith.addi %662, %672 : vector<1x64xi32>
    %c8_i32_397 = arith.constant 8 : i32
    %674 = vector.broadcast %c8_i32_397 : i32 to vector<1x64xi32>
    %675 = arith.cmpi slt, %673, %674 : vector<1x64xi32>
    %676 = arith.andi %671, %675 : vector<1x64xi1>
    %c0_398 = arith.constant 0 : index
    %c0_399 = arith.constant 0 : index
    %677 = vector.load %arg20[%c0_398, %c0_399] : memref<8x82xf32, #tpu.memory_space<vmem>>, vector<8x64xf32>
    %cst_400 = arith.constant 0.000000e+00 : f32
    %678 = vector.shape_cast %676 : vector<1x64xi1> to vector<1x64xi1>
    %679 = vector.broadcast %678 : vector<1x64xi1> to vector<8x64xi1>
    %680 = vector.broadcast %cst_400 : f32 to vector<8x64xf32>
    %681 = arith.select %679, %677, %680 : vector<8x64xi1>, vector<8x64xf32>
    %c0_401 = arith.constant 0 : index
    %c0_402 = arith.constant 0 : index
    %682 = vector.load %arg21[%c0_401, %c0_402] : memref<72x64xf32, #tpu.memory_space<vmem>>, vector<8x64xf32>
    tpu.vector_store %arg21[%c0_401, %c0_402], %681 {strides = array<i32>} : memref<72x64xf32, #tpu.memory_space<vmem>>, vector<8x64xf32>,
    %c0_403 = arith.constant 0 : index
    %c8_404 = arith.constant 8 : index
    %683 = vector.load %arg20[%c0_403, %c8_404] : memref<8x82xf32, #tpu.memory_space<vmem>>, vector<8x64xf32>
    %cst_405 = arith.constant 0.000000e+00 : f32
    %684 = vector.shape_cast %676 : vector<1x64xi1> to vector<1x64xi1>
    %685 = vector.broadcast %684 : vector<1x64xi1> to vector<8x64xi1>
    %686 = vector.broadcast %cst_405 : f32 to vector<8x64xf32>
    %687 = arith.select %685, %683, %686 : vector<8x64xi1>, vector<8x64xf32>
    %c24_406 = arith.constant 24 : index
    %c0_407 = arith.constant 0 : index
    %688 = vector.load %arg21[%c24_406, %c0_407] : memref<72x64xf32, #tpu.memory_space<vmem>>, vector<8x64xf32>
    tpu.vector_store %arg21[%c24_406, %c0_407], %687 {strides = array<i32>} : memref<72x64xf32, #tpu.memory_space<vmem>>, vector<8x64xf32>,
    %c0_408 = arith.constant 0 : index
    %c16_409 = arith.constant 16 : index
    %689 = vector.load %arg20[%c0_408, %c16_409] : memref<8x82xf32, #tpu.memory_space<vmem>>, vector<8x64xf32>
    %cst_410 = arith.constant 0.000000e+00 : f32
    %690 = vector.shape_cast %676 : vector<1x64xi1> to vector<1x64xi1>
    %691 = vector.broadcast %690 : vector<1x64xi1> to vector<8x64xi1>
    %692 = vector.broadcast %cst_410 : f32 to vector<8x64xf32>
    %693 = arith.select %691, %689, %692 : vector<8x64xi1>, vector<8x64xf32>
    %c48_411 = arith.constant 48 : index
    %c0_412 = arith.constant 0 : index
    %694 = vector.load %arg21[%c48_411, %c0_412] : memref<72x64xf32, #tpu.memory_space<vmem>>, vector<8x64xf32>
    tpu.vector_store %arg21[%c48_411, %c0_412], %693 {strides = array<i32>} : memref<72x64xf32, #tpu.memory_space<vmem>>, vector<8x64xf32>,
    %c0_413 = arith.constant 0 : index
    %c1_414 = arith.constant 1 : index
    %695 = vector.load %arg20[%c0_413, %c1_414] : memref<8x82xf32, #tpu.memory_space<vmem>>, vector<8x64xf32>
    %c8_415 = arith.constant 8 : index
    %c0_416 = arith.constant 0 : index
    %696 = vector.load %arg21[%c8_415, %c0_416] : memref<72x64xf32, #tpu.memory_space<vmem>>, vector<8x64xf32>
    tpu.vector_store %arg21[%c8_415, %c0_416], %695 {strides = array<i32>} : memref<72x64xf32, #tpu.memory_space<vmem>>, vector<8x64xf32>,
    %c0_417 = arith.constant 0 : index
    %c9_418 = arith.constant 9 : index
    %697 = vector.load %arg20[%c0_417, %c9_418] : memref<8x82xf32, #tpu.memory_space<vmem>>, vector<8x64xf32>
    %c32_419 = arith.constant 32 : index
    %c0_420 = arith.constant 0 : index
    %698 = vector.load %arg21[%c32_419, %c0_420] : memref<72x64xf32, #tpu.memory_space<vmem>>, vector<8x64xf32>
    tpu.vector_store %arg21[%c32_419, %c0_420], %697 {strides = array<i32>} : memref<72x64xf32, #tpu.memory_space<vmem>>, vector<8x64xf32>,
    %c0_421 = arith.constant 0 : index
    %c17_422 = arith.constant 17 : index
    %699 = vector.load %arg20[%c0_421, %c17_422] : memref<8x82xf32, #tpu.memory_space<vmem>>, vector<8x64xf32>
    %c56_423 = arith.constant 56 : index
    %c0_424 = arith.constant 0 : index
    %700 = vector.load %arg21[%c56_423, %c0_424] : memref<72x64xf32, #tpu.memory_space<vmem>>, vector<8x64xf32>
    tpu.vector_store %arg21[%c56_423, %c0_424], %699 {strides = array<i32>} : memref<72x64xf32, #tpu.memory_space<vmem>>, vector<8x64xf32>,
    %c1_i32_425 = arith.constant 1 : i32
    %701 = vector.broadcast %c1_i32_425 : i32 to vector<1x64xi32>
    %702 = arith.addi %662, %701 : vector<1x64xi32>
    %c0_i32_426 = arith.constant 0 : i32
    %703 = vector.broadcast %c0_i32_426 : i32 to vector<1x64xi32>
    %704 = arith.cmpi sge, %702, %703 : vector<1x64xi32>
    %c1_i32_427 = arith.constant 1 : i32
    %705 = vector.broadcast %c1_i32_427 : i32 to vector<1x64xi32>
    %706 = arith.addi %662, %705 : vector<1x64xi32>
    %c8_i32_428 = arith.constant 8 : i32
    %707 = vector.broadcast %c8_i32_428 : i32 to vector<1x64xi32>
    %708 = arith.cmpi slt, %706, %707 : vector<1x64xi32>
    %709 = arith.andi %704, %708 : vector<1x64xi1>
    %c0_429 = arith.constant 0 : index
    %c2_430 = arith.constant 2 : index
    %710 = vector.load %arg20[%c0_429, %c2_430] : memref<8x82xf32, #tpu.memory_space<vmem>>, vector<8x64xf32>
    %cst_431 = arith.constant 0.000000e+00 : f32
    %711 = vector.shape_cast %709 : vector<1x64xi1> to vector<1x64xi1>
    %712 = vector.broadcast %711 : vector<1x64xi1> to vector<8x64xi1>
    %713 = vector.broadcast %cst_431 : f32 to vector<8x64xf32>
    %714 = arith.select %712, %710, %713 : vector<8x64xi1>, vector<8x64xf32>
    %c16_432 = arith.constant 16 : index
    %c0_433 = arith.constant 0 : index
    %715 = vector.load %arg21[%c16_432, %c0_433] : memref<72x64xf32, #tpu.memory_space<vmem>>, vector<8x64xf32>
    tpu.vector_store %arg21[%c16_432, %c0_433], %714 {strides = array<i32>} : memref<72x64xf32, #tpu.memory_space<vmem>>, vector<8x64xf32>,
    %c0_434 = arith.constant 0 : index
    %c10 = arith.constant 10 : index
    %716 = vector.load %arg20[%c0_434, %c10] : memref<8x82xf32, #tpu.memory_space<vmem>>, vector<8x64xf32>
    %cst_435 = arith.constant 0.000000e+00 : f32
    %717 = vector.shape_cast %709 : vector<1x64xi1> to vector<1x64xi1>
    %718 = vector.broadcast %717 : vector<1x64xi1> to vector<8x64xi1>
    %719 = vector.broadcast %cst_435 : f32 to vector<8x64xf32>
    %720 = arith.select %718, %716, %719 : vector<8x64xi1>, vector<8x64xf32>
    %c40_436 = arith.constant 40 : index
    %c0_437 = arith.constant 0 : index
    %721 = vector.load %arg21[%c40_436, %c0_437] : memref<72x64xf32, #tpu.memory_space<vmem>>, vector<8x64xf32>
    tpu.vector_store %arg21[%c40_436, %c0_437], %720 {strides = array<i32>} : memref<72x64xf32, #tpu.memory_space<vmem>>, vector<8x64xf32>,
    %c0_438 = arith.constant 0 : index
    %c18_439 = arith.constant 18 : index
    %722 = vector.load %arg20[%c0_438, %c18_439] : memref<8x82xf32, #tpu.memory_space<vmem>>, vector<8x64xf32>
    %cst_440 = arith.constant 0.000000e+00 : f32
    %723 = vector.shape_cast %709 : vector<1x64xi1> to vector<1x64xi1>
    %724 = vector.broadcast %723 : vector<1x64xi1> to vector<8x64xi1>
    %725 = vector.broadcast %cst_440 : f32 to vector<8x64xf32>
    %726 = arith.select %724, %722, %725 : vector<8x64xi1>, vector<8x64xf32>
    %c64_441 = arith.constant 64 : index
    %c0_442 = arith.constant 0 : index
    %727 = vector.load %arg21[%c64_441, %c0_442] : memref<72x64xf32, #tpu.memory_space<vmem>>, vector<8x64xf32>
    tpu.vector_store %arg21[%c64_441, %c0_442], %726 {strides = array<i32>} : memref<72x64xf32, #tpu.memory_space<vmem>>, vector<8x64xf32>,
    %c0_443 = arith.constant 0 : index
    %c0_444 = arith.constant 0 : index
    %728 = vector.load %arg8[%c0_443, %c0_444] : memref<8x72xf32, #tpu.memory_space<vmem>>, vector<8x72xf32>
    %c0_445 = arith.constant 0 : index
    %c0_446 = arith.constant 0 : index
    %729 = vector.load %arg21[%c0_445, %c0_446] : memref<72x64xf32, #tpu.memory_space<vmem>>, vector<72x64xf32>
    %cst_447 = arith.constant dense<0.000000e+00> : vector<8x64xf32>
    %730 = tpu.matmul %728, %729, %cst_447 {dimension_numbers = #tpu.dot_dimension_numbers<[1], [0], [0], [1], [0, 0, 1, 1], [], []>} : vector<8x72xf32>, vector<72x64xf32>, vector<8x64xf32> -> vector<8x64xf32>
    %c0_448 = arith.constant 0 : index
    %c0_449 = arith.constant 0 : index
    %731 = vector.load %arg9[%c0_448, %c0_449] : memref<8x1xf32, #tpu.memory_space<vmem>>, vector<8x1xf32>
    %732 = vector.broadcast %731 : vector<8x1xf32> to vector<8x64xf32>
    %733 = arith.addf %730, %732 : vector<8x64xf32>
    %cst_450 = arith.constant 0.000000e+00 : f32
    %734 = vector.broadcast %cst_450 : f32 to vector<8x64xf32>
    %735 = arith.maximumf %733, %734 : vector<8x64xf32>
    %736 = vector.extract_strided_slice %735 {offsets = [0, 0], sizes = [4, 64], strides = [1, 1]} : vector<8x64xf32> to vector<4x64xf32>
    %c0_451 = arith.constant 0 : index
    %c0_452 = arith.constant 0 : index
    %c0_453 = arith.constant 0 : index
    %737 = vector.load %arg13[%c0_451, %c0_452, %c0_453] : memref<1x4x64xf32, #tpu.memory_space<vmem>>, vector<1x4x64xf32>
    %738 = vector.shape_cast %737 : vector<1x4x64xf32> to vector<4x64xf32>
    %739 = vector.shape_cast %736 : vector<4x64xf32> to vector<1x4x64xf32>
    tpu.vector_store %arg13[%c0_451, %c0_452, %c0_453], %739 {strides = array<i32>} : memref<1x4x64xf32, #tpu.memory_space<vmem>>, vector<1x4x64xf32>,
    %cst_454 = arith.constant 0.000000e+00 : f32
    %740 = vector.broadcast %cst_454 : f32 to vector<8x36xf32>
    %c0_455 = arith.constant 0 : index
    %c0_456 = arith.constant 0 : index
    %741 = vector.load %arg22[%c0_455, %c0_456] : memref<8x136xf32, #tpu.memory_space<vmem>>, vector<8x36xf32>
    tpu.vector_store %arg22[%c0_455, %c0_456], %740 {strides = array<i32>} : memref<8x136xf32, #tpu.memory_space<vmem>>, vector<8x36xf32>,
    %cst_457 = arith.constant 0.000000e+00 : f32
    %742 = vector.broadcast %cst_457 : f32 to vector<8x36xf32>
    %c0_458 = arith.constant 0 : index
    %c100_459 = arith.constant 100 : index
    %743 = vector.load %arg22[%c0_458, %c100_459] : memref<8x136xf32, #tpu.memory_space<vmem>>, vector<8x36xf32>
    tpu.vector_store %arg22[%c0_458, %c100_459], %742 {strides = array<i32>} : memref<8x136xf32, #tpu.memory_space<vmem>>, vector<8x36xf32>,
    %c0_460 = arith.constant 0 : index
    %c36_461 = arith.constant 36 : index
    %744 = vector.load %arg22[%c0_460, %c36_461] : memref<8x136xf32, #tpu.memory_space<vmem>>, vector<8x64xf32>
    tpu.vector_store %arg22[%c0_460, %c36_461], %735 {strides = array<i32>} : memref<8x136xf32, #tpu.memory_space<vmem>>, vector<8x64xf32>,
    %c-4_i32_462 = arith.constant -4 : i32
    %745 = vector.broadcast %c-4_i32_462 : i32 to vector<1x64xi32>
    %746 = arith.addi %662, %745 : vector<1x64xi32>
    %c0_i32_463 = arith.constant 0 : i32
    %747 = vector.broadcast %c0_i32_463 : i32 to vector<1x64xi32>
    %748 = arith.cmpi sge, %746, %747 : vector<1x64xi32>
    %c-4_i32_464 = arith.constant -4 : i32
    %749 = vector.broadcast %c-4_i32_464 : i32 to vector<1x64xi32>
    %750 = arith.addi %662, %749 : vector<1x64xi32>
    %c8_i32_465 = arith.constant 8 : i32
    %751 = vector.broadcast %c8_i32_465 : i32 to vector<1x64xi32>
    %752 = arith.cmpi slt, %750, %751 : vector<1x64xi32>
    %753 = arith.andi %748, %752 : vector<1x64xi1>
    %c0_466 = arith.constant 0 : index
    %c0_467 = arith.constant 0 : index
    %754 = vector.load %arg22[%c0_466, %c0_467] : memref<8x136xf32, #tpu.memory_space<vmem>>, vector<8x64xf32>
    %cst_468 = arith.constant 0.000000e+00 : f32
    %755 = vector.shape_cast %753 : vector<1x64xi1> to vector<1x64xi1>
    %756 = vector.broadcast %755 : vector<1x64xi1> to vector<8x64xi1>
    %757 = vector.broadcast %cst_468 : f32 to vector<8x64xf32>
    %758 = arith.select %756, %754, %757 : vector<8x64xi1>, vector<8x64xf32>
    %c0_469 = arith.constant 0 : index
    %c0_470 = arith.constant 0 : index
    %759 = vector.load %arg23[%c0_469, %c0_470] : memref<648x64xf32, #tpu.memory_space<vmem>>, vector<8x64xf32>
    tpu.vector_store %arg23[%c0_469, %c0_470], %758 {strides = array<i32>} : memref<648x64xf32, #tpu.memory_space<vmem>>, vector<8x64xf32>,
    %c0_471 = arith.constant 0 : index
    %c8_472 = arith.constant 8 : index
    %760 = vector.load %arg22[%c0_471, %c8_472] : memref<8x136xf32, #tpu.memory_space<vmem>>, vector<8x64xf32>
    %cst_473 = arith.constant 0.000000e+00 : f32
    %761 = vector.shape_cast %753 : vector<1x64xi1> to vector<1x64xi1>
    %762 = vector.broadcast %761 : vector<1x64xi1> to vector<8x64xi1>
    %763 = vector.broadcast %cst_473 : f32 to vector<8x64xf32>
    %764 = arith.select %762, %760, %763 : vector<8x64xi1>, vector<8x64xf32>
    %c72_474 = arith.constant 72 : index
    %c0_475 = arith.constant 0 : index
    %765 = vector.load %arg23[%c72_474, %c0_475] : memref<648x64xf32, #tpu.memory_space<vmem>>, vector<8x64xf32>
    tpu.vector_store %arg23[%c72_474, %c0_475], %764 {strides = array<i32>} : memref<648x64xf32, #tpu.memory_space<vmem>>, vector<8x64xf32>,
    %c0_476 = arith.constant 0 : index
    %c16_477 = arith.constant 16 : index
    %766 = vector.load %arg22[%c0_476, %c16_477] : memref<8x136xf32, #tpu.memory_space<vmem>>, vector<8x64xf32>
    %cst_478 = arith.constant 0.000000e+00 : f32
    %767 = vector.shape_cast %753 : vector<1x64xi1> to vector<1x64xi1>
    %768 = vector.broadcast %767 : vector<1x64xi1> to vector<8x64xi1>
    %769 = vector.broadcast %cst_478 : f32 to vector<8x64xf32>
    %770 = arith.select %768, %766, %769 : vector<8x64xi1>, vector<8x64xf32>
    %c144_479 = arith.constant 144 : index
    %c0_480 = arith.constant 0 : index
    %771 = vector.load %arg23[%c144_479, %c0_480] : memref<648x64xf32, #tpu.memory_space<vmem>>, vector<8x64xf32>
    tpu.vector_store %arg23[%c144_479, %c0_480], %770 {strides = array<i32>} : memref<648x64xf32, #tpu.memory_space<vmem>>, vector<8x64xf32>,
    %c0_481 = arith.constant 0 : index
    %c24_482 = arith.constant 24 : index
    %772 = vector.load %arg22[%c0_481, %c24_482] : memref<8x136xf32, #tpu.memory_space<vmem>>, vector<8x64xf32>
    %cst_483 = arith.constant 0.000000e+00 : f32
    %773 = vector.shape_cast %753 : vector<1x64xi1> to vector<1x64xi1>
    %774 = vector.broadcast %773 : vector<1x64xi1> to vector<8x64xi1>
    %775 = vector.broadcast %cst_483 : f32 to vector<8x64xf32>
    %776 = arith.select %774, %772, %775 : vector<8x64xi1>, vector<8x64xf32>
    %c216_484 = arith.constant 216 : index
    %c0_485 = arith.constant 0 : index
    %777 = vector.load %arg23[%c216_484, %c0_485] : memref<648x64xf32, #tpu.memory_space<vmem>>, vector<8x64xf32>
    tpu.vector_store %arg23[%c216_484, %c0_485], %776 {strides = array<i32>} : memref<648x64xf32, #tpu.memory_space<vmem>>, vector<8x64xf32>,
    %c0_486 = arith.constant 0 : index
    %c32_487 = arith.constant 32 : index
    %778 = vector.load %arg22[%c0_486, %c32_487] : memref<8x136xf32, #tpu.memory_space<vmem>>, vector<8x64xf32>
    %cst_488 = arith.constant 0.000000e+00 : f32
    %779 = vector.shape_cast %753 : vector<1x64xi1> to vector<1x64xi1>
    %780 = vector.broadcast %779 : vector<1x64xi1> to vector<8x64xi1>
    %781 = vector.broadcast %cst_488 : f32 to vector<8x64xf32>
    %782 = arith.select %780, %778, %781 : vector<8x64xi1>, vector<8x64xf32>
    %c288_489 = arith.constant 288 : index
    %c0_490 = arith.constant 0 : index
    %783 = vector.load %arg23[%c288_489, %c0_490] : memref<648x64xf32, #tpu.memory_space<vmem>>, vector<8x64xf32>
    tpu.vector_store %arg23[%c288_489, %c0_490], %782 {strides = array<i32>} : memref<648x64xf32, #tpu.memory_space<vmem>>, vector<8x64xf32>,
    %c0_491 = arith.constant 0 : index
    %c40_492 = arith.constant 40 : index
    %784 = vector.load %arg22[%c0_491, %c40_492] : memref<8x136xf32, #tpu.memory_space<vmem>>, vector<8x64xf32>
    %cst_493 = arith.constant 0.000000e+00 : f32
    %785 = vector.shape_cast %753 : vector<1x64xi1> to vector<1x64xi1>
    %786 = vector.broadcast %785 : vector<1x64xi1> to vector<8x64xi1>
    %787 = vector.broadcast %cst_493 : f32 to vector<8x64xf32>
    %788 = arith.select %786, %784, %787 : vector<8x64xi1>, vector<8x64xf32>
    %c360_494 = arith.constant 360 : index
    %c0_495 = arith.constant 0 : index
    %789 = vector.load %arg23[%c360_494, %c0_495] : memref<648x64xf32, #tpu.memory_space<vmem>>, vector<8x64xf32>
    tpu.vector_store %arg23[%c360_494, %c0_495], %788 {strides = array<i32>} : memref<648x64xf32, #tpu.memory_space<vmem>>, vector<8x64xf32>,
    %c0_496 = arith.constant 0 : index
    %c48_497 = arith.constant 48 : index
    %790 = vector.load %arg22[%c0_496, %c48_497] : memref<8x136xf32, #tpu.memory_space<vmem>>, vector<8x64xf32>
    %cst_498 = arith.constant 0.000000e+00 : f32
    %791 = vector.shape_cast %753 : vector<1x64xi1> to vector<1x64xi1>
    %792 = vector.broadcast %791 : vector<1x64xi1> to vector<8x64xi1>
    %793 = vector.broadcast %cst_498 : f32 to vector<8x64xf32>
    %794 = arith.select %792, %790, %793 : vector<8x64xi1>, vector<8x64xf32>
    %c432_499 = arith.constant 432 : index
    %c0_500 = arith.constant 0 : index
    %795 = vector.load %arg23[%c432_499, %c0_500] : memref<648x64xf32, #tpu.memory_space<vmem>>, vector<8x64xf32>
    tpu.vector_store %arg23[%c432_499, %c0_500], %794 {strides = array<i32>} : memref<648x64xf32, #tpu.memory_space<vmem>>, vector<8x64xf32>,
    %c0_501 = arith.constant 0 : index
    %c56_502 = arith.constant 56 : index
    %796 = vector.load %arg22[%c0_501, %c56_502] : memref<8x136xf32, #tpu.memory_space<vmem>>, vector<8x64xf32>
    %cst_503 = arith.constant 0.000000e+00 : f32
    %797 = vector.shape_cast %753 : vector<1x64xi1> to vector<1x64xi1>
    %798 = vector.broadcast %797 : vector<1x64xi1> to vector<8x64xi1>
    %799 = vector.broadcast %cst_503 : f32 to vector<8x64xf32>
    %800 = arith.select %798, %796, %799 : vector<8x64xi1>, vector<8x64xf32>
    %c504_504 = arith.constant 504 : index
    %c0_505 = arith.constant 0 : index
    %801 = vector.load %arg23[%c504_504, %c0_505] : memref<648x64xf32, #tpu.memory_space<vmem>>, vector<8x64xf32>
    tpu.vector_store %arg23[%c504_504, %c0_505], %800 {strides = array<i32>} : memref<648x64xf32, #tpu.memory_space<vmem>>, vector<8x64xf32>,
    %c0_506 = arith.constant 0 : index
    %c64_507 = arith.constant 64 : index
    %802 = vector.load %arg22[%c0_506, %c64_507] : memref<8x136xf32, #tpu.memory_space<vmem>>, vector<8x64xf32>
    %cst_508 = arith.constant 0.000000e+00 : f32
    %803 = vector.shape_cast %753 : vector<1x64xi1> to vector<1x64xi1>
    %804 = vector.broadcast %803 : vector<1x64xi1> to vector<8x64xi1>
    %805 = vector.broadcast %cst_508 : f32 to vector<8x64xf32>
    %806 = arith.select %804, %802, %805 : vector<8x64xi1>, vector<8x64xf32>
    %c576_509 = arith.constant 576 : index
    %c0_510 = arith.constant 0 : index
    %807 = vector.load %arg23[%c576_509, %c0_510] : memref<648x64xf32, #tpu.memory_space<vmem>>, vector<8x64xf32>
    tpu.vector_store %arg23[%c576_509, %c0_510], %806 {strides = array<i32>} : memref<648x64xf32, #tpu.memory_space<vmem>>, vector<8x64xf32>,
    %c-3_i32_511 = arith.constant -3 : i32
    %808 = vector.broadcast %c-3_i32_511 : i32 to vector<1x64xi32>
    %809 = arith.addi %662, %808 : vector<1x64xi32>
    %c0_i32_512 = arith.constant 0 : i32
    %810 = vector.broadcast %c0_i32_512 : i32 to vector<1x64xi32>
    %811 = arith.cmpi sge, %809, %810 : vector<1x64xi32>
    %c-3_i32_513 = arith.constant -3 : i32
    %812 = vector.broadcast %c-3_i32_513 : i32 to vector<1x64xi32>
    %813 = arith.addi %662, %812 : vector<1x64xi32>
    %c8_i32_514 = arith.constant 8 : i32
    %814 = vector.broadcast %c8_i32_514 : i32 to vector<1x64xi32>
    %815 = arith.cmpi slt, %813, %814 : vector<1x64xi32>
    %816 = arith.andi %811, %815 : vector<1x64xi1>
    %c0_515 = arith.constant 0 : index
    %c1_516 = arith.constant 1 : index
    %817 = vector.load %arg22[%c0_515, %c1_516] : memref<8x136xf32, #tpu.memory_space<vmem>>, vector<8x64xf32>
    %cst_517 = arith.constant 0.000000e+00 : f32
    %818 = vector.shape_cast %816 : vector<1x64xi1> to vector<1x64xi1>
    %819 = vector.broadcast %818 : vector<1x64xi1> to vector<8x64xi1>
    %820 = vector.broadcast %cst_517 : f32 to vector<8x64xf32>
    %821 = arith.select %819, %817, %820 : vector<8x64xi1>, vector<8x64xf32>
    %c8_518 = arith.constant 8 : index
    %c0_519 = arith.constant 0 : index
    %822 = vector.load %arg23[%c8_518, %c0_519] : memref<648x64xf32, #tpu.memory_space<vmem>>, vector<8x64xf32>
    tpu.vector_store %arg23[%c8_518, %c0_519], %821 {strides = array<i32>} : memref<648x64xf32, #tpu.memory_space<vmem>>, vector<8x64xf32>,
    %c0_520 = arith.constant 0 : index
    %c9_521 = arith.constant 9 : index
    %823 = vector.load %arg22[%c0_520, %c9_521] : memref<8x136xf32, #tpu.memory_space<vmem>>, vector<8x64xf32>
    %cst_522 = arith.constant 0.000000e+00 : f32
    %824 = vector.shape_cast %816 : vector<1x64xi1> to vector<1x64xi1>
    %825 = vector.broadcast %824 : vector<1x64xi1> to vector<8x64xi1>
    %826 = vector.broadcast %cst_522 : f32 to vector<8x64xf32>
    %827 = arith.select %825, %823, %826 : vector<8x64xi1>, vector<8x64xf32>
    %c80_523 = arith.constant 80 : index
    %c0_524 = arith.constant 0 : index
    %828 = vector.load %arg23[%c80_523, %c0_524] : memref<648x64xf32, #tpu.memory_space<vmem>>, vector<8x64xf32>
    tpu.vector_store %arg23[%c80_523, %c0_524], %827 {strides = array<i32>} : memref<648x64xf32, #tpu.memory_space<vmem>>, vector<8x64xf32>,
    %c0_525 = arith.constant 0 : index
    %c17_526 = arith.constant 17 : index
    %829 = vector.load %arg22[%c0_525, %c17_526] : memref<8x136xf32, #tpu.memory_space<vmem>>, vector<8x64xf32>
    %cst_527 = arith.constant 0.000000e+00 : f32
    %830 = vector.shape_cast %816 : vector<1x64xi1> to vector<1x64xi1>
    %831 = vector.broadcast %830 : vector<1x64xi1> to vector<8x64xi1>
    %832 = vector.broadcast %cst_527 : f32 to vector<8x64xf32>
    %833 = arith.select %831, %829, %832 : vector<8x64xi1>, vector<8x64xf32>
    %c152_528 = arith.constant 152 : index
    %c0_529 = arith.constant 0 : index
    %834 = vector.load %arg23[%c152_528, %c0_529] : memref<648x64xf32, #tpu.memory_space<vmem>>, vector<8x64xf32>
    tpu.vector_store %arg23[%c152_528, %c0_529], %833 {strides = array<i32>} : memref<648x64xf32, #tpu.memory_space<vmem>>, vector<8x64xf32>,
    %c0_530 = arith.constant 0 : index
    %c25 = arith.constant 25 : index
    %835 = vector.load %arg22[%c0_530, %c25] : memref<8x136xf32, #tpu.memory_space<vmem>>, vector<8x64xf32>
    %cst_531 = arith.constant 0.000000e+00 : f32
    %836 = vector.shape_cast %816 : vector<1x64xi1> to vector<1x64xi1>
    %837 = vector.broadcast %836 : vector<1x64xi1> to vector<8x64xi1>
    %838 = vector.broadcast %cst_531 : f32 to vector<8x64xf32>
    %839 = arith.select %837, %835, %838 : vector<8x64xi1>, vector<8x64xf32>
    %c224_532 = arith.constant 224 : index
    %c0_533 = arith.constant 0 : index
    %840 = vector.load %arg23[%c224_532, %c0_533] : memref<648x64xf32, #tpu.memory_space<vmem>>, vector<8x64xf32>
    tpu.vector_store %arg23[%c224_532, %c0_533], %839 {strides = array<i32>} : memref<648x64xf32, #tpu.memory_space<vmem>>, vector<8x64xf32>,
    %c0_534 = arith.constant 0 : index
    %c33_535 = arith.constant 33 : index
    %841 = vector.load %arg22[%c0_534, %c33_535] : memref<8x136xf32, #tpu.memory_space<vmem>>, vector<8x64xf32>
    %cst_536 = arith.constant 0.000000e+00 : f32
    %842 = vector.shape_cast %816 : vector<1x64xi1> to vector<1x64xi1>
    %843 = vector.broadcast %842 : vector<1x64xi1> to vector<8x64xi1>
    %844 = vector.broadcast %cst_536 : f32 to vector<8x64xf32>
    %845 = arith.select %843, %841, %844 : vector<8x64xi1>, vector<8x64xf32>
    %c296_537 = arith.constant 296 : index
    %c0_538 = arith.constant 0 : index
    %846 = vector.load %arg23[%c296_537, %c0_538] : memref<648x64xf32, #tpu.memory_space<vmem>>, vector<8x64xf32>
    tpu.vector_store %arg23[%c296_537, %c0_538], %845 {strides = array<i32>} : memref<648x64xf32, #tpu.memory_space<vmem>>, vector<8x64xf32>,
    %c0_539 = arith.constant 0 : index
    %c41 = arith.constant 41 : index
    %847 = vector.load %arg22[%c0_539, %c41] : memref<8x136xf32, #tpu.memory_space<vmem>>, vector<8x64xf32>
    %cst_540 = arith.constant 0.000000e+00 : f32
    %848 = vector.shape_cast %816 : vector<1x64xi1> to vector<1x64xi1>
    %849 = vector.broadcast %848 : vector<1x64xi1> to vector<8x64xi1>
    %850 = vector.broadcast %cst_540 : f32 to vector<8x64xf32>
    %851 = arith.select %849, %847, %850 : vector<8x64xi1>, vector<8x64xf32>
    %c368_541 = arith.constant 368 : index
    %c0_542 = arith.constant 0 : index
    %852 = vector.load %arg23[%c368_541, %c0_542] : memref<648x64xf32, #tpu.memory_space<vmem>>, vector<8x64xf32>
    tpu.vector_store %arg23[%c368_541, %c0_542], %851 {strides = array<i32>} : memref<648x64xf32, #tpu.memory_space<vmem>>, vector<8x64xf32>,
    %c0_543 = arith.constant 0 : index
    %c49_544 = arith.constant 49 : index
    %853 = vector.load %arg22[%c0_543, %c49_544] : memref<8x136xf32, #tpu.memory_space<vmem>>, vector<8x64xf32>
    %cst_545 = arith.constant 0.000000e+00 : f32
    %854 = vector.shape_cast %816 : vector<1x64xi1> to vector<1x64xi1>
    %855 = vector.broadcast %854 : vector<1x64xi1> to vector<8x64xi1>
    %856 = vector.broadcast %cst_545 : f32 to vector<8x64xf32>
    %857 = arith.select %855, %853, %856 : vector<8x64xi1>, vector<8x64xf32>
    %c440_546 = arith.constant 440 : index
    %c0_547 = arith.constant 0 : index
    %858 = vector.load %arg23[%c440_546, %c0_547] : memref<648x64xf32, #tpu.memory_space<vmem>>, vector<8x64xf32>
    tpu.vector_store %arg23[%c440_546, %c0_547], %857 {strides = array<i32>} : memref<648x64xf32, #tpu.memory_space<vmem>>, vector<8x64xf32>,
    %c0_548 = arith.constant 0 : index
    %c57 = arith.constant 57 : index
    %859 = vector.load %arg22[%c0_548, %c57] : memref<8x136xf32, #tpu.memory_space<vmem>>, vector<8x64xf32>
    %cst_549 = arith.constant 0.000000e+00 : f32
    %860 = vector.shape_cast %816 : vector<1x64xi1> to vector<1x64xi1>
    %861 = vector.broadcast %860 : vector<1x64xi1> to vector<8x64xi1>
    %862 = vector.broadcast %cst_549 : f32 to vector<8x64xf32>
    %863 = arith.select %861, %859, %862 : vector<8x64xi1>, vector<8x64xf32>
    %c512_550 = arith.constant 512 : index
    %c0_551 = arith.constant 0 : index
    %864 = vector.load %arg23[%c512_550, %c0_551] : memref<648x64xf32, #tpu.memory_space<vmem>>, vector<8x64xf32>
    tpu.vector_store %arg23[%c512_550, %c0_551], %863 {strides = array<i32>} : memref<648x64xf32, #tpu.memory_space<vmem>>, vector<8x64xf32>,
    %c0_552 = arith.constant 0 : index
    %c65_553 = arith.constant 65 : index
    %865 = vector.load %arg22[%c0_552, %c65_553] : memref<8x136xf32, #tpu.memory_space<vmem>>, vector<8x64xf32>
    %cst_554 = arith.constant 0.000000e+00 : f32
    %866 = vector.shape_cast %816 : vector<1x64xi1> to vector<1x64xi1>
    %867 = vector.broadcast %866 : vector<1x64xi1> to vector<8x64xi1>
    %868 = vector.broadcast %cst_554 : f32 to vector<8x64xf32>
    %869 = arith.select %867, %865, %868 : vector<8x64xi1>, vector<8x64xf32>
    %c584_555 = arith.constant 584 : index
    %c0_556 = arith.constant 0 : index
    %870 = vector.load %arg23[%c584_555, %c0_556] : memref<648x64xf32, #tpu.memory_space<vmem>>, vector<8x64xf32>
    tpu.vector_store %arg23[%c584_555, %c0_556], %869 {strides = array<i32>} : memref<648x64xf32, #tpu.memory_space<vmem>>, vector<8x64xf32>,
    %c-2_i32_557 = arith.constant -2 : i32
    %871 = vector.broadcast %c-2_i32_557 : i32 to vector<1x64xi32>
    %872 = arith.addi %662, %871 : vector<1x64xi32>
    %c0_i32_558 = arith.constant 0 : i32
    %873 = vector.broadcast %c0_i32_558 : i32 to vector<1x64xi32>
    %874 = arith.cmpi sge, %872, %873 : vector<1x64xi32>
    %c-2_i32_559 = arith.constant -2 : i32
    %875 = vector.broadcast %c-2_i32_559 : i32 to vector<1x64xi32>
    %876 = arith.addi %662, %875 : vector<1x64xi32>
    %c8_i32_560 = arith.constant 8 : i32
    %877 = vector.broadcast %c8_i32_560 : i32 to vector<1x64xi32>
    %878 = arith.cmpi slt, %876, %877 : vector<1x64xi32>
    %879 = arith.andi %874, %878 : vector<1x64xi1>
    %c0_561 = arith.constant 0 : index
    %c2_562 = arith.constant 2 : index
    %880 = vector.load %arg22[%c0_561, %c2_562] : memref<8x136xf32, #tpu.memory_space<vmem>>, vector<8x64xf32>
    %cst_563 = arith.constant 0.000000e+00 : f32
    %881 = vector.shape_cast %879 : vector<1x64xi1> to vector<1x64xi1>
    %882 = vector.broadcast %881 : vector<1x64xi1> to vector<8x64xi1>
    %883 = vector.broadcast %cst_563 : f32 to vector<8x64xf32>
    %884 = arith.select %882, %880, %883 : vector<8x64xi1>, vector<8x64xf32>
    %c16_564 = arith.constant 16 : index
    %c0_565 = arith.constant 0 : index
    %885 = vector.load %arg23[%c16_564, %c0_565] : memref<648x64xf32, #tpu.memory_space<vmem>>, vector<8x64xf32>
    tpu.vector_store %arg23[%c16_564, %c0_565], %884 {strides = array<i32>} : memref<648x64xf32, #tpu.memory_space<vmem>>, vector<8x64xf32>,
    %c0_566 = arith.constant 0 : index
    %c10_567 = arith.constant 10 : index
    %886 = vector.load %arg22[%c0_566, %c10_567] : memref<8x136xf32, #tpu.memory_space<vmem>>, vector<8x64xf32>
    %cst_568 = arith.constant 0.000000e+00 : f32
    %887 = vector.shape_cast %879 : vector<1x64xi1> to vector<1x64xi1>
    %888 = vector.broadcast %887 : vector<1x64xi1> to vector<8x64xi1>
    %889 = vector.broadcast %cst_568 : f32 to vector<8x64xf32>
    %890 = arith.select %888, %886, %889 : vector<8x64xi1>, vector<8x64xf32>
    %c88_569 = arith.constant 88 : index
    %c0_570 = arith.constant 0 : index
    %891 = vector.load %arg23[%c88_569, %c0_570] : memref<648x64xf32, #tpu.memory_space<vmem>>, vector<8x64xf32>
    tpu.vector_store %arg23[%c88_569, %c0_570], %890 {strides = array<i32>} : memref<648x64xf32, #tpu.memory_space<vmem>>, vector<8x64xf32>,
    %c0_571 = arith.constant 0 : index
    %c18_572 = arith.constant 18 : index
    %892 = vector.load %arg22[%c0_571, %c18_572] : memref<8x136xf32, #tpu.memory_space<vmem>>, vector<8x64xf32>
    %cst_573 = arith.constant 0.000000e+00 : f32
    %893 = vector.shape_cast %879 : vector<1x64xi1> to vector<1x64xi1>
    %894 = vector.broadcast %893 : vector<1x64xi1> to vector<8x64xi1>
    %895 = vector.broadcast %cst_573 : f32 to vector<8x64xf32>
    %896 = arith.select %894, %892, %895 : vector<8x64xi1>, vector<8x64xf32>
    %c160_574 = arith.constant 160 : index
    %c0_575 = arith.constant 0 : index
    %897 = vector.load %arg23[%c160_574, %c0_575] : memref<648x64xf32, #tpu.memory_space<vmem>>, vector<8x64xf32>
    tpu.vector_store %arg23[%c160_574, %c0_575], %896 {strides = array<i32>} : memref<648x64xf32, #tpu.memory_space<vmem>>, vector<8x64xf32>,
    %c0_576 = arith.constant 0 : index
    %c26 = arith.constant 26 : index
    %898 = vector.load %arg22[%c0_576, %c26] : memref<8x136xf32, #tpu.memory_space<vmem>>, vector<8x64xf32>
    %cst_577 = arith.constant 0.000000e+00 : f32
    %899 = vector.shape_cast %879 : vector<1x64xi1> to vector<1x64xi1>
    %900 = vector.broadcast %899 : vector<1x64xi1> to vector<8x64xi1>
    %901 = vector.broadcast %cst_577 : f32 to vector<8x64xf32>
    %902 = arith.select %900, %898, %901 : vector<8x64xi1>, vector<8x64xf32>
    %c232_578 = arith.constant 232 : index
    %c0_579 = arith.constant 0 : index
    %903 = vector.load %arg23[%c232_578, %c0_579] : memref<648x64xf32, #tpu.memory_space<vmem>>, vector<8x64xf32>
    tpu.vector_store %arg23[%c232_578, %c0_579], %902 {strides = array<i32>} : memref<648x64xf32, #tpu.memory_space<vmem>>, vector<8x64xf32>,
    %c0_580 = arith.constant 0 : index
    %c34_581 = arith.constant 34 : index
    %904 = vector.load %arg22[%c0_580, %c34_581] : memref<8x136xf32, #tpu.memory_space<vmem>>, vector<8x64xf32>
    %cst_582 = arith.constant 0.000000e+00 : f32
    %905 = vector.shape_cast %879 : vector<1x64xi1> to vector<1x64xi1>
    %906 = vector.broadcast %905 : vector<1x64xi1> to vector<8x64xi1>
    %907 = vector.broadcast %cst_582 : f32 to vector<8x64xf32>
    %908 = arith.select %906, %904, %907 : vector<8x64xi1>, vector<8x64xf32>
    %c304_583 = arith.constant 304 : index
    %c0_584 = arith.constant 0 : index
    %909 = vector.load %arg23[%c304_583, %c0_584] : memref<648x64xf32, #tpu.memory_space<vmem>>, vector<8x64xf32>
    tpu.vector_store %arg23[%c304_583, %c0_584], %908 {strides = array<i32>} : memref<648x64xf32, #tpu.memory_space<vmem>>, vector<8x64xf32>,
    %c0_585 = arith.constant 0 : index
    %c42 = arith.constant 42 : index
    %910 = vector.load %arg22[%c0_585, %c42] : memref<8x136xf32, #tpu.memory_space<vmem>>, vector<8x64xf32>
    %cst_586 = arith.constant 0.000000e+00 : f32
    %911 = vector.shape_cast %879 : vector<1x64xi1> to vector<1x64xi1>
    %912 = vector.broadcast %911 : vector<1x64xi1> to vector<8x64xi1>
    %913 = vector.broadcast %cst_586 : f32 to vector<8x64xf32>
    %914 = arith.select %912, %910, %913 : vector<8x64xi1>, vector<8x64xf32>
    %c376_587 = arith.constant 376 : index
    %c0_588 = arith.constant 0 : index
    %915 = vector.load %arg23[%c376_587, %c0_588] : memref<648x64xf32, #tpu.memory_space<vmem>>, vector<8x64xf32>
    tpu.vector_store %arg23[%c376_587, %c0_588], %914 {strides = array<i32>} : memref<648x64xf32, #tpu.memory_space<vmem>>, vector<8x64xf32>,
    %c0_589 = arith.constant 0 : index
    %c50_590 = arith.constant 50 : index
    %916 = vector.load %arg22[%c0_589, %c50_590] : memref<8x136xf32, #tpu.memory_space<vmem>>, vector<8x64xf32>
    %cst_591 = arith.constant 0.000000e+00 : f32
    %917 = vector.shape_cast %879 : vector<1x64xi1> to vector<1x64xi1>
    %918 = vector.broadcast %917 : vector<1x64xi1> to vector<8x64xi1>
    %919 = vector.broadcast %cst_591 : f32 to vector<8x64xf32>
    %920 = arith.select %918, %916, %919 : vector<8x64xi1>, vector<8x64xf32>
    %c448_592 = arith.constant 448 : index
    %c0_593 = arith.constant 0 : index
    %921 = vector.load %arg23[%c448_592, %c0_593] : memref<648x64xf32, #tpu.memory_space<vmem>>, vector<8x64xf32>
    tpu.vector_store %arg23[%c448_592, %c0_593], %920 {strides = array<i32>} : memref<648x64xf32, #tpu.memory_space<vmem>>, vector<8x64xf32>,
    %c0_594 = arith.constant 0 : index
    %c58 = arith.constant 58 : index
    %922 = vector.load %arg22[%c0_594, %c58] : memref<8x136xf32, #tpu.memory_space<vmem>>, vector<8x64xf32>
    %cst_595 = arith.constant 0.000000e+00 : f32
    %923 = vector.shape_cast %879 : vector<1x64xi1> to vector<1x64xi1>
    %924 = vector.broadcast %923 : vector<1x64xi1> to vector<8x64xi1>
    %925 = vector.broadcast %cst_595 : f32 to vector<8x64xf32>
    %926 = arith.select %924, %922, %925 : vector<8x64xi1>, vector<8x64xf32>
    %c520_596 = arith.constant 520 : index
    %c0_597 = arith.constant 0 : index
    %927 = vector.load %arg23[%c520_596, %c0_597] : memref<648x64xf32, #tpu.memory_space<vmem>>, vector<8x64xf32>
    tpu.vector_store %arg23[%c520_596, %c0_597], %926 {strides = array<i32>} : memref<648x64xf32, #tpu.memory_space<vmem>>, vector<8x64xf32>,
    %c0_598 = arith.constant 0 : index
    %c66_599 = arith.constant 66 : index
    %928 = vector.load %arg22[%c0_598, %c66_599] : memref<8x136xf32, #tpu.memory_space<vmem>>, vector<8x64xf32>
    %cst_600 = arith.constant 0.000000e+00 : f32
    %929 = vector.shape_cast %879 : vector<1x64xi1> to vector<1x64xi1>
    %930 = vector.broadcast %929 : vector<1x64xi1> to vector<8x64xi1>
    %931 = vector.broadcast %cst_600 : f32 to vector<8x64xf32>
    %932 = arith.select %930, %928, %931 : vector<8x64xi1>, vector<8x64xf32>
    %c592_601 = arith.constant 592 : index
    %c0_602 = arith.constant 0 : index
    %933 = vector.load %arg23[%c592_601, %c0_602] : memref<648x64xf32, #tpu.memory_space<vmem>>, vector<8x64xf32>
    tpu.vector_store %arg23[%c592_601, %c0_602], %932 {strides = array<i32>} : memref<648x64xf32, #tpu.memory_space<vmem>>, vector<8x64xf32>,
    %c-1_i32_603 = arith.constant -1 : i32
    %934 = vector.broadcast %c-1_i32_603 : i32 to vector<1x64xi32>
    %935 = arith.addi %662, %934 : vector<1x64xi32>
    %c0_i32_604 = arith.constant 0 : i32
    %936 = vector.broadcast %c0_i32_604 : i32 to vector<1x64xi32>
    %937 = arith.cmpi sge, %935, %936 : vector<1x64xi32>
    %c-1_i32_605 = arith.constant -1 : i32
    %938 = vector.broadcast %c-1_i32_605 : i32 to vector<1x64xi32>
    %939 = arith.addi %662, %938 : vector<1x64xi32>
    %c8_i32_606 = arith.constant 8 : i32
    %940 = vector.broadcast %c8_i32_606 : i32 to vector<1x64xi32>
    %941 = arith.cmpi slt, %939, %940 : vector<1x64xi32>
    %942 = arith.andi %937, %941 : vector<1x64xi1>
    %c0_607 = arith.constant 0 : index
    %c3_608 = arith.constant 3 : index
    %943 = vector.load %arg22[%c0_607, %c3_608] : memref<8x136xf32, #tpu.memory_space<vmem>>, vector<8x64xf32>
    %cst_609 = arith.constant 0.000000e+00 : f32
    %944 = vector.shape_cast %942 : vector<1x64xi1> to vector<1x64xi1>
    %945 = vector.broadcast %944 : vector<1x64xi1> to vector<8x64xi1>
    %946 = vector.broadcast %cst_609 : f32 to vector<8x64xf32>
    %947 = arith.select %945, %943, %946 : vector<8x64xi1>, vector<8x64xf32>
    %c24_610 = arith.constant 24 : index
    %c0_611 = arith.constant 0 : index
    %948 = vector.load %arg23[%c24_610, %c0_611] : memref<648x64xf32, #tpu.memory_space<vmem>>, vector<8x64xf32>
    tpu.vector_store %arg23[%c24_610, %c0_611], %947 {strides = array<i32>} : memref<648x64xf32, #tpu.memory_space<vmem>>, vector<8x64xf32>,
    %c0_612 = arith.constant 0 : index
    %c11 = arith.constant 11 : index
    %949 = vector.load %arg22[%c0_612, %c11] : memref<8x136xf32, #tpu.memory_space<vmem>>, vector<8x64xf32>
    %cst_613 = arith.constant 0.000000e+00 : f32
    %950 = vector.shape_cast %942 : vector<1x64xi1> to vector<1x64xi1>
    %951 = vector.broadcast %950 : vector<1x64xi1> to vector<8x64xi1>
    %952 = vector.broadcast %cst_613 : f32 to vector<8x64xf32>
    %953 = arith.select %951, %949, %952 : vector<8x64xi1>, vector<8x64xf32>
    %c96_614 = arith.constant 96 : index
    %c0_615 = arith.constant 0 : index
    %954 = vector.load %arg23[%c96_614, %c0_615] : memref<648x64xf32, #tpu.memory_space<vmem>>, vector<8x64xf32>
    tpu.vector_store %arg23[%c96_614, %c0_615], %953 {strides = array<i32>} : memref<648x64xf32, #tpu.memory_space<vmem>>, vector<8x64xf32>,
    %c0_616 = arith.constant 0 : index
    %c19_617 = arith.constant 19 : index
    %955 = vector.load %arg22[%c0_616, %c19_617] : memref<8x136xf32, #tpu.memory_space<vmem>>, vector<8x64xf32>
    %cst_618 = arith.constant 0.000000e+00 : f32
    %956 = vector.shape_cast %942 : vector<1x64xi1> to vector<1x64xi1>
    %957 = vector.broadcast %956 : vector<1x64xi1> to vector<8x64xi1>
    %958 = vector.broadcast %cst_618 : f32 to vector<8x64xf32>
    %959 = arith.select %957, %955, %958 : vector<8x64xi1>, vector<8x64xf32>
    %c168_619 = arith.constant 168 : index
    %c0_620 = arith.constant 0 : index
    %960 = vector.load %arg23[%c168_619, %c0_620] : memref<648x64xf32, #tpu.memory_space<vmem>>, vector<8x64xf32>
    tpu.vector_store %arg23[%c168_619, %c0_620], %959 {strides = array<i32>} : memref<648x64xf32, #tpu.memory_space<vmem>>, vector<8x64xf32>,
    %c0_621 = arith.constant 0 : index
    %c27 = arith.constant 27 : index
    %961 = vector.load %arg22[%c0_621, %c27] : memref<8x136xf32, #tpu.memory_space<vmem>>, vector<8x64xf32>
    %cst_622 = arith.constant 0.000000e+00 : f32
    %962 = vector.shape_cast %942 : vector<1x64xi1> to vector<1x64xi1>
    %963 = vector.broadcast %962 : vector<1x64xi1> to vector<8x64xi1>
    %964 = vector.broadcast %cst_622 : f32 to vector<8x64xf32>
    %965 = arith.select %963, %961, %964 : vector<8x64xi1>, vector<8x64xf32>
    %c240_623 = arith.constant 240 : index
    %c0_624 = arith.constant 0 : index
    %966 = vector.load %arg23[%c240_623, %c0_624] : memref<648x64xf32, #tpu.memory_space<vmem>>, vector<8x64xf32>
    tpu.vector_store %arg23[%c240_623, %c0_624], %965 {strides = array<i32>} : memref<648x64xf32, #tpu.memory_space<vmem>>, vector<8x64xf32>,
    %c0_625 = arith.constant 0 : index
    %c35_626 = arith.constant 35 : index
    %967 = vector.load %arg22[%c0_625, %c35_626] : memref<8x136xf32, #tpu.memory_space<vmem>>, vector<8x64xf32>
    %cst_627 = arith.constant 0.000000e+00 : f32
    %968 = vector.shape_cast %942 : vector<1x64xi1> to vector<1x64xi1>
    %969 = vector.broadcast %968 : vector<1x64xi1> to vector<8x64xi1>
    %970 = vector.broadcast %cst_627 : f32 to vector<8x64xf32>
    %971 = arith.select %969, %967, %970 : vector<8x64xi1>, vector<8x64xf32>
    %c312_628 = arith.constant 312 : index
    %c0_629 = arith.constant 0 : index
    %972 = vector.load %arg23[%c312_628, %c0_629] : memref<648x64xf32, #tpu.memory_space<vmem>>, vector<8x64xf32>
    tpu.vector_store %arg23[%c312_628, %c0_629], %971 {strides = array<i32>} : memref<648x64xf32, #tpu.memory_space<vmem>>, vector<8x64xf32>,
    %c0_630 = arith.constant 0 : index
    %c43 = arith.constant 43 : index
    %973 = vector.load %arg22[%c0_630, %c43] : memref<8x136xf32, #tpu.memory_space<vmem>>, vector<8x64xf32>
    %cst_631 = arith.constant 0.000000e+00 : f32
    %974 = vector.shape_cast %942 : vector<1x64xi1> to vector<1x64xi1>
    %975 = vector.broadcast %974 : vector<1x64xi1> to vector<8x64xi1>
    %976 = vector.broadcast %cst_631 : f32 to vector<8x64xf32>
    %977 = arith.select %975, %973, %976 : vector<8x64xi1>, vector<8x64xf32>
    %c384_632 = arith.constant 384 : index
    %c0_633 = arith.constant 0 : index
    %978 = vector.load %arg23[%c384_632, %c0_633] : memref<648x64xf32, #tpu.memory_space<vmem>>, vector<8x64xf32>
    tpu.vector_store %arg23[%c384_632, %c0_633], %977 {strides = array<i32>} : memref<648x64xf32, #tpu.memory_space<vmem>>, vector<8x64xf32>,
    %c0_634 = arith.constant 0 : index
    %c51_635 = arith.constant 51 : index
    %979 = vector.load %arg22[%c0_634, %c51_635] : memref<8x136xf32, #tpu.memory_space<vmem>>, vector<8x64xf32>
    %cst_636 = arith.constant 0.000000e+00 : f32
    %980 = vector.shape_cast %942 : vector<1x64xi1> to vector<1x64xi1>
    %981 = vector.broadcast %980 : vector<1x64xi1> to vector<8x64xi1>
    %982 = vector.broadcast %cst_636 : f32 to vector<8x64xf32>
    %983 = arith.select %981, %979, %982 : vector<8x64xi1>, vector<8x64xf32>
    %c456_637 = arith.constant 456 : index
    %c0_638 = arith.constant 0 : index
    %984 = vector.load %arg23[%c456_637, %c0_638] : memref<648x64xf32, #tpu.memory_space<vmem>>, vector<8x64xf32>
    tpu.vector_store %arg23[%c456_637, %c0_638], %983 {strides = array<i32>} : memref<648x64xf32, #tpu.memory_space<vmem>>, vector<8x64xf32>,
    %c0_639 = arith.constant 0 : index
    %c59 = arith.constant 59 : index
    %985 = vector.load %arg22[%c0_639, %c59] : memref<8x136xf32, #tpu.memory_space<vmem>>, vector<8x64xf32>
    %cst_640 = arith.constant 0.000000e+00 : f32
    %986 = vector.shape_cast %942 : vector<1x64xi1> to vector<1x64xi1>
    %987 = vector.broadcast %986 : vector<1x64xi1> to vector<8x64xi1>
    %988 = vector.broadcast %cst_640 : f32 to vector<8x64xf32>
    %989 = arith.select %987, %985, %988 : vector<8x64xi1>, vector<8x64xf32>
    %c528_641 = arith.constant 528 : index
    %c0_642 = arith.constant 0 : index
    %990 = vector.load %arg23[%c528_641, %c0_642] : memref<648x64xf32, #tpu.memory_space<vmem>>, vector<8x64xf32>
    tpu.vector_store %arg23[%c528_641, %c0_642], %989 {strides = array<i32>} : memref<648x64xf32, #tpu.memory_space<vmem>>, vector<8x64xf32>,
    %c0_643 = arith.constant 0 : index
    %c67_644 = arith.constant 67 : index
    %991 = vector.load %arg22[%c0_643, %c67_644] : memref<8x136xf32, #tpu.memory_space<vmem>>, vector<8x64xf32>
    %cst_645 = arith.constant 0.000000e+00 : f32
    %992 = vector.shape_cast %942 : vector<1x64xi1> to vector<1x64xi1>
    %993 = vector.broadcast %992 : vector<1x64xi1> to vector<8x64xi1>
    %994 = vector.broadcast %cst_645 : f32 to vector<8x64xf32>
    %995 = arith.select %993, %991, %994 : vector<8x64xi1>, vector<8x64xf32>
    %c600_646 = arith.constant 600 : index
    %c0_647 = arith.constant 0 : index
    %996 = vector.load %arg23[%c600_646, %c0_647] : memref<648x64xf32, #tpu.memory_space<vmem>>, vector<8x64xf32>
    tpu.vector_store %arg23[%c600_646, %c0_647], %995 {strides = array<i32>} : memref<648x64xf32, #tpu.memory_space<vmem>>, vector<8x64xf32>,
    %c0_648 = arith.constant 0 : index
    %c4_649 = arith.constant 4 : index
    %997 = vector.load %arg22[%c0_648, %c4_649] : memref<8x136xf32, #tpu.memory_space<vmem>>, vector<8x64xf32>
    %c32_650 = arith.constant 32 : index
    %c0_651 = arith.constant 0 : index
    %998 = vector.load %arg23[%c32_650, %c0_651] : memref<648x64xf32, #tpu.memory_space<vmem>>, vector<8x64xf32>
    tpu.vector_store %arg23[%c32_650, %c0_651], %997 {strides = array<i32>} : memref<648x64xf32, #tpu.memory_space<vmem>>, vector<8x64xf32>,
    %c0_652 = arith.constant 0 : index
    %c12 = arith.constant 12 : index
    %999 = vector.load %arg22[%c0_652, %c12] : memref<8x136xf32, #tpu.memory_space<vmem>>, vector<8x64xf32>
    %c104_653 = arith.constant 104 : index
    %c0_654 = arith.constant 0 : index
    %1000 = vector.load %arg23[%c104_653, %c0_654] : memref<648x64xf32, #tpu.memory_space<vmem>>, vector<8x64xf32>
    tpu.vector_store %arg23[%c104_653, %c0_654], %999 {strides = array<i32>} : memref<648x64xf32, #tpu.memory_space<vmem>>, vector<8x64xf32>,
    %c0_655 = arith.constant 0 : index
    %c20_656 = arith.constant 20 : index
    %1001 = vector.load %arg22[%c0_655, %c20_656] : memref<8x136xf32, #tpu.memory_space<vmem>>, vector<8x64xf32>
    %c176_657 = arith.constant 176 : index
    %c0_658 = arith.constant 0 : index
    %1002 = vector.load %arg23[%c176_657, %c0_658] : memref<648x64xf32, #tpu.memory_space<vmem>>, vector<8x64xf32>
    tpu.vector_store %arg23[%c176_657, %c0_658], %1001 {strides = array<i32>} : memref<648x64xf32, #tpu.memory_space<vmem>>, vector<8x64xf32>,
    %c0_659 = arith.constant 0 : index
    %c28 = arith.constant 28 : index
    %1003 = vector.load %arg22[%c0_659, %c28] : memref<8x136xf32, #tpu.memory_space<vmem>>, vector<8x64xf32>
    %c248_660 = arith.constant 248 : index
    %c0_661 = arith.constant 0 : index
    %1004 = vector.load %arg23[%c248_660, %c0_661] : memref<648x64xf32, #tpu.memory_space<vmem>>, vector<8x64xf32>
    tpu.vector_store %arg23[%c248_660, %c0_661], %1003 {strides = array<i32>} : memref<648x64xf32, #tpu.memory_space<vmem>>, vector<8x64xf32>,
    %c0_662 = arith.constant 0 : index
    %c36_663 = arith.constant 36 : index
    %1005 = vector.load %arg22[%c0_662, %c36_663] : memref<8x136xf32, #tpu.memory_space<vmem>>, vector<8x64xf32>
    %c320_664 = arith.constant 320 : index
    %c0_665 = arith.constant 0 : index
    %1006 = vector.load %arg23[%c320_664, %c0_665] : memref<648x64xf32, #tpu.memory_space<vmem>>, vector<8x64xf32>
    tpu.vector_store %arg23[%c320_664, %c0_665], %1005 {strides = array<i32>} : memref<648x64xf32, #tpu.memory_space<vmem>>, vector<8x64xf32>,
    %c0_666 = arith.constant 0 : index
    %c44 = arith.constant 44 : index
    %1007 = vector.load %arg22[%c0_666, %c44] : memref<8x136xf32, #tpu.memory_space<vmem>>, vector<8x64xf32>
    %c392_667 = arith.constant 392 : index
    %c0_668 = arith.constant 0 : index
    %1008 = vector.load %arg23[%c392_667, %c0_668] : memref<648x64xf32, #tpu.memory_space<vmem>>, vector<8x64xf32>
    tpu.vector_store %arg23[%c392_667, %c0_668], %1007 {strides = array<i32>} : memref<648x64xf32, #tpu.memory_space<vmem>>, vector<8x64xf32>,
    %c0_669 = arith.constant 0 : index
    %c52_670 = arith.constant 52 : index
    %1009 = vector.load %arg22[%c0_669, %c52_670] : memref<8x136xf32, #tpu.memory_space<vmem>>, vector<8x64xf32>
    %c464_671 = arith.constant 464 : index
    %c0_672 = arith.constant 0 : index
    %1010 = vector.load %arg23[%c464_671, %c0_672] : memref<648x64xf32, #tpu.memory_space<vmem>>, vector<8x64xf32>
    tpu.vector_store %arg23[%c464_671, %c0_672], %1009 {strides = array<i32>} : memref<648x64xf32, #tpu.memory_space<vmem>>, vector<8x64xf32>,
    %c0_673 = arith.constant 0 : index
    %c60 = arith.constant 60 : index
    %1011 = vector.load %arg22[%c0_673, %c60] : memref<8x136xf32, #tpu.memory_space<vmem>>, vector<8x64xf32>
    %c536_674 = arith.constant 536 : index
    %c0_675 = arith.constant 0 : index
    %1012 = vector.load %arg23[%c536_674, %c0_675] : memref<648x64xf32, #tpu.memory_space<vmem>>, vector<8x64xf32>
    tpu.vector_store %arg23[%c536_674, %c0_675], %1011 {strides = array<i32>} : memref<648x64xf32, #tpu.memory_space<vmem>>, vector<8x64xf32>,
    %c0_676 = arith.constant 0 : index
    %c68_677 = arith.constant 68 : index
    %1013 = vector.load %arg22[%c0_676, %c68_677] : memref<8x136xf32, #tpu.memory_space<vmem>>, vector<8x64xf32>
    %c608_678 = arith.constant 608 : index
    %c0_679 = arith.constant 0 : index
    %1014 = vector.load %arg23[%c608_678, %c0_679] : memref<648x64xf32, #tpu.memory_space<vmem>>, vector<8x64xf32>
    tpu.vector_store %arg23[%c608_678, %c0_679], %1013 {strides = array<i32>} : memref<648x64xf32, #tpu.memory_space<vmem>>, vector<8x64xf32>,
    %c1_i32_680 = arith.constant 1 : i32
    %1015 = vector.broadcast %c1_i32_680 : i32 to vector<1x64xi32>
    %1016 = arith.addi %662, %1015 : vector<1x64xi32>
    %c0_i32_681 = arith.constant 0 : i32
    %1017 = vector.broadcast %c0_i32_681 : i32 to vector<1x64xi32>
    %1018 = arith.cmpi sge, %1016, %1017 : vector<1x64xi32>
    %c1_i32_682 = arith.constant 1 : i32
    %1019 = vector.broadcast %c1_i32_682 : i32 to vector<1x64xi32>
    %1020 = arith.addi %662, %1019 : vector<1x64xi32>
    %c8_i32_683 = arith.constant 8 : i32
    %1021 = vector.broadcast %c8_i32_683 : i32 to vector<1x64xi32>
    %1022 = arith.cmpi slt, %1020, %1021 : vector<1x64xi32>
    %1023 = arith.andi %1018, %1022 : vector<1x64xi1>
    %c0_684 = arith.constant 0 : index
    %c5_685 = arith.constant 5 : index
    %1024 = vector.load %arg22[%c0_684, %c5_685] : memref<8x136xf32, #tpu.memory_space<vmem>>, vector<8x64xf32>
    %cst_686 = arith.constant 0.000000e+00 : f32
    %1025 = vector.shape_cast %1023 : vector<1x64xi1> to vector<1x64xi1>
    %1026 = vector.broadcast %1025 : vector<1x64xi1> to vector<8x64xi1>
    %1027 = vector.broadcast %cst_686 : f32 to vector<8x64xf32>
    %1028 = arith.select %1026, %1024, %1027 : vector<8x64xi1>, vector<8x64xf32>
    %c40_687 = arith.constant 40 : index
    %c0_688 = arith.constant 0 : index
    %1029 = vector.load %arg23[%c40_687, %c0_688] : memref<648x64xf32, #tpu.memory_space<vmem>>, vector<8x64xf32>
    tpu.vector_store %arg23[%c40_687, %c0_688], %1028 {strides = array<i32>} : memref<648x64xf32, #tpu.memory_space<vmem>>, vector<8x64xf32>,
    %c0_689 = arith.constant 0 : index
    %c13 = arith.constant 13 : index
    %1030 = vector.load %arg22[%c0_689, %c13] : memref<8x136xf32, #tpu.memory_space<vmem>>, vector<8x64xf32>
    %cst_690 = arith.constant 0.000000e+00 : f32
    %1031 = vector.shape_cast %1023 : vector<1x64xi1> to vector<1x64xi1>
    %1032 = vector.broadcast %1031 : vector<1x64xi1> to vector<8x64xi1>
    %1033 = vector.broadcast %cst_690 : f32 to vector<8x64xf32>
    %1034 = arith.select %1032, %1030, %1033 : vector<8x64xi1>, vector<8x64xf32>
    %c112_691 = arith.constant 112 : index
    %c0_692 = arith.constant 0 : index
    %1035 = vector.load %arg23[%c112_691, %c0_692] : memref<648x64xf32, #tpu.memory_space<vmem>>, vector<8x64xf32>
    tpu.vector_store %arg23[%c112_691, %c0_692], %1034 {strides = array<i32>} : memref<648x64xf32, #tpu.memory_space<vmem>>, vector<8x64xf32>,
    %c0_693 = arith.constant 0 : index
    %c21_694 = arith.constant 21 : index
    %1036 = vector.load %arg22[%c0_693, %c21_694] : memref<8x136xf32, #tpu.memory_space<vmem>>, vector<8x64xf32>
    %cst_695 = arith.constant 0.000000e+00 : f32
    %1037 = vector.shape_cast %1023 : vector<1x64xi1> to vector<1x64xi1>
    %1038 = vector.broadcast %1037 : vector<1x64xi1> to vector<8x64xi1>
    %1039 = vector.broadcast %cst_695 : f32 to vector<8x64xf32>
    %1040 = arith.select %1038, %1036, %1039 : vector<8x64xi1>, vector<8x64xf32>
    %c184_696 = arith.constant 184 : index
    %c0_697 = arith.constant 0 : index
    %1041 = vector.load %arg23[%c184_696, %c0_697] : memref<648x64xf32, #tpu.memory_space<vmem>>, vector<8x64xf32>
    tpu.vector_store %arg23[%c184_696, %c0_697], %1040 {strides = array<i32>} : memref<648x64xf32, #tpu.memory_space<vmem>>, vector<8x64xf32>,
    %c0_698 = arith.constant 0 : index
    %c29 = arith.constant 29 : index
    %1042 = vector.load %arg22[%c0_698, %c29] : memref<8x136xf32, #tpu.memory_space<vmem>>, vector<8x64xf32>
    %cst_699 = arith.constant 0.000000e+00 : f32
    %1043 = vector.shape_cast %1023 : vector<1x64xi1> to vector<1x64xi1>
    %1044 = vector.broadcast %1043 : vector<1x64xi1> to vector<8x64xi1>
    %1045 = vector.broadcast %cst_699 : f32 to vector<8x64xf32>
    %1046 = arith.select %1044, %1042, %1045 : vector<8x64xi1>, vector<8x64xf32>
    %c256_700 = arith.constant 256 : index
    %c0_701 = arith.constant 0 : index
    %1047 = vector.load %arg23[%c256_700, %c0_701] : memref<648x64xf32, #tpu.memory_space<vmem>>, vector<8x64xf32>
    tpu.vector_store %arg23[%c256_700, %c0_701], %1046 {strides = array<i32>} : memref<648x64xf32, #tpu.memory_space<vmem>>, vector<8x64xf32>,
    %c0_702 = arith.constant 0 : index
    %c37_703 = arith.constant 37 : index
    %1048 = vector.load %arg22[%c0_702, %c37_703] : memref<8x136xf32, #tpu.memory_space<vmem>>, vector<8x64xf32>
    %cst_704 = arith.constant 0.000000e+00 : f32
    %1049 = vector.shape_cast %1023 : vector<1x64xi1> to vector<1x64xi1>
    %1050 = vector.broadcast %1049 : vector<1x64xi1> to vector<8x64xi1>
    %1051 = vector.broadcast %cst_704 : f32 to vector<8x64xf32>
    %1052 = arith.select %1050, %1048, %1051 : vector<8x64xi1>, vector<8x64xf32>
    %c328_705 = arith.constant 328 : index
    %c0_706 = arith.constant 0 : index
    %1053 = vector.load %arg23[%c328_705, %c0_706] : memref<648x64xf32, #tpu.memory_space<vmem>>, vector<8x64xf32>
    tpu.vector_store %arg23[%c328_705, %c0_706], %1052 {strides = array<i32>} : memref<648x64xf32, #tpu.memory_space<vmem>>, vector<8x64xf32>,
    %c0_707 = arith.constant 0 : index
    %c45 = arith.constant 45 : index
    %1054 = vector.load %arg22[%c0_707, %c45] : memref<8x136xf32, #tpu.memory_space<vmem>>, vector<8x64xf32>
    %cst_708 = arith.constant 0.000000e+00 : f32
    %1055 = vector.shape_cast %1023 : vector<1x64xi1> to vector<1x64xi1>
    %1056 = vector.broadcast %1055 : vector<1x64xi1> to vector<8x64xi1>
    %1057 = vector.broadcast %cst_708 : f32 to vector<8x64xf32>
    %1058 = arith.select %1056, %1054, %1057 : vector<8x64xi1>, vector<8x64xf32>
    %c400_709 = arith.constant 400 : index
    %c0_710 = arith.constant 0 : index
    %1059 = vector.load %arg23[%c400_709, %c0_710] : memref<648x64xf32, #tpu.memory_space<vmem>>, vector<8x64xf32>
    tpu.vector_store %arg23[%c400_709, %c0_710], %1058 {strides = array<i32>} : memref<648x64xf32, #tpu.memory_space<vmem>>, vector<8x64xf32>,
    %c0_711 = arith.constant 0 : index
    %c53_712 = arith.constant 53 : index
    %1060 = vector.load %arg22[%c0_711, %c53_712] : memref<8x136xf32, #tpu.memory_space<vmem>>, vector<8x64xf32>
    %cst_713 = arith.constant 0.000000e+00 : f32
    %1061 = vector.shape_cast %1023 : vector<1x64xi1> to vector<1x64xi1>
    %1062 = vector.broadcast %1061 : vector<1x64xi1> to vector<8x64xi1>
    %1063 = vector.broadcast %cst_713 : f32 to vector<8x64xf32>
    %1064 = arith.select %1062, %1060, %1063 : vector<8x64xi1>, vector<8x64xf32>
    %c472_714 = arith.constant 472 : index
    %c0_715 = arith.constant 0 : index
    %1065 = vector.load %arg23[%c472_714, %c0_715] : memref<648x64xf32, #tpu.memory_space<vmem>>, vector<8x64xf32>
    tpu.vector_store %arg23[%c472_714, %c0_715], %1064 {strides = array<i32>} : memref<648x64xf32, #tpu.memory_space<vmem>>, vector<8x64xf32>,
    %c0_716 = arith.constant 0 : index
    %c61 = arith.constant 61 : index
    %1066 = vector.load %arg22[%c0_716, %c61] : memref<8x136xf32, #tpu.memory_space<vmem>>, vector<8x64xf32>
    %cst_717 = arith.constant 0.000000e+00 : f32
    %1067 = vector.shape_cast %1023 : vector<1x64xi1> to vector<1x64xi1>
    %1068 = vector.broadcast %1067 : vector<1x64xi1> to vector<8x64xi1>
    %1069 = vector.broadcast %cst_717 : f32 to vector<8x64xf32>
    %1070 = arith.select %1068, %1066, %1069 : vector<8x64xi1>, vector<8x64xf32>
    %c544_718 = arith.constant 544 : index
    %c0_719 = arith.constant 0 : index
    %1071 = vector.load %arg23[%c544_718, %c0_719] : memref<648x64xf32, #tpu.memory_space<vmem>>, vector<8x64xf32>
    tpu.vector_store %arg23[%c544_718, %c0_719], %1070 {strides = array<i32>} : memref<648x64xf32, #tpu.memory_space<vmem>>, vector<8x64xf32>,
    %c0_720 = arith.constant 0 : index
    %c69_721 = arith.constant 69 : index
    %1072 = vector.load %arg22[%c0_720, %c69_721] : memref<8x136xf32, #tpu.memory_space<vmem>>, vector<8x64xf32>
    %cst_722 = arith.constant 0.000000e+00 : f32
    %1073 = vector.shape_cast %1023 : vector<1x64xi1> to vector<1x64xi1>
    %1074 = vector.broadcast %1073 : vector<1x64xi1> to vector<8x64xi1>
    %1075 = vector.broadcast %cst_722 : f32 to vector<8x64xf32>
    %1076 = arith.select %1074, %1072, %1075 : vector<8x64xi1>, vector<8x64xf32>
    %c616_723 = arith.constant 616 : index
    %c0_724 = arith.constant 0 : index
    %1077 = vector.load %arg23[%c616_723, %c0_724] : memref<648x64xf32, #tpu.memory_space<vmem>>, vector<8x64xf32>
    tpu.vector_store %arg23[%c616_723, %c0_724], %1076 {strides = array<i32>} : memref<648x64xf32, #tpu.memory_space<vmem>>, vector<8x64xf32>,
    %c2_i32_725 = arith.constant 2 : i32
    %1078 = vector.broadcast %c2_i32_725 : i32 to vector<1x64xi32>
    %1079 = arith.addi %662, %1078 : vector<1x64xi32>
    %c0_i32_726 = arith.constant 0 : i32
    %1080 = vector.broadcast %c0_i32_726 : i32 to vector<1x64xi32>
    %1081 = arith.cmpi sge, %1079, %1080 : vector<1x64xi32>
    %c2_i32_727 = arith.constant 2 : i32
    %1082 = vector.broadcast %c2_i32_727 : i32 to vector<1x64xi32>
    %1083 = arith.addi %662, %1082 : vector<1x64xi32>
    %c8_i32_728 = arith.constant 8 : i32
    %1084 = vector.broadcast %c8_i32_728 : i32 to vector<1x64xi32>
    %1085 = arith.cmpi slt, %1083, %1084 : vector<1x64xi32>
    %1086 = arith.andi %1081, %1085 : vector<1x64xi1>
    %c0_729 = arith.constant 0 : index
    %c6_730 = arith.constant 6 : index
    %1087 = vector.load %arg22[%c0_729, %c6_730] : memref<8x136xf32, #tpu.memory_space<vmem>>, vector<8x64xf32>
    %cst_731 = arith.constant 0.000000e+00 : f32
    %1088 = vector.shape_cast %1086 : vector<1x64xi1> to vector<1x64xi1>
    %1089 = vector.broadcast %1088 : vector<1x64xi1> to vector<8x64xi1>
    %1090 = vector.broadcast %cst_731 : f32 to vector<8x64xf32>
    %1091 = arith.select %1089, %1087, %1090 : vector<8x64xi1>, vector<8x64xf32>
    %c48_732 = arith.constant 48 : index
    %c0_733 = arith.constant 0 : index
    %1092 = vector.load %arg23[%c48_732, %c0_733] : memref<648x64xf32, #tpu.memory_space<vmem>>, vector<8x64xf32>
    tpu.vector_store %arg23[%c48_732, %c0_733], %1091 {strides = array<i32>} : memref<648x64xf32, #tpu.memory_space<vmem>>, vector<8x64xf32>,
    %c0_734 = arith.constant 0 : index
    %c14 = arith.constant 14 : index
    %1093 = vector.load %arg22[%c0_734, %c14] : memref<8x136xf32, #tpu.memory_space<vmem>>, vector<8x64xf32>
    %cst_735 = arith.constant 0.000000e+00 : f32
    %1094 = vector.shape_cast %1086 : vector<1x64xi1> to vector<1x64xi1>
    %1095 = vector.broadcast %1094 : vector<1x64xi1> to vector<8x64xi1>
    %1096 = vector.broadcast %cst_735 : f32 to vector<8x64xf32>
    %1097 = arith.select %1095, %1093, %1096 : vector<8x64xi1>, vector<8x64xf32>
    %c120_736 = arith.constant 120 : index
    %c0_737 = arith.constant 0 : index
    %1098 = vector.load %arg23[%c120_736, %c0_737] : memref<648x64xf32, #tpu.memory_space<vmem>>, vector<8x64xf32>
    tpu.vector_store %arg23[%c120_736, %c0_737], %1097 {strides = array<i32>} : memref<648x64xf32, #tpu.memory_space<vmem>>, vector<8x64xf32>,
    %c0_738 = arith.constant 0 : index
    %c22_739 = arith.constant 22 : index
    %1099 = vector.load %arg22[%c0_738, %c22_739] : memref<8x136xf32, #tpu.memory_space<vmem>>, vector<8x64xf32>
    %cst_740 = arith.constant 0.000000e+00 : f32
    %1100 = vector.shape_cast %1086 : vector<1x64xi1> to vector<1x64xi1>
    %1101 = vector.broadcast %1100 : vector<1x64xi1> to vector<8x64xi1>
    %1102 = vector.broadcast %cst_740 : f32 to vector<8x64xf32>
    %1103 = arith.select %1101, %1099, %1102 : vector<8x64xi1>, vector<8x64xf32>
    %c192_741 = arith.constant 192 : index
    %c0_742 = arith.constant 0 : index
    %1104 = vector.load %arg23[%c192_741, %c0_742] : memref<648x64xf32, #tpu.memory_space<vmem>>, vector<8x64xf32>
    tpu.vector_store %arg23[%c192_741, %c0_742], %1103 {strides = array<i32>} : memref<648x64xf32, #tpu.memory_space<vmem>>, vector<8x64xf32>,
    %c0_743 = arith.constant 0 : index
    %c30 = arith.constant 30 : index
    %1105 = vector.load %arg22[%c0_743, %c30] : memref<8x136xf32, #tpu.memory_space<vmem>>, vector<8x64xf32>
    %cst_744 = arith.constant 0.000000e+00 : f32
    %1106 = vector.shape_cast %1086 : vector<1x64xi1> to vector<1x64xi1>
    %1107 = vector.broadcast %1106 : vector<1x64xi1> to vector<8x64xi1>
    %1108 = vector.broadcast %cst_744 : f32 to vector<8x64xf32>
    %1109 = arith.select %1107, %1105, %1108 : vector<8x64xi1>, vector<8x64xf32>
    %c264_745 = arith.constant 264 : index
    %c0_746 = arith.constant 0 : index
    %1110 = vector.load %arg23[%c264_745, %c0_746] : memref<648x64xf32, #tpu.memory_space<vmem>>, vector<8x64xf32>
    tpu.vector_store %arg23[%c264_745, %c0_746], %1109 {strides = array<i32>} : memref<648x64xf32, #tpu.memory_space<vmem>>, vector<8x64xf32>,
    %c0_747 = arith.constant 0 : index
    %c38_748 = arith.constant 38 : index
    %1111 = vector.load %arg22[%c0_747, %c38_748] : memref<8x136xf32, #tpu.memory_space<vmem>>, vector<8x64xf32>
    %cst_749 = arith.constant 0.000000e+00 : f32
    %1112 = vector.shape_cast %1086 : vector<1x64xi1> to vector<1x64xi1>
    %1113 = vector.broadcast %1112 : vector<1x64xi1> to vector<8x64xi1>
    %1114 = vector.broadcast %cst_749 : f32 to vector<8x64xf32>
    %1115 = arith.select %1113, %1111, %1114 : vector<8x64xi1>, vector<8x64xf32>
    %c336_750 = arith.constant 336 : index
    %c0_751 = arith.constant 0 : index
    %1116 = vector.load %arg23[%c336_750, %c0_751] : memref<648x64xf32, #tpu.memory_space<vmem>>, vector<8x64xf32>
    tpu.vector_store %arg23[%c336_750, %c0_751], %1115 {strides = array<i32>} : memref<648x64xf32, #tpu.memory_space<vmem>>, vector<8x64xf32>,
    %c0_752 = arith.constant 0 : index
    %c46 = arith.constant 46 : index
    %1117 = vector.load %arg22[%c0_752, %c46] : memref<8x136xf32, #tpu.memory_space<vmem>>, vector<8x64xf32>
    %cst_753 = arith.constant 0.000000e+00 : f32
    %1118 = vector.shape_cast %1086 : vector<1x64xi1> to vector<1x64xi1>
    %1119 = vector.broadcast %1118 : vector<1x64xi1> to vector<8x64xi1>
    %1120 = vector.broadcast %cst_753 : f32 to vector<8x64xf32>
    %1121 = arith.select %1119, %1117, %1120 : vector<8x64xi1>, vector<8x64xf32>
    %c408_754 = arith.constant 408 : index
    %c0_755 = arith.constant 0 : index
    %1122 = vector.load %arg23[%c408_754, %c0_755] : memref<648x64xf32, #tpu.memory_space<vmem>>, vector<8x64xf32>
    tpu.vector_store %arg23[%c408_754, %c0_755], %1121 {strides = array<i32>} : memref<648x64xf32, #tpu.memory_space<vmem>>, vector<8x64xf32>,
    %c0_756 = arith.constant 0 : index
    %c54_757 = arith.constant 54 : index
    %1123 = vector.load %arg22[%c0_756, %c54_757] : memref<8x136xf32, #tpu.memory_space<vmem>>, vector<8x64xf32>
    %cst_758 = arith.constant 0.000000e+00 : f32
    %1124 = vector.shape_cast %1086 : vector<1x64xi1> to vector<1x64xi1>
    %1125 = vector.broadcast %1124 : vector<1x64xi1> to vector<8x64xi1>
    %1126 = vector.broadcast %cst_758 : f32 to vector<8x64xf32>
    %1127 = arith.select %1125, %1123, %1126 : vector<8x64xi1>, vector<8x64xf32>
    %c480_759 = arith.constant 480 : index
    %c0_760 = arith.constant 0 : index
    %1128 = vector.load %arg23[%c480_759, %c0_760] : memref<648x64xf32, #tpu.memory_space<vmem>>, vector<8x64xf32>
    tpu.vector_store %arg23[%c480_759, %c0_760], %1127 {strides = array<i32>} : memref<648x64xf32, #tpu.memory_space<vmem>>, vector<8x64xf32>,
    %c0_761 = arith.constant 0 : index
    %c62 = arith.constant 62 : index
    %1129 = vector.load %arg22[%c0_761, %c62] : memref<8x136xf32, #tpu.memory_space<vmem>>, vector<8x64xf32>
    %cst_762 = arith.constant 0.000000e+00 : f32
    %1130 = vector.shape_cast %1086 : vector<1x64xi1> to vector<1x64xi1>
    %1131 = vector.broadcast %1130 : vector<1x64xi1> to vector<8x64xi1>
    %1132 = vector.broadcast %cst_762 : f32 to vector<8x64xf32>
    %1133 = arith.select %1131, %1129, %1132 : vector<8x64xi1>, vector<8x64xf32>
    %c552_763 = arith.constant 552 : index
    %c0_764 = arith.constant 0 : index
    %1134 = vector.load %arg23[%c552_763, %c0_764] : memref<648x64xf32, #tpu.memory_space<vmem>>, vector<8x64xf32>
    tpu.vector_store %arg23[%c552_763, %c0_764], %1133 {strides = array<i32>} : memref<648x64xf32, #tpu.memory_space<vmem>>, vector<8x64xf32>,
    %c0_765 = arith.constant 0 : index
    %c70_766 = arith.constant 70 : index
    %1135 = vector.load %arg22[%c0_765, %c70_766] : memref<8x136xf32, #tpu.memory_space<vmem>>, vector<8x64xf32>
    %cst_767 = arith.constant 0.000000e+00 : f32
    %1136 = vector.shape_cast %1086 : vector<1x64xi1> to vector<1x64xi1>
    %1137 = vector.broadcast %1136 : vector<1x64xi1> to vector<8x64xi1>
    %1138 = vector.broadcast %cst_767 : f32 to vector<8x64xf32>
    %1139 = arith.select %1137, %1135, %1138 : vector<8x64xi1>, vector<8x64xf32>
    %c624_768 = arith.constant 624 : index
    %c0_769 = arith.constant 0 : index
    %1140 = vector.load %arg23[%c624_768, %c0_769] : memref<648x64xf32, #tpu.memory_space<vmem>>, vector<8x64xf32>
    tpu.vector_store %arg23[%c624_768, %c0_769], %1139 {strides = array<i32>} : memref<648x64xf32, #tpu.memory_space<vmem>>, vector<8x64xf32>,
    %c3_i32_770 = arith.constant 3 : i32
    %1141 = vector.broadcast %c3_i32_770 : i32 to vector<1x64xi32>
    %1142 = arith.addi %662, %1141 : vector<1x64xi32>
    %c0_i32_771 = arith.constant 0 : i32
    %1143 = vector.broadcast %c0_i32_771 : i32 to vector<1x64xi32>
    %1144 = arith.cmpi sge, %1142, %1143 : vector<1x64xi32>
    %c3_i32_772 = arith.constant 3 : i32
    %1145 = vector.broadcast %c3_i32_772 : i32 to vector<1x64xi32>
    %1146 = arith.addi %662, %1145 : vector<1x64xi32>
    %c8_i32_773 = arith.constant 8 : i32
    %1147 = vector.broadcast %c8_i32_773 : i32 to vector<1x64xi32>
    %1148 = arith.cmpi slt, %1146, %1147 : vector<1x64xi32>
    %1149 = arith.andi %1144, %1148 : vector<1x64xi1>
    %c0_774 = arith.constant 0 : index
    %c7_775 = arith.constant 7 : index
    %1150 = vector.load %arg22[%c0_774, %c7_775] : memref<8x136xf32, #tpu.memory_space<vmem>>, vector<8x64xf32>
    %cst_776 = arith.constant 0.000000e+00 : f32
    %1151 = vector.shape_cast %1149 : vector<1x64xi1> to vector<1x64xi1>
    %1152 = vector.broadcast %1151 : vector<1x64xi1> to vector<8x64xi1>
    %1153 = vector.broadcast %cst_776 : f32 to vector<8x64xf32>
    %1154 = arith.select %1152, %1150, %1153 : vector<8x64xi1>, vector<8x64xf32>
    %c56_777 = arith.constant 56 : index
    %c0_778 = arith.constant 0 : index
    %1155 = vector.load %arg23[%c56_777, %c0_778] : memref<648x64xf32, #tpu.memory_space<vmem>>, vector<8x64xf32>
    tpu.vector_store %arg23[%c56_777, %c0_778], %1154 {strides = array<i32>} : memref<648x64xf32, #tpu.memory_space<vmem>>, vector<8x64xf32>,
    %c0_779 = arith.constant 0 : index
    %c15 = arith.constant 15 : index
    %1156 = vector.load %arg22[%c0_779, %c15] : memref<8x136xf32, #tpu.memory_space<vmem>>, vector<8x64xf32>
    %cst_780 = arith.constant 0.000000e+00 : f32
    %1157 = vector.shape_cast %1149 : vector<1x64xi1> to vector<1x64xi1>
    %1158 = vector.broadcast %1157 : vector<1x64xi1> to vector<8x64xi1>
    %1159 = vector.broadcast %cst_780 : f32 to vector<8x64xf32>
    %1160 = arith.select %1158, %1156, %1159 : vector<8x64xi1>, vector<8x64xf32>
    %c128_781 = arith.constant 128 : index
    %c0_782 = arith.constant 0 : index
    %1161 = vector.load %arg23[%c128_781, %c0_782] : memref<648x64xf32, #tpu.memory_space<vmem>>, vector<8x64xf32>
    tpu.vector_store %arg23[%c128_781, %c0_782], %1160 {strides = array<i32>} : memref<648x64xf32, #tpu.memory_space<vmem>>, vector<8x64xf32>,
    %c0_783 = arith.constant 0 : index
    %c23_784 = arith.constant 23 : index
    %1162 = vector.load %arg22[%c0_783, %c23_784] : memref<8x136xf32, #tpu.memory_space<vmem>>, vector<8x64xf32>
    %cst_785 = arith.constant 0.000000e+00 : f32
    %1163 = vector.shape_cast %1149 : vector<1x64xi1> to vector<1x64xi1>
    %1164 = vector.broadcast %1163 : vector<1x64xi1> to vector<8x64xi1>
    %1165 = vector.broadcast %cst_785 : f32 to vector<8x64xf32>
    %1166 = arith.select %1164, %1162, %1165 : vector<8x64xi1>, vector<8x64xf32>
    %c200_786 = arith.constant 200 : index
    %c0_787 = arith.constant 0 : index
    %1167 = vector.load %arg23[%c200_786, %c0_787] : memref<648x64xf32, #tpu.memory_space<vmem>>, vector<8x64xf32>
    tpu.vector_store %arg23[%c200_786, %c0_787], %1166 {strides = array<i32>} : memref<648x64xf32, #tpu.memory_space<vmem>>, vector<8x64xf32>,
    %c0_788 = arith.constant 0 : index
    %c31 = arith.constant 31 : index
    %1168 = vector.load %arg22[%c0_788, %c31] : memref<8x136xf32, #tpu.memory_space<vmem>>, vector<8x64xf32>
    %cst_789 = arith.constant 0.000000e+00 : f32
    %1169 = vector.shape_cast %1149 : vector<1x64xi1> to vector<1x64xi1>
    %1170 = vector.broadcast %1169 : vector<1x64xi1> to vector<8x64xi1>
    %1171 = vector.broadcast %cst_789 : f32 to vector<8x64xf32>
    %1172 = arith.select %1170, %1168, %1171 : vector<8x64xi1>, vector<8x64xf32>
    %c272_790 = arith.constant 272 : index
    %c0_791 = arith.constant 0 : index
    %1173 = vector.load %arg23[%c272_790, %c0_791] : memref<648x64xf32, #tpu.memory_space<vmem>>, vector<8x64xf32>
    tpu.vector_store %arg23[%c272_790, %c0_791], %1172 {strides = array<i32>} : memref<648x64xf32, #tpu.memory_space<vmem>>, vector<8x64xf32>,
    %c0_792 = arith.constant 0 : index
    %c39_793 = arith.constant 39 : index
    %1174 = vector.load %arg22[%c0_792, %c39_793] : memref<8x136xf32, #tpu.memory_space<vmem>>, vector<8x64xf32>
    %cst_794 = arith.constant 0.000000e+00 : f32
    %1175 = vector.shape_cast %1149 : vector<1x64xi1> to vector<1x64xi1>
    %1176 = vector.broadcast %1175 : vector<1x64xi1> to vector<8x64xi1>
    %1177 = vector.broadcast %cst_794 : f32 to vector<8x64xf32>
    %1178 = arith.select %1176, %1174, %1177 : vector<8x64xi1>, vector<8x64xf32>
    %c344_795 = arith.constant 344 : index
    %c0_796 = arith.constant 0 : index
    %1179 = vector.load %arg23[%c344_795, %c0_796] : memref<648x64xf32, #tpu.memory_space<vmem>>, vector<8x64xf32>
    tpu.vector_store %arg23[%c344_795, %c0_796], %1178 {strides = array<i32>} : memref<648x64xf32, #tpu.memory_space<vmem>>, vector<8x64xf32>,
    %c0_797 = arith.constant 0 : index
    %c47 = arith.constant 47 : index
    %1180 = vector.load %arg22[%c0_797, %c47] : memref<8x136xf32, #tpu.memory_space<vmem>>, vector<8x64xf32>
    %cst_798 = arith.constant 0.000000e+00 : f32
    %1181 = vector.shape_cast %1149 : vector<1x64xi1> to vector<1x64xi1>
    %1182 = vector.broadcast %1181 : vector<1x64xi1> to vector<8x64xi1>
    %1183 = vector.broadcast %cst_798 : f32 to vector<8x64xf32>
    %1184 = arith.select %1182, %1180, %1183 : vector<8x64xi1>, vector<8x64xf32>
    %c416_799 = arith.constant 416 : index
    %c0_800 = arith.constant 0 : index
    %1185 = vector.load %arg23[%c416_799, %c0_800] : memref<648x64xf32, #tpu.memory_space<vmem>>, vector<8x64xf32>
    tpu.vector_store %arg23[%c416_799, %c0_800], %1184 {strides = array<i32>} : memref<648x64xf32, #tpu.memory_space<vmem>>, vector<8x64xf32>,
    %c0_801 = arith.constant 0 : index
    %c55_802 = arith.constant 55 : index
    %1186 = vector.load %arg22[%c0_801, %c55_802] : memref<8x136xf32, #tpu.memory_space<vmem>>, vector<8x64xf32>
    %cst_803 = arith.constant 0.000000e+00 : f32
    %1187 = vector.shape_cast %1149 : vector<1x64xi1> to vector<1x64xi1>
    %1188 = vector.broadcast %1187 : vector<1x64xi1> to vector<8x64xi1>
    %1189 = vector.broadcast %cst_803 : f32 to vector<8x64xf32>
    %1190 = arith.select %1188, %1186, %1189 : vector<8x64xi1>, vector<8x64xf32>
    %c488_804 = arith.constant 488 : index
    %c0_805 = arith.constant 0 : index
    %1191 = vector.load %arg23[%c488_804, %c0_805] : memref<648x64xf32, #tpu.memory_space<vmem>>, vector<8x64xf32>
    tpu.vector_store %arg23[%c488_804, %c0_805], %1190 {strides = array<i32>} : memref<648x64xf32, #tpu.memory_space<vmem>>, vector<8x64xf32>,
    %c0_806 = arith.constant 0 : index
    %c63 = arith.constant 63 : index
    %1192 = vector.load %arg22[%c0_806, %c63] : memref<8x136xf32, #tpu.memory_space<vmem>>, vector<8x64xf32>
    %cst_807 = arith.constant 0.000000e+00 : f32
    %1193 = vector.shape_cast %1149 : vector<1x64xi1> to vector<1x64xi1>
    %1194 = vector.broadcast %1193 : vector<1x64xi1> to vector<8x64xi1>
    %1195 = vector.broadcast %cst_807 : f32 to vector<8x64xf32>
    %1196 = arith.select %1194, %1192, %1195 : vector<8x64xi1>, vector<8x64xf32>
    %c560_808 = arith.constant 560 : index
    %c0_809 = arith.constant 0 : index
    %1197 = vector.load %arg23[%c560_808, %c0_809] : memref<648x64xf32, #tpu.memory_space<vmem>>, vector<8x64xf32>
    tpu.vector_store %arg23[%c560_808, %c0_809], %1196 {strides = array<i32>} : memref<648x64xf32, #tpu.memory_space<vmem>>, vector<8x64xf32>,
    %c0_810 = arith.constant 0 : index
    %c71_811 = arith.constant 71 : index
    %1198 = vector.load %arg22[%c0_810, %c71_811] : memref<8x136xf32, #tpu.memory_space<vmem>>, vector<8x64xf32>
    %cst_812 = arith.constant 0.000000e+00 : f32
    %1199 = vector.shape_cast %1149 : vector<1x64xi1> to vector<1x64xi1>
    %1200 = vector.broadcast %1199 : vector<1x64xi1> to vector<8x64xi1>
    %1201 = vector.broadcast %cst_812 : f32 to vector<8x64xf32>
    %1202 = arith.select %1200, %1198, %1201 : vector<8x64xi1>, vector<8x64xf32>
    %c632_813 = arith.constant 632 : index
    %c0_814 = arith.constant 0 : index
    %1203 = vector.load %arg23[%c632_813, %c0_814] : memref<648x64xf32, #tpu.memory_space<vmem>>, vector<8x64xf32>
    tpu.vector_store %arg23[%c632_813, %c0_814], %1202 {strides = array<i32>} : memref<648x64xf32, #tpu.memory_space<vmem>>, vector<8x64xf32>,
    %c4_i32_815 = arith.constant 4 : i32
    %1204 = vector.broadcast %c4_i32_815 : i32 to vector<1x64xi32>
    %1205 = arith.addi %662, %1204 : vector<1x64xi32>
    %c0_i32_816 = arith.constant 0 : i32
    %1206 = vector.broadcast %c0_i32_816 : i32 to vector<1x64xi32>
    %1207 = arith.cmpi sge, %1205, %1206 : vector<1x64xi32>
    %c4_i32_817 = arith.constant 4 : i32
    %1208 = vector.broadcast %c4_i32_817 : i32 to vector<1x64xi32>
    %1209 = arith.addi %662, %1208 : vector<1x64xi32>
    %c8_i32_818 = arith.constant 8 : i32
    %1210 = vector.broadcast %c8_i32_818 : i32 to vector<1x64xi32>
    %1211 = arith.cmpi slt, %1209, %1210 : vector<1x64xi32>
    %1212 = arith.andi %1207, %1211 : vector<1x64xi1>
    %c0_819 = arith.constant 0 : index
    %c8_820 = arith.constant 8 : index
    %1213 = vector.load %arg22[%c0_819, %c8_820] : memref<8x136xf32, #tpu.memory_space<vmem>>, vector<8x64xf32>
    %cst_821 = arith.constant 0.000000e+00 : f32
    %1214 = vector.shape_cast %1212 : vector<1x64xi1> to vector<1x64xi1>
    %1215 = vector.broadcast %1214 : vector<1x64xi1> to vector<8x64xi1>
    %1216 = vector.broadcast %cst_821 : f32 to vector<8x64xf32>
    %1217 = arith.select %1215, %1213, %1216 : vector<8x64xi1>, vector<8x64xf32>
    %c64_822 = arith.constant 64 : index
    %c0_823 = arith.constant 0 : index
    %1218 = vector.load %arg23[%c64_822, %c0_823] : memref<648x64xf32, #tpu.memory_space<vmem>>, vector<8x64xf32>
    tpu.vector_store %arg23[%c64_822, %c0_823], %1217 {strides = array<i32>} : memref<648x64xf32, #tpu.memory_space<vmem>>, vector<8x64xf32>,
    %c0_824 = arith.constant 0 : index
    %c16_825 = arith.constant 16 : index
    %1219 = vector.load %arg22[%c0_824, %c16_825] : memref<8x136xf32, #tpu.memory_space<vmem>>, vector<8x64xf32>
    %cst_826 = arith.constant 0.000000e+00 : f32
    %1220 = vector.shape_cast %1212 : vector<1x64xi1> to vector<1x64xi1>
    %1221 = vector.broadcast %1220 : vector<1x64xi1> to vector<8x64xi1>
    %1222 = vector.broadcast %cst_826 : f32 to vector<8x64xf32>
    %1223 = arith.select %1221, %1219, %1222 : vector<8x64xi1>, vector<8x64xf32>
    %c136_827 = arith.constant 136 : index
    %c0_828 = arith.constant 0 : index
    %1224 = vector.load %arg23[%c136_827, %c0_828] : memref<648x64xf32, #tpu.memory_space<vmem>>, vector<8x64xf32>
    tpu.vector_store %arg23[%c136_827, %c0_828], %1223 {strides = array<i32>} : memref<648x64xf32, #tpu.memory_space<vmem>>, vector<8x64xf32>,
    %c0_829 = arith.constant 0 : index
    %c24_830 = arith.constant 24 : index
    %1225 = vector.load %arg22[%c0_829, %c24_830] : memref<8x136xf32, #tpu.memory_space<vmem>>, vector<8x64xf32>
    %cst_831 = arith.constant 0.000000e+00 : f32
    %1226 = vector.shape_cast %1212 : vector<1x64xi1> to vector<1x64xi1>
    %1227 = vector.broadcast %1226 : vector<1x64xi1> to vector<8x64xi1>
    %1228 = vector.broadcast %cst_831 : f32 to vector<8x64xf32>
    %1229 = arith.select %1227, %1225, %1228 : vector<8x64xi1>, vector<8x64xf32>
    %c208_832 = arith.constant 208 : index
    %c0_833 = arith.constant 0 : index
    %1230 = vector.load %arg23[%c208_832, %c0_833] : memref<648x64xf32, #tpu.memory_space<vmem>>, vector<8x64xf32>
    tpu.vector_store %arg23[%c208_832, %c0_833], %1229 {strides = array<i32>} : memref<648x64xf32, #tpu.memory_space<vmem>>, vector<8x64xf32>,
    %c0_834 = arith.constant 0 : index
    %c32_835 = arith.constant 32 : index
    %1231 = vector.load %arg22[%c0_834, %c32_835] : memref<8x136xf32, #tpu.memory_space<vmem>>, vector<8x64xf32>
    %cst_836 = arith.constant 0.000000e+00 : f32
    %1232 = vector.shape_cast %1212 : vector<1x64xi1> to vector<1x64xi1>
    %1233 = vector.broadcast %1232 : vector<1x64xi1> to vector<8x64xi1>
    %1234 = vector.broadcast %cst_836 : f32 to vector<8x64xf32>
    %1235 = arith.select %1233, %1231, %1234 : vector<8x64xi1>, vector<8x64xf32>
    %c280_837 = arith.constant 280 : index
    %c0_838 = arith.constant 0 : index
    %1236 = vector.load %arg23[%c280_837, %c0_838] : memref<648x64xf32, #tpu.memory_space<vmem>>, vector<8x64xf32>
    tpu.vector_store %arg23[%c280_837, %c0_838], %1235 {strides = array<i32>} : memref<648x64xf32, #tpu.memory_space<vmem>>, vector<8x64xf32>,
    %c0_839 = arith.constant 0 : index
    %c40_840 = arith.constant 40 : index
    %1237 = vector.load %arg22[%c0_839, %c40_840] : memref<8x136xf32, #tpu.memory_space<vmem>>, vector<8x64xf32>
    %cst_841 = arith.constant 0.000000e+00 : f32
    %1238 = vector.shape_cast %1212 : vector<1x64xi1> to vector<1x64xi1>
    %1239 = vector.broadcast %1238 : vector<1x64xi1> to vector<8x64xi1>
    %1240 = vector.broadcast %cst_841 : f32 to vector<8x64xf32>
    %1241 = arith.select %1239, %1237, %1240 : vector<8x64xi1>, vector<8x64xf32>
    %c352_842 = arith.constant 352 : index
    %c0_843 = arith.constant 0 : index
    %1242 = vector.load %arg23[%c352_842, %c0_843] : memref<648x64xf32, #tpu.memory_space<vmem>>, vector<8x64xf32>
    tpu.vector_store %arg23[%c352_842, %c0_843], %1241 {strides = array<i32>} : memref<648x64xf32, #tpu.memory_space<vmem>>, vector<8x64xf32>,
    %c0_844 = arith.constant 0 : index
    %c48_845 = arith.constant 48 : index
    %1243 = vector.load %arg22[%c0_844, %c48_845] : memref<8x136xf32, #tpu.memory_space<vmem>>, vector<8x64xf32>
    %cst_846 = arith.constant 0.000000e+00 : f32
    %1244 = vector.shape_cast %1212 : vector<1x64xi1> to vector<1x64xi1>
    %1245 = vector.broadcast %1244 : vector<1x64xi1> to vector<8x64xi1>
    %1246 = vector.broadcast %cst_846 : f32 to vector<8x64xf32>
    %1247 = arith.select %1245, %1243, %1246 : vector<8x64xi1>, vector<8x64xf32>
    %c424_847 = arith.constant 424 : index
    %c0_848 = arith.constant 0 : index
    %1248 = vector.load %arg23[%c424_847, %c0_848] : memref<648x64xf32, #tpu.memory_space<vmem>>, vector<8x64xf32>
    tpu.vector_store %arg23[%c424_847, %c0_848], %1247 {strides = array<i32>} : memref<648x64xf32, #tpu.memory_space<vmem>>, vector<8x64xf32>,
    %c0_849 = arith.constant 0 : index
    %c56_850 = arith.constant 56 : index
    %1249 = vector.load %arg22[%c0_849, %c56_850] : memref<8x136xf32, #tpu.memory_space<vmem>>, vector<8x64xf32>
    %cst_851 = arith.constant 0.000000e+00 : f32
    %1250 = vector.shape_cast %1212 : vector<1x64xi1> to vector<1x64xi1>
    %1251 = vector.broadcast %1250 : vector<1x64xi1> to vector<8x64xi1>
    %1252 = vector.broadcast %cst_851 : f32 to vector<8x64xf32>
    %1253 = arith.select %1251, %1249, %1252 : vector<8x64xi1>, vector<8x64xf32>
    %c496_852 = arith.constant 496 : index
    %c0_853 = arith.constant 0 : index
    %1254 = vector.load %arg23[%c496_852, %c0_853] : memref<648x64xf32, #tpu.memory_space<vmem>>, vector<8x64xf32>
    tpu.vector_store %arg23[%c496_852, %c0_853], %1253 {strides = array<i32>} : memref<648x64xf32, #tpu.memory_space<vmem>>, vector<8x64xf32>,
    %c0_854 = arith.constant 0 : index
    %c64_855 = arith.constant 64 : index
    %1255 = vector.load %arg22[%c0_854, %c64_855] : memref<8x136xf32, #tpu.memory_space<vmem>>, vector<8x64xf32>
    %cst_856 = arith.constant 0.000000e+00 : f32
    %1256 = vector.shape_cast %1212 : vector<1x64xi1> to vector<1x64xi1>
    %1257 = vector.broadcast %1256 : vector<1x64xi1> to vector<8x64xi1>
    %1258 = vector.broadcast %cst_856 : f32 to vector<8x64xf32>
    %1259 = arith.select %1257, %1255, %1258 : vector<8x64xi1>, vector<8x64xf32>
    %c568_857 = arith.constant 568 : index
    %c0_858 = arith.constant 0 : index
    %1260 = vector.load %arg23[%c568_857, %c0_858] : memref<648x64xf32, #tpu.memory_space<vmem>>, vector<8x64xf32>
    tpu.vector_store %arg23[%c568_857, %c0_858], %1259 {strides = array<i32>} : memref<648x64xf32, #tpu.memory_space<vmem>>, vector<8x64xf32>,
    %c0_859 = arith.constant 0 : index
    %c72_860 = arith.constant 72 : index
    %1261 = vector.load %arg22[%c0_859, %c72_860] : memref<8x136xf32, #tpu.memory_space<vmem>>, vector<8x64xf32>
    %cst_861 = arith.constant 0.000000e+00 : f32
    %1262 = vector.shape_cast %1212 : vector<1x64xi1> to vector<1x64xi1>
    %1263 = vector.broadcast %1262 : vector<1x64xi1> to vector<8x64xi1>
    %1264 = vector.broadcast %cst_861 : f32 to vector<8x64xf32>
    %1265 = arith.select %1263, %1261, %1264 : vector<8x64xi1>, vector<8x64xf32>
    %c640_862 = arith.constant 640 : index
    %c0_863 = arith.constant 0 : index
    %1266 = vector.load %arg23[%c640_862, %c0_863] : memref<648x64xf32, #tpu.memory_space<vmem>>, vector<8x64xf32>
    tpu.vector_store %arg23[%c640_862, %c0_863], %1265 {strides = array<i32>} : memref<648x64xf32, #tpu.memory_space<vmem>>, vector<8x64xf32>,
    %c0_864 = arith.constant 0 : index
    %c0_865 = arith.constant 0 : index
    %1267 = vector.load %arg10[%c0_864, %c0_865] : memref<8x648xf32, #tpu.memory_space<vmem>>, vector<8x648xf32>
    %c0_866 = arith.constant 0 : index
    %c0_867 = arith.constant 0 : index
    %1268 = vector.load %arg23[%c0_866, %c0_867] : memref<648x64xf32, #tpu.memory_space<vmem>>, vector<648x64xf32>
    %cst_868 = arith.constant dense<0.000000e+00> : vector<8x64xf32>
    %1269 = tpu.matmul %1267, %1268, %cst_868 {dimension_numbers = #tpu.dot_dimension_numbers<[1], [0], [0], [1], [0, 0, 1, 1], [], []>} : vector<8x648xf32>, vector<648x64xf32>, vector<8x64xf32> -> vector<8x64xf32>
    %c0_869 = arith.constant 0 : index
    %c0_870 = arith.constant 0 : index
    %1270 = vector.load %arg11[%c0_869, %c0_870] : memref<8x1xf32, #tpu.memory_space<vmem>>, vector<8x1xf32>
    %1271 = vector.broadcast %1270 : vector<8x1xf32> to vector<8x64xf32>
    %1272 = arith.addf %1269, %1271 : vector<8x64xf32>
    %cst_871 = arith.constant 0.000000e+00 : f32
    %1273 = vector.broadcast %cst_871 : f32 to vector<8x64xf32>
    %1274 = arith.maximumf %1272, %1273 : vector<8x64xf32>
    %1275 = vector.extract_strided_slice %735 {offsets = [0, 0], sizes = [4, 64], strides = [1, 1]} : vector<8x64xf32> to vector<4x64xf32>
    %c0_872 = arith.constant 0 : index
    %c0_873 = arith.constant 0 : index
    %1276 = vector.load %arg24[%c0_872, %c0_873] : memref<8x73xf32, #tpu.memory_space<vmem>>, vector<4x64xf32>
    tpu.vector_store %arg24[%c0_872, %c0_873], %1275 {strides = array<i32>} : memref<8x73xf32, #tpu.memory_space<vmem>>, vector<4x64xf32>,
    %1277 = vector.extract_strided_slice %1274 {offsets = [0, 0], sizes = [4, 64], strides = [1, 1]} : vector<8x64xf32> to vector<4x64xf32>
    %c4_874 = arith.constant 4 : index
    %c0_875 = arith.constant 0 : index
    %1278 = vector.load %arg24[%c4_874, %c0_875] : memref<8x73xf32, #tpu.memory_space<vmem>>, vector<4x64xf32>
    tpu.vector_store %arg24[%c4_874, %c0_875], %1277 {strides = array<i32>} : memref<8x73xf32, #tpu.memory_space<vmem>>, vector<4x64xf32>,
    %cst_876 = arith.constant 0.000000e+00 : f32
    %1279 = vector.broadcast %cst_876 : f32 to vector<8x9xf32>
    %c0_877 = arith.constant 0 : index
    %c64_878 = arith.constant 64 : index
    %1280 = vector.load %arg24[%c0_877, %c64_878] : memref<8x73xf32, #tpu.memory_space<vmem>>, vector<8x9xf32>
    tpu.vector_store %arg24[%c0_877, %c64_878], %1279 {strides = array<i32>} : memref<8x73xf32, #tpu.memory_space<vmem>>, vector<8x9xf32>,
    %c0_879 = arith.constant 0 : index
    %c0_880 = arith.constant 0 : index
    %1281 = vector.load %arg24[%c0_879, %c0_880] : memref<8x73xf32, #tpu.memory_space<vmem>>, vector<8x64xf32>
    %c0_881 = arith.constant 0 : index
    %c1_882 = arith.constant 1 : index
    %1282 = vector.load %arg24[%c0_881, %c1_882] : memref<8x73xf32, #tpu.memory_space<vmem>>, vector<8x64xf32>
    %1283 = arith.maximumf %1281, %1282 : vector<8x64xf32>
    %c0_883 = arith.constant 0 : index
    %c8_884 = arith.constant 8 : index
    %1284 = vector.load %arg24[%c0_883, %c8_884] : memref<8x73xf32, #tpu.memory_space<vmem>>, vector<8x64xf32>
    %c0_885 = arith.constant 0 : index
    %c9_886 = arith.constant 9 : index
    %1285 = vector.load %arg24[%c0_885, %c9_886] : memref<8x73xf32, #tpu.memory_space<vmem>>, vector<8x64xf32>
    %1286 = arith.maximumf %1284, %1285 : vector<8x64xf32>
    %1287 = arith.maximumf %1283, %1286 : vector<8x64xf32>
    %c0_887 = arith.constant 0 : index
    %c0_888 = arith.constant 0 : index
    %1288 = vector.load %arg7[%c0_887, %c0_888] : memref<64x16xf32, #tpu.memory_space<vmem>>, vector<64x16xf32>
    %cst_889 = arith.constant dense<0.000000e+00> : vector<8x16xf32>
    %1289 = tpu.matmul %1287, %1288, %cst_889 {dimension_numbers = #tpu.dot_dimension_numbers<[1], [0], [0], [1], [0, 0, 1, 1], [], []>} : vector<8x64xf32>, vector<64x16xf32>, vector<8x16xf32> -> vector<8x16xf32>
    %c0_890 = arith.constant 0 : index
    %c0_891 = arith.constant 0 : index
    %c0_892 = arith.constant 0 : index
    %1290 = vector.load %arg14[%c0_890, %c0_891, %c0_892] : memref<1x8x16xf32, #tpu.memory_space<vmem>>, vector<1x8x16xf32>
    %1291 = vector.shape_cast %1290 : vector<1x8x16xf32> to vector<8x16xf32>
    %1292 = vector.shape_cast %1289 : vector<8x16xf32> to vector<1x8x16xf32>
    tpu.vector_store %arg14[%c0_890, %c0_891, %c0_892], %1292 {strides = array<i32>} : memref<1x8x16xf32, #tpu.memory_space<vmem>>, vector<1x8x16xf32>,
    return
  }
  func.func @transform_0(%arg0: i32) -> (i32, i32, i32) {
    %c0_i32 = arith.constant 0 : i32
    %c0_i32_0 = arith.constant 0 : i32
    %c0_i32_1 = arith.constant 0 : i32
    return %arg0, %c0_i32, %c0_i32_0 : i32, i32, i32
  }
  func.func @transform_1(%arg0: i32) -> (i32, i32) {
    %c0_i32 = arith.constant 0 : i32
    %c0_i32_0 = arith.constant 0 : i32
    %c0_i32_1 = arith.constant 0 : i32
    return %c0_i32, %c0_i32_0 : i32, i32
  }
  func.func @transform_2(%arg0: i32) -> (i32, i32) {
    %c0_i32 = arith.constant 0 : i32
    %c0_i32_0 = arith.constant 0 : i32
    %c0_i32_1 = arith.constant 0 : i32
    return %c0_i32, %c0_i32_0 : i32, i32
  }
  func.func @transform_3(%arg0: i32) -> (i32, i32) {
    %c0_i32 = arith.constant 0 : i32
    %c0_i32_0 = arith.constant 0 : i32
    %c0_i32_1 = arith.constant 0 : i32
    return %c0_i32, %c0_i32_0 : i32, i32
  }
  func.func @transform_4(%arg0: i32) -> (i32, i32) {
    %c0_i32 = arith.constant 0 : i32
    %c0_i32_0 = arith.constant 0 : i32
    %c0_i32_1 = arith.constant 0 : i32
    return %c0_i32, %c0_i32_0 : i32, i32
  }
  func.func @transform_5(%arg0: i32) -> (i32, i32) {
    %c0_i32 = arith.constant 0 : i32
    %c0_i32_0 = arith.constant 0 : i32
    %c0_i32_1 = arith.constant 0 : i32
    return %c0_i32, %c0_i32_0 : i32, i32
  }
  func.func @transform_6(%arg0: i32) -> (i32, i32) {
    %c0_i32 = arith.constant 0 : i32
    %c0_i32_0 = arith.constant 0 : i32
    %c0_i32_1 = arith.constant 0 : i32
    return %c0_i32, %c0_i32_0 : i32, i32
  }
  func.func @transform_7(%arg0: i32) -> (i32, i32) {
    %c0_i32 = arith.constant 0 : i32
    %c0_i32_0 = arith.constant 0 : i32
    %c0_i32_1 = arith.constant 0 : i32
    return %c0_i32, %c0_i32_0 : i32, i32
  }
  func.func @transform_8(%arg0: i32) -> (i32, i32) {
    %c0_i32 = arith.constant 0 : i32
    %c0_i32_0 = arith.constant 0 : i32
    %c0_i32_1 = arith.constant 0 : i32
    return %c0_i32, %c0_i32_0 : i32, i32
  }
  func.func @transform_9(%arg0: i32) -> (i32, i32) {
    %c0_i32 = arith.constant 0 : i32
    %c0_i32_0 = arith.constant 0 : i32
    %c0_i32_1 = arith.constant 0 : i32
    return %c0_i32, %c0_i32_0 : i32, i32
  }
  func.func @transform_10(%arg0: i32) -> (i32, i32) {
    %c0_i32 = arith.constant 0 : i32
    %c0_i32_0 = arith.constant 0 : i32
    %c0_i32_1 = arith.constant 0 : i32
    return %c0_i32, %c0_i32_0 : i32, i32
  }
  func.func @transform_11(%arg0: i32) -> (i32, i32, i32) {
    %c0_i32 = arith.constant 0 : i32
    %c0_i32_0 = arith.constant 0 : i32
    %c0_i32_1 = arith.constant 0 : i32
    return %arg0, %c0_i32, %c0_i32_0 : i32, i32, i32
  }
  func.func @transform_12(%arg0: i32) -> (i32, i32, i32) {
    %c0_i32 = arith.constant 0 : i32
    %c0_i32_0 = arith.constant 0 : i32
    %c0_i32_1 = arith.constant 0 : i32
    return %arg0, %c0_i32, %c0_i32_0 : i32, i32, i32
  }
  func.func @transform_13(%arg0: i32) -> (i32, i32, i32) {
    %c0_i32 = arith.constant 0 : i32
    %c0_i32_0 = arith.constant 0 : i32
    %c0_i32_1 = arith.constant 0 : i32
    return %arg0, %c0_i32, %c0_i32_0 : i32, i32, i32
  }
}

</mosaic_0001>

<llo_original>
// kernel: tpu_custom_call.1
$region0: #{tpu_custom_call.1}
  #allocation0 [shape = 'u32[]', space=smem, size = 0x4, offset = 0x4, fixed_abs, tag = 'smem constant byte address 0x4 - core index']
  #allocation1 [shape = 'u32[144,128]{1,0:T(1,128)}', space=vmem, size = 0x12000, scoped, tag = 'internal scratch']
  #allocation2 [shape = 'f32[8,290]{1,0:T(8,128)}', space=vmem, size = 0x3000, scoped, tag = 'scratch operand']
  #allocation3 [shape = 'f32[72,256]{1,0:T(8,128)}', space=vmem, size = 0x12000, scoped, tag = 'scratch operand']
  #allocation4 [shape = 'f32[8,392]{1,0:T(8,128)}', space=vmem, size = 0x4000, scoped, tag = 'scratch operand']
  #allocation5 [shape = 'f32[648,256]{1,0:T(8,128)}', space=vmem, size = 0xa2000, scoped, tag = 'scratch operand']
  #allocation6 [shape = 'f32[8,273]{1,0:T(8,128)}', space=vmem, size = 0x3000, scoped, tag = 'scratch operand']
  #allocation7 [shape = 'f32[8,82]{1,0:T(8,128)}', space=vmem, size = 0x1000, scoped, tag = 'scratch operand']
  #allocation8 [shape = 'f32[72,64]{1,0:T(8,128)}', space=vmem, size = 0x9000, scoped, tag = 'scratch operand']
  #allocation9 [shape = 'f32[8,136]{1,0:T(8,128)}', space=vmem, size = 0x2000, scoped, tag = 'scratch operand']
  #allocation10 [shape = 'f32[648,64]{1,0:T(8,128)}', space=vmem, size = 0x51000, scoped, tag = 'scratch operand']
  #allocation11 [shape = 'f32[8,73]{1,0:T(8,128)}', space=vmem, size = 0x1000, scoped, tag = 'scratch operand']
  %s0 = inlined_call_operand.vmem [shape: f32[2,8,256], index: 0, kind: input, shape index: {}]
  %s1 = inlined_call_operand.vmem [shape: f32[256,64], index: 1, kind: input, shape index: {}]
  %s2 = inlined_call_operand.vmem [shape: f32[8,72], index: 2, kind: input, shape index: {}]
  %s3 = inlined_call_operand.vmem [shape: f32[8,1], index: 3, kind: input, shape index: {}]
  %s4 = inlined_call_operand.vmem [shape: f32[8,648], index: 4, kind: input, shape index: {}]
  %s5 = inlined_call_operand.vmem [shape: f32[8,1], index: 5, kind: input, shape index: {}]
  %s6 = inlined_call_operand.vmem [shape: f32[64,16], index: 6, kind: input, shape index: {}]
  %s7 = inlined_call_operand.vmem [shape: f32[8,72], index: 7, kind: input, shape index: {}]
  %s8 = inlined_call_operand.vmem [shape: f32[8,1], index: 8, kind: input, shape index: {}]
  %s9 = inlined_call_operand.vmem [shape: f32[8,648], index: 9, kind: input, shape index: {}]
  %s10 = inlined_call_operand.vmem [shape: f32[8,1], index: 10, kind: input, shape index: {}]
  %s11 = inlined_call_operand.hbm [shape: f32[2,4,256], index: 11, kind: output, shape index: {0}]
  %s12 = inlined_call_operand.hbm [shape: f32[2,4,64], index: 12, kind: output, shape index: {1}]
  %s13 = inlined_call_operand.hbm [shape: f32[2,8,16], index: 13, kind: output, shape index: {2}]
  %14 = xla_tuple %s11, %s12, %s13
  %s15 = sld [smem:[#allocation0]]
  $region93: #{tpu_custom_call.1} parent=0
    _
  %s17 = ssub.s32 1, %s15
  %s18 = scalar_select 0, %s17, %s15
  $region1: #{tpu_custom_call.1} parent=0
    #allocation12 [shape = 'u8[8192]{0}', space=vmem, size = 0x2000, scoped, tag = 'output window, operand 0']
    #allocation13 [shape = 's32[2]{0}', space=sflag, size = 0x8, scoped, tag = 'scoped memory for tpu_custom_call.1']
    #allocation14 [shape = 'u8[4096]{0}', space=vmem, size = 0x1000, scoped, tag = 'output window, operand 1']
    #allocation15 [shape = 's32[2]{0}', space=sflag, size = 0x8, scoped, tag = 'scoped memory for tpu_custom_call.1']
    #allocation16 [shape = 'u8[8192]{0}', space=vmem, size = 0x2000, scoped, tag = 'output window, operand 2']
    %19 = vsyncpa [#allocation13], 0
    %s20 = scalar_lea.sflag [#allocation13], 1
    %21 = vsyncpa %s20, 0
    %22 = vsyncpa [#allocation15], 0
    %s23 = scalar_lea.sflag [#allocation15], 1
    %24 = vsyncpa %s23, 0
    loop: start=0, step=1, limit=4
    $region2: #{tpu_custom_call.1} parent=1 // loop_pre_header
      _
    $region3: #{tpu_custom_call.1} parent=1 // loop_header
      %s26 = sphi 0, %s30
      %p27 = scmp.ge.s32.totalorder %s26, 4
      %s36 = sphi 0, %s38
      %s39 = sphi 0, %s36
      %s40 = sphi 0, %s39
      %s56 = sphi 0, %s40
      %s60 = sphi 0, %s60
      %s62 = sphi 0, %s60
      %s63 = sphi 0, %s62
      %s77 = sphi 0, %s63
      %s81 = sphi 0, %s81
      %s83 = sphi 0, %s81
      %s84 = sphi 0, %s83
      %s98 = sphi 0, %s84
      %s102 = sphi 0, %s102
      %s104 = sphi 0, %s102
      %s105 = sphi 0, %s104
      %s119 = sphi 0, %s105
      %s123 = sphi 0, %s123
      %s125 = sphi 0, %s123
      %s126 = sphi 0, %s125
      %s140 = sphi 0, %s126
      %s144 = sphi 0, %s144
      %s146 = sphi 0, %s144
      %s147 = sphi 0, %s146
      %s161 = sphi 0, %s147
      %s165 = sphi 0, %s165
      %s167 = sphi 0, %s165
      %s168 = sphi 0, %s167
      %s182 = sphi 0, %s168
      %s186 = sphi 0, %s186
      %s188 = sphi 0, %s186
      %s189 = sphi 0, %s188
      %s203 = sphi 0, %s189
      %s207 = sphi 0, %s207
      %s209 = sphi 0, %s207
      %s210 = sphi 0, %s209
      %s224 = sphi 0, %s210
      %s228 = sphi 0, %s228
      %s230 = sphi 0, %s228
      %s231 = sphi 0, %s230
      %s245 = sphi 0, %s231
      %s249 = sphi 0, %s249
      %s251 = sphi 0, %s249
      %s252 = sphi 0, %s251
      %s266 = sphi 0, %s252
      %s272 = sphi 0, %s274
      %s275 = sphi 0, %s272
      %s276 = sphi 0, %s275
      %s292 = sphi 0, %s276
      %s298 = sphi 0, %s300
      %s301 = sphi 0, %s298
      %s302 = sphi 0, %s301
      %s318 = sphi 0, %s302
      %s324 = sphi 0, %s326
      %s327 = sphi 0, %s324
      %s328 = sphi 0, %s327
      %s344 = sphi 0, %s328
    $region4: #{tpu_custom_call.1} parent=1 // loop_header_branch
      %29 = sbr.rel (%p27) target = $region8
    $region5: #{tpu_custom_call.1} parent=1 // loop_body
      %s31 = ssub.s32 %s26, 1
      %s32 = ssub.s32 %s26, 2
      %s33 = sadd.s32 %s26, 1
      %s34 = ssub.s32 %s26, %s33
      %p35 = scmp.eq.s32.totalorder %s34, 0
      %s37 = sadd.s32 %s36, 1
      %s38 = scalar_select %p35, %s36, %s37
      %p41 = pneg %p35
      %p42 = scmp.eq.s32.totalorder %s26, 1
      %p43 = por %p41, %p42
      %p44 = scmp.ne.s32.totalorder %s36, %s39
      %p45 = scmp.eq.s32.totalorder %s26, 0
      %p46 = por %p44, %p45
      %p47 = scmp.ne.s32.totalorder %s36, %s39
      %p48 = scmp.eq.s32.totalorder %s31, 1
      %p49 = por %p47, %p48
      %p50 = scmp.ne.s32.totalorder %s39, %s40
      %p51 = scmp.eq.s32.totalorder %s31, 0
      %p52 = por %p50, %p51
      %p53 = scmp.ne.s32.totalorder %s39, %s40
      %p54 = scmp.eq.s32.totalorder %s32, 1
      %p55 = por %p53, %p54
      %p57 = scmp.ne.s32.totalorder %s40, %s56
      %p58 = scmp.eq.s32.totalorder %s32, 0
      %p59 = por %p57, %p58
      %s61 = sadd.s32 %s60, 1
      %p64 = scmp.eq.s32.totalorder %s26, 1
      %p65 = scmp.ne.s32.totalorder %s60, %s62
      %p66 = scmp.eq.s32.totalorder %s26, 0
      %p67 = por %p65, %p66
      %p68 = scmp.ne.s32.totalorder %s60, %s62
      %p69 = scmp.eq.s32.totalorder %s31, 1
      %p70 = por %p68, %p69
      %p71 = scmp.ne.s32.totalorder %s62, %s63
      %p72 = scmp.eq.s32.totalorder %s31, 0
      %p73 = por %p71, %p72
      %p74 = scmp.ne.s32.totalorder %s62, %s63
      %p75 = scmp.eq.s32.totalorder %s32, 1
      %p76 = por %p74, %p75
      %p78 = scmp.ne.s32.totalorder %s63, %s77
      %p79 = scmp.eq.s32.totalorder %s32, 0
      %p80 = por %p78, %p79
      %s82 = sadd.s32 %s81, 1
      %p85 = scmp.eq.s32.totalorder %s26, 1
      %p86 = scmp.ne.s32.totalorder %s81, %s83
      %p87 = scmp.eq.s32.totalorder %s26, 0
      %p88 = por %p86, %p87
      %p89 = scmp.ne.s32.totalorder %s81, %s83
      %p90 = scmp.eq.s32.totalorder %s31, 1
      %p91 = por %p89, %p90
      %p92 = scmp.ne.s32.totalorder %s83, %s84
      %p93 = scmp.eq.s32.totalorder %s31, 0
      %p94 = por %p92, %p93
      %p95 = scmp.ne.s32.totalorder %s83, %s84
      %p96 = scmp.eq.s32.totalorder %s32, 1
      %p97 = por %p95, %p96
      %p99 = scmp.ne.s32.totalorder %s84, %s98
      %p100 = scmp.eq.s32.totalorder %s32, 0
      %p101 = por %p99, %p100
      %s103 = sadd.s32 %s102, 1
      %p106 = scmp.eq.s32.totalorder %s26, 1
      %p107 = scmp.ne.s32.totalorder %s102, %s104
      %p108 = scmp.eq.s32.totalorder %s26, 0
      %p109 = por %p107, %p108
      %p110 = scmp.ne.s32.totalorder %s102, %s104
      %p111 = scmp.eq.s32.totalorder %s31, 1
      %p112 = por %p110, %p111
      %p113 = scmp.ne.s32.totalorder %s104, %s105
      %p114 = scmp.eq.s32.totalorder %s31, 0
      %p115 = por %p113, %p114
      %p116 = scmp.ne.s32.totalorder %s104, %s105
      %p117 = scmp.eq.s32.totalorder %s32, 1
      %p118 = por %p116, %p117
      %p120 = scmp.ne.s32.totalorder %s105, %s119
      %p121 = scmp.eq.s32.totalorder %s32, 0
      %p122 = por %p120, %p121
      %s124 = sadd.s32 %s123, 1
      %p127 = scmp.eq.s32.totalorder %s26, 1
      %p128 = scmp.ne.s32.totalorder %s123, %s125
      %p129 = scmp.eq.s32.totalorder %s26, 0
      %p130 = por %p128, %p129
      %p131 = scmp.ne.s32.totalorder %s123, %s125
      %p132 = scmp.eq.s32.totalorder %s31, 1
      %p133 = por %p131, %p132
      %p134 = scmp.ne.s32.totalorder %s125, %s126
      %p135 = scmp.eq.s32.totalorder %s31, 0
      %p136 = por %p134, %p135
      %p137 = scmp.ne.s32.totalorder %s125, %s126
      %p138 = scmp.eq.s32.totalorder %s32, 1
      %p139 = por %p137, %p138
      %p141 = scmp.ne.s32.totalorder %s126, %s140
      %p142 = scmp.eq.s32.totalorder %s32, 0
      %p143 = por %p141, %p142
      %s145 = sadd.s32 %s144, 1
      %p148 = scmp.eq.s32.totalorder %s26, 1
      %p149 = scmp.ne.s32.totalorder %s144, %s146
      %p150 = scmp.eq.s32.totalorder %s26, 0
      %p151 = por %p149, %p150
      %p152 = scmp.ne.s32.totalorder %s144, %s146
      %p153 = scmp.eq.s32.totalorder %s31, 1
      %p154 = por %p152, %p153
      %p155 = scmp.ne.s32.totalorder %s146, %s147
      %p156 = scmp.eq.s32.totalorder %s31, 0
      %p157 = por %p155, %p156
      %p158 = scmp.ne.s32.totalorder %s146, %s147
      %p159 = scmp.eq.s32.totalorder %s32, 1
      %p160 = por %p158, %p159
      %p162 = scmp.ne.s32.totalorder %s147, %s161
      %p163 = scmp.eq.s32.totalorder %s32, 0
      %p164 = por %p162, %p163
      %s166 = sadd.s32 %s165, 1
      %p169 = scmp.eq.s32.totalorder %s26, 1
      %p170 = scmp.ne.s32.totalorder %s165, %s167
      %p171 = scmp.eq.s32.totalorder %s26, 0
      %p172 = por %p170, %p171
      %p173 = scmp.ne.s32.totalorder %s165, %s167
      %p174 = scmp.eq.s32.totalorder %s31, 1
      %p175 = por %p173, %p174
      %p176 = scmp.ne.s32.totalorder %s167, %s168
      %p177 = scmp.eq.s32.totalorder %s31, 0
      %p178 = por %p176, %p177
      %p179 = scmp.ne.s32.totalorder %s167, %s168
      %p180 = scmp.eq.s32.totalorder %s32, 1
      %p181 = por %p179, %p180
      %p183 = scmp.ne.s32.totalorder %s168, %s182
      %p184 = scmp.eq.s32.totalorder %s32, 0
      %p185 = por %p183, %p184
      %s187 = sadd.s32 %s186, 1
      %p190 = scmp.eq.s32.totalorder %s26, 1
      %p191 = scmp.ne.s32.totalorder %s186, %s188
      %p192 = scmp.eq.s32.totalorder %s26, 0
      %p193 = por %p191, %p192
      %p194 = scmp.ne.s32.totalorder %s186, %s188
      %p195 = scmp.eq.s32.totalorder %s31, 1
      %p196 = por %p194, %p195
      %p197 = scmp.ne.s32.totalorder %s188, %s189
      %p198 = scmp.eq.s32.totalorder %s31, 0
      %p199 = por %p197, %p198
      %p200 = scmp.ne.s32.totalorder %s188, %s189
      %p201 = scmp.eq.s32.totalorder %s32, 1
      %p202 = por %p200, %p201
      %p204 = scmp.ne.s32.totalorder %s189, %s203
      %p205 = scmp.eq.s32.totalorder %s32, 0
      %p206 = por %p204, %p205
      %s208 = sadd.s32 %s207, 1
      %p211 = scmp.eq.s32.totalorder %s26, 1
      %p212 = scmp.ne.s32.totalorder %s207, %s209
      %p213 = scmp.eq.s32.totalorder %s26, 0
      %p214 = por %p212, %p213
      %p215 = scmp.ne.s32.totalorder %s207, %s209
      %p216 = scmp.eq.s32.totalorder %s31, 1
      %p217 = por %p215, %p216
      %p218 = scmp.ne.s32.totalorder %s209, %s210
      %p219 = scmp.eq.s32.totalorder %s31, 0
      %p220 = por %p218, %p219
      %p221 = scmp.ne.s32.totalorder %s209, %s210
      %p222 = scmp.eq.s32.totalorder %s32, 1
      %p223 = por %p221, %p222
      %p225 = scmp.ne.s32.totalorder %s210, %s224
      %p226 = scmp.eq.s32.totalorder %s32, 0
      %p227 = por %p225, %p226
      %s229 = sadd.s32 %s228, 1
      %p232 = scmp.eq.s32.totalorder %s26, 1
      %p233 = scmp.ne.s32.totalorder %s228, %s230
      %p234 = scmp.eq.s32.totalorder %s26, 0
      %p235 = por %p233, %p234
      %p236 = scmp.ne.s32.totalorder %s228, %s230
      %p237 = scmp.eq.s32.totalorder %s31, 1
      %p238 = por %p236, %p237
      %p239 = scmp.ne.s32.totalorder %s230, %s231
      %p240 = scmp.eq.s32.totalorder %s31, 0
      %p241 = por %p239, %p240
      %p242 = scmp.ne.s32.totalorder %s230, %s231
      %p243 = scmp.eq.s32.totalorder %s32, 1
      %p244 = por %p242, %p243
      %p246 = scmp.ne.s32.totalorder %s231, %s245
      %p247 = scmp.eq.s32.totalorder %s32, 0
      %p248 = por %p246, %p247
      %s250 = sadd.s32 %s249, 1
      %p253 = scmp.eq.s32.totalorder %s26, 1
      %p254 = scmp.ne.s32.totalorder %s249, %s251
      %p255 = scmp.eq.s32.totalorder %s26, 0
      %p256 = por %p254, %p255
      %p257 = scmp.ne.s32.totalorder %s249, %s251
      %p258 = scmp.eq.s32.totalorder %s31, 1
      %p259 = por %p257, %p258
      %p260 = scmp.ne.s32.totalorder %s251, %s252
      %p261 = scmp.eq.s32.totalorder %s31, 0
      %p262 = por %p260, %p261
      %p263 = scmp.ne.s32.totalorder %s251, %s252
      %p264 = scmp.eq.s32.totalorder %s32, 1
      %p265 = por %p263, %p264
      %p267 = scmp.ne.s32.totalorder %s252, %s266
      %p268 = scmp.eq.s32.totalorder %s32, 0
      %p269 = por %p267, %p268
      %s270 = ssub.s32 %s26, %s33
      %p271 = scmp.eq.s32.totalorder %s270, 0
      %s273 = sadd.s32 %s272, 1
      %s274 = scalar_select %p271, %s272, %s273
      %p277 = pneg %p271
      %p278 = scmp.eq.s32.totalorder %s26, 1
      %p279 = por %p277, %p278
      %p280 = scmp.ne.s32.totalorder %s272, %s275
      %p281 = scmp.eq.s32.totalorder %s26, 0
      %p282 = por %p280, %p281
      %p283 = scmp.ne.s32.totalorder %s272, %s275
      %p284 = scmp.eq.s32.totalorder %s31, 1
      %p285 = por %p283, %p284
      %p286 = scmp.ne.s32.totalorder %s275, %s276
      %p287 = scmp.eq.s32.totalorder %s31, 0
      %p288 = por %p286, %p287
      %p289 = scmp.ne.s32.totalorder %s275, %s276
      %p290 = scmp.eq.s32.totalorder %s32, 1
      %p291 = por %p289, %p290
      %p293 = scmp.ne.s32.totalorder %s276, %s292
      %p294 = scmp.eq.s32.totalorder %s32, 0
      %p295 = por %p293, %p294
      %s296 = ssub.s32 %s26, %s33
      %p297 = scmp.eq.s32.totalorder %s296, 0
      %s299 = sadd.s32 %s298, 1
      %s300 = scalar_select %p297, %s298, %s299
      %p303 = pneg %p297
      %p304 = scmp.eq.s32.totalorder %s26, 1
      %p305 = por %p303, %p304
      %p306 = scmp.ne.s32.totalorder %s298, %s301
      %p307 = scmp.eq.s32.totalorder %s26, 0
      %p308 = por %p306, %p307
      %p309 = scmp.ne.s32.totalorder %s298, %s301
      %p310 = scmp.eq.s32.totalorder %s31, 1
      %p311 = por %p309, %p310
      %p312 = scmp.ne.s32.totalorder %s301, %s302
      %p313 = scmp.eq.s32.totalorder %s31, 0
      %p314 = por %p312, %p313
      %p315 = scmp.ne.s32.totalorder %s301, %s302
      %p316 = scmp.eq.s32.totalorder %s32, 1
      %p317 = por %p315, %p316
      %p319 = scmp.ne.s32.totalorder %s302, %s318
      %p320 = scmp.eq.s32.totalorder %s32, 0
      %p321 = por %p319, %p320
      %s322 = ssub.s32 %s26, %s33
      %p323 = scmp.eq.s32.totalorder %s322, 0
      %s325 = sadd.s32 %s324, 1
      %s326 = scalar_select %p323, %s324, %s325
      %p329 = pneg %p323
      %p330 = scmp.eq.s32.totalorder %s26, 1
      %p331 = por %p329, %p330
      %p332 = scmp.ne.s32.totalorder %s324, %s327
      %p333 = scmp.eq.s32.totalorder %s26, 0
      %p334 = por %p332, %p333
      %p335 = scmp.ne.s32.totalorder %s324, %s327
      %p336 = scmp.eq.s32.totalorder %s31, 1
      %p337 = por %p335, %p336
      %p338 = scmp.ne.s32.totalorder %s327, %s328
      %p339 = scmp.eq.s32.totalorder %s31, 0
      %p340 = por %p338, %p339
      %p341 = scmp.ne.s32.totalorder %s327, %s328
      %p342 = scmp.eq.s32.totalorder %s32, 1
      %p343 = por %p341, %p342
      %p345 = scmp.ne.s32.totalorder %s328, %s344
      %p346 = scmp.eq.s32.totalorder %s32, 0
      %p347 = por %p345, %p346
      %p348 = scmp.le.s32.totalorder 1, %s26
      %p349 = scmp.lt.s32.totalorder %s26, 3
      %p350 = pnand %p348, %p349
      %p351 = pneg %p350
      // Predicated region
      $region9: #{tpu_custom_call.1} parent=5 // pred_check
        _
      $region10: #{tpu_custom_call.1} parent=5 // pred_check_branch
        %353 = sbr.rel (%p350) target = $region12
      $region11: #{tpu_custom_call.1} parent=5 // pred_region
        %s354 = ssub.s32 %s26, 1
        // Predicated region
        $region13: #{tpu_custom_call.1} parent=11 // pred_check
          %p355 = pneg %p73
        $region14: #{tpu_custom_call.1} parent=11 // pred_check_branch
          %357 = sbr.rel (%p355) target = $region16
        $region15: #{tpu_custom_call.1} parent=11 // pred_region
          _
        $region16: #{tpu_custom_call.1} parent=11 // pred_fallthru
          _
        // Predicated region
        $region17: #{tpu_custom_call.1} parent=11 // pred_check
          %p358 = pneg %p94
        $region18: #{tpu_custom_call.1} parent=11 // pred_check_branch
          %360 = sbr.rel (%p358) target = $region20
        $region19: #{tpu_custom_call.1} parent=11 // pred_region
          _
        $region20: #{tpu_custom_call.1} parent=11 // pred_fallthru
          _
        // Predicated region
        $region21: #{tpu_custom_call.1} parent=11 // pred_check
          %p361 = pneg %p115
        $region22: #{tpu_custom_call.1} parent=11 // pred_check_branch
          %363 = sbr.rel (%p361) target = $region24
        $region23: #{tpu_custom_call.1} parent=11 // pred_region
          _
        $region24: #{tpu_custom_call.1} parent=11 // pred_fallthru
          _
        // Predicated region
        $region25: #{tpu_custom_call.1} parent=11 // pred_check
          %p364 = pneg %p136
        $region26: #{tpu_custom_call.1} parent=11 // pred_check_branch
          %366 = sbr.rel (%p364) target = $region28
        $region27: #{tpu_custom_call.1} parent=11 // pred_region
          _
        $region28: #{tpu_custom_call.1} parent=11 // pred_fallthru
          _
        // Predicated region
        $region29: #{tpu_custom_call.1} parent=11 // pred_check
          %p367 = pneg %p157
        $region30: #{tpu_custom_call.1} parent=11 // pred_check_branch
          %369 = sbr.rel (%p367) target = $region32
        $region31: #{tpu_custom_call.1} parent=11 // pred_region
          _
        $region32: #{tpu_custom_call.1} parent=11 // pred_fallthru
          _
        // Predicated region
        $region33: #{tpu_custom_call.1} parent=11 // pred_check
          %p370 = pneg %p178
        $region34: #{tpu_custom_call.1} parent=11 // pred_check_branch
          %372 = sbr.rel (%p370) target = $region36
        $region35: #{tpu_custom_call.1} parent=11 // pred_region
          _
        $region36: #{tpu_custom_call.1} parent=11 // pred_fallthru
          _
        // Predicated region
        $region37: #{tpu_custom_call.1} parent=11 // pred_check
          %p373 = pneg %p199
        $region38: #{tpu_custom_call.1} parent=11 // pred_check_branch
          %375 = sbr.rel (%p373) target = $region40
        $region39: #{tpu_custom_call.1} parent=11 // pred_region
          _
        $region40: #{tpu_custom_call.1} parent=11 // pred_fallthru
          _
        // Predicated region
        $region41: #{tpu_custom_call.1} parent=11 // pred_check
          %p376 = pneg %p220
        $region42: #{tpu_custom_call.1} parent=11 // pred_check_branch
          %378 = sbr.rel (%p376) target = $region44
        $region43: #{tpu_custom_call.1} parent=11 // pred_region
          _
        $region44: #{tpu_custom_call.1} parent=11 // pred_fallthru
          _
        // Predicated region
        $region45: #{tpu_custom_call.1} parent=11 // pred_check
          %p379 = pneg %p241
        $region46: #{tpu_custom_call.1} parent=11 // pred_check_branch
          %381 = sbr.rel (%p379) target = $region48
        $region47: #{tpu_custom_call.1} parent=11 // pred_region
          _
        $region48: #{tpu_custom_call.1} parent=11 // pred_fallthru
          _
        // Predicated region
        $region49: #{tpu_custom_call.1} parent=11 // pred_check
          %p382 = pneg %p262
        $region50: #{tpu_custom_call.1} parent=11 // pred_check_branch
          %384 = sbr.rel (%p382) target = $region52
        $region51: #{tpu_custom_call.1} parent=11 // pred_region
          _
        $region52: #{tpu_custom_call.1} parent=11 // pred_fallthru
          _
      $region12: #{tpu_custom_call.1} parent=5 // pred_fallthru
        _
      %p385 = scmp.lt.s32.totalorder %s26, 2
      // Predicated region
      $region53: #{tpu_custom_call.1} parent=5 // pred_check
        %p386 = pneg %p385
      $region54: #{tpu_custom_call.1} parent=5 // pred_check_branch
        %388 = sbr.rel (%p386) target = $region56
      $region55: #{tpu_custom_call.1} parent=5 // pred_region
        // Predicated region
        $region57: #{tpu_custom_call.1} parent=55 // pred_check
          %p389 = pneg %p46
        $region58: #{tpu_custom_call.1} parent=55 // pred_check_branch
          %391 = sbr.rel (%p389) target = $region60
        $region59: #{tpu_custom_call.1} parent=55 // pred_region
          %p392 = scmp.lt.s32.totalorder %s26, 1
          %s393 = scalar_select %p392, %s26, 1
          %s394 = smul.addr %s393, 2
          %s395 = smul.addr %s394, 8
          %s396 = scalar_lea.vmem %s0, %s395
        $region60: #{tpu_custom_call.1} parent=55 // pred_fallthru
          _
      $region56: #{tpu_custom_call.1} parent=5 // pred_fallthru
        _
      %p397 = scmp.le.s32.totalorder 1, %s26
      %p398 = scmp.lt.s32.totalorder %s26, 3
      %p399 = pnand %p397, %p398
      %p400 = pneg %p399
      // Predicated region
      $region61: #{tpu_custom_call.1} parent=5 // pred_check
        _
      $region62: #{tpu_custom_call.1} parent=5 // pred_check_branch
        %402 = sbr.rel (%p399) target = $region64
      $region63: #{tpu_custom_call.1} parent=5 // pred_region
        %s403 = ssub.s32 %s26, 1
        %p404 = scmp.lt.s32.totalorder %s31, 1
        %s405 = scalar_select %p404, %s31, 1
        %s406 = smul.addr %s405, 2
        %s407 = smul.addr %s406, 8
        %s408 = scalar_lea.vmem %s0, %s407
        %p409 = pneg %p52
        %p410 = pneg %p49
        %p411 = pneg %p73
        %p412 = pneg %p70
        %p413 = pneg %p94
        %p414 = pneg %p91
        %p415 = pneg %p115
        %p416 = pneg %p112
        %p417 = pneg %p136
        %p418 = pneg %p133
        %p419 = pneg %p157
        %p420 = pneg %p154
        %p421 = pneg %p178
        %p422 = pneg %p175
        %p423 = pneg %p199
        %p424 = pneg %p196
        %p425 = pneg %p220
        %p426 = pneg %p217
        %p427 = pneg %p241
        %p428 = pneg %p238
        %p429 = pneg %p262
        %p430 = pneg %p259
        %p431 = pneg %p288
        %p432 = pneg %p285
        %s433 = sand.u32 %s275, 1
        %s434 = scalar_lea.sflag [#allocation13], %s433
        %s435 = sand.u32 %s275, 1
        %s436 = smul.addr %s435, 8
        %s437 = scalar_lea.vmem [#allocation12], %s436
        %p438 = pneg %p314
        %p439 = pneg %p311
        %s440 = sand.u32 %s31, 1
        %s441 = scalar_lea.sflag [#allocation15], %s440
        %s442 = sand.u32 %s301, 1
        %s443 = smul.addr %s442, 4
        %s444 = scalar_lea.vmem [#allocation14], %s443
        %p445 = pneg %p340
        %p446 = pneg %p337
        %s447 = sand.u32 %s31, 1
        %s448 = scalar_lea.sflag [#allocation15], %s447
        %s449 = sand.u32 %s327, 1
        %s450 = smul.addr %s449, 8
        %s451 = scalar_lea.vmem [#allocation16], %s450
        %p452 = scmp.lt.s32.totalorder %s31, 1
        %s453 = scalar_select %p452, %s31, 1
        %s454 = smul.addr %s453, 2
        %s455 = smul.addr %s454, 8
        %s456 = scalar_lea.vmem %s0, %s455
        %v457 = vld [vmem:[%s456] sm:$0xff]
        %v458 = vld [vmem:[%s456 + $0x8] sm:$0xff]
        %v459 = vlaneseq
        %v460 = vand.u32 %v459, 127
        %v461 = vadd.s32 %v460, 128
        %vm462 = vcmp.lt.s32.totalorder %v460, 0
        %v463 = vsub.s32 0, %v460
        %v464 = vsel %vm462, %v463, %v460
        %v465 = vshrl.u32 %v464, 4
        %v466 = vand.u32 %v464, 15
        %v467 = vsub.s32 0, %v466
        %v468 = vsel %vm462, %v467, %v466
        %vm469 = vcmp.lt.s32.totalorder %v461, 0
        %v470 = vsub.s32 0, %v461
        %v471 = vsel %vm469, %v470, %v461
        %v472 = vshrl.u32 %v471, 4
        %v473 = vand.u32 %v471, 15
        %v474 = vsub.s32 0, %v473
        %v475 = vsel %vm469, %v474, %v473
        %vm476 = vcmp.ne.s32.totalorder %v468, 0
        %vm477 = vcmp.ne.s32.totalorder %v475, 0
        %vm478 = vcmp.lt.s32.totalorder %v468, 0
        %vm479 = vcmp.lt.s32.totalorder %v475, 0
        %vm480 = vmand %vm478, %vm476
        %vm481 = vmand %vm479, %vm477
        %v482 = vadd.s32 %v468, 16
        %v483 = vadd.s32 %v475, 16
        %v484 = vsel %vm480, %v482, %v468
        %v485 = vsel %vm481, %v483, %v475
        %vm486 = vcmask 138240
        %487 = vst.msk [vmem:[#allocation2] sm:$0xff] %vm486, 0.0
        %vm488 = vcmask 277640
        %489 = vst.msk [vmem:[#allocation2 + $0x10] sm:$0xff] %vm488, 0.0
        %492 = vrot.lane.b32.xlu0 %v457, 17
        %v493 = vpop.permute.xlu0 %492
        %494 = vrot.lane.b32.xlu0 %v458, 17
        %v495 = vpop.permute.xlu0 %494
        %v496 = vsel %vm486, %v493, %v495
        %vm500 = vcmask 1047688
        %501 = vst.msk [vmem:[#allocation2] sm:$0xff] %vm500, %v493
        %502 = vst [vmem:[#allocation2 + $0x8] sm:$0xff] %v496
        %503 = vst.msk [vmem:[#allocation2 + $0x10] sm:$0xff] %vm486, %v495
        %v504 = vadd.s32 %v484, 4294967295
        %v505 = vadd.s32 %v485, 4294967295
        %vm506 = vcmp.ge.s32.totalorder %v504, 0
        %vm507 = vcmp.ge.s32.totalorder %v505, 0
        %vm508 = vcmp.lt.s32.totalorder %v504, 16
        %vm509 = vcmp.lt.s32.totalorder %v505, 16
        %vm510 = vmand %vm506, %vm508
        %vm511 = vmand %vm507, %vm509
        %v512 = vld [vmem:[#allocation2] sm:$0xff]
        %v513 = vld [vmem:[#allocation2 + $0x8] sm:$0xff]
        %v514 = vsel %vm510, 1, 0
        %v515 = vsel %vm511, 1, 0
        %vm516 = vcmp.eq.s32.totalorder %v514, 1
        %vm517 = vcmp.eq.s32.totalorder %v515, 1
        %v518 = vsel %vm516, %v512, 0.0
        %v519 = vsel %vm517, %v513, 0.0
        %520 = vst [vmem:[#allocation3] sm:$0xff] %v518
        %521 = vst [vmem:[#allocation3 + $0x8] sm:$0xff] %v519
        %v522 = vld [vmem:[#allocation2] sm:$0xff]
        %v523 = vld [vmem:[#allocation2 + $0x8] sm:$0xff]
        %v524 = vld [vmem:[#allocation2 + $0x10] sm:$0xff]
        %528 = vrot.lane.b32.xlu0 %v522, 112
        %v529 = vpop.permute.xlu0 %528
        %530 = vrot.lane.b32.xlu0 %v523, 112
        %v531 = vpop.permute.xlu0 %530
        %532 = vrot.lane.b32.xlu0 %v524, 112
        %v533 = vpop.permute.xlu0 %532
        %vm534 = vcmask 916480
        %v535 = vsel %vm534, %v529, %v531
        %v536 = vsel %vm534, %v531, %v533
        %v539 = vsel %vm516, %v535, 0.0
        %v540 = vsel %vm517, %v536, 0.0
        %541 = vst [vmem:[#allocation3 + $0x30] sm:$0xff] %v539
        %542 = vst [vmem:[#allocation3 + $0x38] sm:$0xff] %v540
        %v543 = vld [vmem:[#allocation2] sm:$0xff]
        %v544 = vld [vmem:[#allocation2 + $0x8] sm:$0xff]
        %v545 = vld [vmem:[#allocation2 + $0x10] sm:$0xff]
        %549 = vrot.lane.b32.xlu0 %v543, 96
        %v550 = vpop.permute.xlu0 %549
        %551 = vrot.lane.b32.xlu0 %v544, 96
        %v552 = vpop.permute.xlu0 %551
        %553 = vrot.lane.b32.xlu0 %v545, 96
        %v554 = vpop.permute.xlu0 %553
        %vm555 = vcmask 785408
        %v556 = vsel %vm555, %v550, %v552
        %v557 = vsel %vm555, %v552, %v554
        %v560 = vsel %vm516, %v556, 0.0
        %v561 = vsel %vm517, %v557, 0.0
        %562 = vst [vmem:[#allocation3 + $0x60] sm:$0xff] %v560
        %563 = vst [vmem:[#allocation3 + $0x68] sm:$0xff] %v561
        %v564 = vld [vmem:[#allocation2] sm:$0xff]
        %v565 = vld [vmem:[#allocation2 + $0x8] sm:$0xff]
        %v566 = vld [vmem:[#allocation2 + $0x10] sm:$0xff]
        %570 = vrot.lane.b32.xlu0 %v564, 127
        %v571 = vpop.permute.xlu0 %570
        %572 = vrot.lane.b32.xlu0 %v565, 127
        %v573 = vpop.permute.xlu0 %572
        %574 = vrot.lane.b32.xlu0 %v566, 127
        %v575 = vpop.permute.xlu0 %574
        %vm576 = vcmask 1039360
        %v577 = vsel %vm576, %v571, %v573
        %v578 = vsel %vm576, %v573, %v575
        %581 = vst [vmem:[#allocation3 + $0x10] sm:$0xff] %v577
        %582 = vst [vmem:[#allocation3 + $0x18] sm:$0xff] %v578
        %v583 = vld [vmem:[#allocation2] sm:$0xff]
        %v584 = vld [vmem:[#allocation2 + $0x8] sm:$0xff]
        %v585 = vld [vmem:[#allocation2 + $0x10] sm:$0xff]
        %589 = vrot.lane.b32.xlu0 %v583, 111
        %v590 = vpop.permute.xlu0 %589
        %591 = vrot.lane.b32.xlu0 %v584, 111
        %v592 = vpop.permute.xlu0 %591
        %593 = vrot.lane.b32.xlu0 %v585, 111
        %v594 = vpop.permute.xlu0 %593
        %vm595 = vcmask 908288
        %v596 = vsel %vm595, %v590, %v592
        %v597 = vsel %vm595, %v592, %v594
        %600 = vst [vmem:[#allocation3 + $0x40] sm:$0xff] %v596
        %601 = vst [vmem:[#allocation3 + $0x48] sm:$0xff] %v597
        %v602 = vld [vmem:[#allocation2] sm:$0xff]
        %v603 = vld [vmem:[#allocation2 + $0x8] sm:$0xff]
        %v604 = vld [vmem:[#allocation2 + $0x10] sm:$0xff]
        %608 = vrot.lane.b32.xlu0 %v602, 95
        %v609 = vpop.permute.xlu0 %608
        %610 = vrot.lane.b32.xlu0 %v603, 95
        %v611 = vpop.permute.xlu0 %610
        %612 = vrot.lane.b32.xlu0 %v604, 95
        %v613 = vpop.permute.xlu0 %612
        %vm614 = vcmask 777216
        %v615 = vsel %vm614, %v609, %v611
        %v616 = vsel %vm614, %v611, %v613
        %619 = vst [vmem:[#allocation3 + $0x70] sm:$0xff] %v615
        %620 = vst [vmem:[#allocation3 + $0x78] sm:$0xff] %v616
        %v621 = vadd.s32 %v484, 1
        %v622 = vadd.s32 %v485, 1
        %vm623 = vcmp.ge.s32.totalorder %v621, 0
        %vm624 = vcmp.ge.s32.totalorder %v622, 0
        %vm625 = vcmp.lt.s32.totalorder %v621, 16
        %vm626 = vcmp.lt.s32.totalorder %v622, 16
        %vm627 = vmand %vm623, %vm625
        %vm628 = vmand %vm624, %vm626
        %v629 = vld [vmem:[#allocation2] sm:$0xff]
        %v630 = vld [vmem:[#allocation2 + $0x8] sm:$0xff]
        %v631 = vld [vmem:[#allocation2 + $0x10] sm:$0xff]
        %v632 = vsel %vm627, 1, 0
        %v633 = vsel %vm628, 1, 0
        %vm634 = vcmp.eq.s32.totalorder %v632, 1
        %vm635 = vcmp.eq.s32.totalorder %v633, 1
        %639 = vrot.lane.b32.xlu0 %v629, 126
        %v640 = vpop.permute.xlu0 %639
        %641 = vrot.lane.b32.xlu0 %v630, 126
        %v642 = vpop.permute.xlu0 %641
        %643 = vrot.lane.b32.xlu0 %v631, 126
        %v644 = vpop.permute.xlu0 %643
        %vm645 = vcmask 1031168
        %v646 = vsel %vm645, %v640, %v642
        %v647 = vsel %vm645, %v642, %v644
        %v650 = vsel %vm634, %v646, 0.0
        %v651 = vsel %vm635, %v647, 0.0
        %652 = vst [vmem:[#allocation3 + $0x20] sm:$0xff] %v650
        %653 = vst [vmem:[#allocation3 + $0x28] sm:$0xff] %v651
        %v654 = vld [vmem:[#allocation2] sm:$0xff]
        %v655 = vld [vmem:[#allocation2 + $0x8] sm:$0xff]
        %v656 = vld [vmem:[#allocation2 + $0x10] sm:$0xff]
        %660 = vrot.lane.b32.xlu0 %v654, 110
        %v661 = vpop.permute.xlu0 %660
        %662 = vrot.lane.b32.xlu0 %v655, 110
        %v663 = vpop.permute.xlu0 %662
        %664 = vrot.lane.b32.xlu0 %v656, 110
        %v665 = vpop.permute.xlu0 %664
        %vm666 = vcmask 900096
        %v667 = vsel %vm666, %v661, %v663
        %v668 = vsel %vm666, %v663, %v665
        %v671 = vsel %vm634, %v667, 0.0
        %v672 = vsel %vm635, %v668, 0.0
        %673 = vst [vmem:[#allocation3 + $0x50] sm:$0xff] %v671
        %674 = vst [vmem:[#allocation3 + $0x58] sm:$0xff] %v672
        %v675 = vld [vmem:[#allocation2] sm:$0xff]
        %v676 = vld [vmem:[#allocation2 + $0x8] sm:$0xff]
        %v677 = vld [vmem:[#allocation2 + $0x10] sm:$0xff]
        %681 = vrot.lane.b32.xlu0 %v675, 94
        %v682 = vpop.permute.xlu0 %681
        %683 = vrot.lane.b32.xlu0 %v676, 94
        %v684 = vpop.permute.xlu0 %683
        %685 = vrot.lane.b32.xlu0 %v677, 94
        %v686 = vpop.permute.xlu0 %685
        %vm687 = vcmask 769024
        %v688 = vsel %vm687, %v682, %v684
        %v689 = vsel %vm687, %v684, %v686
        %v692 = vsel %vm634, %v688, 0.0
        %v693 = vsel %vm635, %v689, 0.0
        %694 = vst [vmem:[#allocation3 + $0x80] sm:$0xff] %v692
        %695 = vst [vmem:[#allocation3 + $0x88] sm:$0xff] %v693
        %v696 = vld [vmem:[%s2] sm:$0xff]
        %v697 = vld [vmem:[#allocation3] sm:$0xff]
        %v698 = vld [vmem:[#allocation3 + $0x8] sm:$0xff]
        %v699 = vld [vmem:[#allocation3 + $0x10] sm:$0xff]
        %v700 = vld [vmem:[#allocation3 + $0x18] sm:$0xff]
        %v701 = vld [vmem:[#allocation3 + $0x20] sm:$0xff]
        %v702 = vld [vmem:[#allocation3 + $0x28] sm:$0xff]
        %v703 = vld [vmem:[#allocation3 + $0x30] sm:$0xff]
        %v704 = vld [vmem:[#allocation3 + $0x38] sm:$0xff]
        %v705 = vld [vmem:[#allocation3 + $0x40] sm:$0xff]
        %v706 = vld [vmem:[#allocation3 + $0x48] sm:$0xff]
        %v707 = vld [vmem:[#allocation3 + $0x50] sm:$0xff]
        %v708 = vld [vmem:[#allocation3 + $0x58] sm:$0xff]
        %v709 = vld [vmem:[#allocation3 + $0x60] sm:$0xff]
        %v710 = vld [vmem:[#allocation3 + $0x68] sm:$0xff]
        %v711 = vld [vmem:[#allocation3 + $0x70] sm:$0xff]
        %v712 = vld [vmem:[#allocation3 + $0x78] sm:$0xff]
        %v713 = vld [vmem:[#allocation3 + $0x80] sm:$0xff]
        %v714 = vld [vmem:[#allocation3 + $0x88] sm:$0xff]
        %v715 = vld [vmem:[%s3] sm:$0xff]
        %717 = vset.pattern.permute.xlu0 0
        %718 = vperm.xlu0 %717, %v715
        %v719 = vpop.permute.xlu0 %718
        %vm721 = vcmask 588800
        %v723 = vsel %vm721, %v696, 0
        %725 = vmatprep.subr.mxu0 %v698
        %726 = vmatpush1.msra.mxu0 %v697
        %727 = vmatprep.subr.mxu0 %v700
        %728 = vmatpush1.msra.mxu0 %v699
        %729 = vmatprep.subr.mxu0 %v702
        %730 = vmatpush1.msra.mxu0 %v701
        %731 = vmatprep.subr.mxu0 %v704
        %732 = vmatpush1.msra.mxu0 %v703
        %733 = vmatprep.subr.mxu0 %v706
        %734 = vmatpush1.msra.mxu0 %v705
        %735 = vmatprep.subr.mxu0 %v708
        %736 = vmatpush1.msra.mxu0 %v707
        %737 = vmatprep.subr.mxu0 %v710
        %738 = vmatpush1.msra.mxu0 %v709
        %739 = vmatprep.subr.mxu0 %v712
        %740 = vmatpush1.msra.mxu0 %v711
        %741 = vmatprep.subr.mxu0 %v714
        %742 = vmatpush1.msra.mxu0 %v713
        %743 = vmatprep.subr.mxu0 0.0
        %744 = vmatpush1.msra.mxu0 0.0
        %745 = vmatprep.subr.mxu0 0.0
        %746 = vmatpush1.msra.mxu0 0.0
        %747 = vmatprep.subr.mxu0 0.0
        %748 = vmatpush1.msra.mxu0 0.0
        %749 = vmatprep.subr.mxu0 0.0
        %750 = vmatpush1.msra.mxu0 0.0
        %751 = vmatprep.subr.mxu0 0.0
        %752 = vmatpush1.msra.mxu0 0.0
        %753 = vmatprep.subr.mxu0 0.0
        %754 = vmatpush1.msra.mxu0 0.0
        %755 = vmatprep.subr.mxu0 0.0
        %756 = vmatpush1.msra.mxu0 0.0
        %757 = vmatprep.subr.mxu0 0.0
        %758 = vmatpush1.msra.mxu0 0.0
        %759 = vmatprep.subr.mxu0 0.0
        %760 = vmatpush1.msra.mxu0 0.0
        %761 = vmatprep.subr.mxu0 0.0
        %762 = vmatpush1.msra.mxu0 0.0
        %763 = vmatprep.subr.mxu0 0.0
        %764 = vmatpush1.msra.mxu0 0.0
        %765 = vmatprep.subr.mxu0 0.0
        %766 = vmatpush1.msra.mxu0 0.0
        %767 = vmatprep.subr.mxu0 0.0
        %768 = vmatpush1.msra.mxu0 0.0
        %769 = vmatprep.subr.mxu0 0.0
        %770 = vmatpush1.msra.mxu0 0.0
        %771 = vmatprep.subr.mxu0 0.0
        %772 = vmatpush1.msra.mxu0 0.0
        %773 = vmatprep.subr.mxu0 0.0
        %774 = vmatpush1.msra.mxu0 0.0
        %775 = vmatprep.subr.mxu0 0.0
        %776 = vmatpush1.msra.mxu0 0.0
        %777 = vmatprep.subr.mxu0 0.0
        %778 = vmatpush1.msra.mxu0 0.0
        %779 = vmatprep.subr.mxu0 0.0
        %780 = vmatpush1.msra.mxu0 0.0
        %781 = vmatprep.subr.mxu0 0.0
        %782 = vmatpush1.msra.mxu0 0.0
        %783 = vmatprep.subr.mxu0 0.0
        %784 = vmatpush1.msra.mxu0 0.0
        %785 = vmatprep.subr.mxu0 0.0
        %786 = vmatpush1.msra.mxu0 0.0
        %787 = vmatprep.subr.mxu0 0.0
        %788 = vmatpush1.msra.mxu0 0.0
        %789 = vmatprep.mubr.f32.mxu0 0.0
        %790 = vmatmul.mubr.f32.gmra.mrb[0].mxu0 %v723
        %v791 = vpop.f32.mrb[0].mxu0
        %v792 = vadd.f32 %v719, %v791
        %v793 = vpop.f32.mrb[0].mxu0
        %v794 = vadd.f32 %v719, %v793
        %795 = vdwg.mxu0
        %v796 = vmax.f32 %v792, 0.0
        %v797 = vmax.f32 %v794, 0.0
        %v800 = vcombine.low %v796, %v797
        %802 = vst [vmem:[%s437] sm:$0xff] %v800
        %vm803 = vcmask 556032
        %804 = vst.msk [vmem:[#allocation4] sm:$0xff] %vm803, 0.0
        %vm805 = vcmask 1048096
        %806 = vst.msk [vmem:[#allocation4 + $0x10] sm:$0xff] %vm805, 0.0
        %vm807 = vcmask 64512
        %808 = vst.msk [vmem:[#allocation4 + $0x18] sm:$0xff] %vm807, 0.0
        %809 = vrot.lane.b32.xlu0 %v796, 68
        %v810 = vpop.permute.xlu0 %809
        %811 = vrot.lane.b32.xlu0 %v797, 68
        %v812 = vpop.permute.xlu0 %811
        %v813 = vsel %vm803, %v810, %v812
        %817 = vst.msk [vmem:[#allocation4] sm:$0xff] %vm805, %v810
        %818 = vst [vmem:[#allocation4 + $0x8] sm:$0xff] %v813
        %819 = vst.msk [vmem:[#allocation4 + $0x10] sm:$0xff] %vm803, %v812
        %v820 = vadd.s32 %v484, 4294967292
        %v821 = vadd.s32 %v485, 4294967292
        %vm822 = vcmp.ge.s32.totalorder %v820, 0
        %vm823 = vcmp.ge.s32.totalorder %v821, 0
        %vm824 = vcmp.lt.s32.totalorder %v820, 16
        %vm825 = vcmp.lt.s32.totalorder %v821, 16
        %vm826 = vmand %vm822, %vm824
        %vm827 = vmand %vm823, %vm825
        %v828 = vld [vmem:[#allocation4] sm:$0xff]
        %v829 = vld [vmem:[#allocation4 + $0x8] sm:$0xff]
        %v830 = vsel %vm826, 1, 0
        %v831 = vsel %vm827, 1, 0
        %vm832 = vcmp.eq.s32.totalorder %v830, 1
        %vm833 = vcmp.eq.s32.totalorder %v831, 1
        %v834 = vsel %vm832, %v828, 0.0
        %v835 = vsel %vm833, %v829, 0.0
        %836 = vst [vmem:[#allocation5] sm:$0xff] %v834
        %837 = vst [vmem:[#allocation5 + $0x8] sm:$0xff] %v835
        %v838 = vld [vmem:[#allocation4] sm:$0xff]
        %v839 = vld [vmem:[#allocation4 + $0x8] sm:$0xff]
        %v840 = vld [vmem:[#allocation4 + $0x10] sm:$0xff]
        %844 = vrot.lane.b32.xlu0 %v838, 112
        %v845 = vpop.permute.xlu0 %844
        %846 = vrot.lane.b32.xlu0 %v839, 112
        %v847 = vpop.permute.xlu0 %846
        %848 = vrot.lane.b32.xlu0 %v840, 112
        %v849 = vpop.permute.xlu0 %848
        %v850 = vsel %vm534, %v845, %v847
        %v851 = vsel %vm534, %v847, %v849
        %v854 = vsel %vm832, %v850, 0.0
        %v855 = vsel %vm833, %v851, 0.0
        %856 = vst [vmem:[#allocation5 + $0x90] sm:$0xff] %v854
        %857 = vst [vmem:[#allocation5 + $0x98] sm:$0xff] %v855
        %v858 = vld [vmem:[#allocation4] sm:$0xff]
        %v859 = vld [vmem:[#allocation4 + $0x8] sm:$0xff]
        %v860 = vld [vmem:[#allocation4 + $0x10] sm:$0xff]
        %864 = vrot.lane.b32.xlu0 %v858, 96
        %v865 = vpop.permute.xlu0 %864
        %866 = vrot.lane.b32.xlu0 %v859, 96
        %v867 = vpop.permute.xlu0 %866
        %868 = vrot.lane.b32.xlu0 %v860, 96
        %v869 = vpop.permute.xlu0 %868
        %v870 = vsel %vm555, %v865, %v867
        %v871 = vsel %vm555, %v867, %v869
        %v874 = vsel %vm832, %v870, 0.0
        %v875 = vsel %vm833, %v871, 0.0
        %876 = vst [vmem:[#allocation5 + $0x120] sm:$0xff] %v874
        %877 = vst [vmem:[#allocation5 + $0x128] sm:$0xff] %v875
        %v878 = vld [vmem:[#allocation4] sm:$0xff]
        %v879 = vld [vmem:[#allocation4 + $0x8] sm:$0xff]
        %v880 = vld [vmem:[#allocation4 + $0x10] sm:$0xff]
        %884 = vrot.lane.b32.xlu0 %v878, 80
        %v885 = vpop.permute.xlu0 %884
        %886 = vrot.lane.b32.xlu0 %v879, 80
        %v887 = vpop.permute.xlu0 %886
        %888 = vrot.lane.b32.xlu0 %v880, 80
        %v889 = vpop.permute.xlu0 %888
        %vm890 = vcmask 654336
        %v891 = vsel %vm890, %v885, %v887
        %v892 = vsel %vm890, %v887, %v889
        %v895 = vsel %vm832, %v891, 0.0
        %v896 = vsel %vm833, %v892, 0.0
        %897 = vst [vmem:[#allocation5 + $0x1b0] sm:$0xff] %v895
        %898 = vst [vmem:[#allocation5 + $0x1b8] sm:$0xff] %v896
        %v899 = vld [vmem:[#allocation4] sm:$0xff]
        %v900 = vld [vmem:[#allocation4 + $0x8] sm:$0xff]
        %v901 = vld [vmem:[#allocation4 + $0x10] sm:$0xff]
        %905 = vrot.lane.b32.xlu0 %v899, 64
        %v906 = vpop.permute.xlu0 %905
        %907 = vrot.lane.b32.xlu0 %v900, 64
        %v908 = vpop.permute.xlu0 %907
        %909 = vrot.lane.b32.xlu0 %v901, 64
        %v910 = vpop.permute.xlu0 %909
        %vm911 = vcmask 523264
        %v912 = vsel %vm911, %v906, %v908
        %v913 = vsel %vm911, %v908, %v910
        %v916 = vsel %vm832, %v912, 0.0
        %v917 = vsel %vm833, %v913, 0.0
        %918 = vst [vmem:[#allocation5 + $0x240] sm:$0xff] %v916
        %919 = vst [vmem:[#allocation5 + $0x248] sm:$0xff] %v917
        %v920 = vld [vmem:[#allocation4] sm:$0xff]
        %v921 = vld [vmem:[#allocation4 + $0x8] sm:$0xff]
        %v922 = vld [vmem:[#allocation4 + $0x10] sm:$0xff]
        %926 = vrot.lane.b32.xlu0 %v920, 48
        %v927 = vpop.permute.xlu0 %926
        %928 = vrot.lane.b32.xlu0 %v921, 48
        %v929 = vpop.permute.xlu0 %928
        %930 = vrot.lane.b32.xlu0 %v922, 48
        %v931 = vpop.permute.xlu0 %930
        %vm932 = vcmask 392192
        %v933 = vsel %vm932, %v927, %v929
        %v934 = vsel %vm932, %v929, %v931
        %v937 = vsel %vm832, %v933, 0.0
        %v938 = vsel %vm833, %v934, 0.0
        %939 = vst [vmem:[#allocation5 + $0x2d0] sm:$0xff] %v937
        %940 = vst [vmem:[#allocation5 + $0x2d8] sm:$0xff] %v938
        %v941 = vld [vmem:[#allocation4] sm:$0xff]
        %v942 = vld [vmem:[#allocation4 + $0x8] sm:$0xff]
        %v943 = vld [vmem:[#allocation4 + $0x10] sm:$0xff]
        %947 = vrot.lane.b32.xlu0 %v941, 32
        %v948 = vpop.permute.xlu0 %947
        %949 = vrot.lane.b32.xlu0 %v942, 32
        %v950 = vpop.permute.xlu0 %949
        %951 = vrot.lane.b32.xlu0 %v943, 32
        %v952 = vpop.permute.xlu0 %951
        %vm953 = vcmask 261120
        %v954 = vsel %vm953, %v948, %v950
        %v955 = vsel %vm953, %v950, %v952
        %v958 = vsel %vm832, %v954, 0.0
        %v959 = vsel %vm833, %v955, 0.0
        %960 = vst [vmem:[#allocation5 + $0x360] sm:$0xff] %v958
        %961 = vst [vmem:[#allocation5 + $0x368] sm:$0xff] %v959
        %v962 = vld [vmem:[#allocation4] sm:$0xff]
        %v963 = vld [vmem:[#allocation4 + $0x8] sm:$0xff]
        %v964 = vld [vmem:[#allocation4 + $0x10] sm:$0xff]
        %968 = vrot.lane.b32.xlu0 %v962, 16
        %v969 = vpop.permute.xlu0 %968
        %970 = vrot.lane.b32.xlu0 %v963, 16
        %v971 = vpop.permute.xlu0 %970
        %972 = vrot.lane.b32.xlu0 %v964, 16
        %v973 = vpop.permute.xlu0 %972
        %vm974 = vcmask 130048
        %v975 = vsel %vm974, %v969, %v971
        %v976 = vsel %vm974, %v971, %v973
        %v979 = vsel %vm832, %v975, 0.0
        %v980 = vsel %vm833, %v976, 0.0
        %981 = vst [vmem:[#allocation5 + $0x3f0] sm:$0xff] %v979
        %982 = vst [vmem:[#allocation5 + $0x3f8] sm:$0xff] %v980
        %v983 = vld [vmem:[#allocation4 + $0x8] sm:$0xff]
        %v984 = vld [vmem:[#allocation4 + $0x10] sm:$0xff]
        %v985 = vsel %vm832, %v983, 0.0
        %v986 = vsel %vm833, %v984, 0.0
        %987 = vst [vmem:[#allocation5 + $0x480] sm:$0xff] %v985
        %988 = vst [vmem:[#allocation5 + $0x488] sm:$0xff] %v986
        %v989 = vadd.s32 %v484, 4294967293
        %v990 = vadd.s32 %v485, 4294967293
        %vm991 = vcmp.ge.s32.totalorder %v989, 0
        %vm992 = vcmp.ge.s32.totalorder %v990, 0
        %vm993 = vcmp.lt.s32.totalorder %v989, 16
        %vm994 = vcmp.lt.s32.totalorder %v990, 16
        %vm995 = vmand %vm991, %vm993
        %vm996 = vmand %vm992, %vm994
        %v997 = vld [vmem:[#allocation4] sm:$0xff]
        %v998 = vld [vmem:[#allocation4 + $0x8] sm:$0xff]
        %v999 = vld [vmem:[#allocation4 + $0x10] sm:$0xff]
        %v1000 = vsel %vm995, 1, 0
        %v1001 = vsel %vm996, 1, 0
        %vm1002 = vcmp.eq.s32.totalorder %v1000, 1
        %vm1003 = vcmp.eq.s32.totalorder %v1001, 1
        %1007 = vrot.lane.b32.xlu0 %v997, 127
        %v1008 = vpop.permute.xlu0 %1007
        %1009 = vrot.lane.b32.xlu0 %v998, 127
        %v1010 = vpop.permute.xlu0 %1009
        %1011 = vrot.lane.b32.xlu0 %v999, 127
        %v1012 = vpop.permute.xlu0 %1011
        %v1013 = vsel %vm576, %v1008, %v1010
        %v1014 = vsel %vm576, %v1010, %v1012
        %v1017 = vsel %vm1002, %v1013, 0.0
        %v1018 = vsel %vm1003, %v1014, 0.0
        %1019 = vst [vmem:[#allocation5 + $0x10] sm:$0xff] %v1017
        %1020 = vst [vmem:[#allocation5 + $0x18] sm:$0xff] %v1018
        %v1021 = vld [vmem:[#allocation4] sm:$0xff]
        %v1022 = vld [vmem:[#allocation4 + $0x8] sm:$0xff]
        %v1023 = vld [vmem:[#allocation4 + $0x10] sm:$0xff]
        %1027 = vrot.lane.b32.xlu0 %v1021, 111
        %v1028 = vpop.permute.xlu0 %1027
        %1029 = vrot.lane.b32.xlu0 %v1022, 111
        %v1030 = vpop.permute.xlu0 %1029
        %1031 = vrot.lane.b32.xlu0 %v1023, 111
        %v1032 = vpop.permute.xlu0 %1031
        %v1033 = vsel %vm595, %v1028, %v1030
        %v1034 = vsel %vm595, %v1030, %v1032
        %v1037 = vsel %vm1002, %v1033, 0.0
        %v1038 = vsel %vm1003, %v1034, 0.0
        %1039 = vst [vmem:[#allocation5 + $0xa0] sm:$0xff] %v1037
        %1040 = vst [vmem:[#allocation5 + $0xa8] sm:$0xff] %v1038
        %v1041 = vld [vmem:[#allocation4] sm:$0xff]
        %v1042 = vld [vmem:[#allocation4 + $0x8] sm:$0xff]
        %v1043 = vld [vmem:[#allocation4 + $0x10] sm:$0xff]
        %1047 = vrot.lane.b32.xlu0 %v1041, 95
        %v1048 = vpop.permute.xlu0 %1047
        %1049 = vrot.lane.b32.xlu0 %v1042, 95
        %v1050 = vpop.permute.xlu0 %1049
        %1051 = vrot.lane.b32.xlu0 %v1043, 95
        %v1052 = vpop.permute.xlu0 %1051
        %v1053 = vsel %vm614, %v1048, %v1050
        %v1054 = vsel %vm614, %v1050, %v1052
        %v1057 = vsel %vm1002, %v1053, 0.0
        %v1058 = vsel %vm1003, %v1054, 0.0
        %1059 = vst [vmem:[#allocation5 + $0x130] sm:$0xff] %v1057
        %1060 = vst [vmem:[#allocation5 + $0x138] sm:$0xff] %v1058
        %v1061 = vld [vmem:[#allocation4] sm:$0xff]
        %v1062 = vld [vmem:[#allocation4 + $0x8] sm:$0xff]
        %v1063 = vld [vmem:[#allocation4 + $0x10] sm:$0xff]
        %1067 = vrot.lane.b32.xlu0 %v1061, 79
        %v1068 = vpop.permute.xlu0 %1067
        %1069 = vrot.lane.b32.xlu0 %v1062, 79
        %v1070 = vpop.permute.xlu0 %1069
        %1071 = vrot.lane.b32.xlu0 %v1063, 79
        %v1072 = vpop.permute.xlu0 %1071
        %vm1073 = vcmask 646144
        %v1074 = vsel %vm1073, %v1068, %v1070
        %v1075 = vsel %vm1073, %v1070, %v1072
        %v1078 = vsel %vm1002, %v1074, 0.0
        %v1079 = vsel %vm1003, %v1075, 0.0
        %1080 = vst [vmem:[#allocation5 + $0x1c0] sm:$0xff] %v1078
        %1081 = vst [vmem:[#allocation5 + $0x1c8] sm:$0xff] %v1079
        %v1082 = vld [vmem:[#allocation4] sm:$0xff]
        %v1083 = vld [vmem:[#allocation4 + $0x8] sm:$0xff]
        %v1084 = vld [vmem:[#allocation4 + $0x10] sm:$0xff]
        %1088 = vrot.lane.b32.xlu0 %v1082, 63
        %v1089 = vpop.permute.xlu0 %1088
        %1090 = vrot.lane.b32.xlu0 %v1083, 63
        %v1091 = vpop.permute.xlu0 %1090
        %1092 = vrot.lane.b32.xlu0 %v1084, 63
        %v1093 = vpop.permute.xlu0 %1092
        %vm1094 = vcmask 515072
        %v1095 = vsel %vm1094, %v1089, %v1091
        %v1096 = vsel %vm1094, %v1091, %v1093
        %v1099 = vsel %vm1002, %v1095, 0.0
        %v1100 = vsel %vm1003, %v1096, 0.0
        %1101 = vst [vmem:[#allocation5 + $0x250] sm:$0xff] %v1099
        %1102 = vst [vmem:[#allocation5 + $0x258] sm:$0xff] %v1100
        %v1103 = vld [vmem:[#allocation4] sm:$0xff]
        %v1104 = vld [vmem:[#allocation4 + $0x8] sm:$0xff]
        %v1105 = vld [vmem:[#allocation4 + $0x10] sm:$0xff]
        %1109 = vrot.lane.b32.xlu0 %v1103, 47
        %v1110 = vpop.permute.xlu0 %1109
        %1111 = vrot.lane.b32.xlu0 %v1104, 47
        %v1112 = vpop.permute.xlu0 %1111
        %1113 = vrot.lane.b32.xlu0 %v1105, 47
        %v1114 = vpop.permute.xlu0 %1113
        %vm1115 = vcmask 384000
        %v1116 = vsel %vm1115, %v1110, %v1112
        %v1117 = vsel %vm1115, %v1112, %v1114
        %v1120 = vsel %vm1002, %v1116, 0.0
        %v1121 = vsel %vm1003, %v1117, 0.0
        %1122 = vst [vmem:[#allocation5 + $0x2e0] sm:$0xff] %v1120
        %1123 = vst [vmem:[#allocation5 + $0x2e8] sm:$0xff] %v1121
        %v1124 = vld [vmem:[#allocation4] sm:$0xff]
        %v1125 = vld [vmem:[#allocation4 + $0x8] sm:$0xff]
        %v1126 = vld [vmem:[#allocation4 + $0x10] sm:$0xff]
        %1130 = vrot.lane.b32.xlu0 %v1124, 31
        %v1131 = vpop.permute.xlu0 %1130
        %1132 = vrot.lane.b32.xlu0 %v1125, 31
        %v1133 = vpop.permute.xlu0 %1132
        %1134 = vrot.lane.b32.xlu0 %v1126, 31
        %v1135 = vpop.permute.xlu0 %1134
        %vm1136 = vcmask 252928
        %v1137 = vsel %vm1136, %v1131, %v1133
        %v1138 = vsel %vm1136, %v1133, %v1135
        %v1141 = vsel %vm1002, %v1137, 0.0
        %v1142 = vsel %vm1003, %v1138, 0.0
        %1143 = vst [vmem:[#allocation5 + $0x370] sm:$0xff] %v1141
        %1144 = vst [vmem:[#allocation5 + $0x378] sm:$0xff] %v1142
        %v1145 = vld [vmem:[#allocation4] sm:$0xff]
        %v1146 = vld [vmem:[#allocation4 + $0x8] sm:$0xff]
        %v1147 = vld [vmem:[#allocation4 + $0x10] sm:$0xff]
        %1151 = vrot.lane.b32.xlu0 %v1145, 15
        %v1152 = vpop.permute.xlu0 %1151
        %1153 = vrot.lane.b32.xlu0 %v1146, 15
        %v1154 = vpop.permute.xlu0 %1153
        %1155 = vrot.lane.b32.xlu0 %v1147, 15
        %v1156 = vpop.permute.xlu0 %1155
        %vm1157 = vcmask 121856
        %v1158 = vsel %vm1157, %v1152, %v1154
        %v1159 = vsel %vm1157, %v1154, %v1156
        %v1162 = vsel %vm1002, %v1158, 0.0
        %v1163 = vsel %vm1003, %v1159, 0.0
        %1164 = vst [vmem:[#allocation5 + $0x400] sm:$0xff] %v1162
        %1165 = vst [vmem:[#allocation5 + $0x408] sm:$0xff] %v1163
        %v1166 = vld [vmem:[#allocation4 + $0x8] sm:$0xff]
        %v1167 = vld [vmem:[#allocation4 + $0x10] sm:$0xff]
        %v1168 = vld [vmem:[#allocation4 + $0x18] sm:$0xff]
        %1172 = vrot.lane.b32.xlu0 %v1166, 127
        %v1173 = vpop.permute.xlu0 %1172
        %1174 = vrot.lane.b32.xlu0 %v1167, 127
        %v1175 = vpop.permute.xlu0 %1174
        %1176 = vrot.lane.b32.xlu0 %v1168, 127
        %v1177 = vpop.permute.xlu0 %1176
        %v1178 = vsel %vm576, %v1173, %v1175
        %v1179 = vsel %vm576, %v1175, %v1177
        %v1182 = vsel %vm1002, %v1178, 0.0
        %v1183 = vsel %vm1003, %v1179, 0.0
        %1184 = vst [vmem:[#allocation5 + $0x490] sm:$0xff] %v1182
        %1185 = vst [vmem:[#allocation5 + $0x498] sm:$0xff] %v1183
        %v1186 = vadd.s32 %v484, 4294967294
        %v1187 = vadd.s32 %v485, 4294967294
        %vm1188 = vcmp.ge.s32.totalorder %v1186, 0
        %vm1189 = vcmp.ge.s32.totalorder %v1187, 0
        %vm1190 = vcmp.lt.s32.totalorder %v1186, 16
        %vm1191 = vcmp.lt.s32.totalorder %v1187, 16
        %vm1192 = vmand %vm1188, %vm1190
        %vm1193 = vmand %vm1189, %vm1191
        %v1194 = vld [vmem:[#allocation4] sm:$0xff]
        %v1195 = vld [vmem:[#allocation4 + $0x8] sm:$0xff]
        %v1196 = vld [vmem:[#allocation4 + $0x10] sm:$0xff]
        %v1197 = vsel %vm1192, 1, 0
        %v1198 = vsel %vm1193, 1, 0
        %vm1199 = vcmp.eq.s32.totalorder %v1197, 1
        %vm1200 = vcmp.eq.s32.totalorder %v1198, 1
        %1204 = vrot.lane.b32.xlu0 %v1194, 126
        %v1205 = vpop.permute.xlu0 %1204
        %1206 = vrot.lane.b32.xlu0 %v1195, 126
        %v1207 = vpop.permute.xlu0 %1206
        %1208 = vrot.lane.b32.xlu0 %v1196, 126
        %v1209 = vpop.permute.xlu0 %1208
        %v1210 = vsel %vm645, %v1205, %v1207
        %v1211 = vsel %vm645, %v1207, %v1209
        %v1214 = vsel %vm1199, %v1210, 0.0
        %v1215 = vsel %vm1200, %v1211, 0.0
        %1216 = vst [vmem:[#allocation5 + $0x20] sm:$0xff] %v1214
        %1217 = vst [vmem:[#allocation5 + $0x28] sm:$0xff] %v1215
        %v1218 = vld [vmem:[#allocation4] sm:$0xff]
        %v1219 = vld [vmem:[#allocation4 + $0x8] sm:$0xff]
        %v1220 = vld [vmem:[#allocation4 + $0x10] sm:$0xff]
        %1224 = vrot.lane.b32.xlu0 %v1218, 110
        %v1225 = vpop.permute.xlu0 %1224
        %1226 = vrot.lane.b32.xlu0 %v1219, 110
        %v1227 = vpop.permute.xlu0 %1226
        %1228 = vrot.lane.b32.xlu0 %v1220, 110
        %v1229 = vpop.permute.xlu0 %1228
        %v1230 = vsel %vm666, %v1225, %v1227
        %v1231 = vsel %vm666, %v1227, %v1229
        %v1234 = vsel %vm1199, %v1230, 0.0
        %v1235 = vsel %vm1200, %v1231, 0.0
        %1236 = vst [vmem:[#allocation5 + $0xb0] sm:$0xff] %v1234
        %1237 = vst [vmem:[#allocation5 + $0xb8] sm:$0xff] %v1235
        %v1238 = vld [vmem:[#allocation4] sm:$0xff]
        %v1239 = vld [vmem:[#allocation4 + $0x8] sm:$0xff]
        %v1240 = vld [vmem:[#allocation4 + $0x10] sm:$0xff]
        %1244 = vrot.lane.b32.xlu0 %v1238, 94
        %v1245 = vpop.permute.xlu0 %1244
        %1246 = vrot.lane.b32.xlu0 %v1239, 94
        %v1247 = vpop.permute.xlu0 %1246
        %1248 = vrot.lane.b32.xlu0 %v1240, 94
        %v1249 = vpop.permute.xlu0 %1248
        %v1250 = vsel %vm687, %v1245, %v1247
        %v1251 = vsel %vm687, %v1247, %v1249
        %v1254 = vsel %vm1199, %v1250, 0.0
        %v1255 = vsel %vm1200, %v1251, 0.0
        %1256 = vst [vmem:[#allocation5 + $0x140] sm:$0xff] %v1254
        %1257 = vst [vmem:[#allocation5 + $0x148] sm:$0xff] %v1255
        %v1258 = vld [vmem:[#allocation4] sm:$0xff]
        %v1259 = vld [vmem:[#allocation4 + $0x8] sm:$0xff]
        %v1260 = vld [vmem:[#allocation4 + $0x10] sm:$0xff]
        %1264 = vrot.lane.b32.xlu0 %v1258, 78
        %v1265 = vpop.permute.xlu0 %1264
        %1266 = vrot.lane.b32.xlu0 %v1259, 78
        %v1267 = vpop.permute.xlu0 %1266
        %1268 = vrot.lane.b32.xlu0 %v1260, 78
        %v1269 = vpop.permute.xlu0 %1268
        %vm1270 = vcmask 637952
        %v1271 = vsel %vm1270, %v1265, %v1267
        %v1272 = vsel %vm1270, %v1267, %v1269
        %v1275 = vsel %vm1199, %v1271, 0.0
        %v1276 = vsel %vm1200, %v1272, 0.0
        %1277 = vst [vmem:[#allocation5 + $0x1d0] sm:$0xff] %v1275
        %1278 = vst [vmem:[#allocation5 + $0x1d8] sm:$0xff] %v1276
        %v1279 = vld [vmem:[#allocation4] sm:$0xff]
        %v1280 = vld [vmem:[#allocation4 + $0x8] sm:$0xff]
        %v1281 = vld [vmem:[#allocation4 + $0x10] sm:$0xff]
        %1285 = vrot.lane.b32.xlu0 %v1279, 62
        %v1286 = vpop.permute.xlu0 %1285
        %1287 = vrot.lane.b32.xlu0 %v1280, 62
        %v1288 = vpop.permute.xlu0 %1287
        %1289 = vrot.lane.b32.xlu0 %v1281, 62
        %v1290 = vpop.permute.xlu0 %1289
        %vm1291 = vcmask 506880
        %v1292 = vsel %vm1291, %v1286, %v1288
        %v1293 = vsel %vm1291, %v1288, %v1290
        %v1296 = vsel %vm1199, %v1292, 0.0
        %v1297 = vsel %vm1200, %v1293, 0.0
        %1298 = vst [vmem:[#allocation5 + $0x260] sm:$0xff] %v1296
        %1299 = vst [vmem:[#allocation5 + $0x268] sm:$0xff] %v1297
        %v1300 = vld [vmem:[#allocation4] sm:$0xff]
        %v1301 = vld [vmem:[#allocation4 + $0x8] sm:$0xff]
        %v1302 = vld [vmem:[#allocation4 + $0x10] sm:$0xff]
        %1306 = vrot.lane.b32.xlu0 %v1300, 46
        %v1307 = vpop.permute.xlu0 %1306
        %1308 = vrot.lane.b32.xlu0 %v1301, 46
        %v1309 = vpop.permute.xlu0 %1308
        %1310 = vrot.lane.b32.xlu0 %v1302, 46
        %v1311 = vpop.permute.xlu0 %1310
        %vm1312 = vcmask 375808
        %v1313 = vsel %vm1312, %v1307, %v1309
        %v1314 = vsel %vm1312, %v1309, %v1311
        %v1317 = vsel %vm1199, %v1313, 0.0
        %v1318 = vsel %vm1200, %v1314, 0.0
        %1319 = vst [vmem:[#allocation5 + $0x2f0] sm:$0xff] %v1317
        %1320 = vst [vmem:[#allocation5 + $0x2f8] sm:$0xff] %v1318
        %v1321 = vld [vmem:[#allocation4] sm:$0xff]
        %v1322 = vld [vmem:[#allocation4 + $0x8] sm:$0xff]
        %v1323 = vld [vmem:[#allocation4 + $0x10] sm:$0xff]
        %1327 = vrot.lane.b32.xlu0 %v1321, 30
        %v1328 = vpop.permute.xlu0 %1327
        %1329 = vrot.lane.b32.xlu0 %v1322, 30
        %v1330 = vpop.permute.xlu0 %1329
        %1331 = vrot.lane.b32.xlu0 %v1323, 30
        %v1332 = vpop.permute.xlu0 %1331
        %vm1333 = vcmask 244736
        %v1334 = vsel %vm1333, %v1328, %v1330
        %v1335 = vsel %vm1333, %v1330, %v1332
        %v1338 = vsel %vm1199, %v1334, 0.0
        %v1339 = vsel %vm1200, %v1335, 0.0
        %1340 = vst [vmem:[#allocation5 + $0x380] sm:$0xff] %v1338
        %1341 = vst [vmem:[#allocation5 + $0x388] sm:$0xff] %v1339
        %v1342 = vld [vmem:[#allocation4] sm:$0xff]
        %v1343 = vld [vmem:[#allocation4 + $0x8] sm:$0xff]
        %v1344 = vld [vmem:[#allocation4 + $0x10] sm:$0xff]
        %1348 = vrot.lane.b32.xlu0 %v1342, 14
        %v1349 = vpop.permute.xlu0 %1348
        %1350 = vrot.lane.b32.xlu0 %v1343, 14
        %v1351 = vpop.permute.xlu0 %1350
        %1352 = vrot.lane.b32.xlu0 %v1344, 14
        %v1353 = vpop.permute.xlu0 %1352
        %vm1354 = vcmask 113664
        %v1355 = vsel %vm1354, %v1349, %v1351
        %v1356 = vsel %vm1354, %v1351, %v1353
        %v1359 = vsel %vm1199, %v1355, 0.0
        %v1360 = vsel %vm1200, %v1356, 0.0
        %1361 = vst [vmem:[#allocation5 + $0x410] sm:$0xff] %v1359
        %1362 = vst [vmem:[#allocation5 + $0x418] sm:$0xff] %v1360
        %v1363 = vld [vmem:[#allocation4 + $0x8] sm:$0xff]
        %v1364 = vld [vmem:[#allocation4 + $0x10] sm:$0xff]
        %v1365 = vld [vmem:[#allocation4 + $0x18] sm:$0xff]
        %1369 = vrot.lane.b32.xlu0 %v1363, 126
        %v1370 = vpop.permute.xlu0 %1369
        %1371 = vrot.lane.b32.xlu0 %v1364, 126
        %v1372 = vpop.permute.xlu0 %1371
        %1373 = vrot.lane.b32.xlu0 %v1365, 126
        %v1374 = vpop.permute.xlu0 %1373
        %v1375 = vsel %vm645, %v1370, %v1372
        %v1376 = vsel %vm645, %v1372, %v1374
        %v1379 = vsel %vm1199, %v1375, 0.0
        %v1380 = vsel %vm1200, %v1376, 0.0
        %1381 = vst [vmem:[#allocation5 + $0x4a0] sm:$0xff] %v1379
        %1382 = vst [vmem:[#allocation5 + $0x4a8] sm:$0xff] %v1380
        %v1383 = vld [vmem:[#allocation4] sm:$0xff]
        %v1384 = vld [vmem:[#allocation4 + $0x8] sm:$0xff]
        %v1385 = vld [vmem:[#allocation4 + $0x10] sm:$0xff]
        %1389 = vrot.lane.b32.xlu0 %v1383, 125
        %v1390 = vpop.permute.xlu0 %1389
        %1391 = vrot.lane.b32.xlu0 %v1384, 125
        %v1392 = vpop.permute.xlu0 %1391
        %1393 = vrot.lane.b32.xlu0 %v1385, 125
        %v1394 = vpop.permute.xlu0 %1393
        %vm1395 = vcmask 1022976
        %v1396 = vsel %vm1395, %v1390, %v1392
        %v1397 = vsel %vm1395, %v1392, %v1394
        %v1400 = vsel %vm516, %v1396, 0.0
        %v1401 = vsel %vm517, %v1397, 0.0
        %1402 = vst [vmem:[#allocation5 + $0x30] sm:$0xff] %v1400
        %1403 = vst [vmem:[#allocation5 + $0x38] sm:$0xff] %v1401
        %v1404 = vld [vmem:[#allocation4] sm:$0xff]
        %v1405 = vld [vmem:[#allocation4 + $0x8] sm:$0xff]
        %v1406 = vld [vmem:[#allocation4 + $0x10] sm:$0xff]
        %1410 = vrot.lane.b32.xlu0 %v1404, 109
        %v1411 = vpop.permute.xlu0 %1410
        %1412 = vrot.lane.b32.xlu0 %v1405, 109
        %v1413 = vpop.permute.xlu0 %1412
        %1414 = vrot.lane.b32.xlu0 %v1406, 109
        %v1415 = vpop.permute.xlu0 %1414
        %vm1416 = vcmask 891904
        %v1417 = vsel %vm1416, %v1411, %v1413
        %v1418 = vsel %vm1416, %v1413, %v1415
        %v1421 = vsel %vm516, %v1417, 0.0
        %v1422 = vsel %vm517, %v1418, 0.0
        %1423 = vst [vmem:[#allocation5 + $0xc0] sm:$0xff] %v1421
        %1424 = vst [vmem:[#allocation5 + $0xc8] sm:$0xff] %v1422
        %v1425 = vld [vmem:[#allocation4] sm:$0xff]
        %v1426 = vld [vmem:[#allocation4 + $0x8] sm:$0xff]
        %v1427 = vld [vmem:[#allocation4 + $0x10] sm:$0xff]
        %1431 = vrot.lane.b32.xlu0 %v1425, 93
        %v1432 = vpop.permute.xlu0 %1431
        %1433 = vrot.lane.b32.xlu0 %v1426, 93
        %v1434 = vpop.permute.xlu0 %1433
        %1435 = vrot.lane.b32.xlu0 %v1427, 93
        %v1436 = vpop.permute.xlu0 %1435
        %vm1437 = vcmask 760832
        %v1438 = vsel %vm1437, %v1432, %v1434
        %v1439 = vsel %vm1437, %v1434, %v1436
        %v1442 = vsel %vm516, %v1438, 0.0
        %v1443 = vsel %vm517, %v1439, 0.0
        %1444 = vst [vmem:[#allocation5 + $0x150] sm:$0xff] %v1442
        %1445 = vst [vmem:[#allocation5 + $0x158] sm:$0xff] %v1443
        %v1446 = vld [vmem:[#allocation4] sm:$0xff]
        %v1447 = vld [vmem:[#allocation4 + $0x8] sm:$0xff]
        %v1448 = vld [vmem:[#allocation4 + $0x10] sm:$0xff]
        %1452 = vrot.lane.b32.xlu0 %v1446, 77
        %v1453 = vpop.permute.xlu0 %1452
        %1454 = vrot.lane.b32.xlu0 %v1447, 77
        %v1455 = vpop.permute.xlu0 %1454
        %1456 = vrot.lane.b32.xlu0 %v1448, 77
        %v1457 = vpop.permute.xlu0 %1456
        %vm1458 = vcmask 629760
        %v1459 = vsel %vm1458, %v1453, %v1455
        %v1460 = vsel %vm1458, %v1455, %v1457
        %v1463 = vsel %vm516, %v1459, 0.0
        %v1464 = vsel %vm517, %v1460, 0.0
        %1465 = vst [vmem:[#allocation5 + $0x1e0] sm:$0xff] %v1463
        %1466 = vst [vmem:[#allocation5 + $0x1e8] sm:$0xff] %v1464
        %v1467 = vld [vmem:[#allocation4] sm:$0xff]
        %v1468 = vld [vmem:[#allocation4 + $0x8] sm:$0xff]
        %v1469 = vld [vmem:[#allocation4 + $0x10] sm:$0xff]
        %1473 = vrot.lane.b32.xlu0 %v1467, 61
        %v1474 = vpop.permute.xlu0 %1473
        %1475 = vrot.lane.b32.xlu0 %v1468, 61
        %v1476 = vpop.permute.xlu0 %1475
        %1477 = vrot.lane.b32.xlu0 %v1469, 61
        %v1478 = vpop.permute.xlu0 %1477
        %vm1479 = vcmask 498688
        %v1480 = vsel %vm1479, %v1474, %v1476
        %v1481 = vsel %vm1479, %v1476, %v1478
        %v1484 = vsel %vm516, %v1480, 0.0
        %v1485 = vsel %vm517, %v1481, 0.0
        %1486 = vst [vmem:[#allocation5 + $0x270] sm:$0xff] %v1484
        %1487 = vst [vmem:[#allocation5 + $0x278] sm:$0xff] %v1485
        %v1488 = vld [vmem:[#allocation4] sm:$0xff]
        %v1489 = vld [vmem:[#allocation4 + $0x8] sm:$0xff]
        %v1490 = vld [vmem:[#allocation4 + $0x10] sm:$0xff]
        %1494 = vrot.lane.b32.xlu0 %v1488, 45
        %v1495 = vpop.permute.xlu0 %1494
        %1496 = vrot.lane.b32.xlu0 %v1489, 45
        %v1497 = vpop.permute.xlu0 %1496
        %1498 = vrot.lane.b32.xlu0 %v1490, 45
        %v1499 = vpop.permute.xlu0 %1498
        %vm1500 = vcmask 367616
        %v1501 = vsel %vm1500, %v1495, %v1497
        %v1502 = vsel %vm1500, %v1497, %v1499
        %v1505 = vsel %vm516, %v1501, 0.0
        %v1506 = vsel %vm517, %v1502, 0.0
        %1507 = vst [vmem:[#allocation5 + $0x300] sm:$0xff] %v1505
        %1508 = vst [vmem:[#allocation5 + $0x308] sm:$0xff] %v1506
        %v1509 = vld [vmem:[#allocation4] sm:$0xff]
        %v1510 = vld [vmem:[#allocation4 + $0x8] sm:$0xff]
        %v1511 = vld [vmem:[#allocation4 + $0x10] sm:$0xff]
        %1515 = vrot.lane.b32.xlu0 %v1509, 29
        %v1516 = vpop.permute.xlu0 %1515
        %1517 = vrot.lane.b32.xlu0 %v1510, 29
        %v1518 = vpop.permute.xlu0 %1517
        %1519 = vrot.lane.b32.xlu0 %v1511, 29
        %v1520 = vpop.permute.xlu0 %1519
        %vm1521 = vcmask 236544
        %v1522 = vsel %vm1521, %v1516, %v1518
        %v1523 = vsel %vm1521, %v1518, %v1520
        %v1526 = vsel %vm516, %v1522, 0.0
        %v1527 = vsel %vm517, %v1523, 0.0
        %1528 = vst [vmem:[#allocation5 + $0x390] sm:$0xff] %v1526
        %1529 = vst [vmem:[#allocation5 + $0x398] sm:$0xff] %v1527
        %v1530 = vld [vmem:[#allocation4] sm:$0xff]
        %v1531 = vld [vmem:[#allocation4 + $0x8] sm:$0xff]
        %v1532 = vld [vmem:[#allocation4 + $0x10] sm:$0xff]
        %1536 = vrot.lane.b32.xlu0 %v1530, 13
        %v1537 = vpop.permute.xlu0 %1536
        %1538 = vrot.lane.b32.xlu0 %v1531, 13
        %v1539 = vpop.permute.xlu0 %1538
        %1540 = vrot.lane.b32.xlu0 %v1532, 13
        %v1541 = vpop.permute.xlu0 %1540
        %vm1542 = vcmask 105472
        %v1543 = vsel %vm1542, %v1537, %v1539
        %v1544 = vsel %vm1542, %v1539, %v1541
        %v1547 = vsel %vm516, %v1543, 0.0
        %v1548 = vsel %vm517, %v1544, 0.0
        %1549 = vst [vmem:[#allocation5 + $0x420] sm:$0xff] %v1547
        %1550 = vst [vmem:[#allocation5 + $0x428] sm:$0xff] %v1548
        %v1551 = vld [vmem:[#allocation4 + $0x8] sm:$0xff]
        %v1552 = vld [vmem:[#allocation4 + $0x10] sm:$0xff]
        %v1553 = vld [vmem:[#allocation4 + $0x18] sm:$0xff]
        %1557 = vrot.lane.b32.xlu0 %v1551, 125
        %v1558 = vpop.permute.xlu0 %1557
        %1559 = vrot.lane.b32.xlu0 %v1552, 125
        %v1560 = vpop.permute.xlu0 %1559
        %1561 = vrot.lane.b32.xlu0 %v1553, 125
        %v1562 = vpop.permute.xlu0 %1561
        %v1563 = vsel %vm1395, %v1558, %v1560
        %v1564 = vsel %vm1395, %v1560, %v1562
        %v1567 = vsel %vm516, %v1563, 0.0
        %v1568 = vsel %vm517, %v1564, 0.0
        %1569 = vst [vmem:[#allocation5 + $0x4b0] sm:$0xff] %v1567
        %1570 = vst [vmem:[#allocation5 + $0x4b8] sm:$0xff] %v1568
        %v1571 = vld [vmem:[#allocation4] sm:$0xff]
        %v1572 = vld [vmem:[#allocation4 + $0x8] sm:$0xff]
        %v1573 = vld [vmem:[#allocation4 + $0x10] sm:$0xff]
        %1577 = vrot.lane.b32.xlu0 %v1571, 124
        %v1578 = vpop.permute.xlu0 %1577
        %1579 = vrot.lane.b32.xlu0 %v1572, 124
        %v1580 = vpop.permute.xlu0 %1579
        %1581 = vrot.lane.b32.xlu0 %v1573, 124
        %v1582 = vpop.permute.xlu0 %1581
        %vm1583 = vcmask 1014784
        %v1584 = vsel %vm1583, %v1578, %v1580
        %v1585 = vsel %vm1583, %v1580, %v1582
        %1588 = vst [vmem:[#allocation5 + $0x40] sm:$0xff] %v1584
        %1589 = vst [vmem:[#allocation5 + $0x48] sm:$0xff] %v1585
        %v1590 = vld [vmem:[#allocation4] sm:$0xff]
        %v1591 = vld [vmem:[#allocation4 + $0x8] sm:$0xff]
        %v1592 = vld [vmem:[#allocation4 + $0x10] sm:$0xff]
        %1596 = vrot.lane.b32.xlu0 %v1590, 108
        %v1597 = vpop.permute.xlu0 %1596
        %1598 = vrot.lane.b32.xlu0 %v1591, 108
        %v1599 = vpop.permute.xlu0 %1598
        %1600 = vrot.lane.b32.xlu0 %v1592, 108
        %v1601 = vpop.permute.xlu0 %1600
        %vm1602 = vcmask 883712
        %v1603 = vsel %vm1602, %v1597, %v1599
        %v1604 = vsel %vm1602, %v1599, %v1601
        %1607 = vst [vmem:[#allocation5 + $0xd0] sm:$0xff] %v1603
        %1608 = vst [vmem:[#allocation5 + $0xd8] sm:$0xff] %v1604
        %v1609 = vld [vmem:[#allocation4] sm:$0xff]
        %v1610 = vld [vmem:[#allocation4 + $0x8] sm:$0xff]
        %v1611 = vld [vmem:[#allocation4 + $0x10] sm:$0xff]
        %1615 = vrot.lane.b32.xlu0 %v1609, 92
        %v1616 = vpop.permute.xlu0 %1615
        %1617 = vrot.lane.b32.xlu0 %v1610, 92
        %v1618 = vpop.permute.xlu0 %1617
        %1619 = vrot.lane.b32.xlu0 %v1611, 92
        %v1620 = vpop.permute.xlu0 %1619
        %vm1621 = vcmask 752640
        %v1622 = vsel %vm1621, %v1616, %v1618
        %v1623 = vsel %vm1621, %v1618, %v1620
        %1626 = vst [vmem:[#allocation5 + $0x160] sm:$0xff] %v1622
        %1627 = vst [vmem:[#allocation5 + $0x168] sm:$0xff] %v1623
        %v1628 = vld [vmem:[#allocation4] sm:$0xff]
        %v1629 = vld [vmem:[#allocation4 + $0x8] sm:$0xff]
        %v1630 = vld [vmem:[#allocation4 + $0x10] sm:$0xff]
        %1634 = vrot.lane.b32.xlu0 %v1628, 76
        %v1635 = vpop.permute.xlu0 %1634
        %1636 = vrot.lane.b32.xlu0 %v1629, 76
        %v1637 = vpop.permute.xlu0 %1636
        %1638 = vrot.lane.b32.xlu0 %v1630, 76
        %v1639 = vpop.permute.xlu0 %1638
        %vm1640 = vcmask 621568
        %v1641 = vsel %vm1640, %v1635, %v1637
        %v1642 = vsel %vm1640, %v1637, %v1639
        %1645 = vst [vmem:[#allocation5 + $0x1f0] sm:$0xff] %v1641
        %1646 = vst [vmem:[#allocation5 + $0x1f8] sm:$0xff] %v1642
        %v1647 = vld [vmem:[#allocation4] sm:$0xff]
        %v1648 = vld [vmem:[#allocation4 + $0x8] sm:$0xff]
        %v1649 = vld [vmem:[#allocation4 + $0x10] sm:$0xff]
        %1653 = vrot.lane.b32.xlu0 %v1647, 60
        %v1654 = vpop.permute.xlu0 %1653
        %1655 = vrot.lane.b32.xlu0 %v1648, 60
        %v1656 = vpop.permute.xlu0 %1655
        %1657 = vrot.lane.b32.xlu0 %v1649, 60
        %v1658 = vpop.permute.xlu0 %1657
        %vm1659 = vcmask 490496
        %v1660 = vsel %vm1659, %v1654, %v1656
        %v1661 = vsel %vm1659, %v1656, %v1658
        %1664 = vst [vmem:[#allocation5 + $0x280] sm:$0xff] %v1660
        %1665 = vst [vmem:[#allocation5 + $0x288] sm:$0xff] %v1661
        %v1666 = vld [vmem:[#allocation4] sm:$0xff]
        %v1667 = vld [vmem:[#allocation4 + $0x8] sm:$0xff]
        %v1668 = vld [vmem:[#allocation4 + $0x10] sm:$0xff]
        %1672 = vrot.lane.b32.xlu0 %v1666, 44
        %v1673 = vpop.permute.xlu0 %1672
        %1674 = vrot.lane.b32.xlu0 %v1667, 44
        %v1675 = vpop.permute.xlu0 %1674
        %1676 = vrot.lane.b32.xlu0 %v1668, 44
        %v1677 = vpop.permute.xlu0 %1676
        %vm1678 = vcmask 359424
        %v1679 = vsel %vm1678, %v1673, %v1675
        %v1680 = vsel %vm1678, %v1675, %v1677
        %1683 = vst [vmem:[#allocation5 + $0x310] sm:$0xff] %v1679
        %1684 = vst [vmem:[#allocation5 + $0x318] sm:$0xff] %v1680
        %v1685 = vld [vmem:[#allocation4] sm:$0xff]
        %v1686 = vld [vmem:[#allocation4 + $0x8] sm:$0xff]
        %v1687 = vld [vmem:[#allocation4 + $0x10] sm:$0xff]
        %1691 = vrot.lane.b32.xlu0 %v1685, 28
        %v1692 = vpop.permute.xlu0 %1691
        %1693 = vrot.lane.b32.xlu0 %v1686, 28
        %v1694 = vpop.permute.xlu0 %1693
        %1695 = vrot.lane.b32.xlu0 %v1687, 28
        %v1696 = vpop.permute.xlu0 %1695
        %vm1697 = vcmask 228352
        %v1698 = vsel %vm1697, %v1692, %v1694
        %v1699 = vsel %vm1697, %v1694, %v1696
        %1702 = vst [vmem:[#allocation5 + $0x3a0] sm:$0xff] %v1698
        %1703 = vst [vmem:[#allocation5 + $0x3a8] sm:$0xff] %v1699
        %v1704 = vld [vmem:[#allocation4] sm:$0xff]
        %v1705 = vld [vmem:[#allocation4 + $0x8] sm:$0xff]
        %v1706 = vld [vmem:[#allocation4 + $0x10] sm:$0xff]
        %1710 = vrot.lane.b32.xlu0 %v1704, 12
        %v1711 = vpop.permute.xlu0 %1710
        %1712 = vrot.lane.b32.xlu0 %v1705, 12
        %v1713 = vpop.permute.xlu0 %1712
        %1714 = vrot.lane.b32.xlu0 %v1706, 12
        %v1715 = vpop.permute.xlu0 %1714
        %vm1716 = vcmask 97280
        %v1717 = vsel %vm1716, %v1711, %v1713
        %v1718 = vsel %vm1716, %v1713, %v1715
        %1721 = vst [vmem:[#allocation5 + $0x430] sm:$0xff] %v1717
        %1722 = vst [vmem:[#allocation5 + $0x438] sm:$0xff] %v1718
        %v1723 = vld [vmem:[#allocation4 + $0x8] sm:$0xff]
        %v1724 = vld [vmem:[#allocation4 + $0x10] sm:$0xff]
        %v1725 = vld [vmem:[#allocation4 + $0x18] sm:$0xff]
        %1729 = vrot.lane.b32.xlu0 %v1723, 124
        %v1730 = vpop.permute.xlu0 %1729
        %1731 = vrot.lane.b32.xlu0 %v1724, 124
        %v1732 = vpop.permute.xlu0 %1731
        %1733 = vrot.lane.b32.xlu0 %v1725, 124
        %v1734 = vpop.permute.xlu0 %1733
        %v1735 = vsel %vm1583, %v1730, %v1732
        %v1736 = vsel %vm1583, %v1732, %v1734
        %1739 = vst [vmem:[#allocation5 + $0x4c0] sm:$0xff] %v1735
        %1740 = vst [vmem:[#allocation5 + $0x4c8] sm:$0xff] %v1736
        %v1741 = vld [vmem:[#allocation4] sm:$0xff]
        %v1742 = vld [vmem:[#allocation4 + $0x8] sm:$0xff]
        %v1743 = vld [vmem:[#allocation4 + $0x10] sm:$0xff]
        %1747 = vrot.lane.b32.xlu0 %v1741, 123
        %v1748 = vpop.permute.xlu0 %1747
        %1749 = vrot.lane.b32.xlu0 %v1742, 123
        %v1750 = vpop.permute.xlu0 %1749
        %1751 = vrot.lane.b32.xlu0 %v1743, 123
        %v1752 = vpop.permute.xlu0 %1751
        %vm1753 = vcmask 1006592
        %v1754 = vsel %vm1753, %v1748, %v1750
        %v1755 = vsel %vm1753, %v1750, %v1752
        %v1758 = vsel %vm634, %v1754, 0.0
        %v1759 = vsel %vm635, %v1755, 0.0
        %1760 = vst [vmem:[#allocation5 + $0x50] sm:$0xff] %v1758
        %1761 = vst [vmem:[#allocation5 + $0x58] sm:$0xff] %v1759
        %v1762 = vld [vmem:[#allocation4] sm:$0xff]
        %v1763 = vld [vmem:[#allocation4 + $0x8] sm:$0xff]
        %v1764 = vld [vmem:[#allocation4 + $0x10] sm:$0xff]
        %1768 = vrot.lane.b32.xlu0 %v1762, 107
        %v1769 = vpop.permute.xlu0 %1768
        %1770 = vrot.lane.b32.xlu0 %v1763, 107
        %v1771 = vpop.permute.xlu0 %1770
        %1772 = vrot.lane.b32.xlu0 %v1764, 107
        %v1773 = vpop.permute.xlu0 %1772
        %vm1774 = vcmask 875520
        %v1775 = vsel %vm1774, %v1769, %v1771
        %v1776 = vsel %vm1774, %v1771, %v1773
        %v1779 = vsel %vm634, %v1775, 0.0
        %v1780 = vsel %vm635, %v1776, 0.0
        %1781 = vst [vmem:[#allocation5 + $0xe0] sm:$0xff] %v1779
        %1782 = vst [vmem:[#allocation5 + $0xe8] sm:$0xff] %v1780
        %v1783 = vld [vmem:[#allocation4] sm:$0xff]
        %v1784 = vld [vmem:[#allocation4 + $0x8] sm:$0xff]
        %v1785 = vld [vmem:[#allocation4 + $0x10] sm:$0xff]
        %1789 = vrot.lane.b32.xlu0 %v1783, 91
        %v1790 = vpop.permute.xlu0 %1789
        %1791 = vrot.lane.b32.xlu0 %v1784, 91
        %v1792 = vpop.permute.xlu0 %1791
        %1793 = vrot.lane.b32.xlu0 %v1785, 91
        %v1794 = vpop.permute.xlu0 %1793
        %vm1795 = vcmask 744448
        %v1796 = vsel %vm1795, %v1790, %v1792
        %v1797 = vsel %vm1795, %v1792, %v1794
        %v1800 = vsel %vm634, %v1796, 0.0
        %v1801 = vsel %vm635, %v1797, 0.0
        %1802 = vst [vmem:[#allocation5 + $0x170] sm:$0xff] %v1800
        %1803 = vst [vmem:[#allocation5 + $0x178] sm:$0xff] %v1801
        %v1804 = vld [vmem:[#allocation4] sm:$0xff]
        %v1805 = vld [vmem:[#allocation4 + $0x8] sm:$0xff]
        %v1806 = vld [vmem:[#allocation4 + $0x10] sm:$0xff]
        %1810 = vrot.lane.b32.xlu0 %v1804, 75
        %v1811 = vpop.permute.xlu0 %1810
        %1812 = vrot.lane.b32.xlu0 %v1805, 75
        %v1813 = vpop.permute.xlu0 %1812
        %1814 = vrot.lane.b32.xlu0 %v1806, 75
        %v1815 = vpop.permute.xlu0 %1814
        %vm1816 = vcmask 613376
        %v1817 = vsel %vm1816, %v1811, %v1813
        %v1818 = vsel %vm1816, %v1813, %v1815
        %v1821 = vsel %vm634, %v1817, 0.0
        %v1822 = vsel %vm635, %v1818, 0.0
        %1823 = vst [vmem:[#allocation5 + $0x200] sm:$0xff] %v1821
        %1824 = vst [vmem:[#allocation5 + $0x208] sm:$0xff] %v1822
        %v1825 = vld [vmem:[#allocation4] sm:$0xff]
        %v1826 = vld [vmem:[#allocation4 + $0x8] sm:$0xff]
        %v1827 = vld [vmem:[#allocation4 + $0x10] sm:$0xff]
        %1831 = vrot.lane.b32.xlu0 %v1825, 59
        %v1832 = vpop.permute.xlu0 %1831
        %1833 = vrot.lane.b32.xlu0 %v1826, 59
        %v1834 = vpop.permute.xlu0 %1833
        %1835 = vrot.lane.b32.xlu0 %v1827, 59
        %v1836 = vpop.permute.xlu0 %1835
        %vm1837 = vcmask 482304
        %v1838 = vsel %vm1837, %v1832, %v1834
        %v1839 = vsel %vm1837, %v1834, %v1836
        %v1842 = vsel %vm634, %v1838, 0.0
        %v1843 = vsel %vm635, %v1839, 0.0
        %1844 = vst [vmem:[#allocation5 + $0x290] sm:$0xff] %v1842
        %1845 = vst [vmem:[#allocation5 + $0x298] sm:$0xff] %v1843
        %v1846 = vld [vmem:[#allocation4] sm:$0xff]
        %v1847 = vld [vmem:[#allocation4 + $0x8] sm:$0xff]
        %v1848 = vld [vmem:[#allocation4 + $0x10] sm:$0xff]
        %1852 = vrot.lane.b32.xlu0 %v1846, 43
        %v1853 = vpop.permute.xlu0 %1852
        %1854 = vrot.lane.b32.xlu0 %v1847, 43
        %v1855 = vpop.permute.xlu0 %1854
        %1856 = vrot.lane.b32.xlu0 %v1848, 43
        %v1857 = vpop.permute.xlu0 %1856
        %vm1858 = vcmask 351232
        %v1859 = vsel %vm1858, %v1853, %v1855
        %v1860 = vsel %vm1858, %v1855, %v1857
        %v1863 = vsel %vm634, %v1859, 0.0
        %v1864 = vsel %vm635, %v1860, 0.0
        %1865 = vst [vmem:[#allocation5 + $0x320] sm:$0xff] %v1863
        %1866 = vst [vmem:[#allocation5 + $0x328] sm:$0xff] %v1864
        %v1867 = vld [vmem:[#allocation4] sm:$0xff]
        %v1868 = vld [vmem:[#allocation4 + $0x8] sm:$0xff]
        %v1869 = vld [vmem:[#allocation4 + $0x10] sm:$0xff]
        %1873 = vrot.lane.b32.xlu0 %v1867, 27
        %v1874 = vpop.permute.xlu0 %1873
        %1875 = vrot.lane.b32.xlu0 %v1868, 27
        %v1876 = vpop.permute.xlu0 %1875
        %1877 = vrot.lane.b32.xlu0 %v1869, 27
        %v1878 = vpop.permute.xlu0 %1877
        %vm1879 = vcmask 220160
        %v1880 = vsel %vm1879, %v1874, %v1876
        %v1881 = vsel %vm1879, %v1876, %v1878
        %v1884 = vsel %vm634, %v1880, 0.0
        %v1885 = vsel %vm635, %v1881, 0.0
        %1886 = vst [vmem:[#allocation5 + $0x3b0] sm:$0xff] %v1884
        %1887 = vst [vmem:[#allocation5 + $0x3b8] sm:$0xff] %v1885
        %v1888 = vld [vmem:[#allocation4] sm:$0xff]
        %v1889 = vld [vmem:[#allocation4 + $0x8] sm:$0xff]
        %v1890 = vld [vmem:[#allocation4 + $0x10] sm:$0xff]
        %1894 = vrot.lane.b32.xlu0 %v1888, 11
        %v1895 = vpop.permute.xlu0 %1894
        %1896 = vrot.lane.b32.xlu0 %v1889, 11
        %v1897 = vpop.permute.xlu0 %1896
        %1898 = vrot.lane.b32.xlu0 %v1890, 11
        %v1899 = vpop.permute.xlu0 %1898
        %vm1900 = vcmask 89088
        %v1901 = vsel %vm1900, %v1895, %v1897
        %v1902 = vsel %vm1900, %v1897, %v1899
        %v1905 = vsel %vm634, %v1901, 0.0
        %v1906 = vsel %vm635, %v1902, 0.0
        %1907 = vst [vmem:[#allocation5 + $0x440] sm:$0xff] %v1905
        %1908 = vst [vmem:[#allocation5 + $0x448] sm:$0xff] %v1906
        %v1909 = vld [vmem:[#allocation4 + $0x8] sm:$0xff]
        %v1910 = vld [vmem:[#allocation4 + $0x10] sm:$0xff]
        %v1911 = vld [vmem:[#allocation4 + $0x18] sm:$0xff]
        %1915 = vrot.lane.b32.xlu0 %v1909, 123
        %v1916 = vpop.permute.xlu0 %1915
        %1917 = vrot.lane.b32.xlu0 %v1910, 123
        %v1918 = vpop.permute.xlu0 %1917
        %1919 = vrot.lane.b32.xlu0 %v1911, 123
        %v1920 = vpop.permute.xlu0 %1919
        %v1921 = vsel %vm1753, %v1916, %v1918
        %v1922 = vsel %vm1753, %v1918, %v1920
        %v1925 = vsel %vm634, %v1921, 0.0
        %v1926 = vsel %vm635, %v1922, 0.0
        %1927 = vst [vmem:[#allocation5 + $0x4d0] sm:$0xff] %v1925
        %1928 = vst [vmem:[#allocation5 + $0x4d8] sm:$0xff] %v1926
        %v1929 = vadd.s32 %v484, 2
        %v1930 = vadd.s32 %v485, 2
        %vm1931 = vcmp.ge.s32.totalorder %v1929, 0
        %vm1932 = vcmp.ge.s32.totalorder %v1930, 0
        %vm1933 = vcmp.lt.s32.totalorder %v1929, 16
        %vm1934 = vcmp.lt.s32.totalorder %v1930, 16
        %vm1935 = vmand %vm1931, %vm1933
        %vm1936 = vmand %vm1932, %vm1934
        %v1937 = vld [vmem:[#allocation4] sm:$0xff]
        %v1938 = vld [vmem:[#allocation4 + $0x8] sm:$0xff]
        %v1939 = vld [vmem:[#allocation4 + $0x10] sm:$0xff]
        %v1940 = vsel %vm1935, 1, 0
        %v1941 = vsel %vm1936, 1, 0
        %vm1942 = vcmp.eq.s32.totalorder %v1940, 1
        %vm1943 = vcmp.eq.s32.totalorder %v1941, 1
        %1947 = vrot.lane.b32.xlu0 %v1937, 122
        %v1948 = vpop.permute.xlu0 %1947
        %1949 = vrot.lane.b32.xlu0 %v1938, 122
        %v1950 = vpop.permute.xlu0 %1949
        %1951 = vrot.lane.b32.xlu0 %v1939, 122
        %v1952 = vpop.permute.xlu0 %1951
        %vm1953 = vcmask 998400
        %v1954 = vsel %vm1953, %v1948, %v1950
        %v1955 = vsel %vm1953, %v1950, %v1952
        %v1958 = vsel %vm1942, %v1954, 0.0
        %v1959 = vsel %vm1943, %v1955, 0.0
        %1960 = vst [vmem:[#allocation5 + $0x60] sm:$0xff] %v1958
        %1961 = vst [vmem:[#allocation5 + $0x68] sm:$0xff] %v1959
        %v1962 = vld [vmem:[#allocation4] sm:$0xff]
        %v1963 = vld [vmem:[#allocation4 + $0x8] sm:$0xff]
        %v1964 = vld [vmem:[#allocation4 + $0x10] sm:$0xff]
        %1968 = vrot.lane.b32.xlu0 %v1962, 106
        %v1969 = vpop.permute.xlu0 %1968
        %1970 = vrot.lane.b32.xlu0 %v1963, 106
        %v1971 = vpop.permute.xlu0 %1970
        %1972 = vrot.lane.b32.xlu0 %v1964, 106
        %v1973 = vpop.permute.xlu0 %1972
        %vm1974 = vcmask 867328
        %v1975 = vsel %vm1974, %v1969, %v1971
        %v1976 = vsel %vm1974, %v1971, %v1973
        %v1979 = vsel %vm1942, %v1975, 0.0
        %v1980 = vsel %vm1943, %v1976, 0.0
        %1981 = vst [vmem:[#allocation5 + $0xf0] sm:$0xff] %v1979
        %1982 = vst [vmem:[#allocation5 + $0xf8] sm:$0xff] %v1980
        %v1983 = vld [vmem:[#allocation4] sm:$0xff]
        %v1984 = vld [vmem:[#allocation4 + $0x8] sm:$0xff]
        %v1985 = vld [vmem:[#allocation4 + $0x10] sm:$0xff]
        %1989 = vrot.lane.b32.xlu0 %v1983, 90
        %v1990 = vpop.permute.xlu0 %1989
        %1991 = vrot.lane.b32.xlu0 %v1984, 90
        %v1992 = vpop.permute.xlu0 %1991
        %1993 = vrot.lane.b32.xlu0 %v1985, 90
        %v1994 = vpop.permute.xlu0 %1993
        %vm1995 = vcmask 736256
        %v1996 = vsel %vm1995, %v1990, %v1992
        %v1997 = vsel %vm1995, %v1992, %v1994
        %v2000 = vsel %vm1942, %v1996, 0.0
        %v2001 = vsel %vm1943, %v1997, 0.0
        %2002 = vst [vmem:[#allocation5 + $0x180] sm:$0xff] %v2000
        %2003 = vst [vmem:[#allocation5 + $0x188] sm:$0xff] %v2001
        %v2004 = vld [vmem:[#allocation4] sm:$0xff]
        %v2005 = vld [vmem:[#allocation4 + $0x8] sm:$0xff]
        %v2006 = vld [vmem:[#allocation4 + $0x10] sm:$0xff]
        %2010 = vrot.lane.b32.xlu0 %v2004, 74
        %v2011 = vpop.permute.xlu0 %2010
        %2012 = vrot.lane.b32.xlu0 %v2005, 74
        %v2013 = vpop.permute.xlu0 %2012
        %2014 = vrot.lane.b32.xlu0 %v2006, 74
        %v2015 = vpop.permute.xlu0 %2014
        %vm2016 = vcmask 605184
        %v2017 = vsel %vm2016, %v2011, %v2013
        %v2018 = vsel %vm2016, %v2013, %v2015
        %v2021 = vsel %vm1942, %v2017, 0.0
        %v2022 = vsel %vm1943, %v2018, 0.0
        %2023 = vst [vmem:[#allocation5 + $0x210] sm:$0xff] %v2021
        %2024 = vst [vmem:[#allocation5 + $0x218] sm:$0xff] %v2022
        %v2025 = vld [vmem:[#allocation4] sm:$0xff]
        %v2026 = vld [vmem:[#allocation4 + $0x8] sm:$0xff]
        %v2027 = vld [vmem:[#allocation4 + $0x10] sm:$0xff]
        %2031 = vrot.lane.b32.xlu0 %v2025, 58
        %v2032 = vpop.permute.xlu0 %2031
        %2033 = vrot.lane.b32.xlu0 %v2026, 58
        %v2034 = vpop.permute.xlu0 %2033
        %2035 = vrot.lane.b32.xlu0 %v2027, 58
        %v2036 = vpop.permute.xlu0 %2035
        %vm2037 = vcmask 474112
        %v2038 = vsel %vm2037, %v2032, %v2034
        %v2039 = vsel %vm2037, %v2034, %v2036
        %v2042 = vsel %vm1942, %v2038, 0.0
        %v2043 = vsel %vm1943, %v2039, 0.0
        %2044 = vst [vmem:[#allocation5 + $0x2a0] sm:$0xff] %v2042
        %2045 = vst [vmem:[#allocation5 + $0x2a8] sm:$0xff] %v2043
        %v2046 = vld [vmem:[#allocation4] sm:$0xff]
        %v2047 = vld [vmem:[#allocation4 + $0x8] sm:$0xff]
        %v2048 = vld [vmem:[#allocation4 + $0x10] sm:$0xff]
        %2052 = vrot.lane.b32.xlu0 %v2046, 42
        %v2053 = vpop.permute.xlu0 %2052
        %2054 = vrot.lane.b32.xlu0 %v2047, 42
        %v2055 = vpop.permute.xlu0 %2054
        %2056 = vrot.lane.b32.xlu0 %v2048, 42
        %v2057 = vpop.permute.xlu0 %2056
        %vm2058 = vcmask 343040
        %v2059 = vsel %vm2058, %v2053, %v2055
        %v2060 = vsel %vm2058, %v2055, %v2057
        %v2063 = vsel %vm1942, %v2059, 0.0
        %v2064 = vsel %vm1943, %v2060, 0.0
        %2065 = vst [vmem:[#allocation5 + $0x330] sm:$0xff] %v2063
        %2066 = vst [vmem:[#allocation5 + $0x338] sm:$0xff] %v2064
        %v2067 = vld [vmem:[#allocation4] sm:$0xff]
        %v2068 = vld [vmem:[#allocation4 + $0x8] sm:$0xff]
        %v2069 = vld [vmem:[#allocation4 + $0x10] sm:$0xff]
        %2073 = vrot.lane.b32.xlu0 %v2067, 26
        %v2074 = vpop.permute.xlu0 %2073
        %2075 = vrot.lane.b32.xlu0 %v2068, 26
        %v2076 = vpop.permute.xlu0 %2075
        %2077 = vrot.lane.b32.xlu0 %v2069, 26
        %v2078 = vpop.permute.xlu0 %2077
        %vm2079 = vcmask 211968
        %v2080 = vsel %vm2079, %v2074, %v2076
        %v2081 = vsel %vm2079, %v2076, %v2078
        %v2084 = vsel %vm1942, %v2080, 0.0
        %v2085 = vsel %vm1943, %v2081, 0.0
        %2086 = vst [vmem:[#allocation5 + $0x3c0] sm:$0xff] %v2084
        %2087 = vst [vmem:[#allocation5 + $0x3c8] sm:$0xff] %v2085
        %v2088 = vld [vmem:[#allocation4] sm:$0xff]
        %v2089 = vld [vmem:[#allocation4 + $0x8] sm:$0xff]
        %v2090 = vld [vmem:[#allocation4 + $0x10] sm:$0xff]
        %2094 = vrot.lane.b32.xlu0 %v2088, 10
        %v2095 = vpop.permute.xlu0 %2094
        %2096 = vrot.lane.b32.xlu0 %v2089, 10
        %v2097 = vpop.permute.xlu0 %2096
        %2098 = vrot.lane.b32.xlu0 %v2090, 10
        %v2099 = vpop.permute.xlu0 %2098
        %vm2100 = vcmask 80896
        %v2101 = vsel %vm2100, %v2095, %v2097
        %v2102 = vsel %vm2100, %v2097, %v2099
        %v2105 = vsel %vm1942, %v2101, 0.0
        %v2106 = vsel %vm1943, %v2102, 0.0
        %2107 = vst [vmem:[#allocation5 + $0x450] sm:$0xff] %v2105
        %2108 = vst [vmem:[#allocation5 + $0x458] sm:$0xff] %v2106
        %v2109 = vld [vmem:[#allocation4 + $0x8] sm:$0xff]
        %v2110 = vld [vmem:[#allocation4 + $0x10] sm:$0xff]
        %v2111 = vld [vmem:[#allocation4 + $0x18] sm:$0xff]
        %2115 = vrot.lane.b32.xlu0 %v2109, 122
        %v2116 = vpop.permute.xlu0 %2115
        %2117 = vrot.lane.b32.xlu0 %v2110, 122
        %v2118 = vpop.permute.xlu0 %2117
        %2119 = vrot.lane.b32.xlu0 %v2111, 122
        %v2120 = vpop.permute.xlu0 %2119
        %v2121 = vsel %vm1953, %v2116, %v2118
        %v2122 = vsel %vm1953, %v2118, %v2120
        %v2125 = vsel %vm1942, %v2121, 0.0
        %v2126 = vsel %vm1943, %v2122, 0.0
        %2127 = vst [vmem:[#allocation5 + $0x4e0] sm:$0xff] %v2125
        %2128 = vst [vmem:[#allocation5 + $0x4e8] sm:$0xff] %v2126
        %v2129 = vadd.s32 %v484, 3
        %v2130 = vadd.s32 %v485, 3
        %vm2131 = vcmp.ge.s32.totalorder %v2129, 0
        %vm2132 = vcmp.ge.s32.totalorder %v2130, 0
        %vm2133 = vcmp.lt.s32.totalorder %v2129, 16
        %vm2134 = vcmp.lt.s32.totalorder %v2130, 16
        %vm2135 = vmand %vm2131, %vm2133
        %vm2136 = vmand %vm2132, %vm2134
        %v2137 = vld [vmem:[#allocation4] sm:$0xff]
        %v2138 = vld [vmem:[#allocation4 + $0x8] sm:$0xff]
        %v2139 = vld [vmem:[#allocation4 + $0x10] sm:$0xff]
        %v2140 = vsel %vm2135, 1, 0
        %v2141 = vsel %vm2136, 1, 0
        %vm2142 = vcmp.eq.s32.totalorder %v2140, 1
        %vm2143 = vcmp.eq.s32.totalorder %v2141, 1
        %2147 = vrot.lane.b32.xlu0 %v2137, 121
        %v2148 = vpop.permute.xlu0 %2147
        %2149 = vrot.lane.b32.xlu0 %v2138, 121
        %v2150 = vpop.permute.xlu0 %2149
        %2151 = vrot.lane.b32.xlu0 %v2139, 121
        %v2152 = vpop.permute.xlu0 %2151
        %vm2153 = vcmask 990208
        %v2154 = vsel %vm2153, %v2148, %v2150
        %v2155 = vsel %vm2153, %v2150, %v2152
        %v2158 = vsel %vm2142, %v2154, 0.0
        %v2159 = vsel %vm2143, %v2155, 0.0
        %2160 = vst [vmem:[#allocation5 + $0x70] sm:$0xff] %v2158
        %2161 = vst [vmem:[#allocation5 + $0x78] sm:$0xff] %v2159
        %v2162 = vld [vmem:[#allocation4] sm:$0xff]
        %v2163 = vld [vmem:[#allocation4 + $0x8] sm:$0xff]
        %v2164 = vld [vmem:[#allocation4 + $0x10] sm:$0xff]
        %2168 = vrot.lane.b32.xlu0 %v2162, 105
        %v2169 = vpop.permute.xlu0 %2168
        %2170 = vrot.lane.b32.xlu0 %v2163, 105
        %v2171 = vpop.permute.xlu0 %2170
        %2172 = vrot.lane.b32.xlu0 %v2164, 105
        %v2173 = vpop.permute.xlu0 %2172
        %vm2174 = vcmask 859136
        %v2175 = vsel %vm2174, %v2169, %v2171
        %v2176 = vsel %vm2174, %v2171, %v2173
        %v2179 = vsel %vm2142, %v2175, 0.0
        %v2180 = vsel %vm2143, %v2176, 0.0
        %2181 = vst [vmem:[#allocation5 + $0x100] sm:$0xff] %v2179
        %2182 = vst [vmem:[#allocation5 + $0x108] sm:$0xff] %v2180
        %v2183 = vld [vmem:[#allocation4] sm:$0xff]
        %v2184 = vld [vmem:[#allocation4 + $0x8] sm:$0xff]
        %v2185 = vld [vmem:[#allocation4 + $0x10] sm:$0xff]
        %2189 = vrot.lane.b32.xlu0 %v2183, 89
        %v2190 = vpop.permute.xlu0 %2189
        %2191 = vrot.lane.b32.xlu0 %v2184, 89
        %v2192 = vpop.permute.xlu0 %2191
        %2193 = vrot.lane.b32.xlu0 %v2185, 89
        %v2194 = vpop.permute.xlu0 %2193
        %vm2195 = vcmask 728064
        %v2196 = vsel %vm2195, %v2190, %v2192
        %v2197 = vsel %vm2195, %v2192, %v2194
        %v2200 = vsel %vm2142, %v2196, 0.0
        %v2201 = vsel %vm2143, %v2197, 0.0
        %2202 = vst [vmem:[#allocation5 + $0x190] sm:$0xff] %v2200
        %2203 = vst [vmem:[#allocation5 + $0x198] sm:$0xff] %v2201
        %v2204 = vld [vmem:[#allocation4] sm:$0xff]
        %v2205 = vld [vmem:[#allocation4 + $0x8] sm:$0xff]
        %v2206 = vld [vmem:[#allocation4 + $0x10] sm:$0xff]
        %2210 = vrot.lane.b32.xlu0 %v2204, 73
        %v2211 = vpop.permute.xlu0 %2210
        %2212 = vrot.lane.b32.xlu0 %v2205, 73
        %v2213 = vpop.permute.xlu0 %2212
        %2214 = vrot.lane.b32.xlu0 %v2206, 73
        %v2215 = vpop.permute.xlu0 %2214
        %vm2216 = vcmask 596992
        %v2217 = vsel %vm2216, %v2211, %v2213
        %v2218 = vsel %vm2216, %v2213, %v2215
        %v2221 = vsel %vm2142, %v2217, 0.0
        %v2222 = vsel %vm2143, %v2218, 0.0
        %2223 = vst [vmem:[#allocation5 + $0x220] sm:$0xff] %v2221
        %2224 = vst [vmem:[#allocation5 + $0x228] sm:$0xff] %v2222
        %v2225 = vld [vmem:[#allocation4] sm:$0xff]
        %v2226 = vld [vmem:[#allocation4 + $0x8] sm:$0xff]
        %v2227 = vld [vmem:[#allocation4 + $0x10] sm:$0xff]
        %2231 = vrot.lane.b32.xlu0 %v2225, 57
        %v2232 = vpop.permute.xlu0 %2231
        %2233 = vrot.lane.b32.xlu0 %v2226, 57
        %v2234 = vpop.permute.xlu0 %2233
        %2235 = vrot.lane.b32.xlu0 %v2227, 57
        %v2236 = vpop.permute.xlu0 %2235
        %vm2237 = vcmask 465920
        %v2238 = vsel %vm2237, %v2232, %v2234
        %v2239 = vsel %vm2237, %v2234, %v2236
        %v2242 = vsel %vm2142, %v2238, 0.0
        %v2243 = vsel %vm2143, %v2239, 0.0
        %2244 = vst [vmem:[#allocation5 + $0x2b0] sm:$0xff] %v2242
        %2245 = vst [vmem:[#allocation5 + $0x2b8] sm:$0xff] %v2243
        %v2246 = vld [vmem:[#allocation4] sm:$0xff]
        %v2247 = vld [vmem:[#allocation4 + $0x8] sm:$0xff]
        %v2248 = vld [vmem:[#allocation4 + $0x10] sm:$0xff]
        %2252 = vrot.lane.b32.xlu0 %v2246, 41
        %v2253 = vpop.permute.xlu0 %2252
        %2254 = vrot.lane.b32.xlu0 %v2247, 41
        %v2255 = vpop.permute.xlu0 %2254
        %2256 = vrot.lane.b32.xlu0 %v2248, 41
        %v2257 = vpop.permute.xlu0 %2256
        %vm2258 = vcmask 334848
        %v2259 = vsel %vm2258, %v2253, %v2255
        %v2260 = vsel %vm2258, %v2255, %v2257
        %v2263 = vsel %vm2142, %v2259, 0.0
        %v2264 = vsel %vm2143, %v2260, 0.0
        %2265 = vst [vmem:[#allocation5 + $0x340] sm:$0xff] %v2263
        %2266 = vst [vmem:[#allocation5 + $0x348] sm:$0xff] %v2264
        %v2267 = vld [vmem:[#allocation4] sm:$0xff]
        %v2268 = vld [vmem:[#allocation4 + $0x8] sm:$0xff]
        %v2269 = vld [vmem:[#allocation4 + $0x10] sm:$0xff]
        %2273 = vrot.lane.b32.xlu0 %v2267, 25
        %v2274 = vpop.permute.xlu0 %2273
        %2275 = vrot.lane.b32.xlu0 %v2268, 25
        %v2276 = vpop.permute.xlu0 %2275
        %2277 = vrot.lane.b32.xlu0 %v2269, 25
        %v2278 = vpop.permute.xlu0 %2277
        %vm2279 = vcmask 203776
        %v2280 = vsel %vm2279, %v2274, %v2276
        %v2281 = vsel %vm2279, %v2276, %v2278
        %v2284 = vsel %vm2142, %v2280, 0.0
        %v2285 = vsel %vm2143, %v2281, 0.0
        %2286 = vst [vmem:[#allocation5 + $0x3d0] sm:$0xff] %v2284
        %2287 = vst [vmem:[#allocation5 + $0x3d8] sm:$0xff] %v2285
        %v2288 = vld [vmem:[#allocation4] sm:$0xff]
        %v2289 = vld [vmem:[#allocation4 + $0x8] sm:$0xff]
        %v2290 = vld [vmem:[#allocation4 + $0x10] sm:$0xff]
        %2294 = vrot.lane.b32.xlu0 %v2288, 9
        %v2295 = vpop.permute.xlu0 %2294
        %2296 = vrot.lane.b32.xlu0 %v2289, 9
        %v2297 = vpop.permute.xlu0 %2296
        %2298 = vrot.lane.b32.xlu0 %v2290, 9
        %v2299 = vpop.permute.xlu0 %2298
        %vm2300 = vcmask 72704
        %v2301 = vsel %vm2300, %v2295, %v2297
        %v2302 = vsel %vm2300, %v2297, %v2299
        %v2305 = vsel %vm2142, %v2301, 0.0
        %v2306 = vsel %vm2143, %v2302, 0.0
        %2307 = vst [vmem:[#allocation5 + $0x460] sm:$0xff] %v2305
        %2308 = vst [vmem:[#allocation5 + $0x468] sm:$0xff] %v2306
        %v2309 = vld [vmem:[#allocation4 + $0x8] sm:$0xff]
        %v2310 = vld [vmem:[#allocation4 + $0x10] sm:$0xff]
        %v2311 = vld [vmem:[#allocation4 + $0x18] sm:$0xff]
        %2315 = vrot.lane.b32.xlu0 %v2309, 121
        %v2316 = vpop.permute.xlu0 %2315
        %2317 = vrot.lane.b32.xlu0 %v2310, 121
        %v2318 = vpop.permute.xlu0 %2317
        %2319 = vrot.lane.b32.xlu0 %v2311, 121
        %v2320 = vpop.permute.xlu0 %2319
        %v2321 = vsel %vm2153, %v2316, %v2318
        %v2322 = vsel %vm2153, %v2318, %v2320
        %v2325 = vsel %vm2142, %v2321, 0.0
        %v2326 = vsel %vm2143, %v2322, 0.0
        %2327 = vst [vmem:[#allocation5 + $0x4f0] sm:$0xff] %v2325
        %2328 = vst [vmem:[#allocation5 + $0x4f8] sm:$0xff] %v2326
        %v2329 = vadd.s32 %v484, 4
        %v2330 = vadd.s32 %v485, 4
        %vm2331 = vcmp.ge.s32.totalorder %v2329, 0
        %vm2332 = vcmp.ge.s32.totalorder %v2330, 0
        %vm2333 = vcmp.lt.s32.totalorder %v2329, 16
        %vm2334 = vcmp.lt.s32.totalorder %v2330, 16
        %vm2335 = vmand %vm2331, %vm2333
        %vm2336 = vmand %vm2332, %vm2334
        %v2337 = vld [vmem:[#allocation4] sm:$0xff]
        %v2338 = vld [vmem:[#allocation4 + $0x8] sm:$0xff]
        %v2339 = vld [vmem:[#allocation4 + $0x10] sm:$0xff]
        %v2340 = vsel %vm2335, 1, 0
        %v2341 = vsel %vm2336, 1, 0
        %vm2342 = vcmp.eq.s32.totalorder %v2340, 1
        %vm2343 = vcmp.eq.s32.totalorder %v2341, 1
        %2347 = vrot.lane.b32.xlu0 %v2337, 120
        %v2348 = vpop.permute.xlu0 %2347
        %2349 = vrot.lane.b32.xlu0 %v2338, 120
        %v2350 = vpop.permute.xlu0 %2349
        %2351 = vrot.lane.b32.xlu0 %v2339, 120
        %v2352 = vpop.permute.xlu0 %2351
        %vm2353 = vcmask 982016
        %v2354 = vsel %vm2353, %v2348, %v2350
        %v2355 = vsel %vm2353, %v2350, %v2352
        %v2358 = vsel %vm2342, %v2354, 0.0
        %v2359 = vsel %vm2343, %v2355, 0.0
        %2360 = vst [vmem:[#allocation5 + $0x80] sm:$0xff] %v2358
        %2361 = vst [vmem:[#allocation5 + $0x88] sm:$0xff] %v2359
        %v2362 = vld [vmem:[#allocation4] sm:$0xff]
        %v2363 = vld [vmem:[#allocation4 + $0x8] sm:$0xff]
        %v2364 = vld [vmem:[#allocation4 + $0x10] sm:$0xff]
        %2368 = vrot.lane.b32.xlu0 %v2362, 104
        %v2369 = vpop.permute.xlu0 %2368
        %2370 = vrot.lane.b32.xlu0 %v2363, 104
        %v2371 = vpop.permute.xlu0 %2370
        %2372 = vrot.lane.b32.xlu0 %v2364, 104
        %v2373 = vpop.permute.xlu0 %2372
        %vm2374 = vcmask 850944
        %v2375 = vsel %vm2374, %v2369, %v2371
        %v2376 = vsel %vm2374, %v2371, %v2373
        %v2379 = vsel %vm2342, %v2375, 0.0
        %v2380 = vsel %vm2343, %v2376, 0.0
        %2381 = vst [vmem:[#allocation5 + $0x110] sm:$0xff] %v2379
        %2382 = vst [vmem:[#allocation5 + $0x118] sm:$0xff] %v2380
        %v2383 = vld [vmem:[#allocation4] sm:$0xff]
        %v2384 = vld [vmem:[#allocation4 + $0x8] sm:$0xff]
        %v2385 = vld [vmem:[#allocation4 + $0x10] sm:$0xff]
        %2389 = vrot.lane.b32.xlu0 %v2383, 88
        %v2390 = vpop.permute.xlu0 %2389
        %2391 = vrot.lane.b32.xlu0 %v2384, 88
        %v2392 = vpop.permute.xlu0 %2391
        %2393 = vrot.lane.b32.xlu0 %v2385, 88
        %v2394 = vpop.permute.xlu0 %2393
        %vm2395 = vcmask 719872
        %v2396 = vsel %vm2395, %v2390, %v2392
        %v2397 = vsel %vm2395, %v2392, %v2394
        %v2400 = vsel %vm2342, %v2396, 0.0
        %v2401 = vsel %vm2343, %v2397, 0.0
        %2402 = vst [vmem:[#allocation5 + $0x1a0] sm:$0xff] %v2400
        %2403 = vst [vmem:[#allocation5 + $0x1a8] sm:$0xff] %v2401
        %v2404 = vld [vmem:[#allocation4] sm:$0xff]
        %v2405 = vld [vmem:[#allocation4 + $0x8] sm:$0xff]
        %v2406 = vld [vmem:[#allocation4 + $0x10] sm:$0xff]
        %2410 = vrot.lane.b32.xlu0 %v2404, 72
        %v2411 = vpop.permute.xlu0 %2410
        %2412 = vrot.lane.b32.xlu0 %v2405, 72
        %v2413 = vpop.permute.xlu0 %2412
        %2414 = vrot.lane.b32.xlu0 %v2406, 72
        %v2415 = vpop.permute.xlu0 %2414
        %v2416 = vsel %vm721, %v2411, %v2413
        %v2417 = vsel %vm721, %v2413, %v2415
        %v2420 = vsel %vm2342, %v2416, 0.0
        %v2421 = vsel %vm2343, %v2417, 0.0
        %2422 = vst [vmem:[#allocation5 + $0x230] sm:$0xff] %v2420
        %2423 = vst [vmem:[#allocation5 + $0x238] sm:$0xff] %v2421
        %v2424 = vld [vmem:[#allocation4] sm:$0xff]
        %v2425 = vld [vmem:[#allocation4 + $0x8] sm:$0xff]
        %v2426 = vld [vmem:[#allocation4 + $0x10] sm:$0xff]
        %2430 = vrot.lane.b32.xlu0 %v2424, 56
        %v2431 = vpop.permute.xlu0 %2430
        %2432 = vrot.lane.b32.xlu0 %v2425, 56
        %v2433 = vpop.permute.xlu0 %2432
        %2434 = vrot.lane.b32.xlu0 %v2426, 56
        %v2435 = vpop.permute.xlu0 %2434
        %vm2436 = vcmask 457728
        %v2437 = vsel %vm2436, %v2431, %v2433
        %v2438 = vsel %vm2436, %v2433, %v2435
        %v2441 = vsel %vm2342, %v2437, 0.0
        %v2442 = vsel %vm2343, %v2438, 0.0
        %2443 = vst [vmem:[#allocation5 + $0x2c0] sm:$0xff] %v2441
        %2444 = vst [vmem:[#allocation5 + $0x2c8] sm:$0xff] %v2442
        %v2445 = vld [vmem:[#allocation4] sm:$0xff]
        %v2446 = vld [vmem:[#allocation4 + $0x8] sm:$0xff]
        %v2447 = vld [vmem:[#allocation4 + $0x10] sm:$0xff]
        %2451 = vrot.lane.b32.xlu0 %v2445, 40
        %v2452 = vpop.permute.xlu0 %2451
        %2453 = vrot.lane.b32.xlu0 %v2446, 40
        %v2454 = vpop.permute.xlu0 %2453
        %2455 = vrot.lane.b32.xlu0 %v2447, 40
        %v2456 = vpop.permute.xlu0 %2455
        %vm2457 = vcmask 326656
        %v2458 = vsel %vm2457, %v2452, %v2454
        %v2459 = vsel %vm2457, %v2454, %v2456
        %v2462 = vsel %vm2342, %v2458, 0.0
        %v2463 = vsel %vm2343, %v2459, 0.0
        %2464 = vst [vmem:[#allocation5 + $0x350] sm:$0xff] %v2462
        %2465 = vst [vmem:[#allocation5 + $0x358] sm:$0xff] %v2463
        %v2466 = vld [vmem:[#allocation4] sm:$0xff]
        %v2467 = vld [vmem:[#allocation4 + $0x8] sm:$0xff]
        %v2468 = vld [vmem:[#allocation4 + $0x10] sm:$0xff]
        %2472 = vrot.lane.b32.xlu0 %v2466, 24
        %v2473 = vpop.permute.xlu0 %2472
        %2474 = vrot.lane.b32.xlu0 %v2467, 24
        %v2475 = vpop.permute.xlu0 %2474
        %2476 = vrot.lane.b32.xlu0 %v2468, 24
        %v2477 = vpop.permute.xlu0 %2476
        %vm2478 = vcmask 195584
        %v2479 = vsel %vm2478, %v2473, %v2475
        %v2480 = vsel %vm2478, %v2475, %v2477
        %v2483 = vsel %vm2342, %v2479, 0.0
        %v2484 = vsel %vm2343, %v2480, 0.0
        %2485 = vst [vmem:[#allocation5 + $0x3e0] sm:$0xff] %v2483
        %2486 = vst [vmem:[#allocation5 + $0x3e8] sm:$0xff] %v2484
        %v2487 = vld [vmem:[#allocation4] sm:$0xff]
        %v2488 = vld [vmem:[#allocation4 + $0x8] sm:$0xff]
        %v2489 = vld [vmem:[#allocation4 + $0x10] sm:$0xff]
        %2493 = vrot.lane.b32.xlu0 %v2487, 8
        %v2494 = vpop.permute.xlu0 %2493
        %2495 = vrot.lane.b32.xlu0 %v2488, 8
        %v2496 = vpop.permute.xlu0 %2495
        %2497 = vrot.lane.b32.xlu0 %v2489, 8
        %v2498 = vpop.permute.xlu0 %2497
        %v2499 = vsel %vm807, %v2494, %v2496
        %v2500 = vsel %vm807, %v2496, %v2498
        %v2503 = vsel %vm2342, %v2499, 0.0
        %v2504 = vsel %vm2343, %v2500, 0.0
        %2505 = vst [vmem:[#allocation5 + $0x470] sm:$0xff] %v2503
        %2506 = vst [vmem:[#allocation5 + $0x478] sm:$0xff] %v2504
        %v2507 = vld [vmem:[#allocation4 + $0x8] sm:$0xff]
        %v2508 = vld [vmem:[#allocation4 + $0x10] sm:$0xff]
        %v2509 = vld [vmem:[#allocation4 + $0x18] sm:$0xff]
        %2513 = vrot.lane.b32.xlu0 %v2507, 120
        %v2514 = vpop.permute.xlu0 %2513
        %2515 = vrot.lane.b32.xlu0 %v2508, 120
        %v2516 = vpop.permute.xlu0 %2515
        %2517 = vrot.lane.b32.xlu0 %v2509, 120
        %v2518 = vpop.permute.xlu0 %2517
        %v2519 = vsel %vm2353, %v2514, %v2516
        %v2520 = vsel %vm2353, %v2516, %v2518
        %v2523 = vsel %vm2342, %v2519, 0.0
        %v2524 = vsel %vm2343, %v2520, 0.0
        %2525 = vst [vmem:[#allocation5 + $0x500] sm:$0xff] %v2523
        %2526 = vst [vmem:[#allocation5 + $0x508] sm:$0xff] %v2524
        %v2527 = vld [vmem:[%s4] sm:$0xff]
        %v2528 = vld [vmem:[%s4 + $0x8] sm:$0xff]
        %v2529 = vld [vmem:[%s4 + $0x10] sm:$0xff]
        %v2530 = vld [vmem:[%s4 + $0x18] sm:$0xff]
        %v2531 = vld [vmem:[%s4 + $0x20] sm:$0xff]
        %v2532 = vld [vmem:[%s4 + $0x28] sm:$0xff]
        %v2533 = vld [vmem:[#allocation5] sm:$0xff]
        %v2534 = vld [vmem:[#allocation5 + $0x8] sm:$0xff]
        %v2535 = vld [vmem:[#allocation5 + $0x10] sm:$0xff]
        %v2536 = vld [vmem:[#allocation5 + $0x18] sm:$0xff]
        %v2537 = vld [vmem:[#allocation5 + $0x20] sm:$0xff]
        %v2538 = vld [vmem:[#allocation5 + $0x28] sm:$0xff]
        %v2539 = vld [vmem:[#allocation5 + $0x30] sm:$0xff]
        %v2540 = vld [vmem:[#allocation5 + $0x38] sm:$0xff]
        %v2541 = vld [vmem:[#allocation5 + $0x40] sm:$0xff]
        %v2542 = vld [vmem:[#allocation5 + $0x48] sm:$0xff]
        %v2543 = vld [vmem:[#allocation5 + $0x50] sm:$0xff]
        %v2544 = vld [vmem:[#allocation5 + $0x58] sm:$0xff]
        %v2545 = vld [vmem:[#allocation5 + $0x60] sm:$0xff]
        %v2546 = vld [vmem:[#allocation5 + $0x68] sm:$0xff]
        %v2547 = vld [vmem:[#allocation5 + $0x70] sm:$0xff]
        %v2548 = vld [vmem:[#allocation5 + $0x78] sm:$0xff]
        %v2549 = vld [vmem:[#allocation5 + $0x80] sm:$0xff]
        %v2550 = vld [vmem:[#allocation5 + $0x88] sm:$0xff]
        %v2551 = vld [vmem:[#allocation5 + $0x90] sm:$0xff]
        %v2552 = vld [vmem:[#allocation5 + $0x98] sm:$0xff]
        %v2553 = vld [vmem:[#allocation5 + $0xa0] sm:$0xff]
        %v2554 = vld [vmem:[#allocation5 + $0xa8] sm:$0xff]
        %v2555 = vld [vmem:[#allocation5 + $0xb0] sm:$0xff]
        %v2556 = vld [vmem:[#allocation5 + $0xb8] sm:$0xff]
        %v2557 = vld [vmem:[#allocation5 + $0xc0] sm:$0xff]
        %v2558 = vld [vmem:[#allocation5 + $0xc8] sm:$0xff]
        %v2559 = vld [vmem:[#allocation5 + $0xd0] sm:$0xff]
        %v2560 = vld [vmem:[#allocation5 + $0xd8] sm:$0xff]
        %v2561 = vld [vmem:[#allocation5 + $0xe0] sm:$0xff]
        %v2562 = vld [vmem:[#allocation5 + $0xe8] sm:$0xff]
        %v2563 = vld [vmem:[#allocation5 + $0xf0] sm:$0xff]
        %v2564 = vld [vmem:[#allocation5 + $0xf8] sm:$0xff]
        %v2565 = vld [vmem:[#allocation5 + $0x100] sm:$0xff]
        %v2566 = vld [vmem:[#allocation5 + $0x108] sm:$0xff]
        %v2567 = vld [vmem:[#allocation5 + $0x110] sm:$0xff]
        %v2568 = vld [vmem:[#allocation5 + $0x118] sm:$0xff]
        %v2569 = vld [vmem:[#allocation5 + $0x120] sm:$0xff]
        %v2570 = vld [vmem:[#allocation5 + $0x128] sm:$0xff]
        %v2571 = vld [vmem:[#allocation5 + $0x130] sm:$0xff]
        %v2572 = vld [vmem:[#allocation5 + $0x138] sm:$0xff]
        %v2573 = vld [vmem:[#allocation5 + $0x140] sm:$0xff]
        %v2574 = vld [vmem:[#allocation5 + $0x148] sm:$0xff]
        %v2575 = vld [vmem:[#allocation5 + $0x150] sm:$0xff]
        %v2576 = vld [vmem:[#allocation5 + $0x158] sm:$0xff]
        %v2577 = vld [vmem:[#allocation5 + $0x160] sm:$0xff]
        %v2578 = vld [vmem:[#allocation5 + $0x168] sm:$0xff]
        %v2579 = vld [vmem:[#allocation5 + $0x170] sm:$0xff]
        %v2580 = vld [vmem:[#allocation5 + $0x178] sm:$0xff]
        %v2581 = vld [vmem:[#allocation5 + $0x180] sm:$0xff]
        %v2582 = vld [vmem:[#allocation5 + $0x188] sm:$0xff]
        %v2583 = vld [vmem:[#allocation5 + $0x190] sm:$0xff]
        %v2584 = vld [vmem:[#allocation5 + $0x198] sm:$0xff]
        %v2585 = vld [vmem:[#allocation5 + $0x1a0] sm:$0xff]
        %v2586 = vld [vmem:[#allocation5 + $0x1a8] sm:$0xff]
        %v2587 = vld [vmem:[#allocation5 + $0x1b0] sm:$0xff]
        %v2588 = vld [vmem:[#allocation5 + $0x1b8] sm:$0xff]
        %v2589 = vld [vmem:[#allocation5 + $0x1c0] sm:$0xff]
        %v2590 = vld [vmem:[#allocation5 + $0x1c8] sm:$0xff]
        %v2591 = vld [vmem:[#allocation5 + $0x1d0] sm:$0xff]
        %v2592 = vld [vmem:[#allocation5 + $0x1d8] sm:$0xff]
        %v2593 = vld [vmem:[#allocation5 + $0x1e0] sm:$0xff]
        %v2594 = vld [vmem:[#allocation5 + $0x1e8] sm:$0xff]
        %v2595 = vld [vmem:[#allocation5 + $0x1f0] sm:$0xff]
        %v2596 = vld [vmem:[#allocation5 + $0x1f8] sm:$0xff]
        %v2597 = vld [vmem:[#allocation5 + $0x200] sm:$0xff]
        %v2598 = vld [vmem:[#allocation5 + $0x208] sm:$0xff]
        %v2599 = vld [vmem:[#allocation5 + $0x210] sm:$0xff]
        %v2600 = vld [vmem:[#allocation5 + $0x218] sm:$0xff]
        %v2601 = vld [vmem:[#allocation5 + $0x220] sm:$0xff]
        %v2602 = vld [vmem:[#allocation5 + $0x228] sm:$0xff]
        %v2603 = vld [vmem:[#allocation5 + $0x230] sm:$0xff]
        %v2604 = vld [vmem:[#allocation5 + $0x238] sm:$0xff]
        %v2605 = vld [vmem:[#allocation5 + $0x240] sm:$0xff]
        %v2606 = vld [vmem:[#allocation5 + $0x248] sm:$0xff]
        %v2607 = vld [vmem:[#allocation5 + $0x250] sm:$0xff]
        %v2608 = vld [vmem:[#allocation5 + $0x258] sm:$0xff]
        %v2609 = vld [vmem:[#allocation5 + $0x260] sm:$0xff]
        %v2610 = vld [vmem:[#allocation5 + $0x268] sm:$0xff]
        %v2611 = vld [vmem:[#allocation5 + $0x270] sm:$0xff]
        %v2612 = vld [vmem:[#allocation5 + $0x278] sm:$0xff]
        %v2613 = vld [vmem:[#allocation5 + $0x280] sm:$0xff]
        %v2614 = vld [vmem:[#allocation5 + $0x288] sm:$0xff]
        %v2615 = vld [vmem:[#allocation5 + $0x290] sm:$0xff]
        %v2616 = vld [vmem:[#allocation5 + $0x298] sm:$0xff]
        %v2617 = vld [vmem:[#allocation5 + $0x2a0] sm:$0xff]
        %v2618 = vld [vmem:[#allocation5 + $0x2a8] sm:$0xff]
        %v2619 = vld [vmem:[#allocation5 + $0x2b0] sm:$0xff]
        %v2620 = vld [vmem:[#allocation5 + $0x2b8] sm:$0xff]
        %v2621 = vld [vmem:[#allocation5 + $0x2c0] sm:$0xff]
        %v2622 = vld [vmem:[#allocation5 + $0x2c8] sm:$0xff]
        %v2623 = vld [vmem:[#allocation5 + $0x2d0] sm:$0xff]
        %v2624 = vld [vmem:[#allocation5 + $0x2d8] sm:$0xff]
        %v2625 = vld [vmem:[#allocation5 + $0x2e0] sm:$0xff]
        %v2626 = vld [vmem:[#allocation5 + $0x2e8] sm:$0xff]
        %v2627 = vld [vmem:[#allocation5 + $0x2f0] sm:$0xff]
        %v2628 = vld [vmem:[#allocation5 + $0x2f8] sm:$0xff]
        %v2629 = vld [vmem:[#allocation5 + $0x300] sm:$0xff]
        %v2630 = vld [vmem:[#allocation5 + $0x308] sm:$0xff]
        %v2631 = vld [vmem:[#allocation5 + $0x310] sm:$0xff]
        %v2632 = vld [vmem:[#allocation5 + $0x318] sm:$0xff]
        %v2633 = vld [vmem:[#allocation5 + $0x320] sm:$0xff]
        %v2634 = vld [vmem:[#allocation5 + $0x328] sm:$0xff]
        %v2635 = vld [vmem:[#allocation5 + $0x330] sm:$0xff]
        %v2636 = vld [vmem:[#allocation5 + $0x338] sm:$0xff]
        %v2637 = vld [vmem:[#allocation5 + $0x340] sm:$0xff]
        %v2638 = vld [vmem:[#allocation5 + $0x348] sm:$0xff]
        %v2639 = vld [vmem:[#allocation5 + $0x350] sm:$0xff]
        %v2640 = vld [vmem:[#allocation5 + $0x358] sm:$0xff]
        %v2641 = vld [vmem:[#allocation5 + $0x360] sm:$0xff]
        %v2642 = vld [vmem:[#allocation5 + $0x368] sm:$0xff]
        %v2643 = vld [vmem:[#allocation5 + $0x370] sm:$0xff]
        %v2644 = vld [vmem:[#allocation5 + $0x378] sm:$0xff]
        %v2645 = vld [vmem:[#allocation5 + $0x380] sm:$0xff]
        %v2646 = vld [vmem:[#allocation5 + $0x388] sm:$0xff]
        %v2647 = vld [vmem:[#allocation5 + $0x390] sm:$0xff]
        %v2648 = vld [vmem:[#allocation5 + $0x398] sm:$0xff]
        %v2649 = vld [vmem:[#allocation5 + $0x3a0] sm:$0xff]
        %v2650 = vld [vmem:[#allocation5 + $0x3a8] sm:$0xff]
        %v2651 = vld [vmem:[#allocation5 + $0x3b0] sm:$0xff]
        %v2652 = vld [vmem:[#allocation5 + $0x3b8] sm:$0xff]
        %v2653 = vld [vmem:[#allocation5 + $0x3c0] sm:$0xff]
        %v2654 = vld [vmem:[#allocation5 + $0x3c8] sm:$0xff]
        %v2655 = vld [vmem:[#allocation5 + $0x3d0] sm:$0xff]
        %v2656 = vld [vmem:[#allocation5 + $0x3d8] sm:$0xff]
        %v2657 = vld [vmem:[#allocation5 + $0x3e0] sm:$0xff]
        %v2658 = vld [vmem:[#allocation5 + $0x3e8] sm:$0xff]
        %v2659 = vld [vmem:[#allocation5 + $0x3f0] sm:$0xff]
        %v2660 = vld [vmem:[#allocation5 + $0x3f8] sm:$0xff]
        %v2661 = vld [vmem:[#allocation5 + $0x400] sm:$0xff]
        %v2662 = vld [vmem:[#allocation5 + $0x408] sm:$0xff]
        %v2663 = vld [vmem:[#allocation5 + $0x410] sm:$0xff]
        %v2664 = vld [vmem:[#allocation5 + $0x418] sm:$0xff]
        %v2665 = vld [vmem:[#allocation5 + $0x420] sm:$0xff]
        %v2666 = vld [vmem:[#allocation5 + $0x428] sm:$0xff]
        %v2667 = vld [vmem:[#allocation5 + $0x430] sm:$0xff]
        %v2668 = vld [vmem:[#allocation5 + $0x438] sm:$0xff]
        %v2669 = vld [vmem:[#allocation5 + $0x440] sm:$0xff]
        %v2670 = vld [vmem:[#allocation5 + $0x448] sm:$0xff]
        %v2671 = vld [vmem:[#allocation5 + $0x450] sm:$0xff]
        %v2672 = vld [vmem:[#allocation5 + $0x458] sm:$0xff]
        %v2673 = vld [vmem:[#allocation5 + $0x460] sm:$0xff]
        %v2674 = vld [vmem:[#allocation5 + $0x468] sm:$0xff]
        %v2675 = vld [vmem:[#allocation5 + $0x470] sm:$0xff]
        %v2676 = vld [vmem:[#allocation5 + $0x478] sm:$0xff]
        %v2677 = vld [vmem:[#allocation5 + $0x480] sm:$0xff]
        %v2678 = vld [vmem:[#allocation5 + $0x488] sm:$0xff]
        %v2679 = vld [vmem:[#allocation5 + $0x490] sm:$0xff]
        %v2680 = vld [vmem:[#allocation5 + $0x498] sm:$0xff]
        %v2681 = vld [vmem:[#allocation5 + $0x4a0] sm:$0xff]
        %v2682 = vld [vmem:[#allocation5 + $0x4a8] sm:$0xff]
        %v2683 = vld [vmem:[#allocation5 + $0x4b0] sm:$0xff]
        %v2684 = vld [vmem:[#allocation5 + $0x4b8] sm:$0xff]
        %v2685 = vld [vmem:[#allocation5 + $0x4c0] sm:$0xff]
        %v2686 = vld [vmem:[#allocation5 + $0x4c8] sm:$0xff]
        %v2687 = vld [vmem:[#allocation5 + $0x4d0] sm:$0xff]
        %v2688 = vld [vmem:[#allocation5 + $0x4d8] sm:$0xff]
        %v2689 = vld [vmem:[#allocation5 + $0x4e0] sm:$0xff]
        %v2690 = vld [vmem:[#allocation5 + $0x4e8] sm:$0xff]
        %v2691 = vld [vmem:[#allocation5 + $0x4f0] sm:$0xff]
        %v2692 = vld [vmem:[#allocation5 + $0x4f8] sm:$0xff]
        %v2693 = vld [vmem:[#allocation5 + $0x500] sm:$0xff]
        %v2694 = vld [vmem:[#allocation5 + $0x508] sm:$0xff]
        %v2695 = vld [vmem:[%s5] sm:$0xff]
        %2697 = vset.pattern.permute.xlu0 0
        %2698 = vperm.xlu0 %2697, %v2695
        %v2699 = vpop.permute.xlu0 %2698
        %v2702 = vsel %vm807, %v2532, 0
        %2704 = vmatprep.subr.mxu0 %v2534
        %2705 = vmatpush1.msra.mxu0 %v2533
        %2706 = vmatprep.subr.mxu0 %v2536
        %2707 = vmatpush1.msra.mxu0 %v2535
        %2708 = vmatprep.subr.mxu0 %v2538
        %2709 = vmatpush1.msra.mxu0 %v2537
        %2710 = vmatprep.subr.mxu0 %v2540
        %2711 = vmatpush1.msra.mxu0 %v2539
        %2712 = vmatprep.subr.mxu0 %v2542
        %2713 = vmatpush1.msra.mxu0 %v2541
        %2714 = vmatprep.subr.mxu0 %v2544
        %2715 = vmatpush1.msra.mxu0 %v2543
        %2716 = vmatprep.subr.mxu0 %v2546
        %2717 = vmatpush1.msra.mxu0 %v2545
        %2718 = vmatprep.subr.mxu0 %v2548
        %2719 = vmatpush1.msra.mxu0 %v2547
        %2720 = vmatprep.subr.mxu0 %v2550
        %2721 = vmatpush1.msra.mxu0 %v2549
        %2722 = vmatprep.subr.mxu0 %v2552
        %2723 = vmatpush1.msra.mxu0 %v2551
        %2724 = vmatprep.subr.mxu0 %v2554
        %2725 = vmatpush1.msra.mxu0 %v2553
        %2726 = vmatprep.subr.mxu0 %v2556
        %2727 = vmatpush1.msra.mxu0 %v2555
        %2728 = vmatprep.subr.mxu0 %v2558
        %2729 = vmatpush1.msra.mxu0 %v2557
        %2730 = vmatprep.subr.mxu0 %v2560
        %2731 = vmatpush1.msra.mxu0 %v2559
        %2732 = vmatprep.subr.mxu0 %v2562
        %2733 = vmatpush1.msra.mxu0 %v2561
        %2734 = vmatprep.subr.mxu0 %v2564
        %2735 = vmatpush1.msra.mxu0 %v2563
        %2736 = vmatprep.subr.mxu0 %v2566
        %2737 = vmatpush1.msra.mxu0 %v2565
        %2738 = vmatprep.subr.mxu0 %v2568
        %2739 = vmatpush1.msra.mxu0 %v2567
        %2740 = vmatprep.subr.mxu0 %v2570
        %2741 = vmatpush1.msra.mxu0 %v2569
        %2742 = vmatprep.subr.mxu0 %v2572
        %2743 = vmatpush1.msra.mxu0 %v2571
        %2744 = vmatprep.subr.mxu0 %v2574
        %2745 = vmatpush1.msra.mxu0 %v2573
        %2746 = vmatprep.subr.mxu0 %v2576
        %2747 = vmatpush1.msra.mxu0 %v2575
        %2748 = vmatprep.subr.mxu0 %v2578
        %2749 = vmatpush1.msra.mxu0 %v2577
        %2750 = vmatprep.subr.mxu0 %v2580
        %2751 = vmatpush1.msra.mxu0 %v2579
        %2752 = vmatprep.subr.mxu0 %v2582
        %2753 = vmatpush1.msra.mxu0 %v2581
        %2754 = vmatprep.subr.mxu0 %v2584
        %2755 = vmatpush1.msra.mxu0 %v2583
        %2756 = vmatprep.subr.mxu0 %v2586
        %2757 = vmatpush1.msra.mxu0 %v2585
        %2758 = vmatprep.subr.mxu0 %v2588
        %2759 = vmatpush1.msra.mxu0 %v2587
        %2760 = vmatprep.subr.mxu0 %v2590
        %2761 = vmatpush1.msra.mxu0 %v2589
        %2762 = vmatprep.subr.mxu0 %v2592
        %2763 = vmatpush1.msra.mxu0 %v2591
        %2764 = vmatprep.subr.mxu0 %v2594
        %2765 = vmatpush1.msra.mxu0 %v2593
        %2766 = vmatprep.subr.mxu0 %v2596
        %2767 = vmatpush1.msra.mxu0 %v2595
        %2768 = vmatprep.mubr.f32.mxu0 %v2528
        %2769 = vmatmul.mubr.f32.gmra.mrb[0].mxu0 %v2527
        %v2770 = vpop.f32.mrb[0].mxu0
        %v2771 = vadd.f32 %v2699, %v2770
        %v2772 = vpop.f32.mrb[0].mxu0
        %v2773 = vadd.f32 %v2699, %v2772
        %2774 = vdwg.mxu0
        %2775 = vmatprep.subr.mxu0 %v2598
        %2776 = vmatpush1.msra.mxu0 %v2597
        %2777 = vmatprep.subr.mxu0 %v2600
        %2778 = vmatpush1.msra.mxu0 %v2599
        %2779 = vmatprep.subr.mxu0 %v2602
        %2780 = vmatpush1.msra.mxu0 %v2601
        %2781 = vmatprep.subr.mxu0 %v2604
        %2782 = vmatpush1.msra.mxu0 %v2603
        %2783 = vmatprep.subr.mxu0 %v2606
        %2784 = vmatpush1.msra.mxu0 %v2605
        %2785 = vmatprep.subr.mxu0 %v2608
        %2786 = vmatpush1.msra.mxu0 %v2607
        %2787 = vmatprep.subr.mxu0 %v2610
        %2788 = vmatpush1.msra.mxu0 %v2609
        %2789 = vmatprep.subr.mxu0 %v2612
        %2790 = vmatpush1.msra.mxu0 %v2611
        %2791 = vmatprep.subr.mxu0 %v2614
        %2792 = vmatpush1.msra.mxu0 %v2613
        %2793 = vmatprep.subr.mxu0 %v2616
        %2794 = vmatpush1.msra.mxu0 %v2615
        %2795 = vmatprep.subr.mxu0 %v2618
        %2796 = vmatpush1.msra.mxu0 %v2617
        %2797 = vmatprep.subr.mxu0 %v2620
        %2798 = vmatpush1.msra.mxu0 %v2619
        %2799 = vmatprep.subr.mxu0 %v2622
        %2800 = vmatpush1.msra.mxu0 %v2621
        %2801 = vmatprep.subr.mxu0 %v2624
        %2802 = vmatpush1.msra.mxu0 %v2623
        %2803 = vmatprep.subr.mxu0 %v2626
        %2804 = vmatpush1.msra.mxu0 %v2625
        %2805 = vmatprep.subr.mxu0 %v2628
        %2806 = vmatpush1.msra.mxu0 %v2627
        %2807 = vmatprep.subr.mxu0 %v2630
        %2808 = vmatpush1.msra.mxu0 %v2629
        %2809 = vmatprep.subr.mxu0 %v2632
        %2810 = vmatpush1.msra.mxu0 %v2631
        %2811 = vmatprep.subr.mxu0 %v2634
        %2812 = vmatpush1.msra.mxu0 %v2633
        %2813 = vmatprep.subr.mxu0 %v2636
        %2814 = vmatpush1.msra.mxu0 %v2635
        %2815 = vmatprep.subr.mxu0 %v2638
        %2816 = vmatpush1.msra.mxu0 %v2637
        %2817 = vmatprep.subr.mxu0 %v2640
        %2818 = vmatpush1.msra.mxu0 %v2639
        %2819 = vmatprep.subr.mxu0 %v2642
        %2820 = vmatpush1.msra.mxu0 %v2641
        %2821 = vmatprep.subr.mxu0 %v2644
        %2822 = vmatpush1.msra.mxu0 %v2643
        %2823 = vmatprep.subr.mxu0 %v2646
        %2824 = vmatpush1.msra.mxu0 %v2645
        %2825 = vmatprep.subr.mxu0 %v2648
        %2826 = vmatpush1.msra.mxu0 %v2647
        %2827 = vmatprep.subr.mxu0 %v2650
        %2828 = vmatpush1.msra.mxu0 %v2649
        %2829 = vmatprep.subr.mxu0 %v2652
        %2830 = vmatpush1.msra.mxu0 %v2651
        %2831 = vmatprep.subr.mxu0 %v2654
        %2832 = vmatpush1.msra.mxu0 %v2653
        %2833 = vmatprep.subr.mxu0 %v2656
        %2834 = vmatpush1.msra.mxu0 %v2655
        %2835 = vmatprep.subr.mxu0 %v2658
        %2836 = vmatpush1.msra.mxu0 %v2657
        %2837 = vmatprep.subr.mxu0 %v2660
        %2838 = vmatpush1.msra.mxu0 %v2659
        %2839 = vmatprep.mubr.f32.mxu0 %v2530
        %2840 = vmatmul.mubr.f32.gmra.mrb[0].mxu0 %v2529
        %v2841 = vpop.f32.mrb[0].mxu0
        %v2842 = vadd.f32 %v2771, %v2841
        %v2843 = vpop.f32.mrb[0].mxu0
        %v2844 = vadd.f32 %v2773, %v2843
        %2845 = vdwg.mxu0
        %2846 = vmatprep.subr.mxu0 %v2662
        %2847 = vmatpush1.msra.mxu0 %v2661
        %2848 = vmatprep.subr.mxu0 %v2664
        %2849 = vmatpush1.msra.mxu0 %v2663
        %2850 = vmatprep.subr.mxu0 %v2666
        %2851 = vmatpush1.msra.mxu0 %v2665
        %2852 = vmatprep.subr.mxu0 %v2668
        %2853 = vmatpush1.msra.mxu0 %v2667
        %2854 = vmatprep.subr.mxu0 %v2670
        %2855 = vmatpush1.msra.mxu0 %v2669
        %2856 = vmatprep.subr.mxu0 %v2672
        %2857 = vmatpush1.msra.mxu0 %v2671
        %2858 = vmatprep.subr.mxu0 %v2674
        %2859 = vmatpush1.msra.mxu0 %v2673
        %2860 = vmatprep.subr.mxu0 %v2676
        %2861 = vmatpush1.msra.mxu0 %v2675
        %2862 = vmatprep.subr.mxu0 %v2678
        %2863 = vmatpush1.msra.mxu0 %v2677
        %2864 = vmatprep.subr.mxu0 %v2680
        %2865 = vmatpush1.msra.mxu0 %v2679
        %2866 = vmatprep.subr.mxu0 %v2682
        %2867 = vmatpush1.msra.mxu0 %v2681
        %2868 = vmatprep.subr.mxu0 %v2684
        %2869 = vmatpush1.msra.mxu0 %v2683
        %2870 = vmatprep.subr.mxu0 %v2686
        %2871 = vmatpush1.msra.mxu0 %v2685
        %2872 = vmatprep.subr.mxu0 %v2688
        %2873 = vmatpush1.msra.mxu0 %v2687
        %2874 = vmatprep.subr.mxu0 %v2690
        %2875 = vmatpush1.msra.mxu0 %v2689
        %2876 = vmatprep.subr.mxu0 %v2692
        %2877 = vmatpush1.msra.mxu0 %v2691
        %2878 = vmatprep.subr.mxu0 %v2694
        %2879 = vmatpush1.msra.mxu0 %v2693
        %2880 = vmatprep.subr.mxu0 0.0
        %2881 = vmatpush1.msra.mxu0 0.0
        %2882 = vmatprep.subr.mxu0 0.0
        %2883 = vmatpush1.msra.mxu0 0.0
        %2884 = vmatprep.subr.mxu0 0.0
        %2885 = vmatpush1.msra.mxu0 0.0
        %2886 = vmatprep.subr.mxu0 0.0
        %2887 = vmatpush1.msra.mxu0 0.0
        %2888 = vmatprep.subr.mxu0 0.0
        %2889 = vmatpush1.msra.mxu0 0.0
        %2890 = vmatprep.subr.mxu0 0.0
        %2891 = vmatpush1.msra.mxu0 0.0
        %2892 = vmatprep.subr.mxu0 0.0
        %2893 = vmatpush1.msra.mxu0 0.0
        %2894 = vmatprep.subr.mxu0 0.0
        %2895 = vmatpush1.msra.mxu0 0.0
        %2896 = vmatprep.subr.mxu0 0.0
        %2897 = vmatpush1.msra.mxu0 0.0
        %2898 = vmatprep.subr.mxu0 0.0
        %2899 = vmatpush1.msra.mxu0 0.0
        %2900 = vmatprep.subr.mxu0 0.0
        %2901 = vmatpush1.msra.mxu0 0.0
        %2902 = vmatprep.subr.mxu0 0.0
        %2903 = vmatpush1.msra.mxu0 0.0
        %2904 = vmatprep.subr.mxu0 0.0
        %2905 = vmatpush1.msra.mxu0 0.0
        %2906 = vmatprep.subr.mxu0 0.0
        %2907 = vmatpush1.msra.mxu0 0.0
        %2908 = vmatprep.subr.mxu0 0.0
        %2909 = vmatpush1.msra.mxu0 0.0
        %2910 = vmatprep.mubr.f32.mxu0 %v2702
        %2911 = vmatmul.mubr.f32.gmra.mrb[0].mxu0 %v2531
        %v2912 = vpop.f32.mrb[0].mxu0
        %v2913 = vadd.f32 %v2842, %v2912
        %v2914 = vpop.f32.mrb[0].mxu0
        %v2915 = vadd.f32 %v2844, %v2914
        %2916 = vdwg.mxu0
        %v2917 = vmax.f32 %v2913, 0.0
        %v2918 = vmax.f32 %v2915, 0.0
        %2919 = vst [vmem:[#allocation6] sm:$0xf] %v796
        %2920 = vst [vmem:[#allocation6 + $0x8] sm:$0xf] %v797
        %v2923 = vrot.slane %v2917, 4
        %v2924 = vrot.slane %v2918, 4
        %2927 = vst [vmem:[#allocation6] sm:$0xf0] %v2923
        %2928 = vst [vmem:[#allocation6 + $0x8] sm:$0xf0] %v2924
        %2929 = vst.msk [vmem:[#allocation6 + $0x10] sm:$0xff] %vm486, 0.0
        %v2930 = vld [vmem:[#allocation6] sm:$0xff]
        %v2931 = vld [vmem:[#allocation6 + $0x8] sm:$0xff]
        %v2932 = vld [vmem:[#allocation6 + $0x10] sm:$0xff]
        %2936 = vrot.lane.b32.xlu0 %v2930, 127
        %v2937 = vpop.permute.xlu0 %2936
        %2938 = vrot.lane.b32.xlu0 %v2931, 127
        %v2939 = vpop.permute.xlu0 %2938
        %2940 = vrot.lane.b32.xlu0 %v2932, 127
        %v2941 = vpop.permute.xlu0 %2940
        %v2942 = vsel %vm576, %v2937, %v2939
        %v2943 = vsel %vm576, %v2939, %v2941
        %v2946 = vmax.f32 %v2930, %v2942
        %v2947 = vmax.f32 %v2931, %v2943
        %v2949 = vmax.f32 %v2932, %v2941
        %2953 = vrot.lane.b32.xlu0 %v2946, 112
        %v2954 = vpop.permute.xlu0 %2953
        %2955 = vrot.lane.b32.xlu0 %v2947, 112
        %v2956 = vpop.permute.xlu0 %2955
        %2957 = vrot.lane.b32.xlu0 %v2949, 112
        %v2958 = vpop.permute.xlu0 %2957
        %v2959 = vsel %vm534, %v2954, %v2956
        %v2960 = vsel %vm534, %v2956, %v2958
        %v2963 = vmax.f32 %v2946, %v2959
        %v2964 = vmax.f32 %v2947, %v2960
        %v2965 = vld [vmem:[%s1] sm:$0xff]
        %v2966 = vld [vmem:[%s1 + $0x8] sm:$0xff]
        %v2967 = vld [vmem:[%s1 + $0x10] sm:$0xff]
        %v2968 = vld [vmem:[%s1 + $0x18] sm:$0xff]
        %v2969 = vld [vmem:[%s1 + $0x20] sm:$0xff]
        %v2970 = vld [vmem:[%s1 + $0x28] sm:$0xff]
        %v2971 = vld [vmem:[%s1 + $0x30] sm:$0xff]
        %v2972 = vld [vmem:[%s1 + $0x38] sm:$0xff]
        %v2973 = vld [vmem:[%s1 + $0x40] sm:$0xff]
        %v2974 = vld [vmem:[%s1 + $0x48] sm:$0xff]
        %v2975 = vld [vmem:[%s1 + $0x50] sm:$0xff]
        %v2976 = vld [vmem:[%s1 + $0x58] sm:$0xff]
        %v2977 = vld [vmem:[%s1 + $0x60] sm:$0xff]
        %v2978 = vld [vmem:[%s1 + $0x68] sm:$0xff]
        %v2979 = vld [vmem:[%s1 + $0x70] sm:$0xff]
        %v2980 = vld [vmem:[%s1 + $0x78] sm:$0xff]
        %v2981 = vld [vmem:[%s1 + $0x80] sm:$0xff]
        %v2982 = vld [vmem:[%s1 + $0x88] sm:$0xff]
        %v2983 = vld [vmem:[%s1 + $0x90] sm:$0xff]
        %v2984 = vld [vmem:[%s1 + $0x98] sm:$0xff]
        %v2985 = vld [vmem:[%s1 + $0xa0] sm:$0xff]
        %v2986 = vld [vmem:[%s1 + $0xa8] sm:$0xff]
        %v2987 = vld [vmem:[%s1 + $0xb0] sm:$0xff]
        %v2988 = vld [vmem:[%s1 + $0xb8] sm:$0xff]
        %v2989 = vld [vmem:[%s1 + $0xc0] sm:$0xff]
        %v2990 = vld [vmem:[%s1 + $0xc8] sm:$0xff]
        %v2991 = vld [vmem:[%s1 + $0xd0] sm:$0xff]
        %v2992 = vld [vmem:[%s1 + $0xd8] sm:$0xff]
        %v2993 = vld [vmem:[%s1 + $0xe0] sm:$0xff]
        %v2994 = vld [vmem:[%s1 + $0xe8] sm:$0xff]
        %v2995 = vld [vmem:[%s1 + $0xf0] sm:$0xff]
        %v2996 = vld [vmem:[%s1 + $0xf8] sm:$0xff]
        %2997 = vmatprep.subr.mxu0 0.0
        %2998 = vmatpush1.msra.mxu0 %v2965
        %2999 = vmatprep.subr.mxu0 0.0
        %3000 = vmatpush1.msra.mxu0 %v2966
        %3001 = vmatprep.subr.mxu0 0.0
        %3002 = vmatpush1.msra.mxu0 %v2967
        %3003 = vmatprep.subr.mxu0 0.0
        %3004 = vmatpush1.msra.mxu0 %v2968
        %3005 = vmatprep.subr.mxu0 0.0
        %3006 = vmatpush1.msra.mxu0 %v2969
        %3007 = vmatprep.subr.mxu0 0.0
        %3008 = vmatpush1.msra.mxu0 %v2970
        %3009 = vmatprep.subr.mxu0 0.0
        %3010 = vmatpush1.msra.mxu0 %v2971
        %3011 = vmatprep.subr.mxu0 0.0
        %3012 = vmatpush1.msra.mxu0 %v2972
        %3013 = vmatprep.subr.mxu0 0.0
        %3014 = vmatpush1.msra.mxu0 %v2973
        %3015 = vmatprep.subr.mxu0 0.0
        %3016 = vmatpush1.msra.mxu0 %v2974
        %3017 = vmatprep.subr.mxu0 0.0
        %3018 = vmatpush1.msra.mxu0 %v2975
        %3019 = vmatprep.subr.mxu0 0.0
        %3020 = vmatpush1.msra.mxu0 %v2976
        %3021 = vmatprep.subr.mxu0 0.0
        %3022 = vmatpush1.msra.mxu0 %v2977
        %3023 = vmatprep.subr.mxu0 0.0
        %3024 = vmatpush1.msra.mxu0 %v2978
        %3025 = vmatprep.subr.mxu0 0.0
        %3026 = vmatpush1.msra.mxu0 %v2979
        %3027 = vmatprep.subr.mxu0 0.0
        %3028 = vmatpush1.msra.mxu0 %v2980
        %3029 = vmatprep.subr.mxu0 0.0
        %3030 = vmatpush1.msra.mxu0 %v2981
        %3031 = vmatprep.subr.mxu0 0.0
        %3032 = vmatpush1.msra.mxu0 %v2982
        %3033 = vmatprep.subr.mxu0 0.0
        %3034 = vmatpush1.msra.mxu0 %v2983
        %3035 = vmatprep.subr.mxu0 0.0
        %3036 = vmatpush1.msra.mxu0 %v2984
        %3037 = vmatprep.subr.mxu0 0.0
        %3038 = vmatpush1.msra.mxu0 %v2985
        %3039 = vmatprep.subr.mxu0 0.0
        %3040 = vmatpush1.msra.mxu0 %v2986
        %3041 = vmatprep.subr.mxu0 0.0
        %3042 = vmatpush1.msra.mxu0 %v2987
        %3043 = vmatprep.subr.mxu0 0.0
        %3044 = vmatpush1.msra.mxu0 %v2988
        %3045 = vmatprep.subr.mxu0 0.0
        %3046 = vmatpush1.msra.mxu0 %v2989
        %3047 = vmatprep.subr.mxu0 0.0
        %3048 = vmatpush1.msra.mxu0 %v2990
        %3049 = vmatprep.subr.mxu0 0.0
        %3050 = vmatpush1.msra.mxu0 %v2991
        %3051 = vmatprep.subr.mxu0 0.0
        %3052 = vmatpush1.msra.mxu0 %v2992
        %3053 = vmatprep.subr.mxu0 0.0
        %3054 = vmatpush1.msra.mxu0 %v2993
        %3055 = vmatprep.subr.mxu0 0.0
        %3056 = vmatpush1.msra.mxu0 %v2994
        %3057 = vmatprep.subr.mxu0 0.0
        %3058 = vmatpush1.msra.mxu0 %v2995
        %3059 = vmatprep.subr.mxu0 0.0
        %3060 = vmatpush1.msra.mxu0 %v2996
        %3061 = vmatprep.mubr.f32.mxu0 %v2964
        %3062 = vmatmul.mubr.f32.gmra.mrb[0].mxu0 %v2963
        %v3063 = vpop.f32.mrb[0].mxu0
        %v3064 = vadd.f32 0.0, %v3063
        %v3065 = vpop.f32.mrb[0].mxu0
        %3066 = vdwg.mxu0
        %vm3067 = vcmp.lt.s32.totalorder %v460, 0
        %v3068 = vsub.s32 0, %v460
        %v3069 = vsel %vm3067, %v3068, %v460
        %v3070 = vshrl.u32 %v3069, 3
        %v3071 = vand.u32 %v3069, 7
        %v3072 = vsub.s32 0, %v3071
        %v3073 = vsel %vm3067, %v3072, %v3071
        %vm3074 = vcmp.ne.s32.totalorder %v3073, 0
        %vm3075 = vcmp.lt.s32.totalorder %v3073, 0
        %vm3076 = vmand %vm3075, %vm3074
        %v3077 = vadd.s32 %v3073, 8
        %v3078 = vsel %vm3076, %v3077, %v3073
        %3079 = vst.msk [vmem:[#allocation7] sm:$0xff] %vm2300, 0.0
        %vm3080 = vcmask 671304
        %3081 = vst.msk [vmem:[#allocation7] sm:$0xff] %vm3080, 0.0
        %3083 = vrot.lane.b32.xlu0 %v3064, 9
        %v3084 = vpop.permute.xlu0 %3083
        %vm3086 = vcmask 597064
        %3087 = vst.msk [vmem:[#allocation7] sm:$0xff] %vm3086, %v3084
        %v3088 = vadd.s32 %v3078, 4294967295
        %vm3089 = vcmp.ge.s32.totalorder %v3088, 0
        %vm3090 = vcmp.lt.s32.totalorder %v3088, 8
        %vm3091 = vmand %vm3089, %vm3090
        %v3092 = vld [vmem:[#allocation7] sm:$0xff]
        %v3093 = vsel %vm3091, 1, 0
        %vm3094 = vcmp.eq.s32.totalorder %v3093, 1
        %v3095 = vsel %vm3094, %v3092, 0.0
        %3096 = vst.msk [vmem:[#allocation8] sm:$0xff] %vm911, %v3095
        %v3097 = vld [vmem:[#allocation7] sm:$0xff]
        %3099 = vrot.lane.b32.xlu0 %v3097, 120
        %v3100 = vpop.permute.xlu0 %3099
        %v3102 = vsel %vm3094, %v3100, 0.0
        %3103 = vst.msk [vmem:[#allocation8 + $0x18] sm:$0xff] %vm911, %v3102
        %v3104 = vld [vmem:[#allocation7] sm:$0xff]
        %3106 = vrot.lane.b32.xlu0 %v3104, 112
        %v3107 = vpop.permute.xlu0 %3106
        %v3109 = vsel %vm3094, %v3107, 0.0
        %3110 = vst.msk [vmem:[#allocation8 + $0x30] sm:$0xff] %vm911, %v3109
        %v3111 = vld [vmem:[#allocation7] sm:$0xff]
        %3113 = vrot.lane.b32.xlu0 %v3111, 127
        %v3114 = vpop.permute.xlu0 %3113
        %3116 = vst.msk [vmem:[#allocation8 + $0x8] sm:$0xff] %vm911, %v3114
        %v3117 = vld [vmem:[#allocation7] sm:$0xff]
        %3119 = vrot.lane.b32.xlu0 %v3117, 119
        %v3120 = vpop.permute.xlu0 %3119
        %3122 = vst.msk [vmem:[#allocation8 + $0x20] sm:$0xff] %vm911, %v3120
        %v3123 = vld [vmem:[#allocation7] sm:$0xff]
        %3125 = vrot.lane.b32.xlu0 %v3123, 111
        %v3126 = vpop.permute.xlu0 %3125
        %3128 = vst.msk [vmem:[#allocation8 + $0x38] sm:$0xff] %vm911, %v3126
        %v3129 = vadd.s32 %v3078, 1
        %vm3130 = vcmp.ge.s32.totalorder %v3129, 0
        %vm3131 = vcmp.lt.s32.totalorder %v3129, 8
        %vm3132 = vmand %vm3130, %vm3131
        %v3133 = vld [vmem:[#allocation7] sm:$0xff]
        %v3134 = vsel %vm3132, 1, 0
        %vm3135 = vcmp.eq.s32.totalorder %v3134, 1
        %3137 = vrot.lane.b32.xlu0 %v3133, 126
        %v3138 = vpop.permute.xlu0 %3137
        %v3140 = vsel %vm3135, %v3138, 0.0
        %3141 = vst.msk [vmem:[#allocation8 + $0x10] sm:$0xff] %vm911, %v3140
        %v3142 = vld [vmem:[#allocation7] sm:$0xff]
        %3144 = vrot.lane.b32.xlu0 %v3142, 118
        %v3145 = vpop.permute.xlu0 %3144
        %v3147 = vsel %vm3135, %v3145, 0.0
        %3148 = vst.msk [vmem:[#allocation8 + $0x28] sm:$0xff] %vm911, %v3147
        %v3149 = vld [vmem:[#allocation7] sm:$0xff]
        %3151 = vrot.lane.b32.xlu0 %v3149, 110
        %v3152 = vpop.permute.xlu0 %3151
        %v3154 = vsel %vm3135, %v3152, 0.0
        %3155 = vst.msk [vmem:[#allocation8 + $0x40] sm:$0xff] %vm911, %v3154
        %v3156 = vld [vmem:[%s7] sm:$0xff]
        %v3157 = vld [vmem:[#allocation8] sm:$0xff]
        %v3158 = vld [vmem:[#allocation8 + $0x8] sm:$0xff]
        %v3159 = vld [vmem:[#allocation8 + $0x10] sm:$0xff]
        %v3160 = vld [vmem:[#allocation8 + $0x18] sm:$0xff]
        %v3161 = vld [vmem:[#allocation8 + $0x20] sm:$0xff]
        %v3162 = vld [vmem:[#allocation8 + $0x28] sm:$0xff]
        %v3163 = vld [vmem:[#allocation8 + $0x30] sm:$0xff]
        %v3164 = vld [vmem:[#allocation8 + $0x38] sm:$0xff]
        %v3165 = vld [vmem:[#allocation8 + $0x40] sm:$0xff]
        %v3166 = vld [vmem:[%s8] sm:$0xff]
        %3168 = vset.pattern.permute.xlu0 0
        %3169 = vperm.xlu0 %3168, %v3166
        %v3170 = vpop.permute.xlu0 %3169
        %v3173 = vsel %vm721, %v3156, 0
        %3175 = vmatprep.subr.mxu0 0.0
        %3176 = vmatpush1.msra.mxu0 %v3157
        %3177 = vmatprep.subr.mxu0 0.0
        %3178 = vmatpush1.msra.mxu0 %v3158
        %3179 = vmatprep.subr.mxu0 0.0
        %3180 = vmatpush1.msra.mxu0 %v3159
        %3181 = vmatprep.subr.mxu0 0.0
        %3182 = vmatpush1.msra.mxu0 %v3160
        %3183 = vmatprep.subr.mxu0 0.0
        %3184 = vmatpush1.msra.mxu0 %v3161
        %3185 = vmatprep.subr.mxu0 0.0
        %3186 = vmatpush1.msra.mxu0 %v3162
        %3187 = vmatprep.subr.mxu0 0.0
        %3188 = vmatpush1.msra.mxu0 %v3163
        %3189 = vmatprep.subr.mxu0 0.0
        %3190 = vmatpush1.msra.mxu0 %v3164
        %3191 = vmatprep.subr.mxu0 0.0
        %3192 = vmatpush1.msra.mxu0 %v3165
        %3193 = vmatprep.subr.mxu0 0.0
        %3194 = vmatpush1.msra.mxu0 0.0
        %3195 = vmatprep.subr.mxu0 0.0
        %3196 = vmatpush1.msra.mxu0 0.0
        %3197 = vmatprep.subr.mxu0 0.0
        %3198 = vmatpush1.msra.mxu0 0.0
        %3199 = vmatprep.subr.mxu0 0.0
        %3200 = vmatpush1.msra.mxu0 0.0
        %3201 = vmatprep.subr.mxu0 0.0
        %3202 = vmatpush1.msra.mxu0 0.0
        %3203 = vmatprep.subr.mxu0 0.0
        %3204 = vmatpush1.msra.mxu0 0.0
        %3205 = vmatprep.subr.mxu0 0.0
        %3206 = vmatpush1.msra.mxu0 0.0
        %3207 = vmatprep.subr.mxu0 0.0
        %3208 = vmatpush1.msra.mxu0 0.0
        %3209 = vmatprep.subr.mxu0 0.0
        %3210 = vmatpush1.msra.mxu0 0.0
        %3211 = vmatprep.subr.mxu0 0.0
        %3212 = vmatpush1.msra.mxu0 0.0
        %3213 = vmatprep.subr.mxu0 0.0
        %3214 = vmatpush1.msra.mxu0 0.0
        %3215 = vmatprep.subr.mxu0 0.0
        %3216 = vmatpush1.msra.mxu0 0.0
        %3217 = vmatprep.subr.mxu0 0.0
        %3218 = vmatpush1.msra.mxu0 0.0
        %3219 = vmatprep.subr.mxu0 0.0
        %3220 = vmatpush1.msra.mxu0 0.0
        %3221 = vmatprep.subr.mxu0 0.0
        %3222 = vmatpush1.msra.mxu0 0.0
        %3223 = vmatprep.subr.mxu0 0.0
        %3224 = vmatpush1.msra.mxu0 0.0
        %3225 = vmatprep.subr.mxu0 0.0
        %3226 = vmatpush1.msra.mxu0 0.0
        %3227 = vmatprep.subr.mxu0 0.0
        %3228 = vmatpush1.msra.mxu0 0.0
        %3229 = vmatprep.subr.mxu0 0.0
        %3230 = vmatpush1.msra.mxu0 0.0
        %3231 = vmatprep.subr.mxu0 0.0
        %3232 = vmatpush1.msra.mxu0 0.0
        %3233 = vmatprep.subr.mxu0 0.0
        %3234 = vmatpush1.msra.mxu0 0.0
        %3235 = vmatprep.subr.mxu0 0.0
        %3236 = vmatpush1.msra.mxu0 0.0
        %3237 = vmatprep.subr.mxu0 0.0
        %3238 = vmatpush1.msra.mxu0 0.0
        %3239 = vmatprep.mubr.f32.mxu0 0.0
        %3240 = vmatmul.mubr.f32.gmra.mrb[0].mxu0 %v3173
        %v3241 = vpop.f32.mrb[0].mxu0
        %v3242 = vadd.f32 %v3170, %v3241
        %v3243 = vpop.f32.mrb[0].mxu0
        %3244 = vdwg.mxu0
        %v3245 = vmax.f32 %v3242, 0.0
        %vm3246 = vcmask 519168
        %3247 = vst.msk [vmem:[%s444] sm:$0xf] %vm3246, %v3245
        %vm3248 = vcmask 293888
        %3249 = vst.msk [vmem:[#allocation9] sm:$0xff] %vm3248, 0.0
        %vm3250 = vcmask 1048352
        %3251 = vst.msk [vmem:[#allocation9] sm:$0xff] %vm3250, 0.0
        %3252 = vst.msk [vmem:[#allocation9 + $0x8] sm:$0xff] %vm807, 0.0
        %3254 = vrot.lane.b32.xlu0 %v3245, 36
        %v3255 = vpop.permute.xlu0 %3254
        %vm3257 = vcmask 818464
        %3258 = vst.msk [vmem:[#allocation9] sm:$0xff] %vm3257, %v3255
        %v3259 = vadd.s32 %v3078, 4294967292
        %vm3260 = vcmp.ge.s32.totalorder %v3259, 0
        %vm3261 = vcmp.lt.s32.totalorder %v3259, 8
        %vm3262 = vmand %vm3260, %vm3261
        %v3263 = vld [vmem:[#allocation9] sm:$0xff]
        %v3264 = vsel %vm3262, 1, 0
        %vm3265 = vcmp.eq.s32.totalorder %v3264, 1
        %v3266 = vsel %vm3265, %v3263, 0.0
        %3267 = vst.msk [vmem:[#allocation10] sm:$0xff] %vm911, %v3266
        %v3268 = vld [vmem:[#allocation9] sm:$0xff]
        %3270 = vrot.lane.b32.xlu0 %v3268, 120
        %v3271 = vpop.permute.xlu0 %3270
        %v3273 = vsel %vm3265, %v3271, 0.0
        %3274 = vst.msk [vmem:[#allocation10 + $0x48] sm:$0xff] %vm911, %v3273
        %v3275 = vld [vmem:[#allocation9] sm:$0xff]
        %3277 = vrot.lane.b32.xlu0 %v3275, 112
        %v3278 = vpop.permute.xlu0 %3277
        %v3280 = vsel %vm3265, %v3278, 0.0
        %3281 = vst.msk [vmem:[#allocation10 + $0x90] sm:$0xff] %vm911, %v3280
        %v3282 = vld [vmem:[#allocation9] sm:$0xff]
        %3284 = vrot.lane.b32.xlu0 %v3282, 104
        %v3285 = vpop.permute.xlu0 %3284
        %v3287 = vsel %vm3265, %v3285, 0.0
        %3288 = vst.msk [vmem:[#allocation10 + $0xd8] sm:$0xff] %vm911, %v3287
        %v3289 = vld [vmem:[#allocation9] sm:$0xff]
        %3291 = vrot.lane.b32.xlu0 %v3289, 96
        %v3292 = vpop.permute.xlu0 %3291
        %v3294 = vsel %vm3265, %v3292, 0.0
        %3295 = vst.msk [vmem:[#allocation10 + $0x120] sm:$0xff] %vm911, %v3294
        %v3296 = vld [vmem:[#allocation9] sm:$0xff]
        %3298 = vrot.lane.b32.xlu0 %v3296, 88
        %v3299 = vpop.permute.xlu0 %3298
        %v3301 = vsel %vm3265, %v3299, 0.0
        %3302 = vst.msk [vmem:[#allocation10 + $0x168] sm:$0xff] %vm911, %v3301
        %v3303 = vld [vmem:[#allocation9] sm:$0xff]
        %3305 = vrot.lane.b32.xlu0 %v3303, 80
        %v3306 = vpop.permute.xlu0 %3305
        %v3308 = vsel %vm3265, %v3306, 0.0
        %3309 = vst.msk [vmem:[#allocation10 + $0x1b0] sm:$0xff] %vm911, %v3308
        %v3310 = vld [vmem:[#allocation9] sm:$0xff]
        %3312 = vrot.lane.b32.xlu0 %v3310, 72
        %v3313 = vpop.permute.xlu0 %3312
        %v3315 = vsel %vm3265, %v3313, 0.0
        %3316 = vst.msk [vmem:[#allocation10 + $0x1f8] sm:$0xff] %vm911, %v3315
        %v3317 = vld [vmem:[#allocation9] sm:$0xff]
        %3319 = vrot.lane.b32.xlu0 %v3317, 64
        %v3320 = vpop.permute.xlu0 %3319
        %v3322 = vsel %vm3265, %v3320, 0.0
        %3323 = vst.msk [vmem:[#allocation10 + $0x240] sm:$0xff] %vm911, %v3322
        %v3324 = vadd.s32 %v3078, 4294967293
        %vm3325 = vcmp.ge.s32.totalorder %v3324, 0
        %vm3326 = vcmp.lt.s32.totalorder %v3324, 8
        %vm3327 = vmand %vm3325, %vm3326
        %v3328 = vld [vmem:[#allocation9] sm:$0xff]
        %v3329 = vsel %vm3327, 1, 0
        %vm3330 = vcmp.eq.s32.totalorder %v3329, 1
        %3332 = vrot.lane.b32.xlu0 %v3328, 127
        %v3333 = vpop.permute.xlu0 %3332
        %v3335 = vsel %vm3330, %v3333, 0.0
        %3336 = vst.msk [vmem:[#allocation10 + $0x8] sm:$0xff] %vm911, %v3335
        %v3337 = vld [vmem:[#allocation9] sm:$0xff]
        %3339 = vrot.lane.b32.xlu0 %v3337, 119
        %v3340 = vpop.permute.xlu0 %3339
        %v3342 = vsel %vm3330, %v3340, 0.0
        %3343 = vst.msk [vmem:[#allocation10 + $0x50] sm:$0xff] %vm911, %v3342
        %v3344 = vld [vmem:[#allocation9] sm:$0xff]
        %3346 = vrot.lane.b32.xlu0 %v3344, 111
        %v3347 = vpop.permute.xlu0 %3346
        %v3349 = vsel %vm3330, %v3347, 0.0
        %3350 = vst.msk [vmem:[#allocation10 + $0x98] sm:$0xff] %vm911, %v3349
        %v3351 = vld [vmem:[#allocation9] sm:$0xff]
        %3353 = vrot.lane.b32.xlu0 %v3351, 103
        %v3354 = vpop.permute.xlu0 %3353
        %v3356 = vsel %vm3330, %v3354, 0.0
        %3357 = vst.msk [vmem:[#allocation10 + $0xe0] sm:$0xff] %vm911, %v3356
        %v3358 = vld [vmem:[#allocation9] sm:$0xff]
        %3360 = vrot.lane.b32.xlu0 %v3358, 95
        %v3361 = vpop.permute.xlu0 %3360
        %v3363 = vsel %vm3330, %v3361, 0.0
        %3364 = vst.msk [vmem:[#allocation10 + $0x128] sm:$0xff] %vm911, %v3363
        %v3365 = vld [vmem:[#allocation9] sm:$0xff]
        %3367 = vrot.lane.b32.xlu0 %v3365, 87
        %v3368 = vpop.permute.xlu0 %3367
        %v3370 = vsel %vm3330, %v3368, 0.0
        %3371 = vst.msk [vmem:[#allocation10 + $0x170] sm:$0xff] %vm911, %v3370
        %v3372 = vld [vmem:[#allocation9] sm:$0xff]
        %3374 = vrot.lane.b32.xlu0 %v3372, 79
        %v3375 = vpop.permute.xlu0 %3374
        %v3377 = vsel %vm3330, %v3375, 0.0
        %3378 = vst.msk [vmem:[#allocation10 + $0x1b8] sm:$0xff] %vm911, %v3377
        %v3379 = vld [vmem:[#allocation9] sm:$0xff]
        %3381 = vrot.lane.b32.xlu0 %v3379, 71
        %v3382 = vpop.permute.xlu0 %3381
        %v3384 = vsel %vm3330, %v3382, 0.0
        %3385 = vst.msk [vmem:[#allocation10 + $0x200] sm:$0xff] %vm911, %v3384
        %v3386 = vld [vmem:[#allocation9] sm:$0xff]
        %v3387 = vld [vmem:[#allocation9 + $0x8] sm:$0xff]
        %3390 = vrot.lane.b32.xlu0 %v3386, 63
        %v3391 = vpop.permute.xlu0 %3390
        %3392 = vrot.lane.b32.xlu0 %v3387, 63
        %v3393 = vpop.permute.xlu0 %3392
        %v3394 = vsel %vm1094, %v3391, %v3393
        %v3396 = vsel %vm3330, %v3394, 0.0
        %3397 = vst.msk [vmem:[#allocation10 + $0x248] sm:$0xff] %vm911, %v3396
        %v3398 = vadd.s32 %v3078, 4294967294
        %vm3399 = vcmp.ge.s32.totalorder %v3398, 0
        %vm3400 = vcmp.lt.s32.totalorder %v3398, 8
        %vm3401 = vmand %vm3399, %vm3400
        %v3402 = vld [vmem:[#allocation9] sm:$0xff]
        %v3403 = vsel %vm3401, 1, 0
        %vm3404 = vcmp.eq.s32.totalorder %v3403, 1
        %3406 = vrot.lane.b32.xlu0 %v3402, 126
        %v3407 = vpop.permute.xlu0 %3406
        %v3409 = vsel %vm3404, %v3407, 0.0
        %3410 = vst.msk [vmem:[#allocation10 + $0x10] sm:$0xff] %vm911, %v3409
        %v3411 = vld [vmem:[#allocation9] sm:$0xff]
        %3413 = vrot.lane.b32.xlu0 %v3411, 118
        %v3414 = vpop.permute.xlu0 %3413
        %v3416 = vsel %vm3404, %v3414, 0.0
        %3417 = vst.msk [vmem:[#allocation10 + $0x58] sm:$0xff] %vm911, %v3416
        %v3418 = vld [vmem:[#allocation9] sm:$0xff]
        %3420 = vrot.lane.b32.xlu0 %v3418, 110
        %v3421 = vpop.permute.xlu0 %3420
        %v3423 = vsel %vm3404, %v3421, 0.0
        %3424 = vst.msk [vmem:[#allocation10 + $0xa0] sm:$0xff] %vm911, %v3423
        %v3425 = vld [vmem:[#allocation9] sm:$0xff]
        %3427 = vrot.lane.b32.xlu0 %v3425, 102
        %v3428 = vpop.permute.xlu0 %3427
        %v3430 = vsel %vm3404, %v3428, 0.0
        %3431 = vst.msk [vmem:[#allocation10 + $0xe8] sm:$0xff] %vm911, %v3430
        %v3432 = vld [vmem:[#allocation9] sm:$0xff]
        %3434 = vrot.lane.b32.xlu0 %v3432, 94
        %v3435 = vpop.permute.xlu0 %3434
        %v3437 = vsel %vm3404, %v3435, 0.0
        %3438 = vst.msk [vmem:[#allocation10 + $0x130] sm:$0xff] %vm911, %v3437
        %v3439 = vld [vmem:[#allocation9] sm:$0xff]
        %3441 = vrot.lane.b32.xlu0 %v3439, 86
        %v3442 = vpop.permute.xlu0 %3441
        %v3444 = vsel %vm3404, %v3442, 0.0
        %3445 = vst.msk [vmem:[#allocation10 + $0x178] sm:$0xff] %vm911, %v3444
        %v3446 = vld [vmem:[#allocation9] sm:$0xff]
        %3448 = vrot.lane.b32.xlu0 %v3446, 78
        %v3449 = vpop.permute.xlu0 %3448
        %v3451 = vsel %vm3404, %v3449, 0.0
        %3452 = vst.msk [vmem:[#allocation10 + $0x1c0] sm:$0xff] %vm911, %v3451
        %v3453 = vld [vmem:[#allocation9] sm:$0xff]
        %3455 = vrot.lane.b32.xlu0 %v3453, 70
        %v3456 = vpop.permute.xlu0 %3455
        %v3458 = vsel %vm3404, %v3456, 0.0
        %3459 = vst.msk [vmem:[#allocation10 + $0x208] sm:$0xff] %vm911, %v3458
        %v3460 = vld [vmem:[#allocation9] sm:$0xff]
        %v3461 = vld [vmem:[#allocation9 + $0x8] sm:$0xff]
        %3464 = vrot.lane.b32.xlu0 %v3460, 62
        %v3465 = vpop.permute.xlu0 %3464
        %3466 = vrot.lane.b32.xlu0 %v3461, 62
        %v3467 = vpop.permute.xlu0 %3466
        %v3468 = vsel %vm1291, %v3465, %v3467
        %v3470 = vsel %vm3404, %v3468, 0.0
        %3471 = vst.msk [vmem:[#allocation10 + $0x250] sm:$0xff] %vm911, %v3470
        %v3472 = vld [vmem:[#allocation9] sm:$0xff]
        %3474 = vrot.lane.b32.xlu0 %v3472, 125
        %v3475 = vpop.permute.xlu0 %3474
        %v3477 = vsel %vm3094, %v3475, 0.0
        %3478 = vst.msk [vmem:[#allocation10 + $0x18] sm:$0xff] %vm911, %v3477
        %v3479 = vld [vmem:[#allocation9] sm:$0xff]
        %3481 = vrot.lane.b32.xlu0 %v3479, 117
        %v3482 = vpop.permute.xlu0 %3481
        %v3484 = vsel %vm3094, %v3482, 0.0
        %3485 = vst.msk [vmem:[#allocation10 + $0x60] sm:$0xff] %vm911, %v3484
        %v3486 = vld [vmem:[#allocation9] sm:$0xff]
        %3488 = vrot.lane.b32.xlu0 %v3486, 109
        %v3489 = vpop.permute.xlu0 %3488
        %v3491 = vsel %vm3094, %v3489, 0.0
        %3492 = vst.msk [vmem:[#allocation10 + $0xa8] sm:$0xff] %vm911, %v3491
        %v3493 = vld [vmem:[#allocation9] sm:$0xff]
        %3495 = vrot.lane.b32.xlu0 %v3493, 101
        %v3496 = vpop.permute.xlu0 %3495
        %v3498 = vsel %vm3094, %v3496, 0.0
        %3499 = vst.msk [vmem:[#allocation10 + $0xf0] sm:$0xff] %vm911, %v3498
        %v3500 = vld [vmem:[#allocation9] sm:$0xff]
        %3502 = vrot.lane.b32.xlu0 %v3500, 93
        %v3503 = vpop.permute.xlu0 %3502
        %v3505 = vsel %vm3094, %v3503, 0.0
        %3506 = vst.msk [vmem:[#allocation10 + $0x138] sm:$0xff] %vm911, %v3505
        %v3507 = vld [vmem:[#allocation9] sm:$0xff]
        %3509 = vrot.lane.b32.xlu0 %v3507, 85
        %v3510 = vpop.permute.xlu0 %3509
        %v3512 = vsel %vm3094, %v3510, 0.0
        %3513 = vst.msk [vmem:[#allocation10 + $0x180] sm:$0xff] %vm911, %v3512
        %v3514 = vld [vmem:[#allocation9] sm:$0xff]
        %3516 = vrot.lane.b32.xlu0 %v3514, 77
        %v3517 = vpop.permute.xlu0 %3516
        %v3519 = vsel %vm3094, %v3517, 0.0
        %3520 = vst.msk [vmem:[#allocation10 + $0x1c8] sm:$0xff] %vm911, %v3519
        %v3521 = vld [vmem:[#allocation9] sm:$0xff]
        %3523 = vrot.lane.b32.xlu0 %v3521, 69
        %v3524 = vpop.permute.xlu0 %3523
        %v3526 = vsel %vm3094, %v3524, 0.0
        %3527 = vst.msk [vmem:[#allocation10 + $0x210] sm:$0xff] %vm911, %v3526
        %v3528 = vld [vmem:[#allocation9] sm:$0xff]
        %v3529 = vld [vmem:[#allocation9 + $0x8] sm:$0xff]
        %3532 = vrot.lane.b32.xlu0 %v3528, 61
        %v3533 = vpop.permute.xlu0 %3532
        %3534 = vrot.lane.b32.xlu0 %v3529, 61
        %v3535 = vpop.permute.xlu0 %3534
        %v3536 = vsel %vm1479, %v3533, %v3535
        %v3538 = vsel %vm3094, %v3536, 0.0
        %3539 = vst.msk [vmem:[#allocation10 + $0x258] sm:$0xff] %vm911, %v3538
        %v3540 = vld [vmem:[#allocation9] sm:$0xff]
        %3542 = vrot.lane.b32.xlu0 %v3540, 124
        %v3543 = vpop.permute.xlu0 %3542
        %3545 = vst.msk [vmem:[#allocation10 + $0x20] sm:$0xff] %vm911, %v3543
        %v3546 = vld [vmem:[#allocation9] sm:$0xff]
        %3548 = vrot.lane.b32.xlu0 %v3546, 116
        %v3549 = vpop.permute.xlu0 %3548
        %3551 = vst.msk [vmem:[#allocation10 + $0x68] sm:$0xff] %vm911, %v3549
        %v3552 = vld [vmem:[#allocation9] sm:$0xff]
        %3554 = vrot.lane.b32.xlu0 %v3552, 108
        %v3555 = vpop.permute.xlu0 %3554
        %3557 = vst.msk [vmem:[#allocation10 + $0xb0] sm:$0xff] %vm911, %v3555
        %v3558 = vld [vmem:[#allocation9] sm:$0xff]
        %3560 = vrot.lane.b32.xlu0 %v3558, 100
        %v3561 = vpop.permute.xlu0 %3560
        %3563 = vst.msk [vmem:[#allocation10 + $0xf8] sm:$0xff] %vm911, %v3561
        %v3564 = vld [vmem:[#allocation9] sm:$0xff]
        %3566 = vrot.lane.b32.xlu0 %v3564, 92
        %v3567 = vpop.permute.xlu0 %3566
        %3569 = vst.msk [vmem:[#allocation10 + $0x140] sm:$0xff] %vm911, %v3567
        %v3570 = vld [vmem:[#allocation9] sm:$0xff]
        %3572 = vrot.lane.b32.xlu0 %v3570, 84
        %v3573 = vpop.permute.xlu0 %3572
        %3575 = vst.msk [vmem:[#allocation10 + $0x188] sm:$0xff] %vm911, %v3573
        %v3576 = vld [vmem:[#allocation9] sm:$0xff]
        %3578 = vrot.lane.b32.xlu0 %v3576, 76
        %v3579 = vpop.permute.xlu0 %3578
        %3581 = vst.msk [vmem:[#allocation10 + $0x1d0] sm:$0xff] %vm911, %v3579
        %v3582 = vld [vmem:[#allocation9] sm:$0xff]
        %3584 = vrot.lane.b32.xlu0 %v3582, 68
        %v3585 = vpop.permute.xlu0 %3584
        %3587 = vst.msk [vmem:[#allocation10 + $0x218] sm:$0xff] %vm911, %v3585
        %v3588 = vld [vmem:[#allocation9] sm:$0xff]
        %v3589 = vld [vmem:[#allocation9 + $0x8] sm:$0xff]
        %3592 = vrot.lane.b32.xlu0 %v3588, 60
        %v3593 = vpop.permute.xlu0 %3592
        %3594 = vrot.lane.b32.xlu0 %v3589, 60
        %v3595 = vpop.permute.xlu0 %3594
        %v3596 = vsel %vm1659, %v3593, %v3595
        %3598 = vst.msk [vmem:[#allocation10 + $0x260] sm:$0xff] %vm911, %v3596
        %v3599 = vld [vmem:[#allocation9] sm:$0xff]
        %3601 = vrot.lane.b32.xlu0 %v3599, 123
        %v3602 = vpop.permute.xlu0 %3601
        %v3604 = vsel %vm3135, %v3602, 0.0
        %3605 = vst.msk [vmem:[#allocation10 + $0x28] sm:$0xff] %vm911, %v3604
        %v3606 = vld [vmem:[#allocation9] sm:$0xff]
        %3608 = vrot.lane.b32.xlu0 %v3606, 115
        %v3609 = vpop.permute.xlu0 %3608
        %v3611 = vsel %vm3135, %v3609, 0.0
        %3612 = vst.msk [vmem:[#allocation10 + $0x70] sm:$0xff] %vm911, %v3611
        %v3613 = vld [vmem:[#allocation9] sm:$0xff]
        %3615 = vrot.lane.b32.xlu0 %v3613, 107
        %v3616 = vpop.permute.xlu0 %3615
        %v3618 = vsel %vm3135, %v3616, 0.0
        %3619 = vst.msk [vmem:[#allocation10 + $0xb8] sm:$0xff] %vm911, %v3618
        %v3620 = vld [vmem:[#allocation9] sm:$0xff]
        %3622 = vrot.lane.b32.xlu0 %v3620, 99
        %v3623 = vpop.permute.xlu0 %3622
        %v3625 = vsel %vm3135, %v3623, 0.0
        %3626 = vst.msk [vmem:[#allocation10 + $0x100] sm:$0xff] %vm911, %v3625
        %v3627 = vld [vmem:[#allocation9] sm:$0xff]
        %3629 = vrot.lane.b32.xlu0 %v3627, 91
        %v3630 = vpop.permute.xlu0 %3629
        %v3632 = vsel %vm3135, %v3630, 0.0
        %3633 = vst.msk [vmem:[#allocation10 + $0x148] sm:$0xff] %vm911, %v3632
        %v3634 = vld [vmem:[#allocation9] sm:$0xff]
        %3636 = vrot.lane.b32.xlu0 %v3634, 83
        %v3637 = vpop.permute.xlu0 %3636
        %v3639 = vsel %vm3135, %v3637, 0.0
        %3640 = vst.msk [vmem:[#allocation10 + $0x190] sm:$0xff] %vm911, %v3639
        %v3641 = vld [vmem:[#allocation9] sm:$0xff]
        %3643 = vrot.lane.b32.xlu0 %v3641, 75
        %v3644 = vpop.permute.xlu0 %3643
        %v3646 = vsel %vm3135, %v3644, 0.0
        %3647 = vst.msk [vmem:[#allocation10 + $0x1d8] sm:$0xff] %vm911, %v3646
        %v3648 = vld [vmem:[#allocation9] sm:$0xff]
        %3650 = vrot.lane.b32.xlu0 %v3648, 67
        %v3651 = vpop.permute.xlu0 %3650
        %v3653 = vsel %vm3135, %v3651, 0.0
        %3654 = vst.msk [vmem:[#allocation10 + $0x220] sm:$0xff] %vm911, %v3653
        %v3655 = vld [vmem:[#allocation9] sm:$0xff]
        %v3656 = vld [vmem:[#allocation9 + $0x8] sm:$0xff]
        %3659 = vrot.lane.b32.xlu0 %v3655, 59
        %v3660 = vpop.permute.xlu0 %3659
        %3661 = vrot.lane.b32.xlu0 %v3656, 59
        %v3662 = vpop.permute.xlu0 %3661
        %v3663 = vsel %vm1837, %v3660, %v3662
        %v3665 = vsel %vm3135, %v3663, 0.0
        %3666 = vst.msk [vmem:[#allocation10 + $0x268] sm:$0xff] %vm911, %v3665
        %v3667 = vadd.s32 %v3078, 2
        %vm3668 = vcmp.ge.s32.totalorder %v3667, 0
        %vm3669 = vcmp.lt.s32.totalorder %v3667, 8
        %vm3670 = vmand %vm3668, %vm3669
        %v3671 = vld [vmem:[#allocation9] sm:$0xff]
        %v3672 = vsel %vm3670, 1, 0
        %vm3673 = vcmp.eq.s32.totalorder %v3672, 1
        %3675 = vrot.lane.b32.xlu0 %v3671, 122
        %v3676 = vpop.permute.xlu0 %3675
        %v3678 = vsel %vm3673, %v3676, 0.0
        %3679 = vst.msk [vmem:[#allocation10 + $0x30] sm:$0xff] %vm911, %v3678
        %v3680 = vld [vmem:[#allocation9] sm:$0xff]
        %3682 = vrot.lane.b32.xlu0 %v3680, 114
        %v3683 = vpop.permute.xlu0 %3682
        %v3685 = vsel %vm3673, %v3683, 0.0
        %3686 = vst.msk [vmem:[#allocation10 + $0x78] sm:$0xff] %vm911, %v3685
        %v3687 = vld [vmem:[#allocation9] sm:$0xff]
        %3689 = vrot.lane.b32.xlu0 %v3687, 106
        %v3690 = vpop.permute.xlu0 %3689
        %v3692 = vsel %vm3673, %v3690, 0.0
        %3693 = vst.msk [vmem:[#allocation10 + $0xc0] sm:$0xff] %vm911, %v3692
        %v3694 = vld [vmem:[#allocation9] sm:$0xff]
        %3696 = vrot.lane.b32.xlu0 %v3694, 98
        %v3697 = vpop.permute.xlu0 %3696
        %v3699 = vsel %vm3673, %v3697, 0.0
        %3700 = vst.msk [vmem:[#allocation10 + $0x108] sm:$0xff] %vm911, %v3699
        %v3701 = vld [vmem:[#allocation9] sm:$0xff]
        %3703 = vrot.lane.b32.xlu0 %v3701, 90
        %v3704 = vpop.permute.xlu0 %3703
        %v3706 = vsel %vm3673, %v3704, 0.0
        %3707 = vst.msk [vmem:[#allocation10 + $0x150] sm:$0xff] %vm911, %v3706
        %v3708 = vld [vmem:[#allocation9] sm:$0xff]
        %3710 = vrot.lane.b32.xlu0 %v3708, 82
        %v3711 = vpop.permute.xlu0 %3710
        %v3713 = vsel %vm3673, %v3711, 0.0
        %3714 = vst.msk [vmem:[#allocation10 + $0x198] sm:$0xff] %vm911, %v3713
        %v3715 = vld [vmem:[#allocation9] sm:$0xff]
        %3717 = vrot.lane.b32.xlu0 %v3715, 74
        %v3718 = vpop.permute.xlu0 %3717
        %v3720 = vsel %vm3673, %v3718, 0.0
        %3721 = vst.msk [vmem:[#allocation10 + $0x1e0] sm:$0xff] %vm911, %v3720
        %v3722 = vld [vmem:[#allocation9] sm:$0xff]
        %3724 = vrot.lane.b32.xlu0 %v3722, 66
        %v3725 = vpop.permute.xlu0 %3724
        %v3727 = vsel %vm3673, %v3725, 0.0
        %3728 = vst.msk [vmem:[#allocation10 + $0x228] sm:$0xff] %vm911, %v3727
        %v3729 = vld [vmem:[#allocation9] sm:$0xff]
        %v3730 = vld [vmem:[#allocation9 + $0x8] sm:$0xff]
        %3733 = vrot.lane.b32.xlu0 %v3729, 58
        %v3734 = vpop.permute.xlu0 %3733
        %3735 = vrot.lane.b32.xlu0 %v3730, 58
        %v3736 = vpop.permute.xlu0 %3735
        %v3737 = vsel %vm2037, %v3734, %v3736
        %v3739 = vsel %vm3673, %v3737, 0.0
        %3740 = vst.msk [vmem:[#allocation10 + $0x270] sm:$0xff] %vm911, %v3739
        %v3741 = vadd.s32 %v3078, 3
        %vm3742 = vcmp.ge.s32.totalorder %v3741, 0
        %vm3743 = vcmp.lt.s32.totalorder %v3741, 8
        %vm3744 = vmand %vm3742, %vm3743
        %v3745 = vld [vmem:[#allocation9] sm:$0xff]
        %v3746 = vsel %vm3744, 1, 0
        %vm3747 = vcmp.eq.s32.totalorder %v3746, 1
        %3749 = vrot.lane.b32.xlu0 %v3745, 121
        %v3750 = vpop.permute.xlu0 %3749
        %v3752 = vsel %vm3747, %v3750, 0.0
        %3753 = vst.msk [vmem:[#allocation10 + $0x38] sm:$0xff] %vm911, %v3752
        %v3754 = vld [vmem:[#allocation9] sm:$0xff]
        %3756 = vrot.lane.b32.xlu0 %v3754, 113
        %v3757 = vpop.permute.xlu0 %3756
        %v3759 = vsel %vm3747, %v3757, 0.0
        %3760 = vst.msk [vmem:[#allocation10 + $0x80] sm:$0xff] %vm911, %v3759
        %v3761 = vld [vmem:[#allocation9] sm:$0xff]
        %3763 = vrot.lane.b32.xlu0 %v3761, 105
        %v3764 = vpop.permute.xlu0 %3763
        %v3766 = vsel %vm3747, %v3764, 0.0
        %3767 = vst.msk [vmem:[#allocation10 + $0xc8] sm:$0xff] %vm911, %v3766
        %v3768 = vld [vmem:[#allocation9] sm:$0xff]
        %3770 = vrot.lane.b32.xlu0 %v3768, 97
        %v3771 = vpop.permute.xlu0 %3770
        %v3773 = vsel %vm3747, %v3771, 0.0
        %3774 = vst.msk [vmem:[#allocation10 + $0x110] sm:$0xff] %vm911, %v3773
        %v3775 = vld [vmem:[#allocation9] sm:$0xff]
        %3777 = vrot.lane.b32.xlu0 %v3775, 89
        %v3778 = vpop.permute.xlu0 %3777
        %v3780 = vsel %vm3747, %v3778, 0.0
        %3781 = vst.msk [vmem:[#allocation10 + $0x158] sm:$0xff] %vm911, %v3780
        %v3782 = vld [vmem:[#allocation9] sm:$0xff]
        %3784 = vrot.lane.b32.xlu0 %v3782, 81
        %v3785 = vpop.permute.xlu0 %3784
        %v3787 = vsel %vm3747, %v3785, 0.0
        %3788 = vst.msk [vmem:[#allocation10 + $0x1a0] sm:$0xff] %vm911, %v3787
        %v3789 = vld [vmem:[#allocation9] sm:$0xff]
        %3791 = vrot.lane.b32.xlu0 %v3789, 73
        %v3792 = vpop.permute.xlu0 %3791
        %v3794 = vsel %vm3747, %v3792, 0.0
        %3795 = vst.msk [vmem:[#allocation10 + $0x1e8] sm:$0xff] %vm911, %v3794
        %v3796 = vld [vmem:[#allocation9] sm:$0xff]
        %3798 = vrot.lane.b32.xlu0 %v3796, 65
        %v3799 = vpop.permute.xlu0 %3798
        %v3801 = vsel %vm3747, %v3799, 0.0
        %3802 = vst.msk [vmem:[#allocation10 + $0x230] sm:$0xff] %vm911, %v3801
        %v3803 = vld [vmem:[#allocation9] sm:$0xff]
        %v3804 = vld [vmem:[#allocation9 + $0x8] sm:$0xff]
        %3807 = vrot.lane.b32.xlu0 %v3803, 57
        %v3808 = vpop.permute.xlu0 %3807
        %3809 = vrot.lane.b32.xlu0 %v3804, 57
        %v3810 = vpop.permute.xlu0 %3809
        %v3811 = vsel %vm2237, %v3808, %v3810
        %v3813 = vsel %vm3747, %v3811, 0.0
        %3814 = vst.msk [vmem:[#allocation10 + $0x278] sm:$0xff] %vm911, %v3813
        %v3815 = vadd.s32 %v3078, 4
        %vm3816 = vcmp.ge.s32.totalorder %v3815, 0
        %vm3817 = vcmp.lt.s32.totalorder %v3815, 8
        %vm3818 = vmand %vm3816, %vm3817
        %v3819 = vld [vmem:[#allocation9] sm:$0xff]
        %v3820 = vsel %vm3818, 1, 0
        %vm3821 = vcmp.eq.s32.totalorder %v3820, 1
        %3823 = vrot.lane.b32.xlu0 %v3819, 120
        %v3824 = vpop.permute.xlu0 %3823
        %v3826 = vsel %vm3821, %v3824, 0.0
        %3827 = vst.msk [vmem:[#allocation10 + $0x40] sm:$0xff] %vm911, %v3826
        %v3828 = vld [vmem:[#allocation9] sm:$0xff]
        %3830 = vrot.lane.b32.xlu0 %v3828, 112
        %v3831 = vpop.permute.xlu0 %3830
        %v3833 = vsel %vm3821, %v3831, 0.0
        %3834 = vst.msk [vmem:[#allocation10 + $0x88] sm:$0xff] %vm911, %v3833
        %v3835 = vld [vmem:[#allocation9] sm:$0xff]
        %3837 = vrot.lane.b32.xlu0 %v3835, 104
        %v3838 = vpop.permute.xlu0 %3837
        %v3840 = vsel %vm3821, %v3838, 0.0
        %3841 = vst.msk [vmem:[#allocation10 + $0xd0] sm:$0xff] %vm911, %v3840
        %v3842 = vld [vmem:[#allocation9] sm:$0xff]
        %3844 = vrot.lane.b32.xlu0 %v3842, 96
        %v3845 = vpop.permute.xlu0 %3844
        %v3847 = vsel %vm3821, %v3845, 0.0
        %3848 = vst.msk [vmem:[#allocation10 + $0x118] sm:$0xff] %vm911, %v3847
        %v3849 = vld [vmem:[#allocation9] sm:$0xff]
        %3851 = vrot.lane.b32.xlu0 %v3849, 88
        %v3852 = vpop.permute.xlu0 %3851
        %v3854 = vsel %vm3821, %v3852, 0.0
        %3855 = vst.msk [vmem:[#allocation10 + $0x160] sm:$0xff] %vm911, %v3854
        %v3856 = vld [vmem:[#allocation9] sm:$0xff]
        %3858 = vrot.lane.b32.xlu0 %v3856, 80
        %v3859 = vpop.permute.xlu0 %3858
        %v3861 = vsel %vm3821, %v3859, 0.0
        %3862 = vst.msk [vmem:[#allocation10 + $0x1a8] sm:$0xff] %vm911, %v3861
        %v3863 = vld [vmem:[#allocation9] sm:$0xff]
        %3865 = vrot.lane.b32.xlu0 %v3863, 72
        %v3866 = vpop.permute.xlu0 %3865
        %v3868 = vsel %vm3821, %v3866, 0.0
        %3869 = vst.msk [vmem:[#allocation10 + $0x1f0] sm:$0xff] %vm911, %v3868
        %v3870 = vld [vmem:[#allocation9] sm:$0xff]
        %3872 = vrot.lane.b32.xlu0 %v3870, 64
        %v3873 = vpop.permute.xlu0 %3872
        %v3875 = vsel %vm3821, %v3873, 0.0
        %3876 = vst.msk [vmem:[#allocation10 + $0x238] sm:$0xff] %vm911, %v3875
        %v3877 = vld [vmem:[#allocation9] sm:$0xff]
        %v3878 = vld [vmem:[#allocation9 + $0x8] sm:$0xff]
        %3881 = vrot.lane.b32.xlu0 %v3877, 56
        %v3882 = vpop.permute.xlu0 %3881
        %3883 = vrot.lane.b32.xlu0 %v3878, 56
        %v3884 = vpop.permute.xlu0 %3883
        %v3885 = vsel %vm2436, %v3882, %v3884
        %v3887 = vsel %vm3821, %v3885, 0.0
        %3888 = vst.msk [vmem:[#allocation10 + $0x280] sm:$0xff] %vm911, %v3887
        %v3889 = vld [vmem:[%s9] sm:$0xff]
        %v3890 = vld [vmem:[%s9 + $0x8] sm:$0xff]
        %v3891 = vld [vmem:[%s9 + $0x10] sm:$0xff]
        %v3892 = vld [vmem:[%s9 + $0x18] sm:$0xff]
        %v3893 = vld [vmem:[%s9 + $0x20] sm:$0xff]
        %v3894 = vld [vmem:[%s9 + $0x28] sm:$0xff]
        %v3895 = vld [vmem:[#allocation10] sm:$0xff]
        %v3896 = vld [vmem:[#allocation10 + $0x8] sm:$0xff]
        %v3897 = vld [vmem:[#allocation10 + $0x10] sm:$0xff]
        %v3898 = vld [vmem:[#allocation10 + $0x18] sm:$0xff]
        %v3899 = vld [vmem:[#allocation10 + $0x20] sm:$0xff]
        %v3900 = vld [vmem:[#allocation10 + $0x28] sm:$0xff]
        %v3901 = vld [vmem:[#allocation10 + $0x30] sm:$0xff]
        %v3902 = vld [vmem:[#allocation10 + $0x38] sm:$0xff]
        %v3903 = vld [vmem:[#allocation10 + $0x40] sm:$0xff]
        %v3904 = vld [vmem:[#allocation10 + $0x48] sm:$0xff]
        %v3905 = vld [vmem:[#allocation10 + $0x50] sm:$0xff]
        %v3906 = vld [vmem:[#allocation10 + $0x58] sm:$0xff]
        %v3907 = vld [vmem:[#allocation10 + $0x60] sm:$0xff]
        %v3908 = vld [vmem:[#allocation10 + $0x68] sm:$0xff]
        %v3909 = vld [vmem:[#allocation10 + $0x70] sm:$0xff]
        %v3910 = vld [vmem:[#allocation10 + $0x78] sm:$0xff]
        %v3911 = vld [vmem:[#allocation10 + $0x80] sm:$0xff]
        %v3912 = vld [vmem:[#allocation10 + $0x88] sm:$0xff]
        %v3913 = vld [vmem:[#allocation10 + $0x90] sm:$0xff]
        %v3914 = vld [vmem:[#allocation10 + $0x98] sm:$0xff]
        %v3915 = vld [vmem:[#allocation10 + $0xa0] sm:$0xff]
        %v3916 = vld [vmem:[#allocation10 + $0xa8] sm:$0xff]
        %v3917 = vld [vmem:[#allocation10 + $0xb0] sm:$0xff]
        %v3918 = vld [vmem:[#allocation10 + $0xb8] sm:$0xff]
        %v3919 = vld [vmem:[#allocation10 + $0xc0] sm:$0xff]
        %v3920 = vld [vmem:[#allocation10 + $0xc8] sm:$0xff]
        %v3921 = vld [vmem:[#allocation10 + $0xd0] sm:$0xff]
        %v3922 = vld [vmem:[#allocation10 + $0xd8] sm:$0xff]
        %v3923 = vld [vmem:[#allocation10 + $0xe0] sm:$0xff]
        %v3924 = vld [vmem:[#allocation10 + $0xe8] sm:$0xff]
        %v3925 = vld [vmem:[#allocation10 + $0xf0] sm:$0xff]
        %v3926 = vld [vmem:[#allocation10 + $0xf8] sm:$0xff]
        %v3927 = vld [vmem:[#allocation10 + $0x100] sm:$0xff]
        %v3928 = vld [vmem:[#allocation10 + $0x108] sm:$0xff]
        %v3929 = vld [vmem:[#allocation10 + $0x110] sm:$0xff]
        %v3930 = vld [vmem:[#allocation10 + $0x118] sm:$0xff]
        %v3931 = vld [vmem:[#allocation10 + $0x120] sm:$0xff]
        %v3932 = vld [vmem:[#allocation10 + $0x128] sm:$0xff]
        %v3933 = vld [vmem:[#allocation10 + $0x130] sm:$0xff]
        %v3934 = vld [vmem:[#allocation10 + $0x138] sm:$0xff]
        %v3935 = vld [vmem:[#allocation10 + $0x140] sm:$0xff]
        %v3936 = vld [vmem:[#allocation10 + $0x148] sm:$0xff]
        %v3937 = vld [vmem:[#allocation10 + $0x150] sm:$0xff]
        %v3938 = vld [vmem:[#allocation10 + $0x158] sm:$0xff]
        %v3939 = vld [vmem:[#allocation10 + $0x160] sm:$0xff]
        %v3940 = vld [vmem:[#allocation10 + $0x168] sm:$0xff]
        %v3941 = vld [vmem:[#allocation10 + $0x170] sm:$0xff]
        %v3942 = vld [vmem:[#allocation10 + $0x178] sm:$0xff]
        %v3943 = vld [vmem:[#allocation10 + $0x180] sm:$0xff]
        %v3944 = vld [vmem:[#allocation10 + $0x188] sm:$0xff]
        %v3945 = vld [vmem:[#allocation10 + $0x190] sm:$0xff]
        %v3946 = vld [vmem:[#allocation10 + $0x198] sm:$0xff]
        %v3947 = vld [vmem:[#allocation10 + $0x1a0] sm:$0xff]
        %v3948 = vld [vmem:[#allocation10 + $0x1a8] sm:$0xff]
        %v3949 = vld [vmem:[#allocation10 + $0x1b0] sm:$0xff]
        %v3950 = vld [vmem:[#allocation10 + $0x1b8] sm:$0xff]
        %v3951 = vld [vmem:[#allocation10 + $0x1c0] sm:$0xff]
        %v3952 = vld [vmem:[#allocation10 + $0x1c8] sm:$0xff]
        %v3953 = vld [vmem:[#allocation10 + $0x1d0] sm:$0xff]
        %v3954 = vld [vmem:[#allocation10 + $0x1d8] sm:$0xff]
        %v3955 = vld [vmem:[#allocation10 + $0x1e0] sm:$0xff]
        %v3956 = vld [vmem:[#allocation10 + $0x1e8] sm:$0xff]
        %v3957 = vld [vmem:[#allocation10 + $0x1f0] sm:$0xff]
        %v3958 = vld [vmem:[#allocation10 + $0x1f8] sm:$0xff]
        %v3959 = vld [vmem:[#allocation10 + $0x200] sm:$0xff]
        %v3960 = vld [vmem:[#allocation10 + $0x208] sm:$0xff]
        %v3961 = vld [vmem:[#allocation10 + $0x210] sm:$0xff]
        %v3962 = vld [vmem:[#allocation10 + $0x218] sm:$0xff]
        %v3963 = vld [vmem:[#allocation10 + $0x220] sm:$0xff]
        %v3964 = vld [vmem:[#allocation10 + $0x228] sm:$0xff]
        %v3965 = vld [vmem:[#allocation10 + $0x230] sm:$0xff]
        %v3966 = vld [vmem:[#allocation10 + $0x238] sm:$0xff]
        %v3967 = vld [vmem:[#allocation10 + $0x240] sm:$0xff]
        %v3968 = vld [vmem:[#allocation10 + $0x248] sm:$0xff]
        %v3969 = vld [vmem:[#allocation10 + $0x250] sm:$0xff]
        %v3970 = vld [vmem:[#allocation10 + $0x258] sm:$0xff]
        %v3971 = vld [vmem:[#allocation10 + $0x260] sm:$0xff]
        %v3972 = vld [vmem:[#allocation10 + $0x268] sm:$0xff]
        %v3973 = vld [vmem:[#allocation10 + $0x270] sm:$0xff]
        %v3974 = vld [vmem:[#allocation10 + $0x278] sm:$0xff]
        %v3975 = vld [vmem:[#allocation10 + $0x280] sm:$0xff]
        %v3976 = vld [vmem:[%s10] sm:$0xff]
        %3978 = vset.pattern.permute.xlu0 0
        %3979 = vperm.xlu0 %3978, %v3976
        %v3980 = vpop.permute.xlu0 %3979
        %v3983 = vsel %vm807, %v3894, 0
        %3985 = vmatprep.subr.mxu0 0.0
        %3986 = vmatpush1.msra.mxu0 %v3895
        %3987 = vmatprep.subr.mxu0 0.0
        %3988 = vmatpush1.msra.mxu0 %v3896
        %3989 = vmatprep.subr.mxu0 0.0
        %3990 = vmatpush1.msra.mxu0 %v3897
        %3991 = vmatprep.subr.mxu0 0.0
        %3992 = vmatpush1.msra.mxu0 %v3898
        %3993 = vmatprep.subr.mxu0 0.0
        %3994 = vmatpush1.msra.mxu0 %v3899
        %3995 = vmatprep.subr.mxu0 0.0
        %3996 = vmatpush1.msra.mxu0 %v3900
        %3997 = vmatprep.subr.mxu0 0.0
        %3998 = vmatpush1.msra.mxu0 %v3901
        %3999 = vmatprep.subr.mxu0 0.0
        %4000 = vmatpush1.msra.mxu0 %v3902
        %4001 = vmatprep.subr.mxu0 0.0
        %4002 = vmatpush1.msra.mxu0 %v3903
        %4003 = vmatprep.subr.mxu0 0.0
        %4004 = vmatpush1.msra.mxu0 %v3904
        %4005 = vmatprep.subr.mxu0 0.0
        %4006 = vmatpush1.msra.mxu0 %v3905
        %4007 = vmatprep.subr.mxu0 0.0
        %4008 = vmatpush1.msra.mxu0 %v3906
        %4009 = vmatprep.subr.mxu0 0.0
        %4010 = vmatpush1.msra.mxu0 %v3907
        %4011 = vmatprep.subr.mxu0 0.0
        %4012 = vmatpush1.msra.mxu0 %v3908
        %4013 = vmatprep.subr.mxu0 0.0
        %4014 = vmatpush1.msra.mxu0 %v3909
        %4015 = vmatprep.subr.mxu0 0.0
        %4016 = vmatpush1.msra.mxu0 %v3910
        %4017 = vmatprep.subr.mxu0 0.0
        %4018 = vmatpush1.msra.mxu0 %v3911
        %4019 = vmatprep.subr.mxu0 0.0
        %4020 = vmatpush1.msra.mxu0 %v3912
        %4021 = vmatprep.subr.mxu0 0.0
        %4022 = vmatpush1.msra.mxu0 %v3913
        %4023 = vmatprep.subr.mxu0 0.0
        %4024 = vmatpush1.msra.mxu0 %v3914
        %4025 = vmatprep.subr.mxu0 0.0
        %4026 = vmatpush1.msra.mxu0 %v3915
        %4027 = vmatprep.subr.mxu0 0.0
        %4028 = vmatpush1.msra.mxu0 %v3916
        %4029 = vmatprep.subr.mxu0 0.0
        %4030 = vmatpush1.msra.mxu0 %v3917
        %4031 = vmatprep.subr.mxu0 0.0
        %4032 = vmatpush1.msra.mxu0 %v3918
        %4033 = vmatprep.subr.mxu0 0.0
        %4034 = vmatpush1.msra.mxu0 %v3919
        %4035 = vmatprep.subr.mxu0 0.0
        %4036 = vmatpush1.msra.mxu0 %v3920
        %4037 = vmatprep.subr.mxu0 0.0
        %4038 = vmatpush1.msra.mxu0 %v3921
        %4039 = vmatprep.subr.mxu0 0.0
        %4040 = vmatpush1.msra.mxu0 %v3922
        %4041 = vmatprep.subr.mxu0 0.0
        %4042 = vmatpush1.msra.mxu0 %v3923
        %4043 = vmatprep.subr.mxu0 0.0
        %4044 = vmatpush1.msra.mxu0 %v3924
        %4045 = vmatprep.subr.mxu0 0.0
        %4046 = vmatpush1.msra.mxu0 %v3925
        %4047 = vmatprep.subr.mxu0 0.0
        %4048 = vmatpush1.msra.mxu0 %v3926
        %4049 = vmatprep.mubr.f32.mxu0 %v3890
        %4050 = vmatmul.mubr.f32.gmra.mrb[0].mxu0 %v3889
        %v4051 = vpop.f32.mrb[0].mxu0
        %v4052 = vadd.f32 %v3980, %v4051
        %v4053 = vpop.f32.mrb[0].mxu0
        %4054 = vdwg.mxu0
        %4055 = vmatprep.subr.mxu0 0.0
        %4056 = vmatpush1.msra.mxu0 %v3927
        %4057 = vmatprep.subr.mxu0 0.0
        %4058 = vmatpush1.msra.mxu0 %v3928
        %4059 = vmatprep.subr.mxu0 0.0
        %4060 = vmatpush1.msra.mxu0 %v3929
        %4061 = vmatprep.subr.mxu0 0.0
        %4062 = vmatpush1.msra.mxu0 %v3930
        %4063 = vmatprep.subr.mxu0 0.0
        %4064 = vmatpush1.msra.mxu0 %v3931
        %4065 = vmatprep.subr.mxu0 0.0
        %4066 = vmatpush1.msra.mxu0 %v3932
        %4067 = vmatprep.subr.mxu0 0.0
        %4068 = vmatpush1.msra.mxu0 %v3933
        %4069 = vmatprep.subr.mxu0 0.0
        %4070 = vmatpush1.msra.mxu0 %v3934
        %4071 = vmatprep.subr.mxu0 0.0
        %4072 = vmatpush1.msra.mxu0 %v3935
        %4073 = vmatprep.subr.mxu0 0.0
        %4074 = vmatpush1.msra.mxu0 %v3936
        %4075 = vmatprep.subr.mxu0 0.0
        %4076 = vmatpush1.msra.mxu0 %v3937
        %4077 = vmatprep.subr.mxu0 0.0
        %4078 = vmatpush1.msra.mxu0 %v3938
        %4079 = vmatprep.subr.mxu0 0.0
        %4080 = vmatpush1.msra.mxu0 %v3939
        %4081 = vmatprep.subr.mxu0 0.0
        %4082 = vmatpush1.msra.mxu0 %v3940
        %4083 = vmatprep.subr.mxu0 0.0
        %4084 = vmatpush1.msra.mxu0 %v3941
        %4085 = vmatprep.subr.mxu0 0.0
        %4086 = vmatpush1.msra.mxu0 %v3942
        %4087 = vmatprep.subr.mxu0 0.0
        %4088 = vmatpush1.msra.mxu0 %v3943
        %4089 = vmatprep.subr.mxu0 0.0
        %4090 = vmatpush1.msra.mxu0 %v3944
        %4091 = vmatprep.subr.mxu0 0.0
        %4092 = vmatpush1.msra.mxu0 %v3945
        %4093 = vmatprep.subr.mxu0 0.0
        %4094 = vmatpush1.msra.mxu0 %v3946
        %4095 = vmatprep.subr.mxu0 0.0
        %4096 = vmatpush1.msra.mxu0 %v3947
        %4097 = vmatprep.subr.mxu0 0.0
        %4098 = vmatpush1.msra.mxu0 %v3948
        %4099 = vmatprep.subr.mxu0 0.0
        %4100 = vmatpush1.msra.mxu0 %v3949
        %4101 = vmatprep.subr.mxu0 0.0
        %4102 = vmatpush1.msra.mxu0 %v3950
        %4103 = vmatprep.subr.mxu0 0.0
        %4104 = vmatpush1.msra.mxu0 %v3951
        %4105 = vmatprep.subr.mxu0 0.0
        %4106 = vmatpush1.msra.mxu0 %v3952
        %4107 = vmatprep.subr.mxu0 0.0
        %4108 = vmatpush1.msra.mxu0 %v3953
        %4109 = vmatprep.subr.mxu0 0.0
        %4110 = vmatpush1.msra.mxu0 %v3954
        %4111 = vmatprep.subr.mxu0 0.0
        %4112 = vmatpush1.msra.mxu0 %v3955
        %4113 = vmatprep.subr.mxu0 0.0
        %4114 = vmatpush1.msra.mxu0 %v3956
        %4115 = vmatprep.subr.mxu0 0.0
        %4116 = vmatpush1.msra.mxu0 %v3957
        %4117 = vmatprep.subr.mxu0 0.0
        %4118 = vmatpush1.msra.mxu0 %v3958
        %4119 = vmatprep.mubr.f32.mxu0 %v3892
        %4120 = vmatmul.mubr.f32.gmra.mrb[0].mxu0 %v3891
        %v4121 = vpop.f32.mrb[0].mxu0
        %v4122 = vadd.f32 %v4052, %v4121
        %v4123 = vpop.f32.mrb[0].mxu0
        %4124 = vdwg.mxu0
        %4125 = vmatprep.subr.mxu0 0.0
        %4126 = vmatpush1.msra.mxu0 %v3959
        %4127 = vmatprep.subr.mxu0 0.0
        %4128 = vmatpush1.msra.mxu0 %v3960
        %4129 = vmatprep.subr.mxu0 0.0
        %4130 = vmatpush1.msra.mxu0 %v3961
        %4131 = vmatprep.subr.mxu0 0.0
        %4132 = vmatpush1.msra.mxu0 %v3962
        %4133 = vmatprep.subr.mxu0 0.0
        %4134 = vmatpush1.msra.mxu0 %v3963
        %4135 = vmatprep.subr.mxu0 0.0
        %4136 = vmatpush1.msra.mxu0 %v3964
        %4137 = vmatprep.subr.mxu0 0.0
        %4138 = vmatpush1.msra.mxu0 %v3965
        %4139 = vmatprep.subr.mxu0 0.0
        %4140 = vmatpush1.msra.mxu0 %v3966
        %4141 = vmatprep.subr.mxu0 0.0
        %4142 = vmatpush1.msra.mxu0 %v3967
        %4143 = vmatprep.subr.mxu0 0.0
        %4144 = vmatpush1.msra.mxu0 %v3968
        %4145 = vmatprep.subr.mxu0 0.0
        %4146 = vmatpush1.msra.mxu0 %v3969
        %4147 = vmatprep.subr.mxu0 0.0
        %4148 = vmatpush1.msra.mxu0 %v3970
        %4149 = vmatprep.subr.mxu0 0.0
        %4150 = vmatpush1.msra.mxu0 %v3971
        %4151 = vmatprep.subr.mxu0 0.0
        %4152 = vmatpush1.msra.mxu0 %v3972
        %4153 = vmatprep.subr.mxu0 0.0
        %4154 = vmatpush1.msra.mxu0 %v3973
        %4155 = vmatprep.subr.mxu0 0.0
        %4156 = vmatpush1.msra.mxu0 %v3974
        %4157 = vmatprep.subr.mxu0 0.0
        %4158 = vmatpush1.msra.mxu0 %v3975
        %4159 = vmatprep.subr.mxu0 0.0
        %4160 = vmatpush1.msra.mxu0 0.0
        %4161 = vmatprep.subr.mxu0 0.0
        %4162 = vmatpush1.msra.mxu0 0.0
        %4163 = vmatprep.subr.mxu0 0.0
        %4164 = vmatpush1.msra.mxu0 0.0
        %4165 = vmatprep.subr.mxu0 0.0
        %4166 = vmatpush1.msra.mxu0 0.0
        %4167 = vmatprep.subr.mxu0 0.0
        %4168 = vmatpush1.msra.mxu0 0.0
        %4169 = vmatprep.subr.mxu0 0.0
        %4170 = vmatpush1.msra.mxu0 0.0
        %4171 = vmatprep.subr.mxu0 0.0
        %4172 = vmatpush1.msra.mxu0 0.0
        %4173 = vmatprep.subr.mxu0 0.0
        %4174 = vmatpush1.msra.mxu0 0.0
        %4175 = vmatprep.subr.mxu0 0.0
        %4176 = vmatpush1.msra.mxu0 0.0
        %4177 = vmatprep.subr.mxu0 0.0
        %4178 = vmatpush1.msra.mxu0 0.0
        %4179 = vmatprep.subr.mxu0 0.0
        %4180 = vmatpush1.msra.mxu0 0.0
        %4181 = vmatprep.subr.mxu0 0.0
        %4182 = vmatpush1.msra.mxu0 0.0
        %4183 = vmatprep.subr.mxu0 0.0
        %4184 = vmatpush1.msra.mxu0 0.0
        %4185 = vmatprep.subr.mxu0 0.0
        %4186 = vmatpush1.msra.mxu0 0.0
        %4187 = vmatprep.subr.mxu0 0.0
        %4188 = vmatpush1.msra.mxu0 0.0
        %4189 = vmatprep.mubr.f32.mxu0 %v3983
        %4190 = vmatmul.mubr.f32.gmra.mrb[0].mxu0 %v3893
        %v4191 = vpop.f32.mrb[0].mxu0
        %v4192 = vadd.f32 %v4122, %v4191
        %v4193 = vpop.f32.mrb[0].mxu0
        %4194 = vdwg.mxu0
        %v4195 = vmax.f32 %v4192, 0.0
        %4196 = vst.msk [vmem:[#allocation11] sm:$0xf] %vm3246, %v3245
        %4197 = vst.msk [vmem:[#allocation11 + $0x4] sm:$0xf] %vm3246, %v4195
        %vm4198 = vcmask 597504
        %4199 = vst.msk [vmem:[#allocation11] sm:$0xff] %vm4198, 0.0
        %v4200 = vld [vmem:[#allocation11] sm:$0xff]
        %4202 = vrot.lane.b32.xlu0 %v4200, 127
        %v4203 = vpop.permute.xlu0 %4202
        %v4205 = vmax.f32 %v4200, %v4203
        %4207 = vrot.lane.b32.xlu0 %v4205, 120
        %v4208 = vpop.permute.xlu0 %4207
        %v4210 = vmax.f32 %v4205, %v4208
        %v4211 = vld [vmem:[%s6] sm:$0xff]
        %v4212 = vld [vmem:[%s6 + $0x8] sm:$0xff]
        %v4213 = vld [vmem:[%s6 + $0x10] sm:$0xff]
        %v4214 = vld [vmem:[%s6 + $0x18] sm:$0xff]
        %v4215 = vld [vmem:[%s6 + $0x20] sm:$0xff]
        %v4216 = vld [vmem:[%s6 + $0x28] sm:$0xff]
        %v4217 = vld [vmem:[%s6 + $0x30] sm:$0xff]
        %v4218 = vld [vmem:[%s6 + $0x38] sm:$0xff]
        %v4220 = vsel %vm911, %v4210, 0
        %4222 = vmatprep.subr.mxu0 0.0
        %4223 = vmatpush1.msra.mxu0 %v4211
        %4224 = vmatprep.subr.mxu0 0.0
        %4225 = vmatpush1.msra.mxu0 %v4212
        %4226 = vmatprep.subr.mxu0 0.0
        %4227 = vmatpush1.msra.mxu0 %v4213
        %4228 = vmatprep.subr.mxu0 0.0
        %4229 = vmatpush1.msra.mxu0 %v4214
        %4230 = vmatprep.subr.mxu0 0.0
        %4231 = vmatpush1.msra.mxu0 %v4215
        %4232 = vmatprep.subr.mxu0 0.0
        %4233 = vmatpush1.msra.mxu0 %v4216
        %4234 = vmatprep.subr.mxu0 0.0
        %4235 = vmatpush1.msra.mxu0 %v4217
        %4236 = vmatprep.subr.mxu0 0.0
        %4237 = vmatpush1.msra.mxu0 %v4218
        %4238 = vmatprep.subr.mxu0 0.0
        %4239 = vmatpush1.msra.mxu0 0.0
        %4240 = vmatprep.subr.mxu0 0.0
        %4241 = vmatpush1.msra.mxu0 0.0
        %4242 = vmatprep.subr.mxu0 0.0
        %4243 = vmatpush1.msra.mxu0 0.0
        %4244 = vmatprep.subr.mxu0 0.0
        %4245 = vmatpush1.msra.mxu0 0.0
        %4246 = vmatprep.subr.mxu0 0.0
        %4247 = vmatpush1.msra.mxu0 0.0
        %4248 = vmatprep.subr.mxu0 0.0
        %4249 = vmatpush1.msra.mxu0 0.0
        %4250 = vmatprep.subr.mxu0 0.0
        %4251 = vmatpush1.msra.mxu0 0.0
        %4252 = vmatprep.subr.mxu0 0.0
        %4253 = vmatpush1.msra.mxu0 0.0
        %4254 = vmatprep.subr.mxu0 0.0
        %4255 = vmatpush1.msra.mxu0 0.0
        %4256 = vmatprep.subr.mxu0 0.0
        %4257 = vmatpush1.msra.mxu0 0.0
        %4258 = vmatprep.subr.mxu0 0.0
        %4259 = vmatpush1.msra.mxu0 0.0
        %4260 = vmatprep.subr.mxu0 0.0
        %4261 = vmatpush1.msra.mxu0 0.0
        %4262 = vmatprep.subr.mxu0 0.0
        %4263 = vmatpush1.msra.mxu0 0.0
        %4264 = vmatprep.subr.mxu0 0.0
        %4265 = vmatpush1.msra.mxu0 0.0
        %4266 = vmatprep.subr.mxu0 0.0
        %4267 = vmatpush1.msra.mxu0 0.0
        %4268 = vmatprep.subr.mxu0 0.0
        %4269 = vmatpush1.msra.mxu0 0.0
        %4270 = vmatprep.subr.mxu0 0.0
        %4271 = vmatpush1.msra.mxu0 0.0
        %4272 = vmatprep.subr.mxu0 0.0
        %4273 = vmatpush1.msra.mxu0 0.0
        %4274 = vmatprep.subr.mxu0 0.0
        %4275 = vmatpush1.msra.mxu0 0.0
        %4276 = vmatprep.subr.mxu0 0.0
        %4277 = vmatpush1.msra.mxu0 0.0
        %4278 = vmatprep.subr.mxu0 0.0
        %4279 = vmatpush1.msra.mxu0 0.0
        %4280 = vmatprep.subr.mxu0 0.0
        %4281 = vmatpush1.msra.mxu0 0.0
        %4282 = vmatprep.subr.mxu0 0.0
        %4283 = vmatpush1.msra.mxu0 0.0
        %4284 = vmatprep.subr.mxu0 0.0
        %4285 = vmatpush1.msra.mxu0 0.0
        %4286 = vmatprep.mubr.f32.mxu0 0.0
        %4287 = vmatmul.mubr.f32.gmra.mrb[0].mxu0 %v4220
        %v4288 = vpop.f32.mrb[0].mxu0
        %v4289 = vadd.f32 0.0, %v4288
        %v4290 = vpop.f32.mrb[0].mxu0
        %4291 = vdwg.mxu0
        %4292 = vst.msk [vmem:[%s451] sm:$0xff] %vm974, %v4289
        %s4293 = sand.u32 %s275, 1
        %s4294 = scalar_lea.sflag [#allocation13], %s4293
        %s4295 = sand.u32 %s275, 1
        %s4296 = smul.addr %s4295, 8
        %s4297 = scalar_lea.vmem [#allocation12], %s4296
        %s4298 = sand.u32 %s31, 1
        %s4299 = scalar_lea.sflag [#allocation15], %s4298
        %s4300 = sand.u32 %s301, 1
        %s4301 = smul.addr %s4300, 4
        %s4302 = scalar_lea.vmem [#allocation14], %s4301
        %s4303 = sand.u32 %s31, 1
        %s4304 = scalar_lea.sflag [#allocation15], %s4303
        %s4305 = sand.u32 %s327, 1
        %s4306 = smul.addr %s4305, 8
        %s4307 = scalar_lea.vmem [#allocation16], %s4306
        // Predicated region
        $region65: #{tpu_custom_call.1} parent=63 // pred_check
          %p4308 = pneg %p285
        $region66: #{tpu_custom_call.1} parent=63 // pred_check_branch
          %4310 = sbr.rel (%p4308) target = $region68
        $region67: #{tpu_custom_call.1} parent=63 // pred_region
          %s4312 = ssub.s32 128, 128
          %4313 = vsyncadd %s4294, %s4312
          %s4314 = smul.addr %s31, 2
          %s4315 = smul.addr %s4314, 64
          %s4316 = scalar_lea.hbm %s11, %s4315
          %s4318 = sshll.u32 %s4297, 4
          %s4319 = int_to_ptr.vmem [resolvable:$true] %s4318
          %4321 = dma.vmem_to_hbm [thread:$0]  %s4319, 128, %s4316, %s4294
        $region68: #{tpu_custom_call.1} parent=63 // pred_fallthru
          _
        // Predicated region
        $region69: #{tpu_custom_call.1} parent=63 // pred_check
          %p4322 = pneg %p311
        $region70: #{tpu_custom_call.1} parent=63 // pred_check_branch
          %4324 = sbr.rel (%p4322) target = $region72
        $region71: #{tpu_custom_call.1} parent=63 // pred_region
          %s4326 = ssub.s32 64, 64
          %4327 = vsyncadd %s4299, %s4326
          %s4328 = smul.addr %s31, 64
          %s4329 = scalar_lea.hbm %s12, %s4328
          %s4331 = sshll.u32 %s4302, 4
          %s4332 = int_to_ptr.vmem [resolvable:$true] %s4331
          %4334 = dma.vmem_to_hbm [thread:$0]  %s4332, 64, %s4329, %s4299
        $region72: #{tpu_custom_call.1} parent=63 // pred_fallthru
          _
        // Predicated region
        $region73: #{tpu_custom_call.1} parent=63 // pred_check
          %p4335 = pneg %p337
        $region74: #{tpu_custom_call.1} parent=63 // pred_check_branch
          %4337 = sbr.rel (%p4335) target = $region76
        $region75: #{tpu_custom_call.1} parent=63 // pred_region
          %s4339 = ssub.s32 128, 128
          %4340 = vsyncadd %s4304, %s4339
          %s4341 = smul.addr %s31, 128
          %s4342 = scalar_lea.hbm %s13, %s4341
          %s4344 = sshll.u32 %s4307, 4
          %s4345 = int_to_ptr.vmem [resolvable:$true] %s4344
          %4347 = dma.vmem_to_hbm [thread:$0]  %s4345, 128, %s4342, %s4304
        $region76: #{tpu_custom_call.1} parent=63 // pred_fallthru
          _
      $region64: #{tpu_custom_call.1} parent=5 // pred_fallthru
        _
      %p4348 = scmp.le.s32.totalorder 2, %s26
      // Predicated region
      $region77: #{tpu_custom_call.1} parent=5 // pred_check
        %p4349 = pneg %p4348
      $region78: #{tpu_custom_call.1} parent=5 // pred_check_branch
        %4351 = sbr.rel (%p4349) target = $region80
      $region79: #{tpu_custom_call.1} parent=5 // pred_region
        %s4352 = ssub.s32 %s26, 2
        // Predicated region
        $region81: #{tpu_custom_call.1} parent=79 // pred_check
          %p4353 = pneg %p291
        $region82: #{tpu_custom_call.1} parent=79 // pred_check_branch
          %4355 = sbr.rel (%p4353) target = $region84
        $region83: #{tpu_custom_call.1} parent=79 // pred_region
          %s4356 = sand.u32 %s276, 1
          %s4357 = scalar_lea.sflag [#allocation13], %s4356
          %s4358 = sand.u32 %s276, 1
          %s4359 = smul.addr %s4358, 8
          %s4360 = scalar_lea.vmem [#allocation12], %s4359
          %4361 = dma.done %s4357, 128
        $region84: #{tpu_custom_call.1} parent=79 // pred_fallthru
          _
        // Predicated region
        $region85: #{tpu_custom_call.1} parent=79 // pred_check
          %p4362 = pneg %p317
        $region86: #{tpu_custom_call.1} parent=79 // pred_check_branch
          %4364 = sbr.rel (%p4362) target = $region88
        $region87: #{tpu_custom_call.1} parent=79 // pred_region
          %s4365 = sand.u32 %s32, 1
          %s4366 = scalar_lea.sflag [#allocation15], %s4365
          %s4367 = sand.u32 %s302, 1
          %s4368 = smul.addr %s4367, 4
          %s4369 = scalar_lea.vmem [#allocation14], %s4368
          %4370 = dma.done %s4366, 64
        $region88: #{tpu_custom_call.1} parent=79 // pred_fallthru
          _
        // Predicated region
        $region89: #{tpu_custom_call.1} parent=79 // pred_check
          %p4371 = pneg %p343
        $region90: #{tpu_custom_call.1} parent=79 // pred_check_branch
          %4373 = sbr.rel (%p4371) target = $region92
        $region91: #{tpu_custom_call.1} parent=79 // pred_region
          %s4374 = sand.u32 %s32, 1
          %s4375 = scalar_lea.sflag [#allocation15], %s4374
          %s4376 = sand.u32 %s328, 1
          %s4377 = smul.addr %s4376, 8
          %s4378 = scalar_lea.vmem [#allocation16], %s4377
          %4379 = dma.done %s4375, 128
        $region92: #{tpu_custom_call.1} parent=79 // pred_fallthru
          _
      $region80: #{tpu_custom_call.1} parent=5 // pred_fallthru
        _
    $region6: #{tpu_custom_call.1} parent=1 // loop_footer
      %s30 = sadd.s32 1, %s26
    $region7: #{tpu_custom_call.1} parent=1 // loop_footer_branch
      %25 = sbr.rel target = $region3
    $region8: #{tpu_custom_call.1} parent=1 // loop_exit
      _
    %4380 = vsyncpa [#allocation13], 1
    %s4381 = scalar_lea.sflag [#allocation13], 1
    %4382 = vsyncpa %s4381, 1
    %4383 = vsyncpa [#allocation15], 1
    %s4384 = scalar_lea.sflag [#allocation15], 1
    %4385 = vsyncpa %s4384, 1

</llo_original>
